<compile_context>
chip_gen: v7x
topology: tpu7x:2x2x1
jax: 0.10.0
libtpu: 0.0.40
codegen_flags: <defaults>
</compile_context>

<pallas_src>
import math
import functools

import jax
import jax.numpy as jnp
from jax.experimental import pallas as pl
from jax.experimental.pallas import tpu as pltpu

VMEM_SPEC = pl.BlockSpec(memory_space=pltpu.MemorySpace.VMEM)


# ----------------------- one fused Transformer layer (pure fn on arrays) -----
def _transformer_layer(h, mask_b, wqkg, wo, wf1, wf2, ln_g, ln_b, *, heads, B, S):
    # h: (N=B*S, d) f32 residual stream ; mask_b: (B*heads, S, S) f32 additive mask
    N, d = h.shape
    dk = d // heads
    scale = 1.0 / math.sqrt(dk)

    # fused Q|K|G projection: one bf16 MXU push, f32 accumulation
    qkg = jnp.dot(h.astype(jnp.bfloat16), wqkg,
                  preferred_element_type=jnp.float32)               # (N, 3d) f32

    def split_heads(a):                                             # (N,d) -> (B*H,S,dk)
        return jnp.transpose(a.reshape(B, S, heads, dk),
                             (0, 2, 1, 3)).reshape(B * heads, S, dk)

    qh = split_heads(qkg[:, 0 * d:1 * d]).astype(jnp.bfloat16)
    kh = split_heads(qkg[:, 1 * d:2 * d]).astype(jnp.bfloat16)
    gh = split_heads(qkg[:, 2 * d:3 * d]).astype(jnp.bfloat16)

    # (batch*head)-batched scores, additive mask (hoisted broadcast), softmax
    scores = jnp.einsum('hqd,hkd->hqk', qh, kh,
                        preferred_element_type=jnp.float32) * scale + mask_b
    scores = scores - jnp.max(scores, axis=-1, keepdims=True)
    e = jnp.exp(scores)
    p = e * pl.reciprocal(jnp.sum(e, axis=-1, keepdims=True), approx=True)

    # batched context, merge heads, single output projection
    ctx = jnp.einsum('hqk,hkd->hqd', p.astype(jnp.bfloat16), gh,
                     preferred_element_type=jnp.float32)            # (B*H,S,dk) f32
    ctx = jnp.transpose(ctx.reshape(B, heads, S, dk), (0, 2, 1, 3)).reshape(N, d)
    attn = jnp.dot(ctx.astype(jnp.bfloat16), wo,
                   preferred_element_type=jnp.float32)

    h1 = h + attn                               # residual (dropout == identity)

    # LayerNorm2 (torch eps 1e-5) -- f32 elementwise
    mu = jnp.mean(h1, axis=-1, keepdims=True)
    var = jnp.mean((h1 - mu) ** 2, axis=-1, keepdims=True)
    norm = (h1 - mu) * jax.lax.rsqrt(var + 1e-5) * ln_g + ln_b

    # FFN + residual (bf16 matmuls, f32 accumulate)
    ff1 = jnp.maximum(jnp.dot(norm.astype(jnp.bfloat16), wf1,
                              preferred_element_type=jnp.float32), 0.0)
    return h1 + jnp.dot(ff1.astype(jnp.bfloat16), wf2,
                        preferred_element_type=jnp.float32)


# ----------------------- kernel 1: gamma + word-level transformer tower ------
def _word_kernel(x_ref, mb_ref, gw_ref, gb_ref, wqkg_ref, wo_ref, wf1_ref,
                 wf2_ref, lng_ref, lnb_ref, o_ref, *, heads, n_layers, B, S):
    in1 = x_ref.shape[-1]
    d = gw_ref.shape[-1]

    # gamma Linear + ReLU fused in; whole batch as one (B*S, in1) matmul
    x = x_ref[...].reshape(B * S, in1).astype(jnp.bfloat16)
    h = jnp.maximum(
        jnp.dot(x, gw_ref[...], preferred_element_type=jnp.float32)
        + gb_ref[...], 0.0)                                          # (B*S, d) f32

    # hoist mask broadcast once for all layers
    mask_b = jnp.broadcast_to(mb_ref[...], (B, heads, S, S)).reshape(B * heads, S, S)

    for l in range(n_layers):                                        # static unroll
        h = _transformer_layer(h, mask_b, wqkg_ref[l], wo_ref[l], wf1_ref[l],
                               wf2_ref[l], lng_ref[l], lnb_ref[l],
                               heads=heads, B=B, S=S)
    o_ref[...] = h.reshape(B, S, d)


def word_tower(bert_feature, word_box, gamma, layers, *, heads):
    B, S, in1 = bert_feature.shape
    in2 = gamma['w_t'].shape[1]
    n_layers = layers['wqkg_t'].shape[0]
    mb = jnp.where(word_box == 0, jnp.float32(-1e9),
                   jnp.float32(0.0)).reshape(B, 1, 1, S)

    return pl.pallas_call(
        functools.partial(_word_kernel, heads=heads, n_layers=n_layers, B=B, S=S),
        out_shape=jax.ShapeDtypeStruct((B, S, in2), jnp.float32),
        in_specs=[VMEM_SPEC] * 10,
        out_specs=VMEM_SPEC,
    )(bert_feature, mb, gamma['w_t'], gamma['b'],
      layers['wqkg_t'], layers['wo_t'], layers['wf1_t'], layers['wf2_t'],
      layers['ln2_g'], layers['ln2_b'])


# ----------------------- kernel 2: both phrase towers, parallel tower grid ---
def _phrase_kernel(x_ref, mb_ref, wqkg_ref, wo_ref, wf1_ref, wf2_ref,
                   lng_ref, lnb_ref, o_ref, *, heads, Dn, S):
    d = x_ref.shape[-1]
    h = x_ref[...].reshape(Dn * S, d)                                # f32
    mask_b = jnp.broadcast_to(mb_ref[...], (Dn, heads, S, S)).reshape(Dn * heads, S, S)

    for l in range(2):                                               # 2 layers / tower
        h = _transformer_layer(h, mask_b, wqkg_ref[l], wo_ref[l], wf1_ref[l],
                               wf2_ref[l], lng_ref[l], lnb_ref[l],
                               heads=heads, B=Dn, S=S)
    o_ref[0] = h.reshape(Dn, S, d)


def phrase_towers(feat2, phrase_box, phrase_pad, layers, *, heads):
    Dn, S, d = feat2.shape
    dff = layers['wf1_t'].shape[2]
    mb = jnp.where(phrase_box == phrase_pad, jnp.float32(-1e9),
                   jnp.float32(0.0)).reshape(Dn, 1, 1, S)

    out = pl.pallas_call(
        functools.partial(_phrase_kernel, heads=heads, Dn=Dn, S=S),
        out_shape=jax.ShapeDtypeStruct((2, Dn, S, d), jnp.float32),
        grid=(2,),                               # tower axis: parallel across TCs
        in_specs=[
            pl.BlockSpec((Dn, S, d), lambda t: (0, 0, 0)),        # shared activations
            pl.BlockSpec((Dn, 1, 1, S), lambda t: (0, 0, 0, 0)),  # shared mask
            pl.BlockSpec((2, d, 3 * d), lambda t: (t, 0, 0)),     # tower t layers
            pl.BlockSpec((2, d, d), lambda t: (t, 0, 0)),
            pl.BlockSpec((2, d, dff), lambda t: (t, 0, 0)),
            pl.BlockSpec((2, dff, d), lambda t: (t, 0, 0)),
            pl.BlockSpec((2, 1, d), lambda t: (t, 0, 0)),
            pl.BlockSpec((2, 1, d), lambda t: (t, 0, 0)),
        ],
        out_specs=pl.BlockSpec((1, Dn, S, d), lambda t: (t, 0, 0, 0)),
        compiler_params=pltpu.CompilerParams(dimension_semantics=("parallel",)),
    )(feat2, mb, layers['wqkg_t'], layers['wo_t'], layers['wf1_t'],
      layers['wf2_t'], layers['ln2_g'], layers['ln2_b'])
    return out[0], out[1]


# ----------------------- kernel 3: DMF head ----------------------------------
def _dmf_kernel(x1_ref, x2_ref, dist_ref, w11_ref, b11_ref, w12_ref, b12_ref,
                w21a_ref, w21b_ref, w22_ref, bfin_ref, o_ref, *, od):
    x1 = x1_ref[...].astype(jnp.bfloat16)
    x2 = x2_ref[...].astype(jnp.bfloat16)
    dist = dist_ref[...]

    # paired Linear pairs fused into single (in2, 2*od) bf16 matmuls
    y11 = jnp.dot(x1, w11_ref[...], preferred_element_type=jnp.float32) + b11_ref[...]
    y12 = jnp.dot(x2, w12_ref[...], preferred_element_type=jnp.float32) + b12_ref[...]
    ff1 = jnp.maximum(dist * y11[:, :od] + (1.0 - dist) * y11[:, od:], 0.0)
    ff2 = jnp.maximum(dist * y12[:, :od] + (1.0 - dist) * y12[:, od:], 0.0)

    # gamma21(cat(ff1,ff2)) + gamma22(ff1*ff2) == ff1@W1 + ff2@W2 + (ff1*ff2)@W3 + b
    # (three accumulated dots instead of a materialized concatenate copy)
    logit = (jnp.dot(ff1.astype(jnp.bfloat16), w21a_ref[...],
                     preferred_element_type=jnp.float32)
             + jnp.dot(ff2.astype(jnp.bfloat16), w21b_ref[...],
                       preferred_element_type=jnp.float32)
             + jnp.dot((ff1 * ff2).astype(jnp.bfloat16), w22_ref[...],
                       preferred_element_type=jnp.float32)
             + bfin_ref[...])
    # TODO(synk): classes=2 -> masked vst; at scale pad the output lane width.
    o_ref[...] = logit


def dmf(x1, x2, distance, p):
    n = x1.shape[0]
    classes = p['b_fin'].shape[1]
    od = p['w21a_t'].shape[0]
    return pl.pallas_call(
        functools.partial(_dmf_kernel, od=od),
        out_shape=jax.ShapeDtypeStruct((n, classes), jnp.float32),
        in_specs=[VMEM_SPEC] * 11,
        out_specs=VMEM_SPEC,
    )(x1, x2, distance, p['w11_t'], p['b11'], p['w12_t'], p['b12'],
      p['w21a_t'], p['w21b_t'], p['w22_t'], p['b_fin'])


# ----------------------- parameter init (packed / pre-transposed, bf16) ------
def xavier_normal(key, out_f, in_f):
    std = math.sqrt(2.0 / (in_f + out_f))
    return std * jax.random.normal(key, (out_f, in_f), dtype=jnp.float32)


def init_transformer_packed(key, d, dff):
    ks = jax.random.split(key, 6)
    wq = xavier_normal(ks[0], d, d)
    wk = xavier_normal(ks[1], d, d)
    wg = xavier_normal(ks[2], d, d)
    wo = xavier_normal(ks[3], d, d)
    wf1 = xavier_normal(ks[4], dff, d)
    wf2 = xavier_normal(ks[5], d, dff)
    return {
        'wqkg_t': jnp.concatenate([wq.T, wk.T, wg.T], axis=1).astype(jnp.bfloat16),
        'wo_t': wo.T.astype(jnp.bfloat16),
        'wf1_t': wf1.T.astype(jnp.bfloat16),
        'wf2_t': wf2.T.astype(jnp.bfloat16),
        'ln2_g': jnp.ones((1, d), jnp.float32),
        'ln2_b': jnp.zeros((1, d), jnp.float32),
    }


def stack_layers(blocks):
    return {k: jnp.stack([b[k] for b in blocks], axis=0) for k in blocks[0]}


def init_params(key, in1, in2, out_f, out_dim, classes, max_pt):
    ks = jax.random.split(key, 16)
    t = [init_transformer_packed(ks[3 + i], in2, out_f) for i in range(6)]
    w21 = xavier_normal(ks[13], classes, 2 * out_dim)
    w22 = xavier_normal(ks[14], classes, out_dim)
    return {
        'gamma': {
            'w_t': xavier_normal(ks[0], in2, in1).T.astype(jnp.bfloat16),   # (in1,in2)
            'b': (0.01 * jax.random.normal(ks[1], (in2,), jnp.float32)).reshape(1, in2),
        },
        'theta_h': xavier_normal(ks[2], max_pt, in2),                       # Embedding
        'word_layers': stack_layers(t[0:2]),       # t11, t12
        'phrase_layers': stack_layers(t[2:6]),     # t21_1, t21_2, t22_1, t22_2
        'dmf': {
            'w11_t': jnp.concatenate([xavier_normal(ks[9], out_dim, in2).T,
                                      xavier_normal(ks[10], out_dim, in2).T],
                                     axis=1).astype(jnp.bfloat16),
            'b11': jnp.zeros((1, 2 * out_dim), jnp.float32),
            'w12_t': jnp.concatenate([xavier_normal(ks[11], out_dim, in2).T,
                                      xavier_normal(ks[12], out_dim, in2).T],
                                     axis=1).astype(jnp.bfloat16),
            'b12': jnp.zeros((1, 2 * out_dim), jnp.float32),
            'w21a_t': w21[:, :out_dim].T.astype(jnp.bfloat16),   # (od, classes)
            'w21b_t': w21[:, out_dim:].T.astype(jnp.bfloat16),   # (od, classes)
            'w22_t': w22.T.astype(jnp.bfloat16),                 # (od, classes)
            'b_fin': jnp.zeros((1, classes), jnp.float32),
        },
    }


# ----------------------- Joint.forward ---------------------------------------
def joint_forward(params, bert_feature, feature_phrase, distance, word_box,
                  phrase_box, pt_id, phrase_index, D, phrase, max_m, zeros,
                  *, heads):
    in2 = params['gamma']['w_t'].shape[1]

    # fused: gamma Linear+ReLU -> transformer11 -> transformer12 (one pallas_call)
    t12 = word_tower(bert_feature, word_box, params['gamma'],
                     params['word_layers'], heads=heads)

    # embedding lookup + phrase-feature gather (glue, plain JAX)
    h_features = jnp.take(params['theta_h'], pt_id, axis=0)
    feat2 = jnp.concatenate([t12[:, 0, :] + h_features, zeros], axis=0)[phrase_box]

    # fused: both phrase towers in one pallas_call, parallel tower grid axis
    t21_2, t22_2 = phrase_towers(feat2, phrase_box, phrase,
                                 params['phrase_layers'], heads=heads)

    x1 = t21_2.reshape(D * max_m, in2)[phrase_index][feature_phrase[:, 0]]
    x2 = t22_2.reshape(D * max_m, in2)[phrase_index][feature_phrase[:, 1]]

    return dmf(x1, x2, distance, params['dmf'])


if __name__ == "__main__":
    # module hyper-params
    heads, in_features1, in_features2 = 4, 48, 32
    out_features, out_dim, classes = 32, 16, 2
    max_pt, C = 10, 2
    # data shapes
    bs, seq = 4, 8          # number of sentences, words per sentence
    D, max_m = 2, 4         # documents, max phrases per document
    phrase = bs             # padding id in phrase_box (points at the zeros row)

    key = jax.random.PRNGKey(0)
    k_param, k_bert, k_dist = jax.random.split(key, 3)
    params = init_params(k_param, in_features1, in_features2,
                         out_features, out_dim, classes, max_pt)

    bert_feature = jax.random.normal(k_bert, (bs, seq, in_features1), dtype=jnp.float32)
    word_box = jnp.array([[1, 1, 2, 2, 3, 3, 0, 0],
                          [1, 2, 3, 4, 0, 0, 0, 0],
                          [1, 1, 1, 2, 2, 3, 3, 0],
                          [1, 2, 2, 3, 4, 4, 0, 0]], dtype=jnp.int32)
    pt_id = jnp.array([1, 3, 5, 7], dtype=jnp.int32)
    zeros = jnp.zeros((1, in_features2), dtype=jnp.float32)
    phrase_box = jnp.array([[0, 1, phrase, phrase],
                            [2, 3, phrase, phrase]], dtype=jnp.int32)
    phrase_index = jnp.array([0, 1, 4, 5, 1], dtype=jnp.int32)          # into D*max_m
    feature_phrase = jnp.array([[0, 1], [1, 2], [2, 3],
                                [3, 0], [4, 2], [0, 4]], dtype=jnp.int32)
    n_pairs = feature_phrase.shape[0]
    distance = jax.random.uniform(k_dist, (n_pairs, 1), dtype=jnp.float32)

    logit = joint_forward(params, bert_feature, feature_phrase, distance, word_box,
                          phrase_box, pt_id, phrase_index, D, phrase, max_m, zeros,
                          heads=heads)
    jax.block_until_ready(logit)
    assert logit.shape == (n_pairs, classes)
    print("KERNEL_OK")
</pallas_src>

<mosaic_0001>
module attributes {stable_mosaic.version = 11 : i64} {
  func.func @_word_kernel(%arg0: memref<4x8x48xf32, #tpu.memory_space<vmem>>, %arg1: memref<4x1x1x8xf32, #tpu.memory_space<vmem>>, %arg2: memref<48x32xbf16, #tpu.memory_space<vmem>>, %arg3: memref<1x32xf32, #tpu.memory_space<vmem>>, %arg4: memref<2x32x96xbf16, #tpu.memory_space<vmem>>, %arg5: memref<2x32x32xbf16, #tpu.memory_space<vmem>>, %arg6: memref<2x32x32xbf16, #tpu.memory_space<vmem>>, %arg7: memref<2x32x32xbf16, #tpu.memory_space<vmem>>, %arg8: memref<2x1x32xf32, #tpu.memory_space<vmem>>, %arg9: memref<2x1x32xf32, #tpu.memory_space<vmem>>, %arg10: memref<4x8x32xf32, #tpu.memory_space<vmem>>) attributes {dimension_semantics = [], scalar_prefetch = 0 : i64, scratch_operands = 0 : i64, tpu.core_type = #tpu.core_type<tc>} {
    %c0 = arith.constant 0 : index
    %c0_0 = arith.constant 0 : index
    %c0_1 = arith.constant 0 : index
    %0 = vector.load %arg0[%c0, %c0_0, %c0_1] : memref<4x8x48xf32, #tpu.memory_space<vmem>>, vector<4x8x48xf32>
    %1 = vector.shape_cast %0 : vector<4x8x48xf32> to vector<32x48xf32>
    %2 = arith.truncf %1 : vector<32x48xf32> to vector<32x48xbf16>
    %c0_2 = arith.constant 0 : index
    %c0_3 = arith.constant 0 : index
    %3 = vector.load %arg2[%c0_2, %c0_3] : memref<48x32xbf16, #tpu.memory_space<vmem>>, vector<48x32xbf16>
    %cst = arith.constant dense<0.000000e+00> : vector<32x32xf32>
    %4 = tpu.matmul %2, %3, %cst {dimension_numbers = #tpu.dot_dimension_numbers<[1], [0], [0], [1], [0, 0, 1, 1], [], []>} : vector<32x48xbf16>, vector<48x32xbf16>, vector<32x32xf32> -> vector<32x32xf32>
    %c0_4 = arith.constant 0 : index
    %c0_5 = arith.constant 0 : index
    %5 = vector.load %arg3[%c0_4, %c0_5] : memref<1x32xf32, #tpu.memory_space<vmem>>, vector<1x32xf32>
    %6 = vector.broadcast %5 : vector<1x32xf32> to vector<32x32xf32>
    %7 = arith.addf %4, %6 : vector<32x32xf32>
    %cst_6 = arith.constant 0.000000e+00 : f32
    %8 = vector.broadcast %cst_6 : f32 to vector<32x32xf32>
    %9 = arith.maximumf %7, %8 : vector<32x32xf32>
    %c0_7 = arith.constant 0 : index
    %c0_8 = arith.constant 0 : index
    %c0_9 = arith.constant 0 : index
    %c0_10 = arith.constant 0 : index
    %10 = vector.load %arg1[%c0_7, %c0_8, %c0_9, %c0_10] : memref<4x1x1x8xf32, #tpu.memory_space<vmem>>, vector<4x1x1x8xf32>
    %11 = vector.shape_cast %10 : vector<4x1x1x8xf32> to vector<4x1x1x8xf32>
    %12 = vector.broadcast %11 : vector<4x1x1x8xf32> to vector<4x4x8x8xf32>
    %13 = vector.shape_cast %12 : vector<4x4x8x8xf32> to vector<16x8x8xf32>
    %c0_11 = arith.constant 0 : index
    %c0_12 = arith.constant 0 : index
    %c0_13 = arith.constant 0 : index
    %14 = vector.load %arg4[%c0_11, %c0_12, %c0_13] : memref<2x32x96xbf16, #tpu.memory_space<vmem>>, vector<1x32x96xbf16>
    %15 = vector.shape_cast %14 : vector<1x32x96xbf16> to vector<32x96xbf16>
    %c0_14 = arith.constant 0 : index
    %c0_15 = arith.constant 0 : index
    %c0_16 = arith.constant 0 : index
    %16 = vector.load %arg5[%c0_14, %c0_15, %c0_16] : memref<2x32x32xbf16, #tpu.memory_space<vmem>>, vector<1x32x32xbf16>
    %17 = vector.shape_cast %16 : vector<1x32x32xbf16> to vector<32x32xbf16>
    %c0_17 = arith.constant 0 : index
    %c0_18 = arith.constant 0 : index
    %c0_19 = arith.constant 0 : index
    %18 = vector.load %arg6[%c0_17, %c0_18, %c0_19] : memref<2x32x32xbf16, #tpu.memory_space<vmem>>, vector<1x32x32xbf16>
    %19 = vector.shape_cast %18 : vector<1x32x32xbf16> to vector<32x32xbf16>
    %c0_20 = arith.constant 0 : index
    %c0_21 = arith.constant 0 : index
    %c0_22 = arith.constant 0 : index
    %20 = vector.load %arg7[%c0_20, %c0_21, %c0_22] : memref<2x32x32xbf16, #tpu.memory_space<vmem>>, vector<1x32x32xbf16>
    %21 = vector.shape_cast %20 : vector<1x32x32xbf16> to vector<32x32xbf16>
    %c0_23 = arith.constant 0 : index
    %c0_24 = arith.constant 0 : index
    %c0_25 = arith.constant 0 : index
    %22 = vector.load %arg8[%c0_23, %c0_24, %c0_25] : memref<2x1x32xf32, #tpu.memory_space<vmem>>, vector<1x1x32xf32>
    %23 = vector.shape_cast %22 : vector<1x1x32xf32> to vector<1x32xf32>
    %c0_26 = arith.constant 0 : index
    %c0_27 = arith.constant 0 : index
    %c0_28 = arith.constant 0 : index
    %24 = vector.load %arg9[%c0_26, %c0_27, %c0_28] : memref<2x1x32xf32, #tpu.memory_space<vmem>>, vector<1x1x32xf32>
    %25 = vector.shape_cast %24 : vector<1x1x32xf32> to vector<1x32xf32>
    %26 = arith.truncf %9 : vector<32x32xf32> to vector<32x32xbf16>
    %cst_29 = arith.constant dense<0.000000e+00> : vector<32x96xf32>
    %27 = tpu.matmul %26, %15, %cst_29 {dimension_numbers = #tpu.dot_dimension_numbers<[1], [0], [0], [1], [0, 0, 1, 1], [], []>} : vector<32x32xbf16>, vector<32x96xbf16>, vector<32x96xf32> -> vector<32x96xf32>
    %28 = vector.extract_strided_slice %27 {offsets = [0, 0], sizes = [32, 32], strides = [1, 1]} : vector<32x96xf32> to vector<32x32xf32>
    %29 = vector.shape_cast %28 : vector<32x32xf32> to vector<4x8x4x8xf32>
    %30 = tpu.transpose %29, [0, 2, 1, 3] : vector<4x8x4x8xf32> -> vector<4x4x8x8xf32>
    %31 = vector.shape_cast %30 : vector<4x4x8x8xf32> to vector<16x8x8xf32>
    %32 = arith.truncf %31 : vector<16x8x8xf32> to vector<16x8x8xbf16>
    %33 = vector.extract_strided_slice %27 {offsets = [0, 32], sizes = [32, 32], strides = [1, 1]} : vector<32x96xf32> to vector<32x32xf32>
    %34 = vector.shape_cast %33 : vector<32x32xf32> to vector<4x8x4x8xf32>
    %35 = tpu.transpose %34, [0, 2, 1, 3] : vector<4x8x4x8xf32> -> vector<4x4x8x8xf32>
    %36 = vector.shape_cast %35 : vector<4x4x8x8xf32> to vector<16x8x8xf32>
    %37 = arith.truncf %36 : vector<16x8x8xf32> to vector<16x8x8xbf16>
    %38 = vector.extract_strided_slice %27 {offsets = [0, 64], sizes = [32, 32], strides = [1, 1]} : vector<32x96xf32> to vector<32x32xf32>
    %39 = vector.shape_cast %38 : vector<32x32xf32> to vector<4x8x4x8xf32>
    %40 = tpu.transpose %39, [0, 2, 1, 3] : vector<4x8x4x8xf32> -> vector<4x4x8x8xf32>
    %41 = vector.shape_cast %40 : vector<4x4x8x8xf32> to vector<16x8x8xf32>
    %42 = arith.truncf %41 : vector<16x8x8xf32> to vector<16x8x8xbf16>
    "tpu.trace_start"() <{level = 10 : i32, message = "hqd,hkd->hqk"}> : () -> ()
    %cst_30 = arith.constant dense<0.000000e+00> : vector<16x8x8xf32>
    %43 = tpu.matmul %32, %37, %cst_30 {dimension_numbers = #tpu.dot_dimension_numbers<[2], [2], [1], [1], [0, 0, 0, 1, 1, 1], [0], [0]>} : vector<16x8x8xbf16>, vector<16x8x8xbf16>, vector<16x8x8xf32> -> vector<16x8x8xf32>
    "tpu.trace_stop"() : () -> ()
    %cst_31 = arith.constant 0.353553385 : f32
    %44 = vector.broadcast %cst_31 : f32 to vector<16x8x8xf32>
    %45 = arith.mulf %43, %44 : vector<16x8x8xf32>
    %46 = arith.addf %45, %13 : vector<16x8x8xf32>
    %cst_32 = arith.constant dense<0xFF800000> : vector<16x8xf32>
    %47 = vector.multi_reduction <maximumf>, %46, %cst_32 [2] : vector<16x8x8xf32> to vector<16x8xf32>
    %48 = vector.shape_cast %47 : vector<16x8xf32> to vector<16x8x1xf32>
    %49 = vector.broadcast %48 : vector<16x8x1xf32> to vector<16x8x8xf32>
    %50 = arith.subf %46, %49 : vector<16x8x8xf32>
    %51 = math.exp %50 : vector<16x8x8xf32>
    %cst_33 = arith.constant dense<0.000000e+00> : vector<16x8xf32>
    %52 = vector.multi_reduction <add>, %51, %cst_33 [2] : vector<16x8x8xf32> to vector<16x8xf32>
    %53 = vector.shape_cast %52 : vector<16x8xf32> to vector<16x8x1xf32>
    %54 = tpu.reciprocal %53 {approx = true} : vector<16x8x1xf32> -> vector<16x8x1xf32>
    %55 = vector.broadcast %54 : vector<16x8x1xf32> to vector<16x8x8xf32>
    %56 = arith.mulf %51, %55 : vector<16x8x8xf32>
    %57 = arith.truncf %56 : vector<16x8x8xf32> to vector<16x8x8xbf16>
    "tpu.trace_start"() <{level = 10 : i32, message = "hqk,hkd->hqd"}> : () -> ()
    %cst_34 = arith.constant dense<0.000000e+00> : vector<16x8x8xf32>
    %58 = tpu.matmul %57, %42, %cst_34 {dimension_numbers = #tpu.dot_dimension_numbers<[2], [1], [1], [2], [0, 0, 0, 1, 1, 2], [0], [0]>} : vector<16x8x8xbf16>, vector<16x8x8xbf16>, vector<16x8x8xf32> -> vector<16x8x8xf32>
    "tpu.trace_stop"() : () -> ()
    %59 = vector.shape_cast %58 : vector<16x8x8xf32> to vector<4x4x8x8xf32>
    %60 = tpu.transpose %59, [0, 2, 1, 3] : vector<4x4x8x8xf32> -> vector<4x8x4x8xf32>
    %61 = vector.shape_cast %60 : vector<4x8x4x8xf32> to vector<32x32xf32>
    %62 = arith.truncf %61 : vector<32x32xf32> to vector<32x32xbf16>
    %cst_35 = arith.constant dense<0.000000e+00> : vector<32x32xf32>
    %63 = tpu.matmul %62, %17, %cst_35 {dimension_numbers = #tpu.dot_dimension_numbers<[1], [0], [0], [1], [0, 0, 1, 1], [], []>} : vector<32x32xbf16>, vector<32x32xbf16>, vector<32x32xf32> -> vector<32x32xf32>
    %64 = arith.addf %9, %63 : vector<32x32xf32>
    %cst_36 = arith.constant dense<0.000000e+00> : vector<32xf32>
    %65 = vector.multi_reduction <add>, %64, %cst_36 [1] : vector<32x32xf32> to vector<32xf32>
    %66 = vector.shape_cast %65 : vector<32xf32> to vector<32x1xf32>
    %cst_37 = arith.constant 3.200000e+01 : f32
    %67 = vector.broadcast %cst_37 : f32 to vector<32x1xf32>
    %68 = arith.divf %66, %67 : vector<32x1xf32>
    %69 = vector.broadcast %68 : vector<32x1xf32> to vector<32x32xf32>
    %70 = arith.subf %64, %69 : vector<32x32xf32>
    %71 = arith.mulf %70, %70 : vector<32x32xf32>
    %cst_38 = arith.constant dense<0.000000e+00> : vector<32xf32>
    %72 = vector.multi_reduction <add>, %71, %cst_38 [1] : vector<32x32xf32> to vector<32xf32>
    %73 = vector.shape_cast %72 : vector<32xf32> to vector<32x1xf32>
    %cst_39 = arith.constant 3.200000e+01 : f32
    %74 = vector.broadcast %cst_39 : f32 to vector<32x1xf32>
    %75 = arith.divf %73, %74 : vector<32x1xf32>
    %76 = vector.broadcast %68 : vector<32x1xf32> to vector<32x32xf32>
    %77 = arith.subf %64, %76 : vector<32x32xf32>
    %cst_40 = arith.constant 9.99999974E-6 : f32
    %78 = vector.broadcast %cst_40 : f32 to vector<32x1xf32>
    %79 = arith.addf %75, %78 : vector<32x1xf32>
    %80 = math.rsqrt %79 : vector<32x1xf32>
    %81 = vector.broadcast %80 : vector<32x1xf32> to vector<32x32xf32>
    %82 = arith.mulf %77, %81 : vector<32x32xf32>
    %83 = vector.broadcast %23 : vector<1x32xf32> to vector<32x32xf32>
    %84 = arith.mulf %82, %83 : vector<32x32xf32>
    %85 = vector.broadcast %25 : vector<1x32xf32> to vector<32x32xf32>
    %86 = arith.addf %84, %85 : vector<32x32xf32>
    %87 = arith.truncf %86 : vector<32x32xf32> to vector<32x32xbf16>
    %cst_41 = arith.constant dense<0.000000e+00> : vector<32x32xf32>
    %88 = tpu.matmul %87, %19, %cst_41 {dimension_numbers = #tpu.dot_dimension_numbers<[1], [0], [0], [1], [0, 0, 1, 1], [], []>} : vector<32x32xbf16>, vector<32x32xbf16>, vector<32x32xf32> -> vector<32x32xf32>
    %cst_42 = arith.constant 0.000000e+00 : f32
    %89 = vector.broadcast %cst_42 : f32 to vector<32x32xf32>
    %90 = arith.maximumf %88, %89 : vector<32x32xf32>
    %91 = arith.truncf %90 : vector<32x32xf32> to vector<32x32xbf16>
    %cst_43 = arith.constant dense<0.000000e+00> : vector<32x32xf32>
    %92 = tpu.matmul %91, %21, %cst_43 {dimension_numbers = #tpu.dot_dimension_numbers<[1], [0], [0], [1], [0, 0, 1, 1], [], []>} : vector<32x32xbf16>, vector<32x32xbf16>, vector<32x32xf32> -> vector<32x32xf32>
    %93 = arith.addf %64, %92 : vector<32x32xf32>
    %c1 = arith.constant 1 : index
    %c0_44 = arith.constant 0 : index
    %c0_45 = arith.constant 0 : index
    %94 = vector.load %arg4[%c1, %c0_44, %c0_45] : memref<2x32x96xbf16, #tpu.memory_space<vmem>>, vector<1x32x96xbf16>
    %95 = vector.shape_cast %94 : vector<1x32x96xbf16> to vector<32x96xbf16>
    %c1_46 = arith.constant 1 : index
    %c0_47 = arith.constant 0 : index
    %c0_48 = arith.constant 0 : index
    %96 = vector.load %arg5[%c1_46, %c0_47, %c0_48] : memref<2x32x32xbf16, #tpu.memory_space<vmem>>, vector<1x32x32xbf16>
    %97 = vector.shape_cast %96 : vector<1x32x32xbf16> to vector<32x32xbf16>
    %c1_49 = arith.constant 1 : index
    %c0_50 = arith.constant 0 : index
    %c0_51 = arith.constant 0 : index
    %98 = vector.load %arg6[%c1_49, %c0_50, %c0_51] : memref<2x32x32xbf16, #tpu.memory_space<vmem>>, vector<1x32x32xbf16>
    %99 = vector.shape_cast %98 : vector<1x32x32xbf16> to vector<32x32xbf16>
    %c1_52 = arith.constant 1 : index
    %c0_53 = arith.constant 0 : index
    %c0_54 = arith.constant 0 : index
    %100 = vector.load %arg7[%c1_52, %c0_53, %c0_54] : memref<2x32x32xbf16, #tpu.memory_space<vmem>>, vector<1x32x32xbf16>
    %101 = vector.shape_cast %100 : vector<1x32x32xbf16> to vector<32x32xbf16>
    %c1_55 = arith.constant 1 : index
    %c0_56 = arith.constant 0 : index
    %c0_57 = arith.constant 0 : index
    %102 = vector.load %arg8[%c1_55, %c0_56, %c0_57] : memref<2x1x32xf32, #tpu.memory_space<vmem>>, vector<1x1x32xf32>
    %103 = vector.shape_cast %102 : vector<1x1x32xf32> to vector<1x32xf32>
    %c1_58 = arith.constant 1 : index
    %c0_59 = arith.constant 0 : index
    %c0_60 = arith.constant 0 : index
    %104 = vector.load %arg9[%c1_58, %c0_59, %c0_60] : memref<2x1x32xf32, #tpu.memory_space<vmem>>, vector<1x1x32xf32>
    %105 = vector.shape_cast %104 : vector<1x1x32xf32> to vector<1x32xf32>
    %106 = arith.truncf %93 : vector<32x32xf32> to vector<32x32xbf16>
    %cst_61 = arith.constant dense<0.000000e+00> : vector<32x96xf32>
    %107 = tpu.matmul %106, %95, %cst_61 {dimension_numbers = #tpu.dot_dimension_numbers<[1], [0], [0], [1], [0, 0, 1, 1], [], []>} : vector<32x32xbf16>, vector<32x96xbf16>, vector<32x96xf32> -> vector<32x96xf32>
    %108 = vector.extract_strided_slice %107 {offsets = [0, 0], sizes = [32, 32], strides = [1, 1]} : vector<32x96xf32> to vector<32x32xf32>
    %109 = vector.shape_cast %108 : vector<32x32xf32> to vector<4x8x4x8xf32>
    %110 = tpu.transpose %109, [0, 2, 1, 3] : vector<4x8x4x8xf32> -> vector<4x4x8x8xf32>
    %111 = vector.shape_cast %110 : vector<4x4x8x8xf32> to vector<16x8x8xf32>
    %112 = arith.truncf %111 : vector<16x8x8xf32> to vector<16x8x8xbf16>
    %113 = vector.extract_strided_slice %107 {offsets = [0, 32], sizes = [32, 32], strides = [1, 1]} : vector<32x96xf32> to vector<32x32xf32>
    %114 = vector.shape_cast %113 : vector<32x32xf32> to vector<4x8x4x8xf32>
    %115 = tpu.transpose %114, [0, 2, 1, 3] : vector<4x8x4x8xf32> -> vector<4x4x8x8xf32>
    %116 = vector.shape_cast %115 : vector<4x4x8x8xf32> to vector<16x8x8xf32>
    %117 = arith.truncf %116 : vector<16x8x8xf32> to vector<16x8x8xbf16>
    %118 = vector.extract_strided_slice %107 {offsets = [0, 64], sizes = [32, 32], strides = [1, 1]} : vector<32x96xf32> to vector<32x32xf32>
    %119 = vector.shape_cast %118 : vector<32x32xf32> to vector<4x8x4x8xf32>
    %120 = tpu.transpose %119, [0, 2, 1, 3] : vector<4x8x4x8xf32> -> vector<4x4x8x8xf32>
    %121 = vector.shape_cast %120 : vector<4x4x8x8xf32> to vector<16x8x8xf32>
    %122 = arith.truncf %121 : vector<16x8x8xf32> to vector<16x8x8xbf16>
    "tpu.trace_start"() <{level = 10 : i32, message = "hqd,hkd->hqk"}> : () -> ()
    %cst_62 = arith.constant dense<0.000000e+00> : vector<16x8x8xf32>
    %123 = tpu.matmul %112, %117, %cst_62 {dimension_numbers = #tpu.dot_dimension_numbers<[2], [2], [1], [1], [0, 0, 0, 1, 1, 1], [0], [0]>} : vector<16x8x8xbf16>, vector<16x8x8xbf16>, vector<16x8x8xf32> -> vector<16x8x8xf32>
    "tpu.trace_stop"() : () -> ()
    %cst_63 = arith.constant 0.353553385 : f32
    %124 = vector.broadcast %cst_63 : f32 to vector<16x8x8xf32>
    %125 = arith.mulf %123, %124 : vector<16x8x8xf32>
    %126 = arith.addf %125, %13 : vector<16x8x8xf32>
    %cst_64 = arith.constant dense<0xFF800000> : vector<16x8xf32>
    %127 = vector.multi_reduction <maximumf>, %126, %cst_64 [2] : vector<16x8x8xf32> to vector<16x8xf32>
    %128 = vector.shape_cast %127 : vector<16x8xf32> to vector<16x8x1xf32>
    %129 = vector.broadcast %128 : vector<16x8x1xf32> to vector<16x8x8xf32>
    %130 = arith.subf %126, %129 : vector<16x8x8xf32>
    %131 = math.exp %130 : vector<16x8x8xf32>
    %cst_65 = arith.constant dense<0.000000e+00> : vector<16x8xf32>
    %132 = vector.multi_reduction <add>, %131, %cst_65 [2] : vector<16x8x8xf32> to vector<16x8xf32>
    %133 = vector.shape_cast %132 : vector<16x8xf32> to vector<16x8x1xf32>
    %134 = tpu.reciprocal %133 {approx = true} : vector<16x8x1xf32> -> vector<16x8x1xf32>
    %135 = vector.broadcast %134 : vector<16x8x1xf32> to vector<16x8x8xf32>
    %136 = arith.mulf %131, %135 : vector<16x8x8xf32>
    %137 = arith.truncf %136 : vector<16x8x8xf32> to vector<16x8x8xbf16>
    "tpu.trace_start"() <{level = 10 : i32, message = "hqk,hkd->hqd"}> : () -> ()
    %cst_66 = arith.constant dense<0.000000e+00> : vector<16x8x8xf32>
    %138 = tpu.matmul %137, %122, %cst_66 {dimension_numbers = #tpu.dot_dimension_numbers<[2], [1], [1], [2], [0, 0, 0, 1, 1, 2], [0], [0]>} : vector<16x8x8xbf16>, vector<16x8x8xbf16>, vector<16x8x8xf32> -> vector<16x8x8xf32>
    "tpu.trace_stop"() : () -> ()
    %139 = vector.shape_cast %138 : vector<16x8x8xf32> to vector<4x4x8x8xf32>
    %140 = tpu.transpose %139, [0, 2, 1, 3] : vector<4x4x8x8xf32> -> vector<4x8x4x8xf32>
    %141 = vector.shape_cast %140 : vector<4x8x4x8xf32> to vector<32x32xf32>
    %142 = arith.truncf %141 : vector<32x32xf32> to vector<32x32xbf16>
    %cst_67 = arith.constant dense<0.000000e+00> : vector<32x32xf32>
    %143 = tpu.matmul %142, %97, %cst_67 {dimension_numbers = #tpu.dot_dimension_numbers<[1], [0], [0], [1], [0, 0, 1, 1], [], []>} : vector<32x32xbf16>, vector<32x32xbf16>, vector<32x32xf32> -> vector<32x32xf32>
    %144 = arith.addf %93, %143 : vector<32x32xf32>
    %cst_68 = arith.constant dense<0.000000e+00> : vector<32xf32>
    %145 = vector.multi_reduction <add>, %144, %cst_68 [1] : vector<32x32xf32> to vector<32xf32>
    %146 = vector.shape_cast %145 : vector<32xf32> to vector<32x1xf32>
    %cst_69 = arith.constant 3.200000e+01 : f32
    %147 = vector.broadcast %cst_69 : f32 to vector<32x1xf32>
    %148 = arith.divf %146, %147 : vector<32x1xf32>
    %149 = vector.broadcast %148 : vector<32x1xf32> to vector<32x32xf32>
    %150 = arith.subf %144, %149 : vector<32x32xf32>
    %151 = arith.mulf %150, %150 : vector<32x32xf32>
    %cst_70 = arith.constant dense<0.000000e+00> : vector<32xf32>
    %152 = vector.multi_reduction <add>, %151, %cst_70 [1] : vector<32x32xf32> to vector<32xf32>
    %153 = vector.shape_cast %152 : vector<32xf32> to vector<32x1xf32>
    %cst_71 = arith.constant 3.200000e+01 : f32
    %154 = vector.broadcast %cst_71 : f32 to vector<32x1xf32>
    %155 = arith.divf %153, %154 : vector<32x1xf32>
    %156 = vector.broadcast %148 : vector<32x1xf32> to vector<32x32xf32>
    %157 = arith.subf %144, %156 : vector<32x32xf32>
    %cst_72 = arith.constant 9.99999974E-6 : f32
    %158 = vector.broadcast %cst_72 : f32 to vector<32x1xf32>
    %159 = arith.addf %155, %158 : vector<32x1xf32>
    %160 = math.rsqrt %159 : vector<32x1xf32>
    %161 = vector.broadcast %160 : vector<32x1xf32> to vector<32x32xf32>
    %162 = arith.mulf %157, %161 : vector<32x32xf32>
    %163 = vector.broadcast %103 : vector<1x32xf32> to vector<32x32xf32>
    %164 = arith.mulf %162, %163 : vector<32x32xf32>
    %165 = vector.broadcast %105 : vector<1x32xf32> to vector<32x32xf32>
    %166 = arith.addf %164, %165 : vector<32x32xf32>
    %167 = arith.truncf %166 : vector<32x32xf32> to vector<32x32xbf16>
    %cst_73 = arith.constant dense<0.000000e+00> : vector<32x32xf32>
    %168 = tpu.matmul %167, %99, %cst_73 {dimension_numbers = #tpu.dot_dimension_numbers<[1], [0], [0], [1], [0, 0, 1, 1], [], []>} : vector<32x32xbf16>, vector<32x32xbf16>, vector<32x32xf32> -> vector<32x32xf32>
    %cst_74 = arith.constant 0.000000e+00 : f32
    %169 = vector.broadcast %cst_74 : f32 to vector<32x32xf32>
    %170 = arith.maximumf %168, %169 : vector<32x32xf32>
    %171 = arith.truncf %170 : vector<32x32xf32> to vector<32x32xbf16>
    %cst_75 = arith.constant dense<0.000000e+00> : vector<32x32xf32>
    %172 = tpu.matmul %171, %101, %cst_75 {dimension_numbers = #tpu.dot_dimension_numbers<[1], [0], [0], [1], [0, 0, 1, 1], [], []>} : vector<32x32xbf16>, vector<32x32xbf16>, vector<32x32xf32> -> vector<32x32xf32>
    %173 = arith.addf %144, %172 : vector<32x32xf32>
    %174 = vector.shape_cast %173 : vector<32x32xf32> to vector<4x8x32xf32>
    %c0_76 = arith.constant 0 : index
    %c0_77 = arith.constant 0 : index
    %c0_78 = arith.constant 0 : index
    %175 = vector.load %arg10[%c0_76, %c0_77, %c0_78] : memref<4x8x32xf32, #tpu.memory_space<vmem>>, vector<4x8x32xf32>
    tpu.vector_store %arg10[%c0_76, %c0_77, %c0_78], %174 {strides = array<i32>} : memref<4x8x32xf32, #tpu.memory_space<vmem>>, vector<4x8x32xf32>,
    return
  }
}

</mosaic_0001>

<llo_original>
// kernel: tpu_custom_call.1
$region0: #{tpu_custom_call.1}
  #allocation0 [shape = 'u32[]', space=smem, size = 0x4, offset = 0x4, fixed_abs, tag = 'smem constant byte address 0x4 - core index']
  #allocation1 [shape = 'u32[144,128]{1,0:T(1,128)}', space=vmem, size = 0x12000, scoped, tag = 'internal scratch']
  %s0 = inlined_call_operand.vmem [shape: f32[4,8,48], index: 0, kind: input, shape index: {}]
  %s1 = inlined_call_operand.hbm [shape: f32[4,1,1,8], index: 1, kind: input, shape index: {}]
  %s2 = inlined_call_operand.vmem [shape: bf16[48,32], index: 2, kind: input, shape index: {}]
  %s3 = inlined_call_operand.hbm [shape: f32[1,32], index: 3, kind: input, shape index: {}]
  %s4 = inlined_call_operand.hbm [shape: bf16[2,32,96], index: 4, kind: input, shape index: {}]
  %s5 = inlined_call_operand.hbm [shape: bf16[2,32,32], index: 5, kind: input, shape index: {}]
  %s6 = inlined_call_operand.hbm [shape: bf16[2,32,32], index: 6, kind: input, shape index: {}]
  %s7 = inlined_call_operand.vmem [shape: bf16[2,32,32], index: 7, kind: input, shape index: {}]
  %s8 = inlined_call_operand.vmem [shape: f32[2,1,32], index: 8, kind: input, shape index: {}]
  %s9 = inlined_call_operand.vmem [shape: f32[2,1,32], index: 9, kind: input, shape index: {}]
  %s10 = inlined_call_operand.hbm [shape: f32[4,8,32], index: 10, kind: output, shape index: {}]
  %s11 = sld [smem:[#allocation0]]
  $region70: #{tpu_custom_call.1} parent=0
    _
  %s13 = ssub.s32 1, %s11
  %s14 = scalar_select 0, %s13, %s11
  $region1: #{tpu_custom_call.1} parent=0
    #allocation2 [shape = 'u8[2048]{0}', space=vmem, size = 0x800, scoped, tag = 'input window, operand 1, single buffered']
    #allocation3 [shape = 's32[1]{0}', space=sflag, size = 0x4, scoped, tag = 'scoped memory for tpu_custom_call.1']
    #allocation4 [shape = 's32[1]{0}', space=sflag, size = 0x4, scoped, tag = 'scoped memory for tpu_custom_call.1']
    #allocation5 [shape = 'u8[512]{0}', space=vmem, size = 0x400, scoped, tag = 'input window, operand 3, single buffered']
    #allocation6 [shape = 's32[1]{0}', space=sflag, size = 0x4, scoped, tag = 'scoped memory for tpu_custom_call.1']
    #allocation7 [shape = 'u8[16384]{0}', space=vmem, size = 0x4000, scoped, tag = 'input window, operand 4, single buffered']
    #allocation8 [shape = 'u8[16384]{0}', space=vmem, size = 0x4000, scoped, tag = 'input window, operand 5, single buffered']
    #allocation9 [shape = 's32[1]{0}', space=sflag, size = 0x4, scoped, tag = 'scoped memory for tpu_custom_call.1']
    #allocation10 [shape = 'u8[16384]{0}', space=vmem, size = 0x4000, scoped, tag = 'input window, operand 6, single buffered']
    #allocation11 [shape = 'u8[16384]{0}', space=vmem, size = 0x4000, scoped, tag = 'output window, operand 0, single buffered']
    %15 = vsyncpa [#allocation3], 0
    %16 = vsyncpa [#allocation6], 0
    %17 = vsyncpa [#allocation9], 0
    %18 = vsyncpa [#allocation4], 0
    // Predicated region
    $region2: #{tpu_custom_call.1} parent=1 // pred_check
      _
    $region3: #{tpu_custom_call.1} parent=1 // pred_check_branch
      %20 = sbr.rel (0) target = $region5
    $region4: #{tpu_custom_call.1} parent=1 // pred_region
      _
    $region5: #{tpu_custom_call.1} parent=1 // pred_fallthru
      _
    // Predicated region
    $region6: #{tpu_custom_call.1} parent=1 // pred_check
      _
    $region7: #{tpu_custom_call.1} parent=1 // pred_check_branch
      %22 = sbr.rel (0) target = $region9
    $region8: #{tpu_custom_call.1} parent=1 // pred_region
      %s24 = ssub.s32 64, 64
      %25 = vsyncadd [#allocation3], %s24
      %s26 = sshll.u32 [#allocation2], 4
      %s27 = int_to_ptr.vmem [resolvable:$true] %s26
      %32 = dma.hbm_to_vmem [thread:$0]  %s1, 64, %s27, [#allocation3], 16, 16, 1
    $region9: #{tpu_custom_call.1} parent=1 // pred_fallthru
      _
    // Predicated region
    $region10: #{tpu_custom_call.1} parent=1 // pred_check
      _
    $region11: #{tpu_custom_call.1} parent=1 // pred_check_branch
      %34 = sbr.rel (0) target = $region13
    $region12: #{tpu_custom_call.1} parent=1 // pred_region
      _
    $region13: #{tpu_custom_call.1} parent=1 // pred_fallthru
      _
    // Predicated region
    $region14: #{tpu_custom_call.1} parent=1 // pred_check
      _
    $region15: #{tpu_custom_call.1} parent=1 // pred_check_branch
      %36 = sbr.rel (0) target = $region17
    $region16: #{tpu_custom_call.1} parent=1 // pred_region
      %s38 = ssub.s32 16, 16
      %39 = vsyncadd [#allocation6], %s38
      %s41 = sshll.u32 [#allocation5], 4
      %s42 = int_to_ptr.vmem [resolvable:$true] %s41
      %44 = dma.hbm_to_vmem [thread:$0]  %s3, 16, %s42, [#allocation6]
    $region17: #{tpu_custom_call.1} parent=1 // pred_fallthru
      _
    // Predicated region
    $region18: #{tpu_custom_call.1} parent=1 // pred_check
      _
    $region19: #{tpu_custom_call.1} parent=1 // pred_check_branch
      %46 = sbr.rel (0) target = $region21
    $region20: #{tpu_custom_call.1} parent=1 // pred_region
      %s48 = ssub.s32 512, 512
      %49 = vsyncadd [#allocation6], %s48
      %s50 = sshll.u32 [#allocation7], 4
      %s51 = int_to_ptr.vmem [resolvable:$true] %s50
      %56 = dma.hbm_to_vmem [thread:$0]  %s4, 512, %s51, [#allocation6], 64, 64, 4
    $region21: #{tpu_custom_call.1} parent=1 // pred_fallthru
      _
    // Predicated region
    $region22: #{tpu_custom_call.1} parent=1 // pred_check
      _
    $region23: #{tpu_custom_call.1} parent=1 // pred_check_branch
      %58 = sbr.rel (0) target = $region25
    $region24: #{tpu_custom_call.1} parent=1 // pred_region
      %s60 = ssub.s32 512, 512
      %61 = vsyncadd [#allocation9], %s60
      %s62 = sshll.u32 [#allocation8], 4
      %s63 = int_to_ptr.vmem [resolvable:$true] %s62
      %68 = dma.hbm_to_vmem [thread:$0]  %s5, 512, %s63, [#allocation9], 64, 64, 4
    $region25: #{tpu_custom_call.1} parent=1 // pred_fallthru
      _
    // Predicated region
    $region26: #{tpu_custom_call.1} parent=1 // pred_check
      _
    $region27: #{tpu_custom_call.1} parent=1 // pred_check_branch
      %70 = sbr.rel (0) target = $region29
    $region28: #{tpu_custom_call.1} parent=1 // pred_region
      %s72 = ssub.s32 512, 512
      %73 = vsyncadd [#allocation9], %s72
      %s74 = sshll.u32 [#allocation10], 4
      %s75 = int_to_ptr.vmem [resolvable:$true] %s74
      %80 = dma.hbm_to_vmem [thread:$0]  %s6, 512, %s75, [#allocation9], 64, 64, 4
    $region29: #{tpu_custom_call.1} parent=1 // pred_fallthru
      _
    // Predicated region
    $region30: #{tpu_custom_call.1} parent=1 // pred_check
      _
    $region31: #{tpu_custom_call.1} parent=1 // pred_check_branch
      %82 = sbr.rel (0) target = $region33
    $region32: #{tpu_custom_call.1} parent=1 // pred_region
      _
    $region33: #{tpu_custom_call.1} parent=1 // pred_fallthru
      _
    // Predicated region
    $region34: #{tpu_custom_call.1} parent=1 // pred_check
      _
    $region35: #{tpu_custom_call.1} parent=1 // pred_check_branch
      %84 = sbr.rel (0) target = $region37
    $region36: #{tpu_custom_call.1} parent=1 // pred_region
      _
    $region37: #{tpu_custom_call.1} parent=1 // pred_fallthru
      _
    // Predicated region
    $region38: #{tpu_custom_call.1} parent=1 // pred_check
      _
    $region39: #{tpu_custom_call.1} parent=1 // pred_check_branch
      %86 = sbr.rel (0) target = $region41
    $region40: #{tpu_custom_call.1} parent=1 // pred_region
      _
    $region41: #{tpu_custom_call.1} parent=1 // pred_fallthru
      _
    // Predicated region
    $region42: #{tpu_custom_call.1} parent=1 // pred_check
      _
    $region43: #{tpu_custom_call.1} parent=1 // pred_check_branch
      %88 = sbr.rel (0) target = $region45
    $region44: #{tpu_custom_call.1} parent=1 // pred_region
      %89 = dma.done [#allocation3], 64
    $region45: #{tpu_custom_call.1} parent=1 // pred_fallthru
      _
    // Predicated region
    $region46: #{tpu_custom_call.1} parent=1 // pred_check
      _
    $region47: #{tpu_custom_call.1} parent=1 // pred_check_branch
      %91 = sbr.rel (0) target = $region49
    $region48: #{tpu_custom_call.1} parent=1 // pred_region
      %92 = dma.done [#allocation6], 16
    $region49: #{tpu_custom_call.1} parent=1 // pred_fallthru
      _
    // Predicated region
    $region50: #{tpu_custom_call.1} parent=1 // pred_check
      _
    $region51: #{tpu_custom_call.1} parent=1 // pred_check_branch
      %94 = sbr.rel (0) target = $region53
    $region52: #{tpu_custom_call.1} parent=1 // pred_region
      %95 = dma.done [#allocation6], 512
    $region53: #{tpu_custom_call.1} parent=1 // pred_fallthru
      _
    // Predicated region
    $region54: #{tpu_custom_call.1} parent=1 // pred_check
      _
    $region55: #{tpu_custom_call.1} parent=1 // pred_check_branch
      %97 = sbr.rel (0) target = $region57
    $region56: #{tpu_custom_call.1} parent=1 // pred_region
      %98 = dma.done [#allocation9], 512
    $region57: #{tpu_custom_call.1} parent=1 // pred_fallthru
      _
    // Predicated region
    $region58: #{tpu_custom_call.1} parent=1 // pred_check
      _
    $region59: #{tpu_custom_call.1} parent=1 // pred_check_branch
      %100 = sbr.rel (0) target = $region61
    $region60: #{tpu_custom_call.1} parent=1 // pred_region
      %101 = dma.done [#allocation9], 512
    $region61: #{tpu_custom_call.1} parent=1 // pred_fallthru
      _
    %v103 = vld [vmem:[%s0] sm:$0xff]
    %v104 = vld [vmem:[%s0 + $0x8] sm:$0xff]
    %v105 = vld [vmem:[%s0 + $0x10] sm:$0xff]
    %v106 = vld [vmem:[%s0 + $0x18] sm:$0xff]
    %v107 = vpack.c.bf16 %v104, %v103
    %v108 = vpack.c.bf16 %v106, %v105
    %v109 = vld [vmem:[%s2] sm:$0xf]
    %v110 = vld [vmem:[%s2 + $0x4] sm:$0xf]
    %v111 = vld [vmem:[%s2 + $0x8] sm:$0xf]
    %v112 = vld [vmem:[%s2 + $0xc] sm:$0xf]
    %v113 = vld [vmem:[%s2 + $0x10] sm:$0xf]
    %v114 = vld [vmem:[%s2 + $0x14] sm:$0xf]
    %v115 = vld [vmem:[#allocation5] sm:$0x1]
    %v117 = vlaneseq
    %v118 = vshrl.u32 %v117, 7
    %v119 = vsub.s32 0, %v118
    %v120 = vrot.slane %v115, %v119
    %v128 = vunpack.c.l.b16 %v109
    %v129 = vunpack.c.l.b16 %v110
    %v130 = vunpack.c.l.b16 %v111
    %v131 = vunpack.c.l.b16 %v112
    %v132 = vunpack.c.l.b16 %v113
    %v133 = vunpack.c.l.b16 %v114
    %v134 = vpack.c.b16 %v129, %v128
    %v135 = vpack.c.b16 %v131, %v130
    %v136 = vpack.c.b16 %v133, %v132
    %vm140 = vcmask 392192
    %v142 = vsel %vm140, %v107, 0
    %v145 = vsel %vm140, %v108, 0
    %147 = vmatprep.subr.bf16.mxu0 0
    %148 = vmatpush1.bf16.msra.mxu0 %v134
    %149 = vmatprep.subr.bf16.mxu0 0
    %150 = vmatpush1.bf16.msra.mxu0 %v135
    %151 = vmatprep.subr.bf16.mxu0 0
    %152 = vmatpush1.bf16.msra.mxu0 %v136
    %153 = vmatprep.subr.bf16.mxu0 0
    %154 = vmatpush1.bf16.msra.mxu0 0
    %155 = vmatprep.subr.bf16.mxu0 0
    %156 = vmatpush1.bf16.msra.mxu0 0
    %157 = vmatprep.subr.bf16.mxu0 0
    %158 = vmatpush1.bf16.msra.mxu0 0
    %159 = vmatprep.subr.bf16.mxu0 0
    %160 = vmatpush1.bf16.msra.mxu0 0
    %161 = vmatprep.subr.bf16.mxu0 0
    %162 = vmatpush1.bf16.msra.mxu0 0
    %163 = vmatprep.subr.bf16.mxu0 0
    %164 = vmatpush1.bf16.msra.mxu0 0
    %165 = vmatprep.subr.bf16.mxu0 0
    %166 = vmatpush1.bf16.msra.mxu0 0
    %167 = vmatprep.subr.bf16.mxu0 0
    %168 = vmatpush1.bf16.msra.mxu0 0
    %169 = vmatprep.subr.bf16.mxu0 0
    %170 = vmatpush1.bf16.msra.mxu0 0
    %171 = vmatprep.subr.bf16.mxu0 0
    %172 = vmatpush1.bf16.msra.mxu0 0
    %173 = vmatprep.subr.bf16.mxu0 0
    %174 = vmatpush1.bf16.msra.mxu0 0
    %175 = vmatprep.subr.bf16.mxu0 0
    %176 = vmatpush1.bf16.msra.mxu0 0
    %177 = vmatprep.subr.bf16.mxu0 0
    %178 = vmatpush1.bf16.msra.mxu0 0
    %179 = vmatprep.mubr.bf16.mxu0 0
    %180 = vmatmul.mubr.bf16.gmra.mrb[0].mxu0 %v142
    %v181 = vpop.f32.mrb[0].mxu0
    %v182 = vadd.f32 %v120, %v181
    %v183 = vpop.f32.mrb[0].mxu0
    %v184 = vpop.f32.mrb[0].mxu0
    %v185 = vadd.f32 %v120, %v184
    %v186 = vpop.f32.mrb[0].mxu0
    %187 = vmatprep.mubr.bf16.mxu0 0
    %188 = vmatmul.mubr.bf16.gmra.mrb[0].mxu0 %v145
    %v189 = vpop.f32.mrb[0].mxu0
    %v190 = vadd.f32 %v120, %v189
    %v191 = vpop.f32.mrb[0].mxu0
    %v192 = vpop.f32.mrb[0].mxu0
    %v193 = vadd.f32 %v120, %v192
    %v194 = vpop.f32.mrb[0].mxu0
    %195 = vdwg.mxu0
    %v196 = vmax.f32 %v182, 0.0
    %v197 = vmax.f32 %v185, 0.0
    %v198 = vmax.f32 %v190, 0.0
    %v199 = vmax.f32 %v193, 0.0
    %v200 = vld [vmem:[#allocation2] sm:$0x1]
    %v201 = vld [vmem:[#allocation2 + $0x1] sm:$0x1]
    %v202 = vld [vmem:[#allocation2 + $0x2] sm:$0x1]
    %v203 = vld [vmem:[#allocation2 + $0x3] sm:$0x1]
    %v208 = vlaneseq
    %v209 = vshrl.u32 %v208, 7
    %v210 = vsub.s32 0, %v209
    %v211 = vrot.slane %v200, %v210
    %v212 = vlaneseq
    %v213 = vshrl.u32 %v212, 7
    %v214 = vsub.s32 0, %v213
    %v215 = vrot.slane %v201, %v214
    %v216 = vlaneseq
    %v217 = vshrl.u32 %v216, 7
    %v218 = vsub.s32 0, %v217
    %v219 = vrot.slane %v202, %v218
    %v220 = vlaneseq
    %v221 = vshrl.u32 %v220, 7
    %v222 = vsub.s32 0, %v221
    %v223 = vrot.slane %v203, %v222
    %v228 = vld [vmem:[#allocation7] sm:$0xf]
    %v229 = vld [vmem:[#allocation7 + $0x4] sm:$0xf]
    %v230 = vld [vmem:[#allocation7 + $0x8] sm:$0xf]
    %v231 = vld [vmem:[#allocation7 + $0xc] sm:$0xf]
    %v232 = vld [vmem:[#allocation8] sm:$0xf]
    %v233 = vld [vmem:[#allocation8 + $0x4] sm:$0xf]
    %v234 = vld [vmem:[#allocation8 + $0x8] sm:$0xf]
    %v235 = vld [vmem:[#allocation8 + $0xc] sm:$0xf]
    %v236 = vld [vmem:[#allocation10] sm:$0xf]
    %v237 = vld [vmem:[#allocation10 + $0x4] sm:$0xf]
    %v238 = vld [vmem:[#allocation10 + $0x8] sm:$0xf]
    %v239 = vld [vmem:[#allocation10 + $0xc] sm:$0xf]
    %v240 = vld [vmem:[%s7] sm:$0xf]
    %v241 = vld [vmem:[%s7 + $0x4] sm:$0xf]
    %v242 = vld [vmem:[%s7 + $0x8] sm:$0xf]
    %v243 = vld [vmem:[%s7 + $0xc] sm:$0xf]
    %v244 = vld [vmem:[%s8] sm:$0x1]
    %v245 = vld [vmem:[%s9] sm:$0x1]
    %v246 = vpack.c.bf16 %v197, %v196
    %v247 = vpack.c.bf16 %v199, %v198
    %v252 = vunpack.c.l.b16 %v228
    %v253 = vunpack.c.l.b16 %v229
    %v254 = vunpack.c.l.b16 %v230
    %v255 = vunpack.c.l.b16 %v231
    %v256 = vpack.c.b16 %v253, %v252
    %v257 = vpack.c.b16 %v255, %v254
    %vm260 = vcmask 261120
    %v262 = vsel %vm260, %v246, 0
    %v265 = vsel %vm260, %v247, 0
    %267 = vmatprep.subr.bf16.mxu0 0
    %268 = vmatpush1.bf16.msra.mxu0 %v256
    %269 = vmatprep.subr.bf16.mxu0 0
    %270 = vmatpush1.bf16.msra.mxu0 %v257
    %271 = vmatprep.subr.bf16.mxu0 0
    %272 = vmatpush1.bf16.msra.mxu0 0
    %273 = vmatprep.subr.bf16.mxu0 0
    %274 = vmatpush1.bf16.msra.mxu0 0
    %275 = vmatprep.subr.bf16.mxu0 0
    %276 = vmatpush1.bf16.msra.mxu0 0
    %277 = vmatprep.subr.bf16.mxu0 0
    %278 = vmatpush1.bf16.msra.mxu0 0
    %279 = vmatprep.subr.bf16.mxu0 0
    %280 = vmatpush1.bf16.msra.mxu0 0
    %281 = vmatprep.subr.bf16.mxu0 0
    %282 = vmatpush1.bf16.msra.mxu0 0
    %283 = vmatprep.subr.bf16.mxu0 0
    %284 = vmatpush1.bf16.msra.mxu0 0
    %285 = vmatprep.subr.bf16.mxu0 0
    %286 = vmatpush1.bf16.msra.mxu0 0
    %287 = vmatprep.subr.bf16.mxu0 0
    %288 = vmatpush1.bf16.msra.mxu0 0
    %289 = vmatprep.subr.bf16.mxu0 0
    %290 = vmatpush1.bf16.msra.mxu0 0
    %291 = vmatprep.subr.bf16.mxu0 0
    %292 = vmatpush1.bf16.msra.mxu0 0
    %293 = vmatprep.subr.bf16.mxu0 0
    %294 = vmatpush1.bf16.msra.mxu0 0
    %295 = vmatprep.subr.bf16.mxu0 0
    %296 = vmatpush1.bf16.msra.mxu0 0
    %297 = vmatprep.subr.bf16.mxu0 0
    %298 = vmatpush1.bf16.msra.mxu0 0
    %299 = vmatprep.mubr.bf16.mxu0 0
    %300 = vmatmul.mubr.bf16.gmra.mrb[0].mxu0 %v262
    %v301 = vpop.f32.mrb[0].mxu0
    %v302 = vadd.f32 0.0, %v301
    %v303 = vpop.f32.mrb[0].mxu0
    %v304 = vpop.f32.mrb[0].mxu0
    %v305 = vadd.f32 0.0, %v304
    %v306 = vpop.f32.mrb[0].mxu0
    %307 = vmatprep.mubr.bf16.mxu0 0
    %308 = vmatmul.mubr.bf16.gmra.mrb[0].mxu0 %v265
    %v309 = vpop.f32.mrb[0].mxu0
    %v310 = vadd.f32 0.0, %v309
    %v311 = vpop.f32.mrb[0].mxu0
    %v312 = vpop.f32.mrb[0].mxu0
    %v313 = vadd.f32 0.0, %v312
    %v314 = vpop.f32.mrb[0].mxu0
    %315 = vdwg.mxu0
    %320 = vrot.lane.b32.xlu0 %v302, 120
    %v321 = vpop.permute.xlu0 %320
    %322 = vrot.lane.b32.xlu0 %v305, 120
    %v323 = vpop.permute.xlu0 %322
    %324 = vrot.lane.b32.xlu0 %v310, 120
    %v325 = vpop.permute.xlu0 %324
    %326 = vrot.lane.b32.xlu0 %v313, 120
    %v327 = vpop.permute.xlu0 %326
    %332 = vrot.lane.b32.xlu0 %v302, 112
    %v333 = vpop.permute.xlu0 %332
    %334 = vrot.lane.b32.xlu0 %v305, 112
    %v335 = vpop.permute.xlu0 %334
    %336 = vrot.lane.b32.xlu0 %v310, 112
    %v337 = vpop.permute.xlu0 %336
    %338 = vrot.lane.b32.xlu0 %v313, 112
    %v339 = vpop.permute.xlu0 %338
    %344 = vrot.lane.b32.xlu0 %v302, 104
    %v345 = vpop.permute.xlu0 %344
    %346 = vrot.lane.b32.xlu0 %v305, 104
    %v347 = vpop.permute.xlu0 %346
    %348 = vrot.lane.b32.xlu0 %v310, 104
    %v349 = vpop.permute.xlu0 %348
    %350 = vrot.lane.b32.xlu0 %v313, 104
    %v351 = vpop.permute.xlu0 %350
    %v356 = vcombine.low %v302, %v333
    %v357 = vcombine.high %v302, %v333
    %v359 = vunpack.c.l.s4 1983009808
    %v360 = vunpack.c.0.s8 %v359
    %v361 = vlaneseq
    %v362 = vshrl.u32 %v361, 7
    %v363 = vsub.s32 %v360, %v362
    %v364 = vrot.slane %v356, %v363
    %v366 = vunpack.c.l.s4 1983009808
    %v367 = vunpack.c.0.s8 %v366
    %v368 = vlaneseq
    %v369 = vshrl.u32 %v368, 7
    %v370 = vsub.s32 %v367, %v369
    %v371 = vrot.slane %v357, %v370
    %v372 = vcombine.low %v321, %v345
    %v373 = vcombine.high %v321, %v345
    %v375 = vunpack.c.l.s4 1983009808
    %v376 = vunpack.c.0.s8 %v375
    %v377 = vlaneseq
    %v378 = vshrl.u32 %v377, 7
    %v379 = vsub.s32 %v376, %v378
    %v380 = vrot.slane %v372, %v379
    %v382 = vunpack.c.l.s4 1983009808
    %v383 = vunpack.c.0.s8 %v382
    %v384 = vlaneseq
    %v385 = vshrl.u32 %v384, 7
    %v386 = vsub.s32 %v383, %v385
    %v387 = vrot.slane %v373, %v386
    %v388 = vcombine.low %v364, %v380
    %v389 = vcombine.high %v364, %v380
    %v391 = vunpack.c.l.s4 1934713408
    %v392 = vunpack.c.0.s8 %v391
    %v393 = vlaneseq
    %v394 = vshrl.u32 %v393, 7
    %v395 = vsub.s32 %v392, %v394
    %v396 = vrot.slane %v388, %v395
    %v398 = vunpack.c.l.s4 1934713408
    %v399 = vunpack.c.0.s8 %v398
    %v400 = vlaneseq
    %v401 = vshrl.u32 %v400, 7
    %v402 = vsub.s32 %v399, %v401
    %v403 = vrot.slane %v389, %v402
    %v404 = vcombine.low %v371, %v387
    %v405 = vcombine.high %v371, %v387
    %v407 = vunpack.c.l.s4 1934713408
    %v408 = vunpack.c.0.s8 %v407
    %v409 = vlaneseq
    %v410 = vshrl.u32 %v409, 7
    %v411 = vsub.s32 %v408, %v410
    %v412 = vrot.slane %v404, %v411
    %v414 = vunpack.c.l.s4 1934713408
    %v415 = vunpack.c.0.s8 %v414
    %v416 = vlaneseq
    %v417 = vshrl.u32 %v416, 7
    %v418 = vsub.s32 %v415, %v417
    %v419 = vrot.slane %v405, %v418
    %v420 = vcombine.high %v396, 0.0
    %v421 = vcombine.high %v403, 0.0
    %v422 = vcombine.high %v412, 0.0
    %v423 = vcombine.high %v419, 0.0
    %v424 = vcombine.low %v305, %v335
    %v425 = vcombine.high %v305, %v335
    %v427 = vunpack.c.l.s4 1983009808
    %v428 = vunpack.c.0.s8 %v427
    %v429 = vlaneseq
    %v430 = vshrl.u32 %v429, 7
    %v431 = vsub.s32 %v428, %v430
    %v432 = vrot.slane %v424, %v431
    %v434 = vunpack.c.l.s4 1983009808
    %v435 = vunpack.c.0.s8 %v434
    %v436 = vlaneseq
    %v437 = vshrl.u32 %v436, 7
    %v438 = vsub.s32 %v435, %v437
    %v439 = vrot.slane %v425, %v438
    %v440 = vcombine.low %v323, %v347
    %v441 = vcombine.high %v323, %v347
    %v443 = vunpack.c.l.s4 1983009808
    %v444 = vunpack.c.0.s8 %v443
    %v445 = vlaneseq
    %v446 = vshrl.u32 %v445, 7
    %v447 = vsub.s32 %v444, %v446
    %v448 = vrot.slane %v440, %v447
    %v450 = vunpack.c.l.s4 1983009808
    %v451 = vunpack.c.0.s8 %v450
    %v452 = vlaneseq
    %v453 = vshrl.u32 %v452, 7
    %v454 = vsub.s32 %v451, %v453
    %v455 = vrot.slane %v441, %v454
    %v456 = vcombine.low %v432, %v448
    %v457 = vcombine.high %v432, %v448
    %v459 = vunpack.c.l.s4 1934713408
    %v460 = vunpack.c.0.s8 %v459
    %v461 = vlaneseq
    %v462 = vshrl.u32 %v461, 7
    %v463 = vsub.s32 %v460, %v462
    %v464 = vrot.slane %v456, %v463
    %v466 = vunpack.c.l.s4 1934713408
    %v467 = vunpack.c.0.s8 %v466
    %v468 = vlaneseq
    %v469 = vshrl.u32 %v468, 7
    %v470 = vsub.s32 %v467, %v469
    %v471 = vrot.slane %v457, %v470
    %v472 = vcombine.low %v439, %v455
    %v473 = vcombine.high %v439, %v455
    %v475 = vunpack.c.l.s4 1934713408
    %v476 = vunpack.c.0.s8 %v475
    %v477 = vlaneseq
    %v478 = vshrl.u32 %v477, 7
    %v479 = vsub.s32 %v476, %v478
    %v480 = vrot.slane %v472, %v479
    %v482 = vunpack.c.l.s4 1934713408
    %v483 = vunpack.c.0.s8 %v482
    %v484 = vlaneseq
    %v485 = vshrl.u32 %v484, 7
    %v486 = vsub.s32 %v483, %v485
    %v487 = vrot.slane %v473, %v486
    %v488 = vcombine.high %v464, 0.0
    %v489 = vcombine.high %v471, 0.0
    %v490 = vcombine.high %v480, 0.0
    %v491 = vcombine.high %v487, 0.0
    %v492 = vcombine.low %v310, %v337
    %v493 = vcombine.high %v310, %v337
    %v495 = vunpack.c.l.s4 1983009808
    %v496 = vunpack.c.0.s8 %v495
    %v497 = vlaneseq
    %v498 = vshrl.u32 %v497, 7
    %v499 = vsub.s32 %v496, %v498
    %v500 = vrot.slane %v492, %v499
    %v502 = vunpack.c.l.s4 1983009808
    %v503 = vunpack.c.0.s8 %v502
    %v504 = vlaneseq
    %v505 = vshrl.u32 %v504, 7
    %v506 = vsub.s32 %v503, %v505
    %v507 = vrot.slane %v493, %v506
    %v508 = vcombine.low %v325, %v349
    %v509 = vcombine.high %v325, %v349
    %v511 = vunpack.c.l.s4 1983009808
    %v512 = vunpack.c.0.s8 %v511
    %v513 = vlaneseq
    %v514 = vshrl.u32 %v513, 7
    %v515 = vsub.s32 %v512, %v514
    %v516 = vrot.slane %v508, %v515
    %v518 = vunpack.c.l.s4 1983009808
    %v519 = vunpack.c.0.s8 %v518
    %v520 = vlaneseq
    %v521 = vshrl.u32 %v520, 7
    %v522 = vsub.s32 %v519, %v521
    %v523 = vrot.slane %v509, %v522
    %v524 = vcombine.low %v500, %v516
    %v525 = vcombine.high %v500, %v516
    %v527 = vunpack.c.l.s4 1934713408
    %v528 = vunpack.c.0.s8 %v527
    %v529 = vlaneseq
    %v530 = vshrl.u32 %v529, 7
    %v531 = vsub.s32 %v528, %v530
    %v532 = vrot.slane %v524, %v531
    %v534 = vunpack.c.l.s4 1934713408
    %v535 = vunpack.c.0.s8 %v534
    %v536 = vlaneseq
    %v537 = vshrl.u32 %v536, 7
    %v538 = vsub.s32 %v535, %v537
    %v539 = vrot.slane %v525, %v538
    %v540 = vcombine.low %v507, %v523
    %v541 = vcombine.high %v507, %v523
    %v543 = vunpack.c.l.s4 1934713408
    %v544 = vunpack.c.0.s8 %v543
    %v545 = vlaneseq
    %v546 = vshrl.u32 %v545, 7
    %v547 = vsub.s32 %v544, %v546
    %v548 = vrot.slane %v540, %v547
    %v550 = vunpack.c.l.s4 1934713408
    %v551 = vunpack.c.0.s8 %v550
    %v552 = vlaneseq
    %v553 = vshrl.u32 %v552, 7
    %v554 = vsub.s32 %v551, %v553
    %v555 = vrot.slane %v541, %v554
    %v556 = vcombine.high %v532, 0.0
    %v557 = vcombine.high %v539, 0.0
    %v558 = vcombine.high %v548, 0.0
    %v559 = vcombine.high %v555, 0.0
    %v560 = vcombine.low %v313, %v339
    %v561 = vcombine.high %v313, %v339
    %v563 = vunpack.c.l.s4 1983009808
    %v564 = vunpack.c.0.s8 %v563
    %v565 = vlaneseq
    %v566 = vshrl.u32 %v565, 7
    %v567 = vsub.s32 %v564, %v566
    %v568 = vrot.slane %v560, %v567
    %v570 = vunpack.c.l.s4 1983009808
    %v571 = vunpack.c.0.s8 %v570
    %v572 = vlaneseq
    %v573 = vshrl.u32 %v572, 7
    %v574 = vsub.s32 %v571, %v573
    %v575 = vrot.slane %v561, %v574
    %v576 = vcombine.low %v327, %v351
    %v577 = vcombine.high %v327, %v351
    %v579 = vunpack.c.l.s4 1983009808
    %v580 = vunpack.c.0.s8 %v579
    %v581 = vlaneseq
    %v582 = vshrl.u32 %v581, 7
    %v583 = vsub.s32 %v580, %v582
    %v584 = vrot.slane %v576, %v583
    %v586 = vunpack.c.l.s4 1983009808
    %v587 = vunpack.c.0.s8 %v586
    %v588 = vlaneseq
    %v589 = vshrl.u32 %v588, 7
    %v590 = vsub.s32 %v587, %v589
    %v591 = vrot.slane %v577, %v590
    %v592 = vcombine.low %v568, %v584
    %v593 = vcombine.high %v568, %v584
    %v595 = vunpack.c.l.s4 1934713408
    %v596 = vunpack.c.0.s8 %v595
    %v597 = vlaneseq
    %v598 = vshrl.u32 %v597, 7
    %v599 = vsub.s32 %v596, %v598
    %v600 = vrot.slane %v592, %v599
    %v602 = vunpack.c.l.s4 1934713408
    %v603 = vunpack.c.0.s8 %v602
    %v604 = vlaneseq
    %v605 = vshrl.u32 %v604, 7
    %v606 = vsub.s32 %v603, %v605
    %v607 = vrot.slane %v593, %v606
    %v608 = vcombine.low %v575, %v591
    %v609 = vcombine.high %v575, %v591
    %v611 = vunpack.c.l.s4 1934713408
    %v612 = vunpack.c.0.s8 %v611
    %v613 = vlaneseq
    %v614 = vshrl.u32 %v613, 7
    %v615 = vsub.s32 %v612, %v614
    %v616 = vrot.slane %v608, %v615
    %v618 = vunpack.c.l.s4 1934713408
    %v619 = vunpack.c.0.s8 %v618
    %v620 = vlaneseq
    %v621 = vshrl.u32 %v620, 7
    %v622 = vsub.s32 %v619, %v621
    %v623 = vrot.slane %v609, %v622
    %v624 = vcombine.high %v600, 0.0
    %v625 = vcombine.high %v607, 0.0
    %v626 = vcombine.high %v616, 0.0
    %v627 = vcombine.high %v623, 0.0
    %v628 = vcombine.low %v396, %v403
    %v630 = vunpack.c.l.s4 1983009808
    %v631 = vunpack.c.0.s8 %v630
    %v632 = vlaneseq
    %v633 = vshrl.u32 %v632, 7
    %v634 = vsub.s32 %v631, %v633
    %v635 = vrot.slane %v628, %v634
    %v636 = vcombine.low %v420, %v421
    %v638 = vunpack.c.l.s4 1983009808
    %v639 = vunpack.c.0.s8 %v638
    %v640 = vlaneseq
    %v641 = vshrl.u32 %v640, 7
    %v642 = vsub.s32 %v639, %v641
    %v643 = vrot.slane %v636, %v642
    %v644 = vcombine.low %v412, %v419
    %v646 = vunpack.c.l.s4 1983009808
    %v647 = vunpack.c.0.s8 %v646
    %v648 = vlaneseq
    %v649 = vshrl.u32 %v648, 7
    %v650 = vsub.s32 %v647, %v649
    %v651 = vrot.slane %v644, %v650
    %v652 = vcombine.low %v422, %v423
    %v654 = vunpack.c.l.s4 1983009808
    %v655 = vunpack.c.0.s8 %v654
    %v656 = vlaneseq
    %v657 = vshrl.u32 %v656, 7
    %v658 = vsub.s32 %v655, %v657
    %v659 = vrot.slane %v652, %v658
    %v660 = vcombine.low %v635, %v643
    %v661 = vcombine.high %v635, %v643
    %v663 = vunpack.c.l.s4 1934713408
    %v664 = vunpack.c.0.s8 %v663
    %v665 = vlaneseq
    %v666 = vshrl.u32 %v665, 7
    %v667 = vsub.s32 %v664, %v666
    %v668 = vrot.slane %v660, %v667
    %v670 = vunpack.c.l.s4 1934713408
    %v671 = vunpack.c.0.s8 %v670
    %v672 = vlaneseq
    %v673 = vshrl.u32 %v672, 7
    %v674 = vsub.s32 %v671, %v673
    %v675 = vrot.slane %v661, %v674
    %v676 = vcombine.low %v651, %v659
    %v677 = vcombine.high %v651, %v659
    %v679 = vunpack.c.l.s4 1934713408
    %v680 = vunpack.c.0.s8 %v679
    %v681 = vlaneseq
    %v682 = vshrl.u32 %v681, 7
    %v683 = vsub.s32 %v680, %v682
    %v684 = vrot.slane %v676, %v683
    %v686 = vunpack.c.l.s4 1934713408
    %v687 = vunpack.c.0.s8 %v686
    %v688 = vlaneseq
    %v689 = vshrl.u32 %v688, 7
    %v690 = vsub.s32 %v687, %v689
    %v691 = vrot.slane %v677, %v690
    %v692 = vcombine.low %v668, %v684
    %v693 = vcombine.high %v668, %v684
    %v694 = vcombine.low %v675, %v691
    %v695 = vcombine.high %v675, %v691
    %v696 = vcombine.low %v464, %v471
    %v698 = vunpack.c.l.s4 1983009808
    %v699 = vunpack.c.0.s8 %v698
    %v700 = vlaneseq
    %v701 = vshrl.u32 %v700, 7
    %v702 = vsub.s32 %v699, %v701
    %v703 = vrot.slane %v696, %v702
    %v704 = vcombine.low %v488, %v489
    %v706 = vunpack.c.l.s4 1983009808
    %v707 = vunpack.c.0.s8 %v706
    %v708 = vlaneseq
    %v709 = vshrl.u32 %v708, 7
    %v710 = vsub.s32 %v707, %v709
    %v711 = vrot.slane %v704, %v710
    %v712 = vcombine.low %v480, %v487
    %v714 = vunpack.c.l.s4 1983009808
    %v715 = vunpack.c.0.s8 %v714
    %v716 = vlaneseq
    %v717 = vshrl.u32 %v716, 7
    %v718 = vsub.s32 %v715, %v717
    %v719 = vrot.slane %v712, %v718
    %v720 = vcombine.low %v490, %v491
    %v722 = vunpack.c.l.s4 1983009808
    %v723 = vunpack.c.0.s8 %v722
    %v724 = vlaneseq
    %v725 = vshrl.u32 %v724, 7
    %v726 = vsub.s32 %v723, %v725
    %v727 = vrot.slane %v720, %v726
    %v728 = vcombine.low %v703, %v711
    %v729 = vcombine.high %v703, %v711
    %v731 = vunpack.c.l.s4 1934713408
    %v732 = vunpack.c.0.s8 %v731
    %v733 = vlaneseq
    %v734 = vshrl.u32 %v733, 7
    %v735 = vsub.s32 %v732, %v734
    %v736 = vrot.slane %v728, %v735
    %v738 = vunpack.c.l.s4 1934713408
    %v739 = vunpack.c.0.s8 %v738
    %v740 = vlaneseq
    %v741 = vshrl.u32 %v740, 7
    %v742 = vsub.s32 %v739, %v741
    %v743 = vrot.slane %v729, %v742
    %v744 = vcombine.low %v719, %v727
    %v745 = vcombine.high %v719, %v727
    %v747 = vunpack.c.l.s4 1934713408
    %v748 = vunpack.c.0.s8 %v747
    %v749 = vlaneseq
    %v750 = vshrl.u32 %v749, 7
    %v751 = vsub.s32 %v748, %v750
    %v752 = vrot.slane %v744, %v751
    %v754 = vunpack.c.l.s4 1934713408
    %v755 = vunpack.c.0.s8 %v754
    %v756 = vlaneseq
    %v757 = vshrl.u32 %v756, 7
    %v758 = vsub.s32 %v755, %v757
    %v759 = vrot.slane %v745, %v758
    %v760 = vcombine.low %v736, %v752
    %v761 = vcombine.high %v736, %v752
    %v762 = vcombine.low %v743, %v759
    %v763 = vcombine.high %v743, %v759
    %v764 = vcombine.low %v532, %v539
    %v766 = vunpack.c.l.s4 1983009808
    %v767 = vunpack.c.0.s8 %v766
    %v768 = vlaneseq
    %v769 = vshrl.u32 %v768, 7
    %v770 = vsub.s32 %v767, %v769
    %v771 = vrot.slane %v764, %v770
    %v772 = vcombine.low %v556, %v557
    %v774 = vunpack.c.l.s4 1983009808
    %v775 = vunpack.c.0.s8 %v774
    %v776 = vlaneseq
    %v777 = vshrl.u32 %v776, 7
    %v778 = vsub.s32 %v775, %v777
    %v779 = vrot.slane %v772, %v778
    %v780 = vcombine.low %v548, %v555
    %v782 = vunpack.c.l.s4 1983009808
    %v783 = vunpack.c.0.s8 %v782
    %v784 = vlaneseq
    %v785 = vshrl.u32 %v784, 7
    %v786 = vsub.s32 %v783, %v785
    %v787 = vrot.slane %v780, %v786
    %v788 = vcombine.low %v558, %v559
    %v790 = vunpack.c.l.s4 1983009808
    %v791 = vunpack.c.0.s8 %v790
    %v792 = vlaneseq
    %v793 = vshrl.u32 %v792, 7
    %v794 = vsub.s32 %v791, %v793
    %v795 = vrot.slane %v788, %v794
    %v796 = vcombine.low %v771, %v779
    %v797 = vcombine.high %v771, %v779
    %v799 = vunpack.c.l.s4 1934713408
    %v800 = vunpack.c.0.s8 %v799
    %v801 = vlaneseq
    %v802 = vshrl.u32 %v801, 7
    %v803 = vsub.s32 %v800, %v802
    %v804 = vrot.slane %v796, %v803
    %v806 = vunpack.c.l.s4 1934713408
    %v807 = vunpack.c.0.s8 %v806
    %v808 = vlaneseq
    %v809 = vshrl.u32 %v808, 7
    %v810 = vsub.s32 %v807, %v809
    %v811 = vrot.slane %v797, %v810
    %v812 = vcombine.low %v787, %v795
    %v813 = vcombine.high %v787, %v795
    %v815 = vunpack.c.l.s4 1934713408
    %v816 = vunpack.c.0.s8 %v815
    %v817 = vlaneseq
    %v818 = vshrl.u32 %v817, 7
    %v819 = vsub.s32 %v816, %v818
    %v820 = vrot.slane %v812, %v819
    %v822 = vunpack.c.l.s4 1934713408
    %v823 = vunpack.c.0.s8 %v822
    %v824 = vlaneseq
    %v825 = vshrl.u32 %v824, 7
    %v826 = vsub.s32 %v823, %v825
    %v827 = vrot.slane %v813, %v826
    %v828 = vcombine.low %v804, %v820
    %v829 = vcombine.high %v804, %v820
    %v830 = vcombine.low %v811, %v827
    %v831 = vcombine.high %v811, %v827
    %v832 = vcombine.low %v600, %v607
    %v834 = vunpack.c.l.s4 1983009808
    %v835 = vunpack.c.0.s8 %v834
    %v836 = vlaneseq
    %v837 = vshrl.u32 %v836, 7
    %v838 = vsub.s32 %v835, %v837
    %v839 = vrot.slane %v832, %v838
    %v840 = vcombine.low %v624, %v625
    %v842 = vunpack.c.l.s4 1983009808
    %v843 = vunpack.c.0.s8 %v842
    %v844 = vlaneseq
    %v845 = vshrl.u32 %v844, 7
    %v846 = vsub.s32 %v843, %v845
    %v847 = vrot.slane %v840, %v846
    %v848 = vcombine.low %v616, %v623
    %v850 = vunpack.c.l.s4 1983009808
    %v851 = vunpack.c.0.s8 %v850
    %v852 = vlaneseq
    %v853 = vshrl.u32 %v852, 7
    %v854 = vsub.s32 %v851, %v853
    %v855 = vrot.slane %v848, %v854
    %v856 = vcombine.low %v626, %v627
    %v858 = vunpack.c.l.s4 1983009808
    %v859 = vunpack.c.0.s8 %v858
    %v860 = vlaneseq
    %v861 = vshrl.u32 %v860, 7
    %v862 = vsub.s32 %v859, %v861
    %v863 = vrot.slane %v856, %v862
    %v864 = vcombine.low %v839, %v847
    %v865 = vcombine.high %v839, %v847
    %v867 = vunpack.c.l.s4 1934713408
    %v868 = vunpack.c.0.s8 %v867
    %v869 = vlaneseq
    %v870 = vshrl.u32 %v869, 7
    %v871 = vsub.s32 %v868, %v870
    %v872 = vrot.slane %v864, %v871
    %v874 = vunpack.c.l.s4 1934713408
    %v875 = vunpack.c.0.s8 %v874
    %v876 = vlaneseq
    %v877 = vshrl.u32 %v876, 7
    %v878 = vsub.s32 %v875, %v877
    %v879 = vrot.slane %v865, %v878
    %v880 = vcombine.low %v855, %v863
    %v881 = vcombine.high %v855, %v863
    %v883 = vunpack.c.l.s4 1934713408
    %v884 = vunpack.c.0.s8 %v883
    %v885 = vlaneseq
    %v886 = vshrl.u32 %v885, 7
    %v887 = vsub.s32 %v884, %v886
    %v888 = vrot.slane %v880, %v887
    %v890 = vunpack.c.l.s4 1934713408
    %v891 = vunpack.c.0.s8 %v890
    %v892 = vlaneseq
    %v893 = vshrl.u32 %v892, 7
    %v894 = vsub.s32 %v891, %v893
    %v895 = vrot.slane %v881, %v894
    %v896 = vcombine.low %v872, %v888
    %v897 = vcombine.high %v872, %v888
    %v898 = vcombine.low %v879, %v895
    %v899 = vcombine.high %v879, %v895
    %v900 = vpack.c.bf16 %v692, %v692
    %v901 = vpack.c.bf16 %v693, %v693
    %v902 = vpack.c.bf16 %v694, %v694
    %v903 = vpack.c.bf16 %v695, %v695
    %v904 = vpack.c.bf16 %v760, %v760
    %v905 = vpack.c.bf16 %v761, %v761
    %v906 = vpack.c.bf16 %v762, %v762
    %v907 = vpack.c.bf16 %v763, %v763
    %v908 = vpack.c.bf16 %v828, %v828
    %v909 = vpack.c.bf16 %v829, %v829
    %v910 = vpack.c.bf16 %v830, %v830
    %v911 = vpack.c.bf16 %v831, %v831
    %v912 = vpack.c.bf16 %v896, %v896
    %v913 = vpack.c.bf16 %v897, %v897
    %v914 = vpack.c.bf16 %v898, %v898
    %v915 = vpack.c.bf16 %v899, %v899
    %916 = vrot.lane.b32.xlu0 %v302, 96
    %v917 = vpop.permute.xlu0 %916
    %918 = vrot.lane.b32.xlu0 %v305, 96
    %v919 = vpop.permute.xlu0 %918
    %920 = vrot.lane.b32.xlu0 %v310, 96
    %v921 = vpop.permute.xlu0 %920
    %922 = vrot.lane.b32.xlu0 %v313, 96
    %v923 = vpop.permute.xlu0 %922
    %924 = vrot.lane.b32.xlu0 %v321, 96
    %v925 = vpop.permute.xlu0 %924
    %926 = vrot.lane.b32.xlu0 %v323, 96
    %v927 = vpop.permute.xlu0 %926
    %928 = vrot.lane.b32.xlu0 %v325, 96
    %v929 = vpop.permute.xlu0 %928
    %930 = vrot.lane.b32.xlu0 %v327, 96
    %v931 = vpop.permute.xlu0 %930
    %932 = vrot.lane.b32.xlu0 %v333, 96
    %v933 = vpop.permute.xlu0 %932
    %934 = vrot.lane.b32.xlu0 %v335, 96
    %v935 = vpop.permute.xlu0 %934
    %936 = vrot.lane.b32.xlu0 %v337, 96
    %v937 = vpop.permute.xlu0 %936
    %938 = vrot.lane.b32.xlu0 %v339, 96
    %v939 = vpop.permute.xlu0 %938
    %940 = vrot.lane.b32.xlu0 %v345, 96
    %v941 = vpop.permute.xlu0 %940
    %942 = vrot.lane.b32.xlu0 %v347, 96
    %v943 = vpop.permute.xlu0 %942
    %944 = vrot.lane.b32.xlu0 %v349, 96
    %v945 = vpop.permute.xlu0 %944
    %946 = vrot.lane.b32.xlu0 %v351, 96
    %v947 = vpop.permute.xlu0 %946
    %v964 = vcombine.low %v917, %v933
    %v965 = vcombine.high %v917, %v933
    %v967 = vunpack.c.l.s4 1983009808
    %v968 = vunpack.c.0.s8 %v967
    %v969 = vlaneseq
    %v970 = vshrl.u32 %v969, 7
    %v971 = vsub.s32 %v968, %v970
    %v972 = vrot.slane %v964, %v971
    %v974 = vunpack.c.l.s4 1983009808
    %v975 = vunpack.c.0.s8 %v974
    %v976 = vlaneseq
    %v977 = vshrl.u32 %v976, 7
    %v978 = vsub.s32 %v975, %v977
    %v979 = vrot.slane %v965, %v978
    %v980 = vcombine.low %v925, %v941
    %v981 = vcombine.high %v925, %v941
    %v983 = vunpack.c.l.s4 1983009808
    %v984 = vunpack.c.0.s8 %v983
    %v985 = vlaneseq
    %v986 = vshrl.u32 %v985, 7
    %v987 = vsub.s32 %v984, %v986
    %v988 = vrot.slane %v980, %v987
    %v990 = vunpack.c.l.s4 1983009808
    %v991 = vunpack.c.0.s8 %v990
    %v992 = vlaneseq
    %v993 = vshrl.u32 %v992, 7
    %v994 = vsub.s32 %v991, %v993
    %v995 = vrot.slane %v981, %v994
    %v996 = vcombine.low %v972, %v988
    %v997 = vcombine.high %v972, %v988
    %v999 = vunpack.c.l.s4 1934713408
    %v1000 = vunpack.c.0.s8 %v999
    %v1001 = vlaneseq
    %v1002 = vshrl.u32 %v1001, 7
    %v1003 = vsub.s32 %v1000, %v1002
    %v1004 = vrot.slane %v996, %v1003
    %v1006 = vunpack.c.l.s4 1934713408
    %v1007 = vunpack.c.0.s8 %v1006
    %v1008 = vlaneseq
    %v1009 = vshrl.u32 %v1008, 7
    %v1010 = vsub.s32 %v1007, %v1009
    %v1011 = vrot.slane %v997, %v1010
    %v1012 = vcombine.low %v979, %v995
    %v1013 = vcombine.high %v979, %v995
    %v1015 = vunpack.c.l.s4 1934713408
    %v1016 = vunpack.c.0.s8 %v1015
    %v1017 = vlaneseq
    %v1018 = vshrl.u32 %v1017, 7
    %v1019 = vsub.s32 %v1016, %v1018
    %v1020 = vrot.slane %v1012, %v1019
    %v1022 = vunpack.c.l.s4 1934713408
    %v1023 = vunpack.c.0.s8 %v1022
    %v1024 = vlaneseq
    %v1025 = vshrl.u32 %v1024, 7
    %v1026 = vsub.s32 %v1023, %v1025
    %v1027 = vrot.slane %v1013, %v1026
    %v1028 = vcombine.high %v1004, 0.0
    %v1029 = vcombine.high %v1011, 0.0
    %v1030 = vcombine.high %v1020, 0.0
    %v1031 = vcombine.high %v1027, 0.0
    %v1032 = vcombine.low %v919, %v935
    %v1033 = vcombine.high %v919, %v935
    %v1035 = vunpack.c.l.s4 1983009808
    %v1036 = vunpack.c.0.s8 %v1035
    %v1037 = vlaneseq
    %v1038 = vshrl.u32 %v1037, 7
    %v1039 = vsub.s32 %v1036, %v1038
    %v1040 = vrot.slane %v1032, %v1039
    %v1042 = vunpack.c.l.s4 1983009808
    %v1043 = vunpack.c.0.s8 %v1042
    %v1044 = vlaneseq
    %v1045 = vshrl.u32 %v1044, 7
    %v1046 = vsub.s32 %v1043, %v1045
    %v1047 = vrot.slane %v1033, %v1046
    %v1048 = vcombine.low %v927, %v943
    %v1049 = vcombine.high %v927, %v943
    %v1051 = vunpack.c.l.s4 1983009808
    %v1052 = vunpack.c.0.s8 %v1051
    %v1053 = vlaneseq
    %v1054 = vshrl.u32 %v1053, 7
    %v1055 = vsub.s32 %v1052, %v1054
    %v1056 = vrot.slane %v1048, %v1055
    %v1058 = vunpack.c.l.s4 1983009808
    %v1059 = vunpack.c.0.s8 %v1058
    %v1060 = vlaneseq
    %v1061 = vshrl.u32 %v1060, 7
    %v1062 = vsub.s32 %v1059, %v1061
    %v1063 = vrot.slane %v1049, %v1062
    %v1064 = vcombine.low %v1040, %v1056
    %v1065 = vcombine.high %v1040, %v1056
    %v1067 = vunpack.c.l.s4 1934713408
    %v1068 = vunpack.c.0.s8 %v1067
    %v1069 = vlaneseq
    %v1070 = vshrl.u32 %v1069, 7
    %v1071 = vsub.s32 %v1068, %v1070
    %v1072 = vrot.slane %v1064, %v1071
    %v1074 = vunpack.c.l.s4 1934713408
    %v1075 = vunpack.c.0.s8 %v1074
    %v1076 = vlaneseq
    %v1077 = vshrl.u32 %v1076, 7
    %v1078 = vsub.s32 %v1075, %v1077
    %v1079 = vrot.slane %v1065, %v1078
    %v1080 = vcombine.low %v1047, %v1063
    %v1081 = vcombine.high %v1047, %v1063
    %v1083 = vunpack.c.l.s4 1934713408
    %v1084 = vunpack.c.0.s8 %v1083
    %v1085 = vlaneseq
    %v1086 = vshrl.u32 %v1085, 7
    %v1087 = vsub.s32 %v1084, %v1086
    %v1088 = vrot.slane %v1080, %v1087
    %v1090 = vunpack.c.l.s4 1934713408
    %v1091 = vunpack.c.0.s8 %v1090
    %v1092 = vlaneseq
    %v1093 = vshrl.u32 %v1092, 7
    %v1094 = vsub.s32 %v1091, %v1093
    %v1095 = vrot.slane %v1081, %v1094
    %v1096 = vcombine.high %v1072, 0.0
    %v1097 = vcombine.high %v1079, 0.0
    %v1098 = vcombine.high %v1088, 0.0
    %v1099 = vcombine.high %v1095, 0.0
    %v1100 = vcombine.low %v921, %v937
    %v1101 = vcombine.high %v921, %v937
    %v1103 = vunpack.c.l.s4 1983009808
    %v1104 = vunpack.c.0.s8 %v1103
    %v1105 = vlaneseq
    %v1106 = vshrl.u32 %v1105, 7
    %v1107 = vsub.s32 %v1104, %v1106
    %v1108 = vrot.slane %v1100, %v1107
    %v1110 = vunpack.c.l.s4 1983009808
    %v1111 = vunpack.c.0.s8 %v1110
    %v1112 = vlaneseq
    %v1113 = vshrl.u32 %v1112, 7
    %v1114 = vsub.s32 %v1111, %v1113
    %v1115 = vrot.slane %v1101, %v1114
    %v1116 = vcombine.low %v929, %v945
    %v1117 = vcombine.high %v929, %v945
    %v1119 = vunpack.c.l.s4 1983009808
    %v1120 = vunpack.c.0.s8 %v1119
    %v1121 = vlaneseq
    %v1122 = vshrl.u32 %v1121, 7
    %v1123 = vsub.s32 %v1120, %v1122
    %v1124 = vrot.slane %v1116, %v1123
    %v1126 = vunpack.c.l.s4 1983009808
    %v1127 = vunpack.c.0.s8 %v1126
    %v1128 = vlaneseq
    %v1129 = vshrl.u32 %v1128, 7
    %v1130 = vsub.s32 %v1127, %v1129
    %v1131 = vrot.slane %v1117, %v1130
    %v1132 = vcombine.low %v1108, %v1124
    %v1133 = vcombine.high %v1108, %v1124
    %v1135 = vunpack.c.l.s4 1934713408
    %v1136 = vunpack.c.0.s8 %v1135
    %v1137 = vlaneseq
    %v1138 = vshrl.u32 %v1137, 7
    %v1139 = vsub.s32 %v1136, %v1138
    %v1140 = vrot.slane %v1132, %v1139
    %v1142 = vunpack.c.l.s4 1934713408
    %v1143 = vunpack.c.0.s8 %v1142
    %v1144 = vlaneseq
    %v1145 = vshrl.u32 %v1144, 7
    %v1146 = vsub.s32 %v1143, %v1145
    %v1147 = vrot.slane %v1133, %v1146
    %v1148 = vcombine.low %v1115, %v1131
    %v1149 = vcombine.high %v1115, %v1131
    %v1151 = vunpack.c.l.s4 1934713408
    %v1152 = vunpack.c.0.s8 %v1151
    %v1153 = vlaneseq
    %v1154 = vshrl.u32 %v1153, 7
    %v1155 = vsub.s32 %v1152, %v1154
    %v1156 = vrot.slane %v1148, %v1155
    %v1158 = vunpack.c.l.s4 1934713408
    %v1159 = vunpack.c.0.s8 %v1158
    %v1160 = vlaneseq
    %v1161 = vshrl.u32 %v1160, 7
    %v1162 = vsub.s32 %v1159, %v1161
    %v1163 = vrot.slane %v1149, %v1162
    %v1164 = vcombine.high %v1140, 0.0
    %v1165 = vcombine.high %v1147, 0.0
    %v1166 = vcombine.high %v1156, 0.0
    %v1167 = vcombine.high %v1163, 0.0
    %v1168 = vcombine.low %v923, %v939
    %v1169 = vcombine.high %v923, %v939
    %v1171 = vunpack.c.l.s4 1983009808
    %v1172 = vunpack.c.0.s8 %v1171
    %v1173 = vlaneseq
    %v1174 = vshrl.u32 %v1173, 7
    %v1175 = vsub.s32 %v1172, %v1174
    %v1176 = vrot.slane %v1168, %v1175
    %v1178 = vunpack.c.l.s4 1983009808
    %v1179 = vunpack.c.0.s8 %v1178
    %v1180 = vlaneseq
    %v1181 = vshrl.u32 %v1180, 7
    %v1182 = vsub.s32 %v1179, %v1181
    %v1183 = vrot.slane %v1169, %v1182
    %v1184 = vcombine.low %v931, %v947
    %v1185 = vcombine.high %v931, %v947
    %v1187 = vunpack.c.l.s4 1983009808
    %v1188 = vunpack.c.0.s8 %v1187
    %v1189 = vlaneseq
    %v1190 = vshrl.u32 %v1189, 7
    %v1191 = vsub.s32 %v1188, %v1190
    %v1192 = vrot.slane %v1184, %v1191
    %v1194 = vunpack.c.l.s4 1983009808
    %v1195 = vunpack.c.0.s8 %v1194
    %v1196 = vlaneseq
    %v1197 = vshrl.u32 %v1196, 7
    %v1198 = vsub.s32 %v1195, %v1197
    %v1199 = vrot.slane %v1185, %v1198
    %v1200 = vcombine.low %v1176, %v1192
    %v1201 = vcombine.high %v1176, %v1192
    %v1203 = vunpack.c.l.s4 1934713408
    %v1204 = vunpack.c.0.s8 %v1203
    %v1205 = vlaneseq
    %v1206 = vshrl.u32 %v1205, 7
    %v1207 = vsub.s32 %v1204, %v1206
    %v1208 = vrot.slane %v1200, %v1207
    %v1210 = vunpack.c.l.s4 1934713408
    %v1211 = vunpack.c.0.s8 %v1210
    %v1212 = vlaneseq
    %v1213 = vshrl.u32 %v1212, 7
    %v1214 = vsub.s32 %v1211, %v1213
    %v1215 = vrot.slane %v1201, %v1214
    %v1216 = vcombine.low %v1183, %v1199
    %v1217 = vcombine.high %v1183, %v1199
    %v1219 = vunpack.c.l.s4 1934713408
    %v1220 = vunpack.c.0.s8 %v1219
    %v1221 = vlaneseq
    %v1222 = vshrl.u32 %v1221, 7
    %v1223 = vsub.s32 %v1220, %v1222
    %v1224 = vrot.slane %v1216, %v1223
    %v1226 = vunpack.c.l.s4 1934713408
    %v1227 = vunpack.c.0.s8 %v1226
    %v1228 = vlaneseq
    %v1229 = vshrl.u32 %v1228, 7
    %v1230 = vsub.s32 %v1227, %v1229
    %v1231 = vrot.slane %v1217, %v1230
    %v1232 = vcombine.high %v1208, 0.0
    %v1233 = vcombine.high %v1215, 0.0
    %v1234 = vcombine.high %v1224, 0.0
    %v1235 = vcombine.high %v1231, 0.0
    %v1236 = vcombine.low %v1004, %v1011
    %v1238 = vunpack.c.l.s4 1983009808
    %v1239 = vunpack.c.0.s8 %v1238
    %v1240 = vlaneseq
    %v1241 = vshrl.u32 %v1240, 7
    %v1242 = vsub.s32 %v1239, %v1241
    %v1243 = vrot.slane %v1236, %v1242
    %v1244 = vcombine.low %v1028, %v1029
    %v1246 = vunpack.c.l.s4 1983009808
    %v1247 = vunpack.c.0.s8 %v1246
    %v1248 = vlaneseq
    %v1249 = vshrl.u32 %v1248, 7
    %v1250 = vsub.s32 %v1247, %v1249
    %v1251 = vrot.slane %v1244, %v1250
    %v1252 = vcombine.low %v1020, %v1027
    %v1254 = vunpack.c.l.s4 1983009808
    %v1255 = vunpack.c.0.s8 %v1254
    %v1256 = vlaneseq
    %v1257 = vshrl.u32 %v1256, 7
    %v1258 = vsub.s32 %v1255, %v1257
    %v1259 = vrot.slane %v1252, %v1258
    %v1260 = vcombine.low %v1030, %v1031
    %v1262 = vunpack.c.l.s4 1983009808
    %v1263 = vunpack.c.0.s8 %v1262
    %v1264 = vlaneseq
    %v1265 = vshrl.u32 %v1264, 7
    %v1266 = vsub.s32 %v1263, %v1265
    %v1267 = vrot.slane %v1260, %v1266
    %v1268 = vcombine.low %v1243, %v1251
    %v1269 = vcombine.high %v1243, %v1251
    %v1271 = vunpack.c.l.s4 1934713408
    %v1272 = vunpack.c.0.s8 %v1271
    %v1273 = vlaneseq
    %v1274 = vshrl.u32 %v1273, 7
    %v1275 = vsub.s32 %v1272, %v1274
    %v1276 = vrot.slane %v1268, %v1275
    %v1278 = vunpack.c.l.s4 1934713408
    %v1279 = vunpack.c.0.s8 %v1278
    %v1280 = vlaneseq
    %v1281 = vshrl.u32 %v1280, 7
    %v1282 = vsub.s32 %v1279, %v1281
    %v1283 = vrot.slane %v1269, %v1282
    %v1284 = vcombine.low %v1259, %v1267
    %v1285 = vcombine.high %v1259, %v1267
    %v1287 = vunpack.c.l.s4 1934713408
    %v1288 = vunpack.c.0.s8 %v1287
    %v1289 = vlaneseq
    %v1290 = vshrl.u32 %v1289, 7
    %v1291 = vsub.s32 %v1288, %v1290
    %v1292 = vrot.slane %v1284, %v1291
    %v1294 = vunpack.c.l.s4 1934713408
    %v1295 = vunpack.c.0.s8 %v1294
    %v1296 = vlaneseq
    %v1297 = vshrl.u32 %v1296, 7
    %v1298 = vsub.s32 %v1295, %v1297
    %v1299 = vrot.slane %v1285, %v1298
    %v1300 = vcombine.low %v1276, %v1292
    %v1301 = vcombine.high %v1276, %v1292
    %v1302 = vcombine.low %v1283, %v1299
    %v1303 = vcombine.high %v1283, %v1299
    %v1304 = vcombine.low %v1072, %v1079
    %v1306 = vunpack.c.l.s4 1983009808
    %v1307 = vunpack.c.0.s8 %v1306
    %v1308 = vlaneseq
    %v1309 = vshrl.u32 %v1308, 7
    %v1310 = vsub.s32 %v1307, %v1309
    %v1311 = vrot.slane %v1304, %v1310
    %v1312 = vcombine.low %v1096, %v1097
    %v1314 = vunpack.c.l.s4 1983009808
    %v1315 = vunpack.c.0.s8 %v1314
    %v1316 = vlaneseq
    %v1317 = vshrl.u32 %v1316, 7
    %v1318 = vsub.s32 %v1315, %v1317
    %v1319 = vrot.slane %v1312, %v1318
    %v1320 = vcombine.low %v1088, %v1095
    %v1322 = vunpack.c.l.s4 1983009808
    %v1323 = vunpack.c.0.s8 %v1322
    %v1324 = vlaneseq
    %v1325 = vshrl.u32 %v1324, 7
    %v1326 = vsub.s32 %v1323, %v1325
    %v1327 = vrot.slane %v1320, %v1326
    %v1328 = vcombine.low %v1098, %v1099
    %v1330 = vunpack.c.l.s4 1983009808
    %v1331 = vunpack.c.0.s8 %v1330
    %v1332 = vlaneseq
    %v1333 = vshrl.u32 %v1332, 7
    %v1334 = vsub.s32 %v1331, %v1333
    %v1335 = vrot.slane %v1328, %v1334
    %v1336 = vcombine.low %v1311, %v1319
    %v1337 = vcombine.high %v1311, %v1319
    %v1339 = vunpack.c.l.s4 1934713408
    %v1340 = vunpack.c.0.s8 %v1339
    %v1341 = vlaneseq
    %v1342 = vshrl.u32 %v1341, 7
    %v1343 = vsub.s32 %v1340, %v1342
    %v1344 = vrot.slane %v1336, %v1343
    %v1346 = vunpack.c.l.s4 1934713408
    %v1347 = vunpack.c.0.s8 %v1346
    %v1348 = vlaneseq
    %v1349 = vshrl.u32 %v1348, 7
    %v1350 = vsub.s32 %v1347, %v1349
    %v1351 = vrot.slane %v1337, %v1350
    %v1352 = vcombine.low %v1327, %v1335
    %v1353 = vcombine.high %v1327, %v1335
    %v1355 = vunpack.c.l.s4 1934713408
    %v1356 = vunpack.c.0.s8 %v1355
    %v1357 = vlaneseq
    %v1358 = vshrl.u32 %v1357, 7
    %v1359 = vsub.s32 %v1356, %v1358
    %v1360 = vrot.slane %v1352, %v1359
    %v1362 = vunpack.c.l.s4 1934713408
    %v1363 = vunpack.c.0.s8 %v1362
    %v1364 = vlaneseq
    %v1365 = vshrl.u32 %v1364, 7
    %v1366 = vsub.s32 %v1363, %v1365
    %v1367 = vrot.slane %v1353, %v1366
    %v1368 = vcombine.low %v1344, %v1360
    %v1369 = vcombine.high %v1344, %v1360
    %v1370 = vcombine.low %v1351, %v1367
    %v1371 = vcombine.high %v1351, %v1367
    %v1372 = vcombine.low %v1140, %v1147
    %v1374 = vunpack.c.l.s4 1983009808
    %v1375 = vunpack.c.0.s8 %v1374
    %v1376 = vlaneseq
    %v1377 = vshrl.u32 %v1376, 7
    %v1378 = vsub.s32 %v1375, %v1377
    %v1379 = vrot.slane %v1372, %v1378
    %v1380 = vcombine.low %v1164, %v1165
    %v1382 = vunpack.c.l.s4 1983009808
    %v1383 = vunpack.c.0.s8 %v1382
    %v1384 = vlaneseq
    %v1385 = vshrl.u32 %v1384, 7
    %v1386 = vsub.s32 %v1383, %v1385
    %v1387 = vrot.slane %v1380, %v1386
    %v1388 = vcombine.low %v1156, %v1163
    %v1390 = vunpack.c.l.s4 1983009808
    %v1391 = vunpack.c.0.s8 %v1390
    %v1392 = vlaneseq
    %v1393 = vshrl.u32 %v1392, 7
    %v1394 = vsub.s32 %v1391, %v1393
    %v1395 = vrot.slane %v1388, %v1394
    %v1396 = vcombine.low %v1166, %v1167
    %v1398 = vunpack.c.l.s4 1983009808
    %v1399 = vunpack.c.0.s8 %v1398
    %v1400 = vlaneseq
    %v1401 = vshrl.u32 %v1400, 7
    %v1402 = vsub.s32 %v1399, %v1401
    %v1403 = vrot.slane %v1396, %v1402
    %v1404 = vcombine.low %v1379, %v1387
    %v1405 = vcombine.high %v1379, %v1387
    %v1407 = vunpack.c.l.s4 1934713408
    %v1408 = vunpack.c.0.s8 %v1407
    %v1409 = vlaneseq
    %v1410 = vshrl.u32 %v1409, 7
    %v1411 = vsub.s32 %v1408, %v1410
    %v1412 = vrot.slane %v1404, %v1411
    %v1414 = vunpack.c.l.s4 1934713408
    %v1415 = vunpack.c.0.s8 %v1414
    %v1416 = vlaneseq
    %v1417 = vshrl.u32 %v1416, 7
    %v1418 = vsub.s32 %v1415, %v1417
    %v1419 = vrot.slane %v1405, %v1418
    %v1420 = vcombine.low %v1395, %v1403
    %v1421 = vcombine.high %v1395, %v1403
    %v1423 = vunpack.c.l.s4 1934713408
    %v1424 = vunpack.c.0.s8 %v1423
    %v1425 = vlaneseq
    %v1426 = vshrl.u32 %v1425, 7
    %v1427 = vsub.s32 %v1424, %v1426
    %v1428 = vrot.slane %v1420, %v1427
    %v1430 = vunpack.c.l.s4 1934713408
    %v1431 = vunpack.c.0.s8 %v1430
    %v1432 = vlaneseq
    %v1433 = vshrl.u32 %v1432, 7
    %v1434 = vsub.s32 %v1431, %v1433
    %v1435 = vrot.slane %v1421, %v1434
    %v1436 = vcombine.low %v1412, %v1428
    %v1437 = vcombine.high %v1412, %v1428
    %v1438 = vcombine.low %v1419, %v1435
    %v1439 = vcombine.high %v1419, %v1435
    %v1440 = vcombine.low %v1208, %v1215
    %v1442 = vunpack.c.l.s4 1983009808
    %v1443 = vunpack.c.0.s8 %v1442
    %v1444 = vlaneseq
    %v1445 = vshrl.u32 %v1444, 7
    %v1446 = vsub.s32 %v1443, %v1445
    %v1447 = vrot.slane %v1440, %v1446
    %v1448 = vcombine.low %v1232, %v1233
    %v1450 = vunpack.c.l.s4 1983009808
    %v1451 = vunpack.c.0.s8 %v1450
    %v1452 = vlaneseq
    %v1453 = vshrl.u32 %v1452, 7
    %v1454 = vsub.s32 %v1451, %v1453
    %v1455 = vrot.slane %v1448, %v1454
    %v1456 = vcombine.low %v1224, %v1231
    %v1458 = vunpack.c.l.s4 1983009808
    %v1459 = vunpack.c.0.s8 %v1458
    %v1460 = vlaneseq
    %v1461 = vshrl.u32 %v1460, 7
    %v1462 = vsub.s32 %v1459, %v1461
    %v1463 = vrot.slane %v1456, %v1462
    %v1464 = vcombine.low %v1234, %v1235
    %v1466 = vunpack.c.l.s4 1983009808
    %v1467 = vunpack.c.0.s8 %v1466
    %v1468 = vlaneseq
    %v1469 = vshrl.u32 %v1468, 7
    %v1470 = vsub.s32 %v1467, %v1469
    %v1471 = vrot.slane %v1464, %v1470
    %v1472 = vcombine.low %v1447, %v1455
    %v1473 = vcombine.high %v1447, %v1455
    %v1475 = vunpack.c.l.s4 1934713408
    %v1476 = vunpack.c.0.s8 %v1475
    %v1477 = vlaneseq
    %v1478 = vshrl.u32 %v1477, 7
    %v1479 = vsub.s32 %v1476, %v1478
    %v1480 = vrot.slane %v1472, %v1479
    %v1482 = vunpack.c.l.s4 1934713408
    %v1483 = vunpack.c.0.s8 %v1482
    %v1484 = vlaneseq
    %v1485 = vshrl.u32 %v1484, 7
    %v1486 = vsub.s32 %v1483, %v1485
    %v1487 = vrot.slane %v1473, %v1486
    %v1488 = vcombine.low %v1463, %v1471
    %v1489 = vcombine.high %v1463, %v1471
    %v1491 = vunpack.c.l.s4 1934713408
    %v1492 = vunpack.c.0.s8 %v1491
    %v1493 = vlaneseq
    %v1494 = vshrl.u32 %v1493, 7
    %v1495 = vsub.s32 %v1492, %v1494
    %v1496 = vrot.slane %v1488, %v1495
    %v1498 = vunpack.c.l.s4 1934713408
    %v1499 = vunpack.c.0.s8 %v1498
    %v1500 = vlaneseq
    %v1501 = vshrl.u32 %v1500, 7
    %v1502 = vsub.s32 %v1499, %v1501
    %v1503 = vrot.slane %v1489, %v1502
    %v1504 = vcombine.low %v1480, %v1496
    %v1505 = vcombine.high %v1480, %v1496
    %v1506 = vcombine.low %v1487, %v1503
    %v1507 = vcombine.high %v1487, %v1503
    %v1508 = vpack.c.bf16 %v1300, %v1300
    %v1509 = vpack.c.bf16 %v1301, %v1301
    %v1510 = vpack.c.bf16 %v1302, %v1302
    %v1511 = vpack.c.bf16 %v1303, %v1303
    %v1512 = vpack.c.bf16 %v1368, %v1368
    %v1513 = vpack.c.bf16 %v1369, %v1369
    %v1514 = vpack.c.bf16 %v1370, %v1370
    %v1515 = vpack.c.bf16 %v1371, %v1371
    %v1516 = vpack.c.bf16 %v1436, %v1436
    %v1517 = vpack.c.bf16 %v1437, %v1437
    %v1518 = vpack.c.bf16 %v1438, %v1438
    %v1519 = vpack.c.bf16 %v1439, %v1439
    %v1520 = vpack.c.bf16 %v1504, %v1504
    %v1521 = vpack.c.bf16 %v1505, %v1505
    %v1522 = vpack.c.bf16 %v1506, %v1506
    %v1523 = vpack.c.bf16 %v1507, %v1507
    %1524 = vrot.lane.b32.xlu0 %v302, 64
    %v1525 = vpop.permute.xlu0 %1524
    %1526 = vrot.lane.b32.xlu0 %v305, 64
    %v1527 = vpop.permute.xlu0 %1526
    %1528 = vrot.lane.b32.xlu0 %v310, 64
    %v1529 = vpop.permute.xlu0 %1528
    %1530 = vrot.lane.b32.xlu0 %v313, 64
    %v1531 = vpop.permute.xlu0 %1530
    %1532 = vrot.lane.b32.xlu0 %v321, 64
    %v1533 = vpop.permute.xlu0 %1532
    %1534 = vrot.lane.b32.xlu0 %v323, 64
    %v1535 = vpop.permute.xlu0 %1534
    %1536 = vrot.lane.b32.xlu0 %v325, 64
    %v1537 = vpop.permute.xlu0 %1536
    %1538 = vrot.lane.b32.xlu0 %v327, 64
    %v1539 = vpop.permute.xlu0 %1538
    %1540 = vrot.lane.b32.xlu0 %v333, 64
    %v1541 = vpop.permute.xlu0 %1540
    %1542 = vrot.lane.b32.xlu0 %v335, 64
    %v1543 = vpop.permute.xlu0 %1542
    %1544 = vrot.lane.b32.xlu0 %v337, 64
    %v1545 = vpop.permute.xlu0 %1544
    %1546 = vrot.lane.b32.xlu0 %v339, 64
    %v1547 = vpop.permute.xlu0 %1546
    %1548 = vrot.lane.b32.xlu0 %v345, 64
    %v1549 = vpop.permute.xlu0 %1548
    %1550 = vrot.lane.b32.xlu0 %v347, 64
    %v1551 = vpop.permute.xlu0 %1550
    %1552 = vrot.lane.b32.xlu0 %v349, 64
    %v1553 = vpop.permute.xlu0 %1552
    %1554 = vrot.lane.b32.xlu0 %v351, 64
    %v1555 = vpop.permute.xlu0 %1554
    %v1572 = vcombine.low %v1525, %v1541
    %v1573 = vcombine.high %v1525, %v1541
    %v1575 = vunpack.c.l.s4 1983009808
    %v1576 = vunpack.c.0.s8 %v1575
    %v1577 = vlaneseq
    %v1578 = vshrl.u32 %v1577, 7
    %v1579 = vsub.s32 %v1576, %v1578
    %v1580 = vrot.slane %v1572, %v1579
    %v1582 = vunpack.c.l.s4 1983009808
    %v1583 = vunpack.c.0.s8 %v1582
    %v1584 = vlaneseq
    %v1585 = vshrl.u32 %v1584, 7
    %v1586 = vsub.s32 %v1583, %v1585
    %v1587 = vrot.slane %v1573, %v1586
    %v1588 = vcombine.low %v1533, %v1549
    %v1589 = vcombine.high %v1533, %v1549
    %v1591 = vunpack.c.l.s4 1983009808
    %v1592 = vunpack.c.0.s8 %v1591
    %v1593 = vlaneseq
    %v1594 = vshrl.u32 %v1593, 7
    %v1595 = vsub.s32 %v1592, %v1594
    %v1596 = vrot.slane %v1588, %v1595
    %v1598 = vunpack.c.l.s4 1983009808
    %v1599 = vunpack.c.0.s8 %v1598
    %v1600 = vlaneseq
    %v1601 = vshrl.u32 %v1600, 7
    %v1602 = vsub.s32 %v1599, %v1601
    %v1603 = vrot.slane %v1589, %v1602
    %v1604 = vcombine.low %v1580, %v1596
    %v1605 = vcombine.high %v1580, %v1596
    %v1607 = vunpack.c.l.s4 1934713408
    %v1608 = vunpack.c.0.s8 %v1607
    %v1609 = vlaneseq
    %v1610 = vshrl.u32 %v1609, 7
    %v1611 = vsub.s32 %v1608, %v1610
    %v1612 = vrot.slane %v1604, %v1611
    %v1614 = vunpack.c.l.s4 1934713408
    %v1615 = vunpack.c.0.s8 %v1614
    %v1616 = vlaneseq
    %v1617 = vshrl.u32 %v1616, 7
    %v1618 = vsub.s32 %v1615, %v1617
    %v1619 = vrot.slane %v1605, %v1618
    %v1620 = vcombine.low %v1587, %v1603
    %v1621 = vcombine.high %v1587, %v1603
    %v1623 = vunpack.c.l.s4 1934713408
    %v1624 = vunpack.c.0.s8 %v1623
    %v1625 = vlaneseq
    %v1626 = vshrl.u32 %v1625, 7
    %v1627 = vsub.s32 %v1624, %v1626
    %v1628 = vrot.slane %v1620, %v1627
    %v1630 = vunpack.c.l.s4 1934713408
    %v1631 = vunpack.c.0.s8 %v1630
    %v1632 = vlaneseq
    %v1633 = vshrl.u32 %v1632, 7
    %v1634 = vsub.s32 %v1631, %v1633
    %v1635 = vrot.slane %v1621, %v1634
    %v1636 = vcombine.high %v1612, 0.0
    %v1637 = vcombine.high %v1619, 0.0
    %v1638 = vcombine.high %v1628, 0.0
    %v1639 = vcombine.high %v1635, 0.0
    %v1640 = vcombine.low %v1527, %v1543
    %v1641 = vcombine.high %v1527, %v1543
    %v1643 = vunpack.c.l.s4 1983009808
    %v1644 = vunpack.c.0.s8 %v1643
    %v1645 = vlaneseq
    %v1646 = vshrl.u32 %v1645, 7
    %v1647 = vsub.s32 %v1644, %v1646
    %v1648 = vrot.slane %v1640, %v1647
    %v1650 = vunpack.c.l.s4 1983009808
    %v1651 = vunpack.c.0.s8 %v1650
    %v1652 = vlaneseq
    %v1653 = vshrl.u32 %v1652, 7
    %v1654 = vsub.s32 %v1651, %v1653
    %v1655 = vrot.slane %v1641, %v1654
    %v1656 = vcombine.low %v1535, %v1551
    %v1657 = vcombine.high %v1535, %v1551
    %v1659 = vunpack.c.l.s4 1983009808
    %v1660 = vunpack.c.0.s8 %v1659
    %v1661 = vlaneseq
    %v1662 = vshrl.u32 %v1661, 7
    %v1663 = vsub.s32 %v1660, %v1662
    %v1664 = vrot.slane %v1656, %v1663
    %v1666 = vunpack.c.l.s4 1983009808
    %v1667 = vunpack.c.0.s8 %v1666
    %v1668 = vlaneseq
    %v1669 = vshrl.u32 %v1668, 7
    %v1670 = vsub.s32 %v1667, %v1669
    %v1671 = vrot.slane %v1657, %v1670
    %v1672 = vcombine.low %v1648, %v1664
    %v1673 = vcombine.high %v1648, %v1664
    %v1675 = vunpack.c.l.s4 1934713408
    %v1676 = vunpack.c.0.s8 %v1675
    %v1677 = vlaneseq
    %v1678 = vshrl.u32 %v1677, 7
    %v1679 = vsub.s32 %v1676, %v1678
    %v1680 = vrot.slane %v1672, %v1679
    %v1682 = vunpack.c.l.s4 1934713408
    %v1683 = vunpack.c.0.s8 %v1682
    %v1684 = vlaneseq
    %v1685 = vshrl.u32 %v1684, 7
    %v1686 = vsub.s32 %v1683, %v1685
    %v1687 = vrot.slane %v1673, %v1686
    %v1688 = vcombine.low %v1655, %v1671
    %v1689 = vcombine.high %v1655, %v1671
    %v1691 = vunpack.c.l.s4 1934713408
    %v1692 = vunpack.c.0.s8 %v1691
    %v1693 = vlaneseq
    %v1694 = vshrl.u32 %v1693, 7
    %v1695 = vsub.s32 %v1692, %v1694
    %v1696 = vrot.slane %v1688, %v1695
    %v1698 = vunpack.c.l.s4 1934713408
    %v1699 = vunpack.c.0.s8 %v1698
    %v1700 = vlaneseq
    %v1701 = vshrl.u32 %v1700, 7
    %v1702 = vsub.s32 %v1699, %v1701
    %v1703 = vrot.slane %v1689, %v1702
    %v1704 = vcombine.high %v1680, 0.0
    %v1705 = vcombine.high %v1687, 0.0
    %v1706 = vcombine.high %v1696, 0.0
    %v1707 = vcombine.high %v1703, 0.0
    %v1708 = vcombine.low %v1529, %v1545
    %v1709 = vcombine.high %v1529, %v1545
    %v1711 = vunpack.c.l.s4 1983009808
    %v1712 = vunpack.c.0.s8 %v1711
    %v1713 = vlaneseq
    %v1714 = vshrl.u32 %v1713, 7
    %v1715 = vsub.s32 %v1712, %v1714
    %v1716 = vrot.slane %v1708, %v1715
    %v1718 = vunpack.c.l.s4 1983009808
    %v1719 = vunpack.c.0.s8 %v1718
    %v1720 = vlaneseq
    %v1721 = vshrl.u32 %v1720, 7
    %v1722 = vsub.s32 %v1719, %v1721
    %v1723 = vrot.slane %v1709, %v1722
    %v1724 = vcombine.low %v1537, %v1553
    %v1725 = vcombine.high %v1537, %v1553
    %v1727 = vunpack.c.l.s4 1983009808
    %v1728 = vunpack.c.0.s8 %v1727
    %v1729 = vlaneseq
    %v1730 = vshrl.u32 %v1729, 7
    %v1731 = vsub.s32 %v1728, %v1730
    %v1732 = vrot.slane %v1724, %v1731
    %v1734 = vunpack.c.l.s4 1983009808
    %v1735 = vunpack.c.0.s8 %v1734
    %v1736 = vlaneseq
    %v1737 = vshrl.u32 %v1736, 7
    %v1738 = vsub.s32 %v1735, %v1737
    %v1739 = vrot.slane %v1725, %v1738
    %v1740 = vcombine.low %v1716, %v1732
    %v1741 = vcombine.high %v1716, %v1732
    %v1743 = vunpack.c.l.s4 1934713408
    %v1744 = vunpack.c.0.s8 %v1743
    %v1745 = vlaneseq
    %v1746 = vshrl.u32 %v1745, 7
    %v1747 = vsub.s32 %v1744, %v1746
    %v1748 = vrot.slane %v1740, %v1747
    %v1750 = vunpack.c.l.s4 1934713408
    %v1751 = vunpack.c.0.s8 %v1750
    %v1752 = vlaneseq
    %v1753 = vshrl.u32 %v1752, 7
    %v1754 = vsub.s32 %v1751, %v1753
    %v1755 = vrot.slane %v1741, %v1754
    %v1756 = vcombine.low %v1723, %v1739
    %v1757 = vcombine.high %v1723, %v1739
    %v1759 = vunpack.c.l.s4 1934713408
    %v1760 = vunpack.c.0.s8 %v1759
    %v1761 = vlaneseq
    %v1762 = vshrl.u32 %v1761, 7
    %v1763 = vsub.s32 %v1760, %v1762
    %v1764 = vrot.slane %v1756, %v1763
    %v1766 = vunpack.c.l.s4 1934713408
    %v1767 = vunpack.c.0.s8 %v1766
    %v1768 = vlaneseq
    %v1769 = vshrl.u32 %v1768, 7
    %v1770 = vsub.s32 %v1767, %v1769
    %v1771 = vrot.slane %v1757, %v1770
    %v1772 = vcombine.high %v1748, 0.0
    %v1773 = vcombine.high %v1755, 0.0
    %v1774 = vcombine.high %v1764, 0.0
    %v1775 = vcombine.high %v1771, 0.0
    %v1776 = vcombine.low %v1531, %v1547
    %v1777 = vcombine.high %v1531, %v1547
    %v1779 = vunpack.c.l.s4 1983009808
    %v1780 = vunpack.c.0.s8 %v1779
    %v1781 = vlaneseq
    %v1782 = vshrl.u32 %v1781, 7
    %v1783 = vsub.s32 %v1780, %v1782
    %v1784 = vrot.slane %v1776, %v1783
    %v1786 = vunpack.c.l.s4 1983009808
    %v1787 = vunpack.c.0.s8 %v1786
    %v1788 = vlaneseq
    %v1789 = vshrl.u32 %v1788, 7
    %v1790 = vsub.s32 %v1787, %v1789
    %v1791 = vrot.slane %v1777, %v1790
    %v1792 = vcombine.low %v1539, %v1555
    %v1793 = vcombine.high %v1539, %v1555
    %v1795 = vunpack.c.l.s4 1983009808
    %v1796 = vunpack.c.0.s8 %v1795
    %v1797 = vlaneseq
    %v1798 = vshrl.u32 %v1797, 7
    %v1799 = vsub.s32 %v1796, %v1798
    %v1800 = vrot.slane %v1792, %v1799
    %v1802 = vunpack.c.l.s4 1983009808
    %v1803 = vunpack.c.0.s8 %v1802
    %v1804 = vlaneseq
    %v1805 = vshrl.u32 %v1804, 7
    %v1806 = vsub.s32 %v1803, %v1805
    %v1807 = vrot.slane %v1793, %v1806
    %v1808 = vcombine.low %v1784, %v1800
    %v1809 = vcombine.high %v1784, %v1800
    %v1811 = vunpack.c.l.s4 1934713408
    %v1812 = vunpack.c.0.s8 %v1811
    %v1813 = vlaneseq
    %v1814 = vshrl.u32 %v1813, 7
    %v1815 = vsub.s32 %v1812, %v1814
    %v1816 = vrot.slane %v1808, %v1815
    %v1818 = vunpack.c.l.s4 1934713408
    %v1819 = vunpack.c.0.s8 %v1818
    %v1820 = vlaneseq
    %v1821 = vshrl.u32 %v1820, 7
    %v1822 = vsub.s32 %v1819, %v1821
    %v1823 = vrot.slane %v1809, %v1822
    %v1824 = vcombine.low %v1791, %v1807
    %v1825 = vcombine.high %v1791, %v1807
    %v1827 = vunpack.c.l.s4 1934713408
    %v1828 = vunpack.c.0.s8 %v1827
    %v1829 = vlaneseq
    %v1830 = vshrl.u32 %v1829, 7
    %v1831 = vsub.s32 %v1828, %v1830
    %v1832 = vrot.slane %v1824, %v1831
    %v1834 = vunpack.c.l.s4 1934713408
    %v1835 = vunpack.c.0.s8 %v1834
    %v1836 = vlaneseq
    %v1837 = vshrl.u32 %v1836, 7
    %v1838 = vsub.s32 %v1835, %v1837
    %v1839 = vrot.slane %v1825, %v1838
    %v1840 = vcombine.high %v1816, 0.0
    %v1841 = vcombine.high %v1823, 0.0
    %v1842 = vcombine.high %v1832, 0.0
    %v1843 = vcombine.high %v1839, 0.0
    %v1844 = vcombine.low %v1612, %v1619
    %v1846 = vunpack.c.l.s4 1983009808
    %v1847 = vunpack.c.0.s8 %v1846
    %v1848 = vlaneseq
    %v1849 = vshrl.u32 %v1848, 7
    %v1850 = vsub.s32 %v1847, %v1849
    %v1851 = vrot.slane %v1844, %v1850
    %v1852 = vcombine.low %v1636, %v1637
    %v1854 = vunpack.c.l.s4 1983009808
    %v1855 = vunpack.c.0.s8 %v1854
    %v1856 = vlaneseq
    %v1857 = vshrl.u32 %v1856, 7
    %v1858 = vsub.s32 %v1855, %v1857
    %v1859 = vrot.slane %v1852, %v1858
    %v1860 = vcombine.low %v1628, %v1635
    %v1862 = vunpack.c.l.s4 1983009808
    %v1863 = vunpack.c.0.s8 %v1862
    %v1864 = vlaneseq
    %v1865 = vshrl.u32 %v1864, 7
    %v1866 = vsub.s32 %v1863, %v1865
    %v1867 = vrot.slane %v1860, %v1866
    %v1868 = vcombine.low %v1638, %v1639
    %v1870 = vunpack.c.l.s4 1983009808
    %v1871 = vunpack.c.0.s8 %v1870
    %v1872 = vlaneseq
    %v1873 = vshrl.u32 %v1872, 7
    %v1874 = vsub.s32 %v1871, %v1873
    %v1875 = vrot.slane %v1868, %v1874
    %v1876 = vcombine.low %v1851, %v1859
    %v1877 = vcombine.high %v1851, %v1859
    %v1879 = vunpack.c.l.s4 1934713408
    %v1880 = vunpack.c.0.s8 %v1879
    %v1881 = vlaneseq
    %v1882 = vshrl.u32 %v1881, 7
    %v1883 = vsub.s32 %v1880, %v1882
    %v1884 = vrot.slane %v1876, %v1883
    %v1886 = vunpack.c.l.s4 1934713408
    %v1887 = vunpack.c.0.s8 %v1886
    %v1888 = vlaneseq
    %v1889 = vshrl.u32 %v1888, 7
    %v1890 = vsub.s32 %v1887, %v1889
    %v1891 = vrot.slane %v1877, %v1890
    %v1892 = vcombine.low %v1867, %v1875
    %v1893 = vcombine.high %v1867, %v1875
    %v1895 = vunpack.c.l.s4 1934713408
    %v1896 = vunpack.c.0.s8 %v1895
    %v1897 = vlaneseq
    %v1898 = vshrl.u32 %v1897, 7
    %v1899 = vsub.s32 %v1896, %v1898
    %v1900 = vrot.slane %v1892, %v1899
    %v1902 = vunpack.c.l.s4 1934713408
    %v1903 = vunpack.c.0.s8 %v1902
    %v1904 = vlaneseq
    %v1905 = vshrl.u32 %v1904, 7
    %v1906 = vsub.s32 %v1903, %v1905
    %v1907 = vrot.slane %v1893, %v1906
    %v1908 = vcombine.low %v1884, %v1900
    %v1909 = vcombine.high %v1884, %v1900
    %v1910 = vcombine.low %v1891, %v1907
    %v1911 = vcombine.high %v1891, %v1907
    %v1912 = vcombine.low %v1680, %v1687
    %v1914 = vunpack.c.l.s4 1983009808
    %v1915 = vunpack.c.0.s8 %v1914
    %v1916 = vlaneseq
    %v1917 = vshrl.u32 %v1916, 7
    %v1918 = vsub.s32 %v1915, %v1917
    %v1919 = vrot.slane %v1912, %v1918
    %v1920 = vcombine.low %v1704, %v1705
    %v1922 = vunpack.c.l.s4 1983009808
    %v1923 = vunpack.c.0.s8 %v1922
    %v1924 = vlaneseq
    %v1925 = vshrl.u32 %v1924, 7
    %v1926 = vsub.s32 %v1923, %v1925
    %v1927 = vrot.slane %v1920, %v1926
    %v1928 = vcombine.low %v1696, %v1703
    %v1930 = vunpack.c.l.s4 1983009808
    %v1931 = vunpack.c.0.s8 %v1930
    %v1932 = vlaneseq
    %v1933 = vshrl.u32 %v1932, 7
    %v1934 = vsub.s32 %v1931, %v1933
    %v1935 = vrot.slane %v1928, %v1934
    %v1936 = vcombine.low %v1706, %v1707
    %v1938 = vunpack.c.l.s4 1983009808
    %v1939 = vunpack.c.0.s8 %v1938
    %v1940 = vlaneseq
    %v1941 = vshrl.u32 %v1940, 7
    %v1942 = vsub.s32 %v1939, %v1941
    %v1943 = vrot.slane %v1936, %v1942
    %v1944 = vcombine.low %v1919, %v1927
    %v1945 = vcombine.high %v1919, %v1927
    %v1947 = vunpack.c.l.s4 1934713408
    %v1948 = vunpack.c.0.s8 %v1947
    %v1949 = vlaneseq
    %v1950 = vshrl.u32 %v1949, 7
    %v1951 = vsub.s32 %v1948, %v1950
    %v1952 = vrot.slane %v1944, %v1951
    %v1954 = vunpack.c.l.s4 1934713408
    %v1955 = vunpack.c.0.s8 %v1954
    %v1956 = vlaneseq
    %v1957 = vshrl.u32 %v1956, 7
    %v1958 = vsub.s32 %v1955, %v1957
    %v1959 = vrot.slane %v1945, %v1958
    %v1960 = vcombine.low %v1935, %v1943
    %v1961 = vcombine.high %v1935, %v1943
    %v1963 = vunpack.c.l.s4 1934713408
    %v1964 = vunpack.c.0.s8 %v1963
    %v1965 = vlaneseq
    %v1966 = vshrl.u32 %v1965, 7
    %v1967 = vsub.s32 %v1964, %v1966
    %v1968 = vrot.slane %v1960, %v1967
    %v1970 = vunpack.c.l.s4 1934713408
    %v1971 = vunpack.c.0.s8 %v1970
    %v1972 = vlaneseq
    %v1973 = vshrl.u32 %v1972, 7
    %v1974 = vsub.s32 %v1971, %v1973
    %v1975 = vrot.slane %v1961, %v1974
    %v1976 = vcombine.low %v1952, %v1968
    %v1977 = vcombine.high %v1952, %v1968
    %v1978 = vcombine.low %v1959, %v1975
    %v1979 = vcombine.high %v1959, %v1975
    %v1980 = vcombine.low %v1748, %v1755
    %v1982 = vunpack.c.l.s4 1983009808
    %v1983 = vunpack.c.0.s8 %v1982
    %v1984 = vlaneseq
    %v1985 = vshrl.u32 %v1984, 7
    %v1986 = vsub.s32 %v1983, %v1985
    %v1987 = vrot.slane %v1980, %v1986
    %v1988 = vcombine.low %v1772, %v1773
    %v1990 = vunpack.c.l.s4 1983009808
    %v1991 = vunpack.c.0.s8 %v1990
    %v1992 = vlaneseq
    %v1993 = vshrl.u32 %v1992, 7
    %v1994 = vsub.s32 %v1991, %v1993
    %v1995 = vrot.slane %v1988, %v1994
    %v1996 = vcombine.low %v1764, %v1771
    %v1998 = vunpack.c.l.s4 1983009808
    %v1999 = vunpack.c.0.s8 %v1998
    %v2000 = vlaneseq
    %v2001 = vshrl.u32 %v2000, 7
    %v2002 = vsub.s32 %v1999, %v2001
    %v2003 = vrot.slane %v1996, %v2002
    %v2004 = vcombine.low %v1774, %v1775
    %v2006 = vunpack.c.l.s4 1983009808
    %v2007 = vunpack.c.0.s8 %v2006
    %v2008 = vlaneseq
    %v2009 = vshrl.u32 %v2008, 7
    %v2010 = vsub.s32 %v2007, %v2009
    %v2011 = vrot.slane %v2004, %v2010
    %v2012 = vcombine.low %v1987, %v1995
    %v2013 = vcombine.high %v1987, %v1995
    %v2015 = vunpack.c.l.s4 1934713408
    %v2016 = vunpack.c.0.s8 %v2015
    %v2017 = vlaneseq
    %v2018 = vshrl.u32 %v2017, 7
    %v2019 = vsub.s32 %v2016, %v2018
    %v2020 = vrot.slane %v2012, %v2019
    %v2022 = vunpack.c.l.s4 1934713408
    %v2023 = vunpack.c.0.s8 %v2022
    %v2024 = vlaneseq
    %v2025 = vshrl.u32 %v2024, 7
    %v2026 = vsub.s32 %v2023, %v2025
    %v2027 = vrot.slane %v2013, %v2026
    %v2028 = vcombine.low %v2003, %v2011
    %v2029 = vcombine.high %v2003, %v2011
    %v2031 = vunpack.c.l.s4 1934713408
    %v2032 = vunpack.c.0.s8 %v2031
    %v2033 = vlaneseq
    %v2034 = vshrl.u32 %v2033, 7
    %v2035 = vsub.s32 %v2032, %v2034
    %v2036 = vrot.slane %v2028, %v2035
    %v2038 = vunpack.c.l.s4 1934713408
    %v2039 = vunpack.c.0.s8 %v2038
    %v2040 = vlaneseq
    %v2041 = vshrl.u32 %v2040, 7
    %v2042 = vsub.s32 %v2039, %v2041
    %v2043 = vrot.slane %v2029, %v2042
    %v2044 = vcombine.low %v2020, %v2036
    %v2045 = vcombine.high %v2020, %v2036
    %v2046 = vcombine.low %v2027, %v2043
    %v2047 = vcombine.high %v2027, %v2043
    %v2048 = vcombine.low %v1816, %v1823
    %v2050 = vunpack.c.l.s4 1983009808
    %v2051 = vunpack.c.0.s8 %v2050
    %v2052 = vlaneseq
    %v2053 = vshrl.u32 %v2052, 7
    %v2054 = vsub.s32 %v2051, %v2053
    %v2055 = vrot.slane %v2048, %v2054
    %v2056 = vcombine.low %v1840, %v1841
    %v2058 = vunpack.c.l.s4 1983009808
    %v2059 = vunpack.c.0.s8 %v2058
    %v2060 = vlaneseq
    %v2061 = vshrl.u32 %v2060, 7
    %v2062 = vsub.s32 %v2059, %v2061
    %v2063 = vrot.slane %v2056, %v2062
    %v2064 = vcombine.low %v1832, %v1839
    %v2066 = vunpack.c.l.s4 1983009808
    %v2067 = vunpack.c.0.s8 %v2066
    %v2068 = vlaneseq
    %v2069 = vshrl.u32 %v2068, 7
    %v2070 = vsub.s32 %v2067, %v2069
    %v2071 = vrot.slane %v2064, %v2070
    %v2072 = vcombine.low %v1842, %v1843
    %v2074 = vunpack.c.l.s4 1983009808
    %v2075 = vunpack.c.0.s8 %v2074
    %v2076 = vlaneseq
    %v2077 = vshrl.u32 %v2076, 7
    %v2078 = vsub.s32 %v2075, %v2077
    %v2079 = vrot.slane %v2072, %v2078
    %v2080 = vcombine.low %v2055, %v2063
    %v2081 = vcombine.high %v2055, %v2063
    %v2083 = vunpack.c.l.s4 1934713408
    %v2084 = vunpack.c.0.s8 %v2083
    %v2085 = vlaneseq
    %v2086 = vshrl.u32 %v2085, 7
    %v2087 = vsub.s32 %v2084, %v2086
    %v2088 = vrot.slane %v2080, %v2087
    %v2090 = vunpack.c.l.s4 1934713408
    %v2091 = vunpack.c.0.s8 %v2090
    %v2092 = vlaneseq
    %v2093 = vshrl.u32 %v2092, 7
    %v2094 = vsub.s32 %v2091, %v2093
    %v2095 = vrot.slane %v2081, %v2094
    %v2096 = vcombine.low %v2071, %v2079
    %v2097 = vcombine.high %v2071, %v2079
    %v2099 = vunpack.c.l.s4 1934713408
    %v2100 = vunpack.c.0.s8 %v2099
    %v2101 = vlaneseq
    %v2102 = vshrl.u32 %v2101, 7
    %v2103 = vsub.s32 %v2100, %v2102
    %v2104 = vrot.slane %v2096, %v2103
    %v2106 = vunpack.c.l.s4 1934713408
    %v2107 = vunpack.c.0.s8 %v2106
    %v2108 = vlaneseq
    %v2109 = vshrl.u32 %v2108, 7
    %v2110 = vsub.s32 %v2107, %v2109
    %v2111 = vrot.slane %v2097, %v2110
    %v2112 = vcombine.low %v2088, %v2104
    %v2113 = vcombine.high %v2088, %v2104
    %v2114 = vcombine.low %v2095, %v2111
    %v2115 = vcombine.high %v2095, %v2111
    %v2116 = vpack.c.bf16 %v1908, %v1908
    %v2117 = vpack.c.bf16 %v1909, %v1909
    %v2118 = vpack.c.bf16 %v1910, %v1910
    %v2119 = vpack.c.bf16 %v1911, %v1911
    %v2120 = vpack.c.bf16 %v1976, %v1976
    %v2121 = vpack.c.bf16 %v1977, %v1977
    %v2122 = vpack.c.bf16 %v1978, %v1978
    %v2123 = vpack.c.bf16 %v1979, %v1979
    %v2124 = vpack.c.bf16 %v2044, %v2044
    %v2125 = vpack.c.bf16 %v2045, %v2045
    %v2126 = vpack.c.bf16 %v2046, %v2046
    %v2127 = vpack.c.bf16 %v2047, %v2047
    %v2128 = vpack.c.bf16 %v2112, %v2112
    %v2129 = vpack.c.bf16 %v2113, %v2113
    %v2130 = vpack.c.bf16 %v2114, %v2114
    %v2131 = vpack.c.bf16 %v2115, %v2115
    %vm2132 = vcmask 64512
    %v2134 = vsel %vm2132, %v900, 0
    %v2137 = vsel %vm2132, %v1508, 0
    %2139 = vmatprep.subr.bf16.mxu0 0
    %2140 = vmatpush1.bf16.xpose.msra.mxu0 %v2137
    %2141 = vmatprep.subr.bf16.mxu0 0
    %2142 = vmatpush1.bf16.xpose.msra.mxu0 0
    %2143 = vmatprep.subr.bf16.mxu0 0
    %2144 = vmatpush1.bf16.xpose.msra.mxu0 0
    %2145 = vmatprep.subr.bf16.mxu0 0
    %2146 = vmatpush1.bf16.xpose.msra.mxu0 0
    %2147 = vmatprep.subr.bf16.mxu0 0
    %2148 = vmatpush1.bf16.xpose.msra.mxu0 0
    %2149 = vmatprep.subr.bf16.mxu0 0
    %2150 = vmatpush1.bf16.xpose.msra.mxu0 0
    %2151 = vmatprep.subr.bf16.mxu0 0
    %2152 = vmatpush1.bf16.xpose.msra.mxu0 0
    %2153 = vmatprep.subr.bf16.mxu0 0
    %2154 = vmatpush1.bf16.xpose.msra.mxu0 0
    %2155 = vmatprep.subr.bf16.mxu0 0
    %2156 = vmatpush1.bf16.xpose.msra.mxu0 0
    %2157 = vmatprep.subr.bf16.mxu0 0
    %2158 = vmatpush1.bf16.xpose.msra.mxu0 0
    %2159 = vmatprep.subr.bf16.mxu0 0
    %2160 = vmatpush1.bf16.xpose.msra.mxu0 0
    %2161 = vmatprep.subr.bf16.mxu0 0
    %2162 = vmatpush1.bf16.xpose.msra.mxu0 0
    %2163 = vmatprep.subr.bf16.mxu0 0
    %2164 = vmatpush1.bf16.xpose.msra.mxu0 0
    %2165 = vmatprep.subr.bf16.mxu0 0
    %2166 = vmatpush1.bf16.xpose.msra.mxu0 0
    %2167 = vmatprep.subr.bf16.mxu0 0
    %2168 = vmatpush1.bf16.xpose.msra.mxu0 0
    %2169 = vmatprep.subr.bf16.mxu0 0
    %2170 = vmatpush1.bf16.xpose.msra.mxu0 0
    %2171 = vmatprep.mubr.bf16.mxu0 0
    %2172 = vmatmul.mubr.bf16.gmra.mrb[0].mxu0 %v2134
    %v2173 = vpop.f32.mrb[0].mxu0
    %v2174 = vadd.f32 0.0, %v2173
    %v2175 = vpop.f32.mrb[0].mxu0
    %v2176 = vpop.f32.mrb[0].mxu0
    %v2177 = vpop.f32.mrb[0].mxu0
    %2178 = vdwg.mxu0
    %v2180 = vsel %vm2132, %v901, 0
    %v2183 = vsel %vm2132, %v1509, 0
    %2185 = vmatprep.subr.bf16.mxu0 0
    %2186 = vmatpush1.bf16.xpose.msra.mxu0 %v2183
    %2187 = vmatprep.subr.bf16.mxu0 0
    %2188 = vmatpush1.bf16.xpose.msra.mxu0 0
    %2189 = vmatprep.subr.bf16.mxu0 0
    %2190 = vmatpush1.bf16.xpose.msra.mxu0 0
    %2191 = vmatprep.subr.bf16.mxu0 0
    %2192 = vmatpush1.bf16.xpose.msra.mxu0 0
    %2193 = vmatprep.subr.bf16.mxu0 0
    %2194 = vmatpush1.bf16.xpose.msra.mxu0 0
    %2195 = vmatprep.subr.bf16.mxu0 0
    %2196 = vmatpush1.bf16.xpose.msra.mxu0 0
    %2197 = vmatprep.subr.bf16.mxu0 0
    %2198 = vmatpush1.bf16.xpose.msra.mxu0 0
    %2199 = vmatprep.subr.bf16.mxu0 0
    %2200 = vmatpush1.bf16.xpose.msra.mxu0 0
    %2201 = vmatprep.subr.bf16.mxu0 0
    %2202 = vmatpush1.bf16.xpose.msra.mxu0 0
    %2203 = vmatprep.subr.bf16.mxu0 0
    %2204 = vmatpush1.bf16.xpose.msra.mxu0 0
    %2205 = vmatprep.subr.bf16.mxu0 0
    %2206 = vmatpush1.bf16.xpose.msra.mxu0 0
    %2207 = vmatprep.subr.bf16.mxu0 0
    %2208 = vmatpush1.bf16.xpose.msra.mxu0 0
    %2209 = vmatprep.subr.bf16.mxu0 0
    %2210 = vmatpush1.bf16.xpose.msra.mxu0 0
    %2211 = vmatprep.subr.bf16.mxu0 0
    %2212 = vmatpush1.bf16.xpose.msra.mxu0 0
    %2213 = vmatprep.subr.bf16.mxu0 0
    %2214 = vmatpush1.bf16.xpose.msra.mxu0 0
    %2215 = vmatprep.subr.bf16.mxu0 0
    %2216 = vmatpush1.bf16.xpose.msra.mxu0 0
    %2217 = vmatprep.mubr.bf16.mxu0 0
    %2218 = vmatmul.mubr.bf16.gmra.mrb[0].mxu0 %v2180
    %v2219 = vpop.f32.mrb[0].mxu0
    %v2220 = vadd.f32 0.0, %v2219
    %v2221 = vpop.f32.mrb[0].mxu0
    %v2222 = vpop.f32.mrb[0].mxu0
    %v2223 = vpop.f32.mrb[0].mxu0
    %2224 = vdwg.mxu0
    %v2226 = vsel %vm2132, %v902, 0
    %v2229 = vsel %vm2132, %v1510, 0
    %2231 = vmatprep.subr.bf16.mxu0 0
    %2232 = vmatpush1.bf16.xpose.msra.mxu0 %v2229
    %2233 = vmatprep.subr.bf16.mxu0 0
    %2234 = vmatpush1.bf16.xpose.msra.mxu0 0
    %2235 = vmatprep.subr.bf16.mxu0 0
    %2236 = vmatpush1.bf16.xpose.msra.mxu0 0
    %2237 = vmatprep.subr.bf16.mxu0 0
    %2238 = vmatpush1.bf16.xpose.msra.mxu0 0
    %2239 = vmatprep.subr.bf16.mxu0 0
    %2240 = vmatpush1.bf16.xpose.msra.mxu0 0
    %2241 = vmatprep.subr.bf16.mxu0 0
    %2242 = vmatpush1.bf16.xpose.msra.mxu0 0
    %2243 = vmatprep.subr.bf16.mxu0 0
    %2244 = vmatpush1.bf16.xpose.msra.mxu0 0
    %2245 = vmatprep.subr.bf16.mxu0 0
    %2246 = vmatpush1.bf16.xpose.msra.mxu0 0
    %2247 = vmatprep.subr.bf16.mxu0 0
    %2248 = vmatpush1.bf16.xpose.msra.mxu0 0
    %2249 = vmatprep.subr.bf16.mxu0 0
    %2250 = vmatpush1.bf16.xpose.msra.mxu0 0
    %2251 = vmatprep.subr.bf16.mxu0 0
    %2252 = vmatpush1.bf16.xpose.msra.mxu0 0
    %2253 = vmatprep.subr.bf16.mxu0 0
    %2254 = vmatpush1.bf16.xpose.msra.mxu0 0
    %2255 = vmatprep.subr.bf16.mxu0 0
    %2256 = vmatpush1.bf16.xpose.msra.mxu0 0
    %2257 = vmatprep.subr.bf16.mxu0 0
    %2258 = vmatpush1.bf16.xpose.msra.mxu0 0
    %2259 = vmatprep.subr.bf16.mxu0 0
    %2260 = vmatpush1.bf16.xpose.msra.mxu0 0
    %2261 = vmatprep.subr.bf16.mxu0 0
    %2262 = vmatpush1.bf16.xpose.msra.mxu0 0
    %2263 = vmatprep.mubr.bf16.mxu0 0
    %2264 = vmatmul.mubr.bf16.gmra.mrb[0].mxu0 %v2226
    %v2265 = vpop.f32.mrb[0].mxu0
    %v2266 = vadd.f32 0.0, %v2265
    %v2267 = vpop.f32.mrb[0].mxu0
    %v2268 = vpop.f32.mrb[0].mxu0
    %v2269 = vpop.f32.mrb[0].mxu0
    %2270 = vdwg.mxu0
    %v2272 = vsel %vm2132, %v903, 0
    %v2275 = vsel %vm2132, %v1511, 0
    %2277 = vmatprep.subr.bf16.mxu0 0
    %2278 = vmatpush1.bf16.xpose.msra.mxu0 %v2275
    %2279 = vmatprep.subr.bf16.mxu0 0
    %2280 = vmatpush1.bf16.xpose.msra.mxu0 0
    %2281 = vmatprep.subr.bf16.mxu0 0
    %2282 = vmatpush1.bf16.xpose.msra.mxu0 0
    %2283 = vmatprep.subr.bf16.mxu0 0
    %2284 = vmatpush1.bf16.xpose.msra.mxu0 0
    %2285 = vmatprep.subr.bf16.mxu0 0
    %2286 = vmatpush1.bf16.xpose.msra.mxu0 0
    %2287 = vmatprep.subr.bf16.mxu0 0
    %2288 = vmatpush1.bf16.xpose.msra.mxu0 0
    %2289 = vmatprep.subr.bf16.mxu0 0
    %2290 = vmatpush1.bf16.xpose.msra.mxu0 0
    %2291 = vmatprep.subr.bf16.mxu0 0
    %2292 = vmatpush1.bf16.xpose.msra.mxu0 0
    %2293 = vmatprep.subr.bf16.mxu0 0
    %2294 = vmatpush1.bf16.xpose.msra.mxu0 0
    %2295 = vmatprep.subr.bf16.mxu0 0
    %2296 = vmatpush1.bf16.xpose.msra.mxu0 0
    %2297 = vmatprep.subr.bf16.mxu0 0
    %2298 = vmatpush1.bf16.xpose.msra.mxu0 0
    %2299 = vmatprep.subr.bf16.mxu0 0
    %2300 = vmatpush1.bf16.xpose.msra.mxu0 0
    %2301 = vmatprep.subr.bf16.mxu0 0
    %2302 = vmatpush1.bf16.xpose.msra.mxu0 0
    %2303 = vmatprep.subr.bf16.mxu0 0
    %2304 = vmatpush1.bf16.xpose.msra.mxu0 0
    %2305 = vmatprep.subr.bf16.mxu0 0
    %2306 = vmatpush1.bf16.xpose.msra.mxu0 0
    %2307 = vmatprep.subr.bf16.mxu0 0
    %2308 = vmatpush1.bf16.xpose.msra.mxu0 0
    %2309 = vmatprep.mubr.bf16.mxu0 0
    %2310 = vmatmul.mubr.bf16.gmra.mrb[0].mxu0 %v2272
    %v2311 = vpop.f32.mrb[0].mxu0
    %v2312 = vadd.f32 0.0, %v2311
    %v2313 = vpop.f32.mrb[0].mxu0
    %v2314 = vpop.f32.mrb[0].mxu0
    %v2315 = vpop.f32.mrb[0].mxu0
    %2316 = vdwg.mxu0
    %v2318 = vsel %vm2132, %v904, 0
    %v2321 = vsel %vm2132, %v1512, 0
    %2323 = vmatprep.subr.bf16.mxu0 0
    %2324 = vmatpush1.bf16.xpose.msra.mxu0 %v2321
    %2325 = vmatprep.subr.bf16.mxu0 0
    %2326 = vmatpush1.bf16.xpose.msra.mxu0 0
    %2327 = vmatprep.subr.bf16.mxu0 0
    %2328 = vmatpush1.bf16.xpose.msra.mxu0 0
    %2329 = vmatprep.subr.bf16.mxu0 0
    %2330 = vmatpush1.bf16.xpose.msra.mxu0 0
    %2331 = vmatprep.subr.bf16.mxu0 0
    %2332 = vmatpush1.bf16.xpose.msra.mxu0 0
    %2333 = vmatprep.subr.bf16.mxu0 0
    %2334 = vmatpush1.bf16.xpose.msra.mxu0 0
    %2335 = vmatprep.subr.bf16.mxu0 0
    %2336 = vmatpush1.bf16.xpose.msra.mxu0 0
    %2337 = vmatprep.subr.bf16.mxu0 0
    %2338 = vmatpush1.bf16.xpose.msra.mxu0 0
    %2339 = vmatprep.subr.bf16.mxu0 0
    %2340 = vmatpush1.bf16.xpose.msra.mxu0 0
    %2341 = vmatprep.subr.bf16.mxu0 0
    %2342 = vmatpush1.bf16.xpose.msra.mxu0 0
    %2343 = vmatprep.subr.bf16.mxu0 0
    %2344 = vmatpush1.bf16.xpose.msra.mxu0 0
    %2345 = vmatprep.subr.bf16.mxu0 0
    %2346 = vmatpush1.bf16.xpose.msra.mxu0 0
    %2347 = vmatprep.subr.bf16.mxu0 0
    %2348 = vmatpush1.bf16.xpose.msra.mxu0 0
    %2349 = vmatprep.subr.bf16.mxu0 0
    %2350 = vmatpush1.bf16.xpose.msra.mxu0 0
    %2351 = vmatprep.subr.bf16.mxu0 0
    %2352 = vmatpush1.bf16.xpose.msra.mxu0 0
    %2353 = vmatprep.subr.bf16.mxu0 0
    %2354 = vmatpush1.bf16.xpose.msra.mxu0 0
    %2355 = vmatprep.mubr.bf16.mxu0 0
    %2356 = vmatmul.mubr.bf16.gmra.mrb[0].mxu0 %v2318
    %v2357 = vpop.f32.mrb[0].mxu0
    %v2358 = vadd.f32 0.0, %v2357
    %v2359 = vpop.f32.mrb[0].mxu0
    %v2360 = vpop.f32.mrb[0].mxu0
    %v2361 = vpop.f32.mrb[0].mxu0
    %2362 = vdwg.mxu0
    %v2364 = vsel %vm2132, %v905, 0
    %v2367 = vsel %vm2132, %v1513, 0
    %2369 = vmatprep.subr.bf16.mxu0 0
    %2370 = vmatpush1.bf16.xpose.msra.mxu0 %v2367
    %2371 = vmatprep.subr.bf16.mxu0 0
    %2372 = vmatpush1.bf16.xpose.msra.mxu0 0
    %2373 = vmatprep.subr.bf16.mxu0 0
    %2374 = vmatpush1.bf16.xpose.msra.mxu0 0
    %2375 = vmatprep.subr.bf16.mxu0 0
    %2376 = vmatpush1.bf16.xpose.msra.mxu0 0
    %2377 = vmatprep.subr.bf16.mxu0 0
    %2378 = vmatpush1.bf16.xpose.msra.mxu0 0
    %2379 = vmatprep.subr.bf16.mxu0 0
    %2380 = vmatpush1.bf16.xpose.msra.mxu0 0
    %2381 = vmatprep.subr.bf16.mxu0 0
    %2382 = vmatpush1.bf16.xpose.msra.mxu0 0
    %2383 = vmatprep.subr.bf16.mxu0 0
    %2384 = vmatpush1.bf16.xpose.msra.mxu0 0
    %2385 = vmatprep.subr.bf16.mxu0 0
    %2386 = vmatpush1.bf16.xpose.msra.mxu0 0
    %2387 = vmatprep.subr.bf16.mxu0 0
    %2388 = vmatpush1.bf16.xpose.msra.mxu0 0
    %2389 = vmatprep.subr.bf16.mxu0 0
    %2390 = vmatpush1.bf16.xpose.msra.mxu0 0
    %2391 = vmatprep.subr.bf16.mxu0 0
    %2392 = vmatpush1.bf16.xpose.msra.mxu0 0
    %2393 = vmatprep.subr.bf16.mxu0 0
    %2394 = vmatpush1.bf16.xpose.msra.mxu0 0
    %2395 = vmatprep.subr.bf16.mxu0 0
    %2396 = vmatpush1.bf16.xpose.msra.mxu0 0
    %2397 = vmatprep.subr.bf16.mxu0 0
    %2398 = vmatpush1.bf16.xpose.msra.mxu0 0
    %2399 = vmatprep.subr.bf16.mxu0 0
    %2400 = vmatpush1.bf16.xpose.msra.mxu0 0
    %2401 = vmatprep.mubr.bf16.mxu0 0
    %2402 = vmatmul.mubr.bf16.gmra.mrb[0].mxu0 %v2364
    %v2403 = vpop.f32.mrb[0].mxu0
    %v2404 = vadd.f32 0.0, %v2403
    %v2405 = vpop.f32.mrb[0].mxu0
    %v2406 = vpop.f32.mrb[0].mxu0
    %v2407 = vpop.f32.mrb[0].mxu0
    %2408 = vdwg.mxu0
    %v2410 = vsel %vm2132, %v906, 0
    %v2413 = vsel %vm2132, %v1514, 0
    %2415 = vmatprep.subr.bf16.mxu0 0
    %2416 = vmatpush1.bf16.xpose.msra.mxu0 %v2413
    %2417 = vmatprep.subr.bf16.mxu0 0
    %2418 = vmatpush1.bf16.xpose.msra.mxu0 0
    %2419 = vmatprep.subr.bf16.mxu0 0
    %2420 = vmatpush1.bf16.xpose.msra.mxu0 0
    %2421 = vmatprep.subr.bf16.mxu0 0
    %2422 = vmatpush1.bf16.xpose.msra.mxu0 0
    %2423 = vmatprep.subr.bf16.mxu0 0
    %2424 = vmatpush1.bf16.xpose.msra.mxu0 0
    %2425 = vmatprep.subr.bf16.mxu0 0
    %2426 = vmatpush1.bf16.xpose.msra.mxu0 0
    %2427 = vmatprep.subr.bf16.mxu0 0
    %2428 = vmatpush1.bf16.xpose.msra.mxu0 0
    %2429 = vmatprep.subr.bf16.mxu0 0
    %2430 = vmatpush1.bf16.xpose.msra.mxu0 0
    %2431 = vmatprep.subr.bf16.mxu0 0
    %2432 = vmatpush1.bf16.xpose.msra.mxu0 0
    %2433 = vmatprep.subr.bf16.mxu0 0
    %2434 = vmatpush1.bf16.xpose.msra.mxu0 0
    %2435 = vmatprep.subr.bf16.mxu0 0
    %2436 = vmatpush1.bf16.xpose.msra.mxu0 0
    %2437 = vmatprep.subr.bf16.mxu0 0
    %2438 = vmatpush1.bf16.xpose.msra.mxu0 0
    %2439 = vmatprep.subr.bf16.mxu0 0
    %2440 = vmatpush1.bf16.xpose.msra.mxu0 0
    %2441 = vmatprep.subr.bf16.mxu0 0
    %2442 = vmatpush1.bf16.xpose.msra.mxu0 0
    %2443 = vmatprep.subr.bf16.mxu0 0
    %2444 = vmatpush1.bf16.xpose.msra.mxu0 0
    %2445 = vmatprep.subr.bf16.mxu0 0
    %2446 = vmatpush1.bf16.xpose.msra.mxu0 0
    %2447 = vmatprep.mubr.bf16.mxu0 0
    %2448 = vmatmul.mubr.bf16.gmra.mrb[0].mxu0 %v2410
    %v2449 = vpop.f32.mrb[0].mxu0
    %v2450 = vadd.f32 0.0, %v2449
    %v2451 = vpop.f32.mrb[0].mxu0
    %v2452 = vpop.f32.mrb[0].mxu0
    %v2453 = vpop.f32.mrb[0].mxu0
    %2454 = vdwg.mxu0
    %v2456 = vsel %vm2132, %v907, 0
    %v2459 = vsel %vm2132, %v1515, 0
    %2461 = vmatprep.subr.bf16.mxu0 0
    %2462 = vmatpush1.bf16.xpose.msra.mxu0 %v2459
    %2463 = vmatprep.subr.bf16.mxu0 0
    %2464 = vmatpush1.bf16.xpose.msra.mxu0 0
    %2465 = vmatprep.subr.bf16.mxu0 0
    %2466 = vmatpush1.bf16.xpose.msra.mxu0 0
    %2467 = vmatprep.subr.bf16.mxu0 0
    %2468 = vmatpush1.bf16.xpose.msra.mxu0 0
    %2469 = vmatprep.subr.bf16.mxu0 0
    %2470 = vmatpush1.bf16.xpose.msra.mxu0 0
    %2471 = vmatprep.subr.bf16.mxu0 0
    %2472 = vmatpush1.bf16.xpose.msra.mxu0 0
    %2473 = vmatprep.subr.bf16.mxu0 0
    %2474 = vmatpush1.bf16.xpose.msra.mxu0 0
    %2475 = vmatprep.subr.bf16.mxu0 0
    %2476 = vmatpush1.bf16.xpose.msra.mxu0 0
    %2477 = vmatprep.subr.bf16.mxu0 0
    %2478 = vmatpush1.bf16.xpose.msra.mxu0 0
    %2479 = vmatprep.subr.bf16.mxu0 0
    %2480 = vmatpush1.bf16.xpose.msra.mxu0 0
    %2481 = vmatprep.subr.bf16.mxu0 0
    %2482 = vmatpush1.bf16.xpose.msra.mxu0 0
    %2483 = vmatprep.subr.bf16.mxu0 0
    %2484 = vmatpush1.bf16.xpose.msra.mxu0 0
    %2485 = vmatprep.subr.bf16.mxu0 0
    %2486 = vmatpush1.bf16.xpose.msra.mxu0 0
    %2487 = vmatprep.subr.bf16.mxu0 0
    %2488 = vmatpush1.bf16.xpose.msra.mxu0 0
    %2489 = vmatprep.subr.bf16.mxu0 0
    %2490 = vmatpush1.bf16.xpose.msra.mxu0 0
    %2491 = vmatprep.subr.bf16.mxu0 0
    %2492 = vmatpush1.bf16.xpose.msra.mxu0 0
    %2493 = vmatprep.mubr.bf16.mxu0 0
    %2494 = vmatmul.mubr.bf16.gmra.mrb[0].mxu0 %v2456
    %v2495 = vpop.f32.mrb[0].mxu0
    %v2496 = vadd.f32 0.0, %v2495
    %v2497 = vpop.f32.mrb[0].mxu0
    %v2498 = vpop.f32.mrb[0].mxu0
    %v2499 = vpop.f32.mrb[0].mxu0
    %2500 = vdwg.mxu0
    %v2502 = vsel %vm2132, %v908, 0
    %v2505 = vsel %vm2132, %v1516, 0
    %2507 = vmatprep.subr.bf16.mxu0 0
    %2508 = vmatpush1.bf16.xpose.msra.mxu0 %v2505
    %2509 = vmatprep.subr.bf16.mxu0 0
    %2510 = vmatpush1.bf16.xpose.msra.mxu0 0
    %2511 = vmatprep.subr.bf16.mxu0 0
    %2512 = vmatpush1.bf16.xpose.msra.mxu0 0
    %2513 = vmatprep.subr.bf16.mxu0 0
    %2514 = vmatpush1.bf16.xpose.msra.mxu0 0
    %2515 = vmatprep.subr.bf16.mxu0 0
    %2516 = vmatpush1.bf16.xpose.msra.mxu0 0
    %2517 = vmatprep.subr.bf16.mxu0 0
    %2518 = vmatpush1.bf16.xpose.msra.mxu0 0
    %2519 = vmatprep.subr.bf16.mxu0 0
    %2520 = vmatpush1.bf16.xpose.msra.mxu0 0
    %2521 = vmatprep.subr.bf16.mxu0 0
    %2522 = vmatpush1.bf16.xpose.msra.mxu0 0
    %2523 = vmatprep.subr.bf16.mxu0 0
    %2524 = vmatpush1.bf16.xpose.msra.mxu0 0
    %2525 = vmatprep.subr.bf16.mxu0 0
    %2526 = vmatpush1.bf16.xpose.msra.mxu0 0
    %2527 = vmatprep.subr.bf16.mxu0 0
    %2528 = vmatpush1.bf16.xpose.msra.mxu0 0
    %2529 = vmatprep.subr.bf16.mxu0 0
    %2530 = vmatpush1.bf16.xpose.msra.mxu0 0
    %2531 = vmatprep.subr.bf16.mxu0 0
    %2532 = vmatpush1.bf16.xpose.msra.mxu0 0
    %2533 = vmatprep.subr.bf16.mxu0 0
    %2534 = vmatpush1.bf16.xpose.msra.mxu0 0
    %2535 = vmatprep.subr.bf16.mxu0 0
    %2536 = vmatpush1.bf16.xpose.msra.mxu0 0
    %2537 = vmatprep.subr.bf16.mxu0 0
    %2538 = vmatpush1.bf16.xpose.msra.mxu0 0
    %2539 = vmatprep.mubr.bf16.mxu0 0
    %2540 = vmatmul.mubr.bf16.gmra.mrb[0].mxu0 %v2502
    %v2541 = vpop.f32.mrb[0].mxu0
    %v2542 = vadd.f32 0.0, %v2541
    %v2543 = vpop.f32.mrb[0].mxu0
    %v2544 = vpop.f32.mrb[0].mxu0
    %v2545 = vpop.f32.mrb[0].mxu0
    %2546 = vdwg.mxu0
    %v2548 = vsel %vm2132, %v909, 0
    %v2551 = vsel %vm2132, %v1517, 0
    %2553 = vmatprep.subr.bf16.mxu0 0
    %2554 = vmatpush1.bf16.xpose.msra.mxu0 %v2551
    %2555 = vmatprep.subr.bf16.mxu0 0
    %2556 = vmatpush1.bf16.xpose.msra.mxu0 0
    %2557 = vmatprep.subr.bf16.mxu0 0
    %2558 = vmatpush1.bf16.xpose.msra.mxu0 0
    %2559 = vmatprep.subr.bf16.mxu0 0
    %2560 = vmatpush1.bf16.xpose.msra.mxu0 0
    %2561 = vmatprep.subr.bf16.mxu0 0
    %2562 = vmatpush1.bf16.xpose.msra.mxu0 0
    %2563 = vmatprep.subr.bf16.mxu0 0
    %2564 = vmatpush1.bf16.xpose.msra.mxu0 0
    %2565 = vmatprep.subr.bf16.mxu0 0
    %2566 = vmatpush1.bf16.xpose.msra.mxu0 0
    %2567 = vmatprep.subr.bf16.mxu0 0
    %2568 = vmatpush1.bf16.xpose.msra.mxu0 0
    %2569 = vmatprep.subr.bf16.mxu0 0
    %2570 = vmatpush1.bf16.xpose.msra.mxu0 0
    %2571 = vmatprep.subr.bf16.mxu0 0
    %2572 = vmatpush1.bf16.xpose.msra.mxu0 0
    %2573 = vmatprep.subr.bf16.mxu0 0
    %2574 = vmatpush1.bf16.xpose.msra.mxu0 0
    %2575 = vmatprep.subr.bf16.mxu0 0
    %2576 = vmatpush1.bf16.xpose.msra.mxu0 0
    %2577 = vmatprep.subr.bf16.mxu0 0
    %2578 = vmatpush1.bf16.xpose.msra.mxu0 0
    %2579 = vmatprep.subr.bf16.mxu0 0
    %2580 = vmatpush1.bf16.xpose.msra.mxu0 0
    %2581 = vmatprep.subr.bf16.mxu0 0
    %2582 = vmatpush1.bf16.xpose.msra.mxu0 0
    %2583 = vmatprep.subr.bf16.mxu0 0
    %2584 = vmatpush1.bf16.xpose.msra.mxu0 0
    %2585 = vmatprep.mubr.bf16.mxu0 0
    %2586 = vmatmul.mubr.bf16.gmra.mrb[0].mxu0 %v2548
    %v2587 = vpop.f32.mrb[0].mxu0
    %v2588 = vadd.f32 0.0, %v2587
    %v2589 = vpop.f32.mrb[0].mxu0
    %v2590 = vpop.f32.mrb[0].mxu0
    %v2591 = vpop.f32.mrb[0].mxu0
    %2592 = vdwg.mxu0
    %v2594 = vsel %vm2132, %v910, 0
    %v2597 = vsel %vm2132, %v1518, 0
    %2599 = vmatprep.subr.bf16.mxu0 0
    %2600 = vmatpush1.bf16.xpose.msra.mxu0 %v2597
    %2601 = vmatprep.subr.bf16.mxu0 0
    %2602 = vmatpush1.bf16.xpose.msra.mxu0 0
    %2603 = vmatprep.subr.bf16.mxu0 0
    %2604 = vmatpush1.bf16.xpose.msra.mxu0 0
    %2605 = vmatprep.subr.bf16.mxu0 0
    %2606 = vmatpush1.bf16.xpose.msra.mxu0 0
    %2607 = vmatprep.subr.bf16.mxu0 0
    %2608 = vmatpush1.bf16.xpose.msra.mxu0 0
    %2609 = vmatprep.subr.bf16.mxu0 0
    %2610 = vmatpush1.bf16.xpose.msra.mxu0 0
    %2611 = vmatprep.subr.bf16.mxu0 0
    %2612 = vmatpush1.bf16.xpose.msra.mxu0 0
    %2613 = vmatprep.subr.bf16.mxu0 0
    %2614 = vmatpush1.bf16.xpose.msra.mxu0 0
    %2615 = vmatprep.subr.bf16.mxu0 0
    %2616 = vmatpush1.bf16.xpose.msra.mxu0 0
    %2617 = vmatprep.subr.bf16.mxu0 0
    %2618 = vmatpush1.bf16.xpose.msra.mxu0 0
    %2619 = vmatprep.subr.bf16.mxu0 0
    %2620 = vmatpush1.bf16.xpose.msra.mxu0 0
    %2621 = vmatprep.subr.bf16.mxu0 0
    %2622 = vmatpush1.bf16.xpose.msra.mxu0 0
    %2623 = vmatprep.subr.bf16.mxu0 0
    %2624 = vmatpush1.bf16.xpose.msra.mxu0 0
    %2625 = vmatprep.subr.bf16.mxu0 0
    %2626 = vmatpush1.bf16.xpose.msra.mxu0 0
    %2627 = vmatprep.subr.bf16.mxu0 0
    %2628 = vmatpush1.bf16.xpose.msra.mxu0 0
    %2629 = vmatprep.subr.bf16.mxu0 0
    %2630 = vmatpush1.bf16.xpose.msra.mxu0 0
    %2631 = vmatprep.mubr.bf16.mxu0 0
    %2632 = vmatmul.mubr.bf16.gmra.mrb[0].mxu0 %v2594
    %v2633 = vpop.f32.mrb[0].mxu0
    %v2634 = vadd.f32 0.0, %v2633
    %v2635 = vpop.f32.mrb[0].mxu0
    %v2636 = vpop.f32.mrb[0].mxu0
    %v2637 = vpop.f32.mrb[0].mxu0
    %2638 = vdwg.mxu0
    %v2640 = vsel %vm2132, %v911, 0
    %v2643 = vsel %vm2132, %v1519, 0
    %2645 = vmatprep.subr.bf16.mxu0 0
    %2646 = vmatpush1.bf16.xpose.msra.mxu0 %v2643
    %2647 = vmatprep.subr.bf16.mxu0 0
    %2648 = vmatpush1.bf16.xpose.msra.mxu0 0
    %2649 = vmatprep.subr.bf16.mxu0 0
    %2650 = vmatpush1.bf16.xpose.msra.mxu0 0
    %2651 = vmatprep.subr.bf16.mxu0 0
    %2652 = vmatpush1.bf16.xpose.msra.mxu0 0
    %2653 = vmatprep.subr.bf16.mxu0 0
    %2654 = vmatpush1.bf16.xpose.msra.mxu0 0
    %2655 = vmatprep.subr.bf16.mxu0 0
    %2656 = vmatpush1.bf16.xpose.msra.mxu0 0
    %2657 = vmatprep.subr.bf16.mxu0 0
    %2658 = vmatpush1.bf16.xpose.msra.mxu0 0
    %2659 = vmatprep.subr.bf16.mxu0 0
    %2660 = vmatpush1.bf16.xpose.msra.mxu0 0
    %2661 = vmatprep.subr.bf16.mxu0 0
    %2662 = vmatpush1.bf16.xpose.msra.mxu0 0
    %2663 = vmatprep.subr.bf16.mxu0 0
    %2664 = vmatpush1.bf16.xpose.msra.mxu0 0
    %2665 = vmatprep.subr.bf16.mxu0 0
    %2666 = vmatpush1.bf16.xpose.msra.mxu0 0
    %2667 = vmatprep.subr.bf16.mxu0 0
    %2668 = vmatpush1.bf16.xpose.msra.mxu0 0
    %2669 = vmatprep.subr.bf16.mxu0 0
    %2670 = vmatpush1.bf16.xpose.msra.mxu0 0
    %2671 = vmatprep.subr.bf16.mxu0 0
    %2672 = vmatpush1.bf16.xpose.msra.mxu0 0
    %2673 = vmatprep.subr.bf16.mxu0 0
    %2674 = vmatpush1.bf16.xpose.msra.mxu0 0
    %2675 = vmatprep.subr.bf16.mxu0 0
    %2676 = vmatpush1.bf16.xpose.msra.mxu0 0
    %2677 = vmatprep.mubr.bf16.mxu0 0
    %2678 = vmatmul.mubr.bf16.gmra.mrb[0].mxu0 %v2640
    %v2679 = vpop.f32.mrb[0].mxu0
    %v2680 = vadd.f32 0.0, %v2679
    %v2681 = vpop.f32.mrb[0].mxu0
    %v2682 = vpop.f32.mrb[0].mxu0
    %v2683 = vpop.f32.mrb[0].mxu0
    %2684 = vdwg.mxu0
    %v2686 = vsel %vm2132, %v912, 0
    %v2689 = vsel %vm2132, %v1520, 0
    %2691 = vmatprep.subr.bf16.mxu0 0
    %2692 = vmatpush1.bf16.xpose.msra.mxu0 %v2689
    %2693 = vmatprep.subr.bf16.mxu0 0
    %2694 = vmatpush1.bf16.xpose.msra.mxu0 0
    %2695 = vmatprep.subr.bf16.mxu0 0
    %2696 = vmatpush1.bf16.xpose.msra.mxu0 0
    %2697 = vmatprep.subr.bf16.mxu0 0
    %2698 = vmatpush1.bf16.xpose.msra.mxu0 0
    %2699 = vmatprep.subr.bf16.mxu0 0
    %2700 = vmatpush1.bf16.xpose.msra.mxu0 0
    %2701 = vmatprep.subr.bf16.mxu0 0
    %2702 = vmatpush1.bf16.xpose.msra.mxu0 0
    %2703 = vmatprep.subr.bf16.mxu0 0
    %2704 = vmatpush1.bf16.xpose.msra.mxu0 0
    %2705 = vmatprep.subr.bf16.mxu0 0
    %2706 = vmatpush1.bf16.xpose.msra.mxu0 0
    %2707 = vmatprep.subr.bf16.mxu0 0
    %2708 = vmatpush1.bf16.xpose.msra.mxu0 0
    %2709 = vmatprep.subr.bf16.mxu0 0
    %2710 = vmatpush1.bf16.xpose.msra.mxu0 0
    %2711 = vmatprep.subr.bf16.mxu0 0
    %2712 = vmatpush1.bf16.xpose.msra.mxu0 0
    %2713 = vmatprep.subr.bf16.mxu0 0
    %2714 = vmatpush1.bf16.xpose.msra.mxu0 0
    %2715 = vmatprep.subr.bf16.mxu0 0
    %2716 = vmatpush1.bf16.xpose.msra.mxu0 0
    %2717 = vmatprep.subr.bf16.mxu0 0
    %2718 = vmatpush1.bf16.xpose.msra.mxu0 0
    %2719 = vmatprep.subr.bf16.mxu0 0
    %2720 = vmatpush1.bf16.xpose.msra.mxu0 0
    %2721 = vmatprep.subr.bf16.mxu0 0
    %2722 = vmatpush1.bf16.xpose.msra.mxu0 0
    %2723 = vmatprep.mubr.bf16.mxu0 0
    %2724 = vmatmul.mubr.bf16.gmra.mrb[0].mxu0 %v2686
    %v2725 = vpop.f32.mrb[0].mxu0
    %v2726 = vadd.f32 0.0, %v2725
    %v2727 = vpop.f32.mrb[0].mxu0
    %v2728 = vpop.f32.mrb[0].mxu0
    %v2729 = vpop.f32.mrb[0].mxu0
    %2730 = vdwg.mxu0
    %v2732 = vsel %vm2132, %v913, 0
    %v2735 = vsel %vm2132, %v1521, 0
    %2737 = vmatprep.subr.bf16.mxu0 0
    %2738 = vmatpush1.bf16.xpose.msra.mxu0 %v2735
    %2739 = vmatprep.subr.bf16.mxu0 0
    %2740 = vmatpush1.bf16.xpose.msra.mxu0 0
    %2741 = vmatprep.subr.bf16.mxu0 0
    %2742 = vmatpush1.bf16.xpose.msra.mxu0 0
    %2743 = vmatprep.subr.bf16.mxu0 0
    %2744 = vmatpush1.bf16.xpose.msra.mxu0 0
    %2745 = vmatprep.subr.bf16.mxu0 0
    %2746 = vmatpush1.bf16.xpose.msra.mxu0 0
    %2747 = vmatprep.subr.bf16.mxu0 0
    %2748 = vmatpush1.bf16.xpose.msra.mxu0 0
    %2749 = vmatprep.subr.bf16.mxu0 0
    %2750 = vmatpush1.bf16.xpose.msra.mxu0 0
    %2751 = vmatprep.subr.bf16.mxu0 0
    %2752 = vmatpush1.bf16.xpose.msra.mxu0 0
    %2753 = vmatprep.subr.bf16.mxu0 0
    %2754 = vmatpush1.bf16.xpose.msra.mxu0 0
    %2755 = vmatprep.subr.bf16.mxu0 0
    %2756 = vmatpush1.bf16.xpose.msra.mxu0 0
    %2757 = vmatprep.subr.bf16.mxu0 0
    %2758 = vmatpush1.bf16.xpose.msra.mxu0 0
    %2759 = vmatprep.subr.bf16.mxu0 0
    %2760 = vmatpush1.bf16.xpose.msra.mxu0 0
    %2761 = vmatprep.subr.bf16.mxu0 0
    %2762 = vmatpush1.bf16.xpose.msra.mxu0 0
    %2763 = vmatprep.subr.bf16.mxu0 0
    %2764 = vmatpush1.bf16.xpose.msra.mxu0 0
    %2765 = vmatprep.subr.bf16.mxu0 0
    %2766 = vmatpush1.bf16.xpose.msra.mxu0 0
    %2767 = vmatprep.subr.bf16.mxu0 0
    %2768 = vmatpush1.bf16.xpose.msra.mxu0 0
    %2769 = vmatprep.mubr.bf16.mxu0 0
    %2770 = vmatmul.mubr.bf16.gmra.mrb[0].mxu0 %v2732
    %v2771 = vpop.f32.mrb[0].mxu0
    %v2772 = vadd.f32 0.0, %v2771
    %v2773 = vpop.f32.mrb[0].mxu0
    %v2774 = vpop.f32.mrb[0].mxu0
    %v2775 = vpop.f32.mrb[0].mxu0
    %2776 = vdwg.mxu0
    %v2778 = vsel %vm2132, %v914, 0
    %v2781 = vsel %vm2132, %v1522, 0
    %2783 = vmatprep.subr.bf16.mxu0 0
    %2784 = vmatpush1.bf16.xpose.msra.mxu0 %v2781
    %2785 = vmatprep.subr.bf16.mxu0 0
    %2786 = vmatpush1.bf16.xpose.msra.mxu0 0
    %2787 = vmatprep.subr.bf16.mxu0 0
    %2788 = vmatpush1.bf16.xpose.msra.mxu0 0
    %2789 = vmatprep.subr.bf16.mxu0 0
    %2790 = vmatpush1.bf16.xpose.msra.mxu0 0
    %2791 = vmatprep.subr.bf16.mxu0 0
    %2792 = vmatpush1.bf16.xpose.msra.mxu0 0
    %2793 = vmatprep.subr.bf16.mxu0 0
    %2794 = vmatpush1.bf16.xpose.msra.mxu0 0
    %2795 = vmatprep.subr.bf16.mxu0 0
    %2796 = vmatpush1.bf16.xpose.msra.mxu0 0
    %2797 = vmatprep.subr.bf16.mxu0 0
    %2798 = vmatpush1.bf16.xpose.msra.mxu0 0
    %2799 = vmatprep.subr.bf16.mxu0 0
    %2800 = vmatpush1.bf16.xpose.msra.mxu0 0
    %2801 = vmatprep.subr.bf16.mxu0 0
    %2802 = vmatpush1.bf16.xpose.msra.mxu0 0
    %2803 = vmatprep.subr.bf16.mxu0 0
    %2804 = vmatpush1.bf16.xpose.msra.mxu0 0
    %2805 = vmatprep.subr.bf16.mxu0 0
    %2806 = vmatpush1.bf16.xpose.msra.mxu0 0
    %2807 = vmatprep.subr.bf16.mxu0 0
    %2808 = vmatpush1.bf16.xpose.msra.mxu0 0
    %2809 = vmatprep.subr.bf16.mxu0 0
    %2810 = vmatpush1.bf16.xpose.msra.mxu0 0
    %2811 = vmatprep.subr.bf16.mxu0 0
    %2812 = vmatpush1.bf16.xpose.msra.mxu0 0
    %2813 = vmatprep.subr.bf16.mxu0 0
    %2814 = vmatpush1.bf16.xpose.msra.mxu0 0
    %2815 = vmatprep.mubr.bf16.mxu0 0
    %2816 = vmatmul.mubr.bf16.gmra.mrb[0].mxu0 %v2778
    %v2817 = vpop.f32.mrb[0].mxu0
    %v2818 = vadd.f32 0.0, %v2817
    %v2819 = vpop.f32.mrb[0].mxu0
    %v2820 = vpop.f32.mrb[0].mxu0
    %v2821 = vpop.f32.mrb[0].mxu0
    %2822 = vdwg.mxu0
    %v2824 = vsel %vm2132, %v915, 0
    %v2827 = vsel %vm2132, %v1523, 0
    %2829 = vmatprep.subr.bf16.mxu0 0
    %2830 = vmatpush1.bf16.xpose.msra.mxu0 %v2827
    %2831 = vmatprep.subr.bf16.mxu0 0
    %2832 = vmatpush1.bf16.xpose.msra.mxu0 0
    %2833 = vmatprep.subr.bf16.mxu0 0
    %2834 = vmatpush1.bf16.xpose.msra.mxu0 0
    %2835 = vmatprep.subr.bf16.mxu0 0
    %2836 = vmatpush1.bf16.xpose.msra.mxu0 0
    %2837 = vmatprep.subr.bf16.mxu0 0
    %2838 = vmatpush1.bf16.xpose.msra.mxu0 0
    %2839 = vmatprep.subr.bf16.mxu0 0
    %2840 = vmatpush1.bf16.xpose.msra.mxu0 0
    %2841 = vmatprep.subr.bf16.mxu0 0
    %2842 = vmatpush1.bf16.xpose.msra.mxu0 0
    %2843 = vmatprep.subr.bf16.mxu0 0
    %2844 = vmatpush1.bf16.xpose.msra.mxu0 0
    %2845 = vmatprep.subr.bf16.mxu0 0
    %2846 = vmatpush1.bf16.xpose.msra.mxu0 0
    %2847 = vmatprep.subr.bf16.mxu0 0
    %2848 = vmatpush1.bf16.xpose.msra.mxu0 0
    %2849 = vmatprep.subr.bf16.mxu0 0
    %2850 = vmatpush1.bf16.xpose.msra.mxu0 0
    %2851 = vmatprep.subr.bf16.mxu0 0
    %2852 = vmatpush1.bf16.xpose.msra.mxu0 0
    %2853 = vmatprep.subr.bf16.mxu0 0
    %2854 = vmatpush1.bf16.xpose.msra.mxu0 0
    %2855 = vmatprep.subr.bf16.mxu0 0
    %2856 = vmatpush1.bf16.xpose.msra.mxu0 0
    %2857 = vmatprep.subr.bf16.mxu0 0
    %2858 = vmatpush1.bf16.xpose.msra.mxu0 0
    %2859 = vmatprep.subr.bf16.mxu0 0
    %2860 = vmatpush1.bf16.xpose.msra.mxu0 0
    %2861 = vmatprep.mubr.bf16.mxu0 0
    %2862 = vmatmul.mubr.bf16.gmra.mrb[0].mxu0 %v2824
    %v2863 = vpop.f32.mrb[0].mxu0
    %v2864 = vadd.f32 0.0, %v2863
    %v2865 = vpop.f32.mrb[0].mxu0
    %v2866 = vpop.f32.mrb[0].mxu0
    %v2867 = vpop.f32.mrb[0].mxu0
    %2868 = vdwg.mxu0
    %v2869 = vmul.f32 %v2174, 0.35355338
    %v2870 = vmul.f32 %v2220, 0.35355338
    %v2871 = vmul.f32 %v2266, 0.35355338
    %v2872 = vmul.f32 %v2312, 0.35355338
    %v2873 = vmul.f32 %v2358, 0.35355338
    %v2874 = vmul.f32 %v2404, 0.35355338
    %v2875 = vmul.f32 %v2450, 0.35355338
    %v2876 = vmul.f32 %v2496, 0.35355338
    %v2877 = vmul.f32 %v2542, 0.35355338
    %v2878 = vmul.f32 %v2588, 0.35355338
    %v2879 = vmul.f32 %v2634, 0.35355338
    %v2880 = vmul.f32 %v2680, 0.35355338
    %v2881 = vmul.f32 %v2726, 0.35355338
    %v2882 = vmul.f32 %v2772, 0.35355338
    %v2883 = vmul.f32 %v2818, 0.35355338
    %v2884 = vmul.f32 %v2864, 0.35355338
    %v2885 = vadd.f32 %v2869, %v211
    %v2886 = vadd.f32 %v2870, %v211
    %v2887 = vadd.f32 %v2871, %v211
    %v2888 = vadd.f32 %v2872, %v211
    %v2889 = vadd.f32 %v2873, %v215
    %v2890 = vadd.f32 %v2874, %v215
    %v2891 = vadd.f32 %v2875, %v215
    %v2892 = vadd.f32 %v2876, %v215
    %v2893 = vadd.f32 %v2877, %v219
    %v2894 = vadd.f32 %v2878, %v219
    %v2895 = vadd.f32 %v2879, %v219
    %v2896 = vadd.f32 %v2880, %v219
    %v2897 = vadd.f32 %v2881, %v223
    %v2898 = vadd.f32 %v2882, %v223
    %v2899 = vadd.f32 %v2883, %v223
    %v2900 = vadd.f32 %v2884, %v223
    %v2901 = vsel %vm2132, %v2885, -inf
    %2902 = vmax.xlane.f32.xlu0 %v2901
    %v2903 = vpop.xlane.xlu0 %2902
    %v2904 = vsel %vm2132, %v2886, -inf
    %2905 = vmax.xlane.f32.xlu0 %v2904
    %v2906 = vpop.xlane.xlu0 %2905
    %v2907 = vsel %vm2132, %v2887, -inf
    %2908 = vmax.xlane.f32.xlu0 %v2907
    %v2909 = vpop.xlane.xlu0 %2908
    %v2910 = vsel %vm2132, %v2888, -inf
    %2911 = vmax.xlane.f32.xlu0 %v2910
    %v2912 = vpop.xlane.xlu0 %2911
    %v2913 = vsel %vm2132, %v2889, -inf
    %2914 = vmax.xlane.f32.xlu0 %v2913
    %v2915 = vpop.xlane.xlu0 %2914
    %v2916 = vsel %vm2132, %v2890, -inf
    %2917 = vmax.xlane.f32.xlu0 %v2916
    %v2918 = vpop.xlane.xlu0 %2917
    %v2919 = vsel %vm2132, %v2891, -inf
    %2920 = vmax.xlane.f32.xlu0 %v2919
    %v2921 = vpop.xlane.xlu0 %2920
    %v2922 = vsel %vm2132, %v2892, -inf
    %2923 = vmax.xlane.f32.xlu0 %v2922
    %v2924 = vpop.xlane.xlu0 %2923
    %v2925 = vsel %vm2132, %v2893, -inf
    %2926 = vmax.xlane.f32.xlu0 %v2925
    %v2927 = vpop.xlane.xlu0 %2926
    %v2928 = vsel %vm2132, %v2894, -inf
    %2929 = vmax.xlane.f32.xlu0 %v2928
    %v2930 = vpop.xlane.xlu0 %2929
    %v2931 = vsel %vm2132, %v2895, -inf
    %2932 = vmax.xlane.f32.xlu0 %v2931
    %v2933 = vpop.xlane.xlu0 %2932
    %v2934 = vsel %vm2132, %v2896, -inf
    %2935 = vmax.xlane.f32.xlu0 %v2934
    %v2936 = vpop.xlane.xlu0 %2935
    %v2937 = vsel %vm2132, %v2897, -inf
    %2938 = vmax.xlane.f32.xlu0 %v2937
    %v2939 = vpop.xlane.xlu0 %2938
    %v2940 = vsel %vm2132, %v2898, -inf
    %2941 = vmax.xlane.f32.xlu0 %v2940
    %v2942 = vpop.xlane.xlu0 %2941
    %v2943 = vsel %vm2132, %v2899, -inf
    %2944 = vmax.xlane.f32.xlu0 %v2943
    %v2945 = vpop.xlane.xlu0 %2944
    %v2946 = vsel %vm2132, %v2900, -inf
    %2947 = vmax.xlane.f32.xlu0 %v2946
    %v2948 = vpop.xlane.xlu0 %2947
    %v2949 = vsub.f32 %v2885, %v2903
    %v2950 = vsub.f32 %v2886, %v2906
    %v2951 = vsub.f32 %v2887, %v2909
    %v2952 = vsub.f32 %v2888, %v2912
    %v2953 = vsub.f32 %v2889, %v2915
    %v2954 = vsub.f32 %v2890, %v2918
    %v2955 = vsub.f32 %v2891, %v2921
    %v2956 = vsub.f32 %v2892, %v2924
    %v2957 = vsub.f32 %v2893, %v2927
    %v2958 = vsub.f32 %v2894, %v2930
    %v2959 = vsub.f32 %v2895, %v2933
    %v2960 = vsub.f32 %v2896, %v2936
    %v2961 = vsub.f32 %v2897, %v2939
    %v2962 = vsub.f32 %v2898, %v2942
    %v2963 = vsub.f32 %v2899, %v2945
    %v2964 = vsub.f32 %v2900, %v2948
    %v2965 = vmul.f32 %v2949, 1.442695
    %v2966 = vpow.pop %v2965
    %v2967 = vmul.f32 %v2950, 1.442695
    %v2968 = vpow.pop %v2967
    %v2969 = vmul.f32 %v2951, 1.442695
    %v2970 = vpow.pop %v2969
    %v2971 = vmul.f32 %v2952, 1.442695
    %v2972 = vpow.pop %v2971
    %v2973 = vmul.f32 %v2953, 1.442695
    %v2974 = vpow.pop %v2973
    %v2975 = vmul.f32 %v2954, 1.442695
    %v2976 = vpow.pop %v2975
    %v2977 = vmul.f32 %v2955, 1.442695
    %v2978 = vpow.pop %v2977
    %v2979 = vmul.f32 %v2956, 1.442695
    %v2980 = vpow.pop %v2979
    %v2981 = vmul.f32 %v2957, 1.442695
    %v2982 = vpow.pop %v2981
    %v2983 = vmul.f32 %v2958, 1.442695
    %v2984 = vpow.pop %v2983
    %v2985 = vmul.f32 %v2959, 1.442695
    %v2986 = vpow.pop %v2985
    %v2987 = vmul.f32 %v2960, 1.442695
    %v2988 = vpow.pop %v2987
    %v2989 = vmul.f32 %v2961, 1.442695
    %v2990 = vpow.pop %v2989
    %v2991 = vmul.f32 %v2962, 1.442695
    %v2992 = vpow.pop %v2991
    %v2993 = vmul.f32 %v2963, 1.442695
    %v2994 = vpow.pop %v2993
    %v2995 = vmul.f32 %v2964, 1.442695
    %v2996 = vpow.pop %v2995
    %v2997 = vsel %vm2132, %v2966, 0.0
    %2998 = vadd.xlane.f32.xlu0 %v2997
    %v2999 = vpop.xlane.xlu0 %2998
    %v3000 = vsel %vm2132, %v2968, 0.0
    %3001 = vadd.xlane.f32.xlu0 %v3000
    %v3002 = vpop.xlane.xlu0 %3001
    %v3003 = vsel %vm2132, %v2970, 0.0
    %3004 = vadd.xlane.f32.xlu0 %v3003
    %v3005 = vpop.xlane.xlu0 %3004
    %v3006 = vsel %vm2132, %v2972, 0.0
    %3007 = vadd.xlane.f32.xlu0 %v3006
    %v3008 = vpop.xlane.xlu0 %3007
    %v3009 = vsel %vm2132, %v2974, 0.0
    %3010 = vadd.xlane.f32.xlu0 %v3009
    %v3011 = vpop.xlane.xlu0 %3010
    %v3012 = vsel %vm2132, %v2976, 0.0
    %3013 = vadd.xlane.f32.xlu0 %v3012
    %v3014 = vpop.xlane.xlu0 %3013
    %v3015 = vsel %vm2132, %v2978, 0.0
    %3016 = vadd.xlane.f32.xlu0 %v3015
    %v3017 = vpop.xlane.xlu0 %3016
    %v3018 = vsel %vm2132, %v2980, 0.0
    %3019 = vadd.xlane.f32.xlu0 %v3018
    %v3020 = vpop.xlane.xlu0 %3019
    %v3021 = vsel %vm2132, %v2982, 0.0
    %3022 = vadd.xlane.f32.xlu0 %v3021
    %v3023 = vpop.xlane.xlu0 %3022
    %v3024 = vsel %vm2132, %v2984, 0.0
    %3025 = vadd.xlane.f32.xlu0 %v3024
    %v3026 = vpop.xlane.xlu0 %3025
    %v3027 = vsel %vm2132, %v2986, 0.0
    %3028 = vadd.xlane.f32.xlu0 %v3027
    %v3029 = vpop.xlane.xlu0 %3028
    %v3030 = vsel %vm2132, %v2988, 0.0
    %3031 = vadd.xlane.f32.xlu0 %v3030
    %v3032 = vpop.xlane.xlu0 %3031
    %v3033 = vsel %vm2132, %v2990, 0.0
    %3034 = vadd.xlane.f32.xlu0 %v3033
    %v3035 = vpop.xlane.xlu0 %3034
    %v3036 = vsel %vm2132, %v2992, 0.0
    %3037 = vadd.xlane.f32.xlu0 %v3036
    %v3038 = vpop.xlane.xlu0 %3037
    %v3039 = vsel %vm2132, %v2994, 0.0
    %3040 = vadd.xlane.f32.xlu0 %v3039
    %v3041 = vpop.xlane.xlu0 %3040
    %v3042 = vsel %vm2132, %v2996, 0.0
    %3043 = vadd.xlane.f32.xlu0 %v3042
    %v3044 = vpop.xlane.xlu0 %3043
    %v3045 = vrcp.pop %v2999
    %v3046 = vrcp.pop %v3002
    %v3047 = vrcp.pop %v3005
    %v3048 = vrcp.pop %v3008
    %v3049 = vrcp.pop %v3011
    %v3050 = vrcp.pop %v3014
    %v3051 = vrcp.pop %v3017
    %v3052 = vrcp.pop %v3020
    %v3053 = vrcp.pop %v3023
    %v3054 = vrcp.pop %v3026
    %v3055 = vrcp.pop %v3029
    %v3056 = vrcp.pop %v3032
    %v3057 = vrcp.pop %v3035
    %v3058 = vrcp.pop %v3038
    %v3059 = vrcp.pop %v3041
    %v3060 = vrcp.pop %v3044
    %v3061 = vmul.f32 %v2966, %v3045
    %v3062 = vmul.f32 %v2968, %v3046
    %v3063 = vmul.f32 %v2970, %v3047
    %v3064 = vmul.f32 %v2972, %v3048
    %v3065 = vmul.f32 %v2974, %v3049
    %v3066 = vmul.f32 %v2976, %v3050
    %v3067 = vmul.f32 %v2978, %v3051
    %v3068 = vmul.f32 %v2980, %v3052
    %v3069 = vmul.f32 %v2982, %v3053
    %v3070 = vmul.f32 %v2984, %v3054
    %v3071 = vmul.f32 %v2986, %v3055
    %v3072 = vmul.f32 %v2988, %v3056
    %v3073 = vmul.f32 %v2990, %v3057
    %v3074 = vmul.f32 %v2992, %v3058
    %v3075 = vmul.f32 %v2994, %v3059
    %v3076 = vmul.f32 %v2996, %v3060
    %v3077 = vpack.c.bf16 %v3061, %v3061
    %v3078 = vpack.c.bf16 %v3062, %v3062
    %v3079 = vpack.c.bf16 %v3063, %v3063
    %v3080 = vpack.c.bf16 %v3064, %v3064
    %v3081 = vpack.c.bf16 %v3065, %v3065
    %v3082 = vpack.c.bf16 %v3066, %v3066
    %v3083 = vpack.c.bf16 %v3067, %v3067
    %v3084 = vpack.c.bf16 %v3068, %v3068
    %v3085 = vpack.c.bf16 %v3069, %v3069
    %v3086 = vpack.c.bf16 %v3070, %v3070
    %v3087 = vpack.c.bf16 %v3071, %v3071
    %v3088 = vpack.c.bf16 %v3072, %v3072
    %v3089 = vpack.c.bf16 %v3073, %v3073
    %v3090 = vpack.c.bf16 %v3074, %v3074
    %v3091 = vpack.c.bf16 %v3075, %v3075
    %v3092 = vpack.c.bf16 %v3076, %v3076
    %v3094 = vsel %vm2132, %v3077, 0
    %vm3096 = vcmask 1043456
    %v3098 = vsel %vm3096, %v2116, 0
    %3100 = vmatprep.subr.bf16.mxu0 0
    %3101 = vmatpush1.bf16.msra.mxu0 %v3098
    %3102 = vmatprep.subr.bf16.mxu0 0
    %3103 = vmatpush1.bf16.msra.mxu0 0
    %3104 = vmatprep.subr.bf16.mxu0 0
    %3105 = vmatpush1.bf16.msra.mxu0 0
    %3106 = vmatprep.subr.bf16.mxu0 0
    %3107 = vmatpush1.bf16.msra.mxu0 0
    %3108 = vmatprep.subr.bf16.mxu0 0
    %3109 = vmatpush1.bf16.msra.mxu0 0
    %3110 = vmatprep.subr.bf16.mxu0 0
    %3111 = vmatpush1.bf16.msra.mxu0 0
    %3112 = vmatprep.subr.bf16.mxu0 0
    %3113 = vmatpush1.bf16.msra.mxu0 0
    %3114 = vmatprep.subr.bf16.mxu0 0
    %3115 = vmatpush1.bf16.msra.mxu0 0
    %3116 = vmatprep.subr.bf16.mxu0 0
    %3117 = vmatpush1.bf16.msra.mxu0 0
    %3118 = vmatprep.subr.bf16.mxu0 0
    %3119 = vmatpush1.bf16.msra.mxu0 0
    %3120 = vmatprep.subr.bf16.mxu0 0
    %3121 = vmatpush1.bf16.msra.mxu0 0
    %3122 = vmatprep.subr.bf16.mxu0 0
    %3123 = vmatpush1.bf16.msra.mxu0 0
    %3124 = vmatprep.subr.bf16.mxu0 0
    %3125 = vmatpush1.bf16.msra.mxu0 0
    %3126 = vmatprep.subr.bf16.mxu0 0
    %3127 = vmatpush1.bf16.msra.mxu0 0
    %3128 = vmatprep.subr.bf16.mxu0 0
    %3129 = vmatpush1.bf16.msra.mxu0 0
    %3130 = vmatprep.subr.bf16.mxu0 0
    %3131 = vmatpush1.bf16.msra.mxu0 0
    %3132 = vmatprep.mubr.bf16.mxu0 0
    %3133 = vmatmul.mubr.bf16.gmra.mrb[0].mxu0 %v3094
    %v3134 = vpop.f32.mrb[0].mxu0
    %v3135 = vadd.f32 0.0, %v3134
    %v3136 = vpop.f32.mrb[0].mxu0
    %v3137 = vpop.f32.mrb[0].mxu0
    %v3138 = vpop.f32.mrb[0].mxu0
    %3139 = vdwg.mxu0
    %v3141 = vsel %vm2132, %v3078, 0
    %v3144 = vsel %vm3096, %v2117, 0
    %3146 = vmatprep.subr.bf16.mxu0 0
    %3147 = vmatpush1.bf16.msra.mxu0 %v3144
    %3148 = vmatprep.subr.bf16.mxu0 0
    %3149 = vmatpush1.bf16.msra.mxu0 0
    %3150 = vmatprep.subr.bf16.mxu0 0
    %3151 = vmatpush1.bf16.msra.mxu0 0
    %3152 = vmatprep.subr.bf16.mxu0 0
    %3153 = vmatpush1.bf16.msra.mxu0 0
    %3154 = vmatprep.subr.bf16.mxu0 0
    %3155 = vmatpush1.bf16.msra.mxu0 0
    %3156 = vmatprep.subr.bf16.mxu0 0
    %3157 = vmatpush1.bf16.msra.mxu0 0
    %3158 = vmatprep.subr.bf16.mxu0 0
    %3159 = vmatpush1.bf16.msra.mxu0 0
    %3160 = vmatprep.subr.bf16.mxu0 0
    %3161 = vmatpush1.bf16.msra.mxu0 0
    %3162 = vmatprep.subr.bf16.mxu0 0
    %3163 = vmatpush1.bf16.msra.mxu0 0
    %3164 = vmatprep.subr.bf16.mxu0 0
    %3165 = vmatpush1.bf16.msra.mxu0 0
    %3166 = vmatprep.subr.bf16.mxu0 0
    %3167 = vmatpush1.bf16.msra.mxu0 0
    %3168 = vmatprep.subr.bf16.mxu0 0
    %3169 = vmatpush1.bf16.msra.mxu0 0
    %3170 = vmatprep.subr.bf16.mxu0 0
    %3171 = vmatpush1.bf16.msra.mxu0 0
    %3172 = vmatprep.subr.bf16.mxu0 0
    %3173 = vmatpush1.bf16.msra.mxu0 0
    %3174 = vmatprep.subr.bf16.mxu0 0
    %3175 = vmatpush1.bf16.msra.mxu0 0
    %3176 = vmatprep.subr.bf16.mxu0 0
    %3177 = vmatpush1.bf16.msra.mxu0 0
    %3178 = vmatprep.mubr.bf16.mxu0 0
    %3179 = vmatmul.mubr.bf16.gmra.mrb[0].mxu0 %v3141
    %v3180 = vpop.f32.mrb[0].mxu0
    %v3181 = vadd.f32 0.0, %v3180
    %v3182 = vpop.f32.mrb[0].mxu0
    %v3183 = vpop.f32.mrb[0].mxu0
    %v3184 = vpop.f32.mrb[0].mxu0
    %3185 = vdwg.mxu0
    %v3187 = vsel %vm2132, %v3079, 0
    %v3190 = vsel %vm3096, %v2118, 0
    %3192 = vmatprep.subr.bf16.mxu0 0
    %3193 = vmatpush1.bf16.msra.mxu0 %v3190
    %3194 = vmatprep.subr.bf16.mxu0 0
    %3195 = vmatpush1.bf16.msra.mxu0 0
    %3196 = vmatprep.subr.bf16.mxu0 0
    %3197 = vmatpush1.bf16.msra.mxu0 0
    %3198 = vmatprep.subr.bf16.mxu0 0
    %3199 = vmatpush1.bf16.msra.mxu0 0
    %3200 = vmatprep.subr.bf16.mxu0 0
    %3201 = vmatpush1.bf16.msra.mxu0 0
    %3202 = vmatprep.subr.bf16.mxu0 0
    %3203 = vmatpush1.bf16.msra.mxu0 0
    %3204 = vmatprep.subr.bf16.mxu0 0
    %3205 = vmatpush1.bf16.msra.mxu0 0
    %3206 = vmatprep.subr.bf16.mxu0 0
    %3207 = vmatpush1.bf16.msra.mxu0 0
    %3208 = vmatprep.subr.bf16.mxu0 0
    %3209 = vmatpush1.bf16.msra.mxu0 0
    %3210 = vmatprep.subr.bf16.mxu0 0
    %3211 = vmatpush1.bf16.msra.mxu0 0
    %3212 = vmatprep.subr.bf16.mxu0 0
    %3213 = vmatpush1.bf16.msra.mxu0 0
    %3214 = vmatprep.subr.bf16.mxu0 0
    %3215 = vmatpush1.bf16.msra.mxu0 0
    %3216 = vmatprep.subr.bf16.mxu0 0
    %3217 = vmatpush1.bf16.msra.mxu0 0
    %3218 = vmatprep.subr.bf16.mxu0 0
    %3219 = vmatpush1.bf16.msra.mxu0 0
    %3220 = vmatprep.subr.bf16.mxu0 0
    %3221 = vmatpush1.bf16.msra.mxu0 0
    %3222 = vmatprep.subr.bf16.mxu0 0
    %3223 = vmatpush1.bf16.msra.mxu0 0
    %3224 = vmatprep.mubr.bf16.mxu0 0
    %3225 = vmatmul.mubr.bf16.gmra.mrb[0].mxu0 %v3187
    %v3226 = vpop.f32.mrb[0].mxu0
    %v3227 = vadd.f32 0.0, %v3226
    %v3228 = vpop.f32.mrb[0].mxu0
    %v3229 = vpop.f32.mrb[0].mxu0
    %v3230 = vpop.f32.mrb[0].mxu0
    %3231 = vdwg.mxu0
    %v3233 = vsel %vm2132, %v3080, 0
    %v3236 = vsel %vm3096, %v2119, 0
    %3238 = vmatprep.subr.bf16.mxu0 0
    %3239 = vmatpush1.bf16.msra.mxu0 %v3236
    %3240 = vmatprep.subr.bf16.mxu0 0
    %3241 = vmatpush1.bf16.msra.mxu0 0
    %3242 = vmatprep.subr.bf16.mxu0 0
    %3243 = vmatpush1.bf16.msra.mxu0 0
    %3244 = vmatprep.subr.bf16.mxu0 0
    %3245 = vmatpush1.bf16.msra.mxu0 0
    %3246 = vmatprep.subr.bf16.mxu0 0
    %3247 = vmatpush1.bf16.msra.mxu0 0
    %3248 = vmatprep.subr.bf16.mxu0 0
    %3249 = vmatpush1.bf16.msra.mxu0 0
    %3250 = vmatprep.subr.bf16.mxu0 0
    %3251 = vmatpush1.bf16.msra.mxu0 0
    %3252 = vmatprep.subr.bf16.mxu0 0
    %3253 = vmatpush1.bf16.msra.mxu0 0
    %3254 = vmatprep.subr.bf16.mxu0 0
    %3255 = vmatpush1.bf16.msra.mxu0 0
    %3256 = vmatprep.subr.bf16.mxu0 0
    %3257 = vmatpush1.bf16.msra.mxu0 0
    %3258 = vmatprep.subr.bf16.mxu0 0
    %3259 = vmatpush1.bf16.msra.mxu0 0
    %3260 = vmatprep.subr.bf16.mxu0 0
    %3261 = vmatpush1.bf16.msra.mxu0 0
    %3262 = vmatprep.subr.bf16.mxu0 0
    %3263 = vmatpush1.bf16.msra.mxu0 0
    %3264 = vmatprep.subr.bf16.mxu0 0
    %3265 = vmatpush1.bf16.msra.mxu0 0
    %3266 = vmatprep.subr.bf16.mxu0 0
    %3267 = vmatpush1.bf16.msra.mxu0 0
    %3268 = vmatprep.subr.bf16.mxu0 0
    %3269 = vmatpush1.bf16.msra.mxu0 0
    %3270 = vmatprep.mubr.bf16.mxu0 0
    %3271 = vmatmul.mubr.bf16.gmra.mrb[0].mxu0 %v3233
    %v3272 = vpop.f32.mrb[0].mxu0
    %v3273 = vadd.f32 0.0, %v3272
    %v3274 = vpop.f32.mrb[0].mxu0
    %v3275 = vpop.f32.mrb[0].mxu0
    %v3276 = vpop.f32.mrb[0].mxu0
    %3277 = vdwg.mxu0
    %v3279 = vsel %vm2132, %v3081, 0
    %v3282 = vsel %vm3096, %v2120, 0
    %3284 = vmatprep.subr.bf16.mxu0 0
    %3285 = vmatpush1.bf16.msra.mxu0 %v3282
    %3286 = vmatprep.subr.bf16.mxu0 0
    %3287 = vmatpush1.bf16.msra.mxu0 0
    %3288 = vmatprep.subr.bf16.mxu0 0
    %3289 = vmatpush1.bf16.msra.mxu0 0
    %3290 = vmatprep.subr.bf16.mxu0 0
    %3291 = vmatpush1.bf16.msra.mxu0 0
    %3292 = vmatprep.subr.bf16.mxu0 0
    %3293 = vmatpush1.bf16.msra.mxu0 0
    %3294 = vmatprep.subr.bf16.mxu0 0
    %3295 = vmatpush1.bf16.msra.mxu0 0
    %3296 = vmatprep.subr.bf16.mxu0 0
    %3297 = vmatpush1.bf16.msra.mxu0 0
    %3298 = vmatprep.subr.bf16.mxu0 0
    %3299 = vmatpush1.bf16.msra.mxu0 0
    %3300 = vmatprep.subr.bf16.mxu0 0
    %3301 = vmatpush1.bf16.msra.mxu0 0
    %3302 = vmatprep.subr.bf16.mxu0 0
    %3303 = vmatpush1.bf16.msra.mxu0 0
    %3304 = vmatprep.subr.bf16.mxu0 0
    %3305 = vmatpush1.bf16.msra.mxu0 0
    %3306 = vmatprep.subr.bf16.mxu0 0
    %3307 = vmatpush1.bf16.msra.mxu0 0
    %3308 = vmatprep.subr.bf16.mxu0 0
    %3309 = vmatpush1.bf16.msra.mxu0 0
    %3310 = vmatprep.subr.bf16.mxu0 0
    %3311 = vmatpush1.bf16.msra.mxu0 0
    %3312 = vmatprep.subr.bf16.mxu0 0
    %3313 = vmatpush1.bf16.msra.mxu0 0
    %3314 = vmatprep.subr.bf16.mxu0 0
    %3315 = vmatpush1.bf16.msra.mxu0 0
    %3316 = vmatprep.mubr.bf16.mxu0 0
    %3317 = vmatmul.mubr.bf16.gmra.mrb[0].mxu0 %v3279
    %v3318 = vpop.f32.mrb[0].mxu0
    %v3319 = vadd.f32 0.0, %v3318
    %v3320 = vpop.f32.mrb[0].mxu0
    %v3321 = vpop.f32.mrb[0].mxu0
    %v3322 = vpop.f32.mrb[0].mxu0
    %3323 = vdwg.mxu0
    %v3325 = vsel %vm2132, %v3082, 0
    %v3328 = vsel %vm3096, %v2121, 0
    %3330 = vmatprep.subr.bf16.mxu0 0
    %3331 = vmatpush1.bf16.msra.mxu0 %v3328
    %3332 = vmatprep.subr.bf16.mxu0 0
    %3333 = vmatpush1.bf16.msra.mxu0 0
    %3334 = vmatprep.subr.bf16.mxu0 0
    %3335 = vmatpush1.bf16.msra.mxu0 0
    %3336 = vmatprep.subr.bf16.mxu0 0
    %3337 = vmatpush1.bf16.msra.mxu0 0
    %3338 = vmatprep.subr.bf16.mxu0 0
    %3339 = vmatpush1.bf16.msra.mxu0 0
    %3340 = vmatprep.subr.bf16.mxu0 0
    %3341 = vmatpush1.bf16.msra.mxu0 0
    %3342 = vmatprep.subr.bf16.mxu0 0
    %3343 = vmatpush1.bf16.msra.mxu0 0
    %3344 = vmatprep.subr.bf16.mxu0 0
    %3345 = vmatpush1.bf16.msra.mxu0 0
    %3346 = vmatprep.subr.bf16.mxu0 0
    %3347 = vmatpush1.bf16.msra.mxu0 0
    %3348 = vmatprep.subr.bf16.mxu0 0
    %3349 = vmatpush1.bf16.msra.mxu0 0
    %3350 = vmatprep.subr.bf16.mxu0 0
    %3351 = vmatpush1.bf16.msra.mxu0 0
    %3352 = vmatprep.subr.bf16.mxu0 0
    %3353 = vmatpush1.bf16.msra.mxu0 0
    %3354 = vmatprep.subr.bf16.mxu0 0
    %3355 = vmatpush1.bf16.msra.mxu0 0
    %3356 = vmatprep.subr.bf16.mxu0 0
    %3357 = vmatpush1.bf16.msra.mxu0 0
    %3358 = vmatprep.subr.bf16.mxu0 0
    %3359 = vmatpush1.bf16.msra.mxu0 0
    %3360 = vmatprep.subr.bf16.mxu0 0
    %3361 = vmatpush1.bf16.msra.mxu0 0
    %3362 = vmatprep.mubr.bf16.mxu0 0
    %3363 = vmatmul.mubr.bf16.gmra.mrb[0].mxu0 %v3325
    %v3364 = vpop.f32.mrb[0].mxu0
    %v3365 = vadd.f32 0.0, %v3364
    %v3366 = vpop.f32.mrb[0].mxu0
    %v3367 = vpop.f32.mrb[0].mxu0
    %v3368 = vpop.f32.mrb[0].mxu0
    %3369 = vdwg.mxu0
    %v3371 = vsel %vm2132, %v3083, 0
    %v3374 = vsel %vm3096, %v2122, 0
    %3376 = vmatprep.subr.bf16.mxu0 0
    %3377 = vmatpush1.bf16.msra.mxu0 %v3374
    %3378 = vmatprep.subr.bf16.mxu0 0
    %3379 = vmatpush1.bf16.msra.mxu0 0
    %3380 = vmatprep.subr.bf16.mxu0 0
    %3381 = vmatpush1.bf16.msra.mxu0 0
    %3382 = vmatprep.subr.bf16.mxu0 0
    %3383 = vmatpush1.bf16.msra.mxu0 0
    %3384 = vmatprep.subr.bf16.mxu0 0
    %3385 = vmatpush1.bf16.msra.mxu0 0
    %3386 = vmatprep.subr.bf16.mxu0 0
    %3387 = vmatpush1.bf16.msra.mxu0 0
    %3388 = vmatprep.subr.bf16.mxu0 0
    %3389 = vmatpush1.bf16.msra.mxu0 0
    %3390 = vmatprep.subr.bf16.mxu0 0
    %3391 = vmatpush1.bf16.msra.mxu0 0
    %3392 = vmatprep.subr.bf16.mxu0 0
    %3393 = vmatpush1.bf16.msra.mxu0 0
    %3394 = vmatprep.subr.bf16.mxu0 0
    %3395 = vmatpush1.bf16.msra.mxu0 0
    %3396 = vmatprep.subr.bf16.mxu0 0
    %3397 = vmatpush1.bf16.msra.mxu0 0
    %3398 = vmatprep.subr.bf16.mxu0 0
    %3399 = vmatpush1.bf16.msra.mxu0 0
    %3400 = vmatprep.subr.bf16.mxu0 0
    %3401 = vmatpush1.bf16.msra.mxu0 0
    %3402 = vmatprep.subr.bf16.mxu0 0
    %3403 = vmatpush1.bf16.msra.mxu0 0
    %3404 = vmatprep.subr.bf16.mxu0 0
    %3405 = vmatpush1.bf16.msra.mxu0 0
    %3406 = vmatprep.subr.bf16.mxu0 0
    %3407 = vmatpush1.bf16.msra.mxu0 0
    %3408 = vmatprep.mubr.bf16.mxu0 0
    %3409 = vmatmul.mubr.bf16.gmra.mrb[0].mxu0 %v3371
    %v3410 = vpop.f32.mrb[0].mxu0
    %v3411 = vadd.f32 0.0, %v3410
    %v3412 = vpop.f32.mrb[0].mxu0
    %v3413 = vpop.f32.mrb[0].mxu0
    %v3414 = vpop.f32.mrb[0].mxu0
    %3415 = vdwg.mxu0
    %v3417 = vsel %vm2132, %v3084, 0
    %v3420 = vsel %vm3096, %v2123, 0
    %3422 = vmatprep.subr.bf16.mxu0 0
    %3423 = vmatpush1.bf16.msra.mxu0 %v3420
    %3424 = vmatprep.subr.bf16.mxu0 0
    %3425 = vmatpush1.bf16.msra.mxu0 0
    %3426 = vmatprep.subr.bf16.mxu0 0
    %3427 = vmatpush1.bf16.msra.mxu0 0
    %3428 = vmatprep.subr.bf16.mxu0 0
    %3429 = vmatpush1.bf16.msra.mxu0 0
    %3430 = vmatprep.subr.bf16.mxu0 0
    %3431 = vmatpush1.bf16.msra.mxu0 0
    %3432 = vmatprep.subr.bf16.mxu0 0
    %3433 = vmatpush1.bf16.msra.mxu0 0
    %3434 = vmatprep.subr.bf16.mxu0 0
    %3435 = vmatpush1.bf16.msra.mxu0 0
    %3436 = vmatprep.subr.bf16.mxu0 0
    %3437 = vmatpush1.bf16.msra.mxu0 0
    %3438 = vmatprep.subr.bf16.mxu0 0
    %3439 = vmatpush1.bf16.msra.mxu0 0
    %3440 = vmatprep.subr.bf16.mxu0 0
    %3441 = vmatpush1.bf16.msra.mxu0 0
    %3442 = vmatprep.subr.bf16.mxu0 0
    %3443 = vmatpush1.bf16.msra.mxu0 0
    %3444 = vmatprep.subr.bf16.mxu0 0
    %3445 = vmatpush1.bf16.msra.mxu0 0
    %3446 = vmatprep.subr.bf16.mxu0 0
    %3447 = vmatpush1.bf16.msra.mxu0 0
    %3448 = vmatprep.subr.bf16.mxu0 0
    %3449 = vmatpush1.bf16.msra.mxu0 0
    %3450 = vmatprep.subr.bf16.mxu0 0
    %3451 = vmatpush1.bf16.msra.mxu0 0
    %3452 = vmatprep.subr.bf16.mxu0 0
    %3453 = vmatpush1.bf16.msra.mxu0 0
    %3454 = vmatprep.mubr.bf16.mxu0 0
    %3455 = vmatmul.mubr.bf16.gmra.mrb[0].mxu0 %v3417
    %v3456 = vpop.f32.mrb[0].mxu0
    %v3457 = vadd.f32 0.0, %v3456
    %v3458 = vpop.f32.mrb[0].mxu0
    %v3459 = vpop.f32.mrb[0].mxu0
    %v3460 = vpop.f32.mrb[0].mxu0
    %3461 = vdwg.mxu0
    %v3463 = vsel %vm2132, %v3085, 0
    %v3466 = vsel %vm3096, %v2124, 0
    %3468 = vmatprep.subr.bf16.mxu0 0
    %3469 = vmatpush1.bf16.msra.mxu0 %v3466
    %3470 = vmatprep.subr.bf16.mxu0 0
    %3471 = vmatpush1.bf16.msra.mxu0 0
    %3472 = vmatprep.subr.bf16.mxu0 0
    %3473 = vmatpush1.bf16.msra.mxu0 0
    %3474 = vmatprep.subr.bf16.mxu0 0
    %3475 = vmatpush1.bf16.msra.mxu0 0
    %3476 = vmatprep.subr.bf16.mxu0 0
    %3477 = vmatpush1.bf16.msra.mxu0 0
    %3478 = vmatprep.subr.bf16.mxu0 0
    %3479 = vmatpush1.bf16.msra.mxu0 0
    %3480 = vmatprep.subr.bf16.mxu0 0
    %3481 = vmatpush1.bf16.msra.mxu0 0
    %3482 = vmatprep.subr.bf16.mxu0 0
    %3483 = vmatpush1.bf16.msra.mxu0 0
    %3484 = vmatprep.subr.bf16.mxu0 0
    %3485 = vmatpush1.bf16.msra.mxu0 0
    %3486 = vmatprep.subr.bf16.mxu0 0
    %3487 = vmatpush1.bf16.msra.mxu0 0
    %3488 = vmatprep.subr.bf16.mxu0 0
    %3489 = vmatpush1.bf16.msra.mxu0 0
    %3490 = vmatprep.subr.bf16.mxu0 0
    %3491 = vmatpush1.bf16.msra.mxu0 0
    %3492 = vmatprep.subr.bf16.mxu0 0
    %3493 = vmatpush1.bf16.msra.mxu0 0
    %3494 = vmatprep.subr.bf16.mxu0 0
    %3495 = vmatpush1.bf16.msra.mxu0 0
    %3496 = vmatprep.subr.bf16.mxu0 0
    %3497 = vmatpush1.bf16.msra.mxu0 0
    %3498 = vmatprep.subr.bf16.mxu0 0
    %3499 = vmatpush1.bf16.msra.mxu0 0
    %3500 = vmatprep.mubr.bf16.mxu0 0
    %3501 = vmatmul.mubr.bf16.gmra.mrb[0].mxu0 %v3463
    %v3502 = vpop.f32.mrb[0].mxu0
    %v3503 = vadd.f32 0.0, %v3502
    %v3504 = vpop.f32.mrb[0].mxu0
    %v3505 = vpop.f32.mrb[0].mxu0
    %v3506 = vpop.f32.mrb[0].mxu0
    %3507 = vdwg.mxu0
    %v3509 = vsel %vm2132, %v3086, 0
    %v3512 = vsel %vm3096, %v2125, 0
    %3514 = vmatprep.subr.bf16.mxu0 0
    %3515 = vmatpush1.bf16.msra.mxu0 %v3512
    %3516 = vmatprep.subr.bf16.mxu0 0
    %3517 = vmatpush1.bf16.msra.mxu0 0
    %3518 = vmatprep.subr.bf16.mxu0 0
    %3519 = vmatpush1.bf16.msra.mxu0 0
    %3520 = vmatprep.subr.bf16.mxu0 0
    %3521 = vmatpush1.bf16.msra.mxu0 0
    %3522 = vmatprep.subr.bf16.mxu0 0
    %3523 = vmatpush1.bf16.msra.mxu0 0
    %3524 = vmatprep.subr.bf16.mxu0 0
    %3525 = vmatpush1.bf16.msra.mxu0 0
    %3526 = vmatprep.subr.bf16.mxu0 0
    %3527 = vmatpush1.bf16.msra.mxu0 0
    %3528 = vmatprep.subr.bf16.mxu0 0
    %3529 = vmatpush1.bf16.msra.mxu0 0
    %3530 = vmatprep.subr.bf16.mxu0 0
    %3531 = vmatpush1.bf16.msra.mxu0 0
    %3532 = vmatprep.subr.bf16.mxu0 0
    %3533 = vmatpush1.bf16.msra.mxu0 0
    %3534 = vmatprep.subr.bf16.mxu0 0
    %3535 = vmatpush1.bf16.msra.mxu0 0
    %3536 = vmatprep.subr.bf16.mxu0 0
    %3537 = vmatpush1.bf16.msra.mxu0 0
    %3538 = vmatprep.subr.bf16.mxu0 0
    %3539 = vmatpush1.bf16.msra.mxu0 0
    %3540 = vmatprep.subr.bf16.mxu0 0
    %3541 = vmatpush1.bf16.msra.mxu0 0
    %3542 = vmatprep.subr.bf16.mxu0 0
    %3543 = vmatpush1.bf16.msra.mxu0 0
    %3544 = vmatprep.subr.bf16.mxu0 0
    %3545 = vmatpush1.bf16.msra.mxu0 0
    %3546 = vmatprep.mubr.bf16.mxu0 0
    %3547 = vmatmul.mubr.bf16.gmra.mrb[0].mxu0 %v3509
    %v3548 = vpop.f32.mrb[0].mxu0
    %v3549 = vadd.f32 0.0, %v3548
    %v3550 = vpop.f32.mrb[0].mxu0
    %v3551 = vpop.f32.mrb[0].mxu0
    %v3552 = vpop.f32.mrb[0].mxu0
    %3553 = vdwg.mxu0
    %v3555 = vsel %vm2132, %v3087, 0
    %v3558 = vsel %vm3096, %v2126, 0
    %3560 = vmatprep.subr.bf16.mxu0 0
    %3561 = vmatpush1.bf16.msra.mxu0 %v3558
    %3562 = vmatprep.subr.bf16.mxu0 0
    %3563 = vmatpush1.bf16.msra.mxu0 0
    %3564 = vmatprep.subr.bf16.mxu0 0
    %3565 = vmatpush1.bf16.msra.mxu0 0
    %3566 = vmatprep.subr.bf16.mxu0 0
    %3567 = vmatpush1.bf16.msra.mxu0 0
    %3568 = vmatprep.subr.bf16.mxu0 0
    %3569 = vmatpush1.bf16.msra.mxu0 0
    %3570 = vmatprep.subr.bf16.mxu0 0
    %3571 = vmatpush1.bf16.msra.mxu0 0
    %3572 = vmatprep.subr.bf16.mxu0 0
    %3573 = vmatpush1.bf16.msra.mxu0 0
    %3574 = vmatprep.subr.bf16.mxu0 0
    %3575 = vmatpush1.bf16.msra.mxu0 0
    %3576 = vmatprep.subr.bf16.mxu0 0
    %3577 = vmatpush1.bf16.msra.mxu0 0
    %3578 = vmatprep.subr.bf16.mxu0 0
    %3579 = vmatpush1.bf16.msra.mxu0 0
    %3580 = vmatprep.subr.bf16.mxu0 0
    %3581 = vmatpush1.bf16.msra.mxu0 0
    %3582 = vmatprep.subr.bf16.mxu0 0
    %3583 = vmatpush1.bf16.msra.mxu0 0
    %3584 = vmatprep.subr.bf16.mxu0 0
    %3585 = vmatpush1.bf16.msra.mxu0 0
    %3586 = vmatprep.subr.bf16.mxu0 0
    %3587 = vmatpush1.bf16.msra.mxu0 0
    %3588 = vmatprep.subr.bf16.mxu0 0
    %3589 = vmatpush1.bf16.msra.mxu0 0
    %3590 = vmatprep.subr.bf16.mxu0 0
    %3591 = vmatpush1.bf16.msra.mxu0 0
    %3592 = vmatprep.mubr.bf16.mxu0 0
    %3593 = vmatmul.mubr.bf16.gmra.mrb[0].mxu0 %v3555
    %v3594 = vpop.f32.mrb[0].mxu0
    %v3595 = vadd.f32 0.0, %v3594
    %v3596 = vpop.f32.mrb[0].mxu0
    %v3597 = vpop.f32.mrb[0].mxu0
    %v3598 = vpop.f32.mrb[0].mxu0
    %3599 = vdwg.mxu0
    %v3601 = vsel %vm2132, %v3088, 0
    %v3604 = vsel %vm3096, %v2127, 0
    %3606 = vmatprep.subr.bf16.mxu0 0
    %3607 = vmatpush1.bf16.msra.mxu0 %v3604
    %3608 = vmatprep.subr.bf16.mxu0 0
    %3609 = vmatpush1.bf16.msra.mxu0 0
    %3610 = vmatprep.subr.bf16.mxu0 0
    %3611 = vmatpush1.bf16.msra.mxu0 0
    %3612 = vmatprep.subr.bf16.mxu0 0
    %3613 = vmatpush1.bf16.msra.mxu0 0
    %3614 = vmatprep.subr.bf16.mxu0 0
    %3615 = vmatpush1.bf16.msra.mxu0 0
    %3616 = vmatprep.subr.bf16.mxu0 0
    %3617 = vmatpush1.bf16.msra.mxu0 0
    %3618 = vmatprep.subr.bf16.mxu0 0
    %3619 = vmatpush1.bf16.msra.mxu0 0
    %3620 = vmatprep.subr.bf16.mxu0 0
    %3621 = vmatpush1.bf16.msra.mxu0 0
    %3622 = vmatprep.subr.bf16.mxu0 0
    %3623 = vmatpush1.bf16.msra.mxu0 0
    %3624 = vmatprep.subr.bf16.mxu0 0
    %3625 = vmatpush1.bf16.msra.mxu0 0
    %3626 = vmatprep.subr.bf16.mxu0 0
    %3627 = vmatpush1.bf16.msra.mxu0 0
    %3628 = vmatprep.subr.bf16.mxu0 0
    %3629 = vmatpush1.bf16.msra.mxu0 0
    %3630 = vmatprep.subr.bf16.mxu0 0
    %3631 = vmatpush1.bf16.msra.mxu0 0
    %3632 = vmatprep.subr.bf16.mxu0 0
    %3633 = vmatpush1.bf16.msra.mxu0 0
    %3634 = vmatprep.subr.bf16.mxu0 0
    %3635 = vmatpush1.bf16.msra.mxu0 0
    %3636 = vmatprep.subr.bf16.mxu0 0
    %3637 = vmatpush1.bf16.msra.mxu0 0
    %3638 = vmatprep.mubr.bf16.mxu0 0
    %3639 = vmatmul.mubr.bf16.gmra.mrb[0].mxu0 %v3601
    %v3640 = vpop.f32.mrb[0].mxu0
    %v3641 = vadd.f32 0.0, %v3640
    %v3642 = vpop.f32.mrb[0].mxu0
    %v3643 = vpop.f32.mrb[0].mxu0
    %v3644 = vpop.f32.mrb[0].mxu0
    %3645 = vdwg.mxu0
    %v3647 = vsel %vm2132, %v3089, 0
    %v3650 = vsel %vm3096, %v2128, 0
    %3652 = vmatprep.subr.bf16.mxu0 0
    %3653 = vmatpush1.bf16.msra.mxu0 %v3650
    %3654 = vmatprep.subr.bf16.mxu0 0
    %3655 = vmatpush1.bf16.msra.mxu0 0
    %3656 = vmatprep.subr.bf16.mxu0 0
    %3657 = vmatpush1.bf16.msra.mxu0 0
    %3658 = vmatprep.subr.bf16.mxu0 0
    %3659 = vmatpush1.bf16.msra.mxu0 0
    %3660 = vmatprep.subr.bf16.mxu0 0
    %3661 = vmatpush1.bf16.msra.mxu0 0
    %3662 = vmatprep.subr.bf16.mxu0 0
    %3663 = vmatpush1.bf16.msra.mxu0 0
    %3664 = vmatprep.subr.bf16.mxu0 0
    %3665 = vmatpush1.bf16.msra.mxu0 0
    %3666 = vmatprep.subr.bf16.mxu0 0
    %3667 = vmatpush1.bf16.msra.mxu0 0
    %3668 = vmatprep.subr.bf16.mxu0 0
    %3669 = vmatpush1.bf16.msra.mxu0 0
    %3670 = vmatprep.subr.bf16.mxu0 0
    %3671 = vmatpush1.bf16.msra.mxu0 0
    %3672 = vmatprep.subr.bf16.mxu0 0
    %3673 = vmatpush1.bf16.msra.mxu0 0
    %3674 = vmatprep.subr.bf16.mxu0 0
    %3675 = vmatpush1.bf16.msra.mxu0 0
    %3676 = vmatprep.subr.bf16.mxu0 0
    %3677 = vmatpush1.bf16.msra.mxu0 0
    %3678 = vmatprep.subr.bf16.mxu0 0
    %3679 = vmatpush1.bf16.msra.mxu0 0
    %3680 = vmatprep.subr.bf16.mxu0 0
    %3681 = vmatpush1.bf16.msra.mxu0 0
    %3682 = vmatprep.subr.bf16.mxu0 0
    %3683 = vmatpush1.bf16.msra.mxu0 0
    %3684 = vmatprep.mubr.bf16.mxu0 0
    %3685 = vmatmul.mubr.bf16.gmra.mrb[0].mxu0 %v3647
    %v3686 = vpop.f32.mrb[0].mxu0
    %v3687 = vadd.f32 0.0, %v3686
    %v3688 = vpop.f32.mrb[0].mxu0
    %v3689 = vpop.f32.mrb[0].mxu0
    %v3690 = vpop.f32.mrb[0].mxu0
    %3691 = vdwg.mxu0
    %v3693 = vsel %vm2132, %v3090, 0
    %v3696 = vsel %vm3096, %v2129, 0
    %3698 = vmatprep.subr.bf16.mxu0 0
    %3699 = vmatpush1.bf16.msra.mxu0 %v3696
    %3700 = vmatprep.subr.bf16.mxu0 0
    %3701 = vmatpush1.bf16.msra.mxu0 0
    %3702 = vmatprep.subr.bf16.mxu0 0
    %3703 = vmatpush1.bf16.msra.mxu0 0
    %3704 = vmatprep.subr.bf16.mxu0 0
    %3705 = vmatpush1.bf16.msra.mxu0 0
    %3706 = vmatprep.subr.bf16.mxu0 0
    %3707 = vmatpush1.bf16.msra.mxu0 0
    %3708 = vmatprep.subr.bf16.mxu0 0
    %3709 = vmatpush1.bf16.msra.mxu0 0
    %3710 = vmatprep.subr.bf16.mxu0 0
    %3711 = vmatpush1.bf16.msra.mxu0 0
    %3712 = vmatprep.subr.bf16.mxu0 0
    %3713 = vmatpush1.bf16.msra.mxu0 0
    %3714 = vmatprep.subr.bf16.mxu0 0
    %3715 = vmatpush1.bf16.msra.mxu0 0
    %3716 = vmatprep.subr.bf16.mxu0 0
    %3717 = vmatpush1.bf16.msra.mxu0 0
    %3718 = vmatprep.subr.bf16.mxu0 0
    %3719 = vmatpush1.bf16.msra.mxu0 0
    %3720 = vmatprep.subr.bf16.mxu0 0
    %3721 = vmatpush1.bf16.msra.mxu0 0
    %3722 = vmatprep.subr.bf16.mxu0 0
    %3723 = vmatpush1.bf16.msra.mxu0 0
    %3724 = vmatprep.subr.bf16.mxu0 0
    %3725 = vmatpush1.bf16.msra.mxu0 0
    %3726 = vmatprep.subr.bf16.mxu0 0
    %3727 = vmatpush1.bf16.msra.mxu0 0
    %3728 = vmatprep.subr.bf16.mxu0 0
    %3729 = vmatpush1.bf16.msra.mxu0 0
    %3730 = vmatprep.mubr.bf16.mxu0 0
    %3731 = vmatmul.mubr.bf16.gmra.mrb[0].mxu0 %v3693
    %v3732 = vpop.f32.mrb[0].mxu0
    %v3733 = vadd.f32 0.0, %v3732
    %v3734 = vpop.f32.mrb[0].mxu0
    %v3735 = vpop.f32.mrb[0].mxu0
    %v3736 = vpop.f32.mrb[0].mxu0
    %3737 = vdwg.mxu0
    %v3739 = vsel %vm2132, %v3091, 0
    %v3742 = vsel %vm3096, %v2130, 0
    %3744 = vmatprep.subr.bf16.mxu0 0
    %3745 = vmatpush1.bf16.msra.mxu0 %v3742
    %3746 = vmatprep.subr.bf16.mxu0 0
    %3747 = vmatpush1.bf16.msra.mxu0 0
    %3748 = vmatprep.subr.bf16.mxu0 0
    %3749 = vmatpush1.bf16.msra.mxu0 0
    %3750 = vmatprep.subr.bf16.mxu0 0
    %3751 = vmatpush1.bf16.msra.mxu0 0
    %3752 = vmatprep.subr.bf16.mxu0 0
    %3753 = vmatpush1.bf16.msra.mxu0 0
    %3754 = vmatprep.subr.bf16.mxu0 0
    %3755 = vmatpush1.bf16.msra.mxu0 0
    %3756 = vmatprep.subr.bf16.mxu0 0
    %3757 = vmatpush1.bf16.msra.mxu0 0
    %3758 = vmatprep.subr.bf16.mxu0 0
    %3759 = vmatpush1.bf16.msra.mxu0 0
    %3760 = vmatprep.subr.bf16.mxu0 0
    %3761 = vmatpush1.bf16.msra.mxu0 0
    %3762 = vmatprep.subr.bf16.mxu0 0
    %3763 = vmatpush1.bf16.msra.mxu0 0
    %3764 = vmatprep.subr.bf16.mxu0 0
    %3765 = vmatpush1.bf16.msra.mxu0 0
    %3766 = vmatprep.subr.bf16.mxu0 0
    %3767 = vmatpush1.bf16.msra.mxu0 0
    %3768 = vmatprep.subr.bf16.mxu0 0
    %3769 = vmatpush1.bf16.msra.mxu0 0
    %3770 = vmatprep.subr.bf16.mxu0 0
    %3771 = vmatpush1.bf16.msra.mxu0 0
    %3772 = vmatprep.subr.bf16.mxu0 0
    %3773 = vmatpush1.bf16.msra.mxu0 0
    %3774 = vmatprep.subr.bf16.mxu0 0
    %3775 = vmatpush1.bf16.msra.mxu0 0
    %3776 = vmatprep.mubr.bf16.mxu0 0
    %3777 = vmatmul.mubr.bf16.gmra.mrb[0].mxu0 %v3739
    %v3778 = vpop.f32.mrb[0].mxu0
    %v3779 = vadd.f32 0.0, %v3778
    %v3780 = vpop.f32.mrb[0].mxu0
    %v3781 = vpop.f32.mrb[0].mxu0
    %v3782 = vpop.f32.mrb[0].mxu0
    %3783 = vdwg.mxu0
    %v3785 = vsel %vm2132, %v3092, 0
    %v3788 = vsel %vm3096, %v2131, 0
    %3790 = vmatprep.subr.bf16.mxu0 0
    %3791 = vmatpush1.bf16.msra.mxu0 %v3788
    %3792 = vmatprep.subr.bf16.mxu0 0
    %3793 = vmatpush1.bf16.msra.mxu0 0
    %3794 = vmatprep.subr.bf16.mxu0 0
    %3795 = vmatpush1.bf16.msra.mxu0 0
    %3796 = vmatprep.subr.bf16.mxu0 0
    %3797 = vmatpush1.bf16.msra.mxu0 0
    %3798 = vmatprep.subr.bf16.mxu0 0
    %3799 = vmatpush1.bf16.msra.mxu0 0
    %3800 = vmatprep.subr.bf16.mxu0 0
    %3801 = vmatpush1.bf16.msra.mxu0 0
    %3802 = vmatprep.subr.bf16.mxu0 0
    %3803 = vmatpush1.bf16.msra.mxu0 0
    %3804 = vmatprep.subr.bf16.mxu0 0
    %3805 = vmatpush1.bf16.msra.mxu0 0
    %3806 = vmatprep.subr.bf16.mxu0 0
    %3807 = vmatpush1.bf16.msra.mxu0 0
    %3808 = vmatprep.subr.bf16.mxu0 0
    %3809 = vmatpush1.bf16.msra.mxu0 0
    %3810 = vmatprep.subr.bf16.mxu0 0
    %3811 = vmatpush1.bf16.msra.mxu0 0
    %3812 = vmatprep.subr.bf16.mxu0 0
    %3813 = vmatpush1.bf16.msra.mxu0 0
    %3814 = vmatprep.subr.bf16.mxu0 0
    %3815 = vmatpush1.bf16.msra.mxu0 0
    %3816 = vmatprep.subr.bf16.mxu0 0
    %3817 = vmatpush1.bf16.msra.mxu0 0
    %3818 = vmatprep.subr.bf16.mxu0 0
    %3819 = vmatpush1.bf16.msra.mxu0 0
    %3820 = vmatprep.subr.bf16.mxu0 0
    %3821 = vmatpush1.bf16.msra.mxu0 0
    %3822 = vmatprep.mubr.bf16.mxu0 0
    %3823 = vmatmul.mubr.bf16.gmra.mrb[0].mxu0 %v3785
    %v3824 = vpop.f32.mrb[0].mxu0
    %v3825 = vadd.f32 0.0, %v3824
    %v3826 = vpop.f32.mrb[0].mxu0
    %v3827 = vpop.f32.mrb[0].mxu0
    %v3828 = vpop.f32.mrb[0].mxu0
    %3829 = vdwg.mxu0
    %v3830 = vcombine.low %v3135, %v3227
    %v3831 = vcombine.high %v3135, %v3227
    %v3833 = vunpack.c.l.s4 1983009808
    %v3834 = vunpack.c.0.s8 %v3833
    %v3835 = vlaneseq
    %v3836 = vshrl.u32 %v3835, 7
    %v3837 = vsub.s32 %v3834, %v3836
    %v3838 = vrot.slane %v3830, %v3837
    %v3840 = vunpack.c.l.s4 1983009808
    %v3841 = vunpack.c.0.s8 %v3840
    %v3842 = vlaneseq
    %v3843 = vshrl.u32 %v3842, 7
    %v3844 = vsub.s32 %v3841, %v3843
    %v3845 = vrot.slane %v3831, %v3844
    %v3846 = vcombine.low %v3181, %v3273
    %v3847 = vcombine.high %v3181, %v3273
    %v3849 = vunpack.c.l.s4 1983009808
    %v3850 = vunpack.c.0.s8 %v3849
    %v3851 = vlaneseq
    %v3852 = vshrl.u32 %v3851, 7
    %v3853 = vsub.s32 %v3850, %v3852
    %v3854 = vrot.slane %v3846, %v3853
    %v3856 = vunpack.c.l.s4 1983009808
    %v3857 = vunpack.c.0.s8 %v3856
    %v3858 = vlaneseq
    %v3859 = vshrl.u32 %v3858, 7
    %v3860 = vsub.s32 %v3857, %v3859
    %v3861 = vrot.slane %v3847, %v3860
    %v3862 = vcombine.low %v3838, %v3854
    %v3863 = vcombine.high %v3838, %v3854
    %v3865 = vunpack.c.l.s4 1934713408
    %v3866 = vunpack.c.0.s8 %v3865
    %v3867 = vlaneseq
    %v3868 = vshrl.u32 %v3867, 7
    %v3869 = vsub.s32 %v3866, %v3868
    %v3870 = vrot.slane %v3862, %v3869
    %v3872 = vunpack.c.l.s4 1934713408
    %v3873 = vunpack.c.0.s8 %v3872
    %v3874 = vlaneseq
    %v3875 = vshrl.u32 %v3874, 7
    %v3876 = vsub.s32 %v3873, %v3875
    %v3877 = vrot.slane %v3863, %v3876
    %v3878 = vcombine.low %v3845, %v3861
    %v3879 = vcombine.high %v3845, %v3861
    %v3881 = vunpack.c.l.s4 1934713408
    %v3882 = vunpack.c.0.s8 %v3881
    %v3883 = vlaneseq
    %v3884 = vshrl.u32 %v3883, 7
    %v3885 = vsub.s32 %v3882, %v3884
    %v3886 = vrot.slane %v3878, %v3885
    %v3888 = vunpack.c.l.s4 1934713408
    %v3889 = vunpack.c.0.s8 %v3888
    %v3890 = vlaneseq
    %v3891 = vshrl.u32 %v3890, 7
    %v3892 = vsub.s32 %v3889, %v3891
    %v3893 = vrot.slane %v3879, %v3892
    %v3894 = vcombine.high %v3870, 0.0
    %v3895 = vcombine.high %v3877, 0.0
    %v3896 = vcombine.high %v3886, 0.0
    %v3897 = vcombine.high %v3893, 0.0
    %v3898 = vcombine.low %v3319, %v3411
    %v3899 = vcombine.high %v3319, %v3411
    %v3901 = vunpack.c.l.s4 1983009808
    %v3902 = vunpack.c.0.s8 %v3901
    %v3903 = vlaneseq
    %v3904 = vshrl.u32 %v3903, 7
    %v3905 = vsub.s32 %v3902, %v3904
    %v3906 = vrot.slane %v3898, %v3905
    %v3908 = vunpack.c.l.s4 1983009808
    %v3909 = vunpack.c.0.s8 %v3908
    %v3910 = vlaneseq
    %v3911 = vshrl.u32 %v3910, 7
    %v3912 = vsub.s32 %v3909, %v3911
    %v3913 = vrot.slane %v3899, %v3912
    %v3914 = vcombine.low %v3365, %v3457
    %v3915 = vcombine.high %v3365, %v3457
    %v3917 = vunpack.c.l.s4 1983009808
    %v3918 = vunpack.c.0.s8 %v3917
    %v3919 = vlaneseq
    %v3920 = vshrl.u32 %v3919, 7
    %v3921 = vsub.s32 %v3918, %v3920
    %v3922 = vrot.slane %v3914, %v3921
    %v3924 = vunpack.c.l.s4 1983009808
    %v3925 = vunpack.c.0.s8 %v3924
    %v3926 = vlaneseq
    %v3927 = vshrl.u32 %v3926, 7
    %v3928 = vsub.s32 %v3925, %v3927
    %v3929 = vrot.slane %v3915, %v3928
    %v3930 = vcombine.low %v3906, %v3922
    %v3931 = vcombine.high %v3906, %v3922
    %v3933 = vunpack.c.l.s4 1934713408
    %v3934 = vunpack.c.0.s8 %v3933
    %v3935 = vlaneseq
    %v3936 = vshrl.u32 %v3935, 7
    %v3937 = vsub.s32 %v3934, %v3936
    %v3938 = vrot.slane %v3930, %v3937
    %v3940 = vunpack.c.l.s4 1934713408
    %v3941 = vunpack.c.0.s8 %v3940
    %v3942 = vlaneseq
    %v3943 = vshrl.u32 %v3942, 7
    %v3944 = vsub.s32 %v3941, %v3943
    %v3945 = vrot.slane %v3931, %v3944
    %v3946 = vcombine.low %v3913, %v3929
    %v3947 = vcombine.high %v3913, %v3929
    %v3949 = vunpack.c.l.s4 1934713408
    %v3950 = vunpack.c.0.s8 %v3949
    %v3951 = vlaneseq
    %v3952 = vshrl.u32 %v3951, 7
    %v3953 = vsub.s32 %v3950, %v3952
    %v3954 = vrot.slane %v3946, %v3953
    %v3956 = vunpack.c.l.s4 1934713408
    %v3957 = vunpack.c.0.s8 %v3956
    %v3958 = vlaneseq
    %v3959 = vshrl.u32 %v3958, 7
    %v3960 = vsub.s32 %v3957, %v3959
    %v3961 = vrot.slane %v3947, %v3960
    %v3962 = vcombine.high %v3938, 0.0
    %v3963 = vcombine.high %v3945, 0.0
    %v3964 = vcombine.high %v3954, 0.0
    %v3965 = vcombine.high %v3961, 0.0
    %v3966 = vcombine.low %v3503, %v3595
    %v3967 = vcombine.high %v3503, %v3595
    %v3969 = vunpack.c.l.s4 1983009808
    %v3970 = vunpack.c.0.s8 %v3969
    %v3971 = vlaneseq
    %v3972 = vshrl.u32 %v3971, 7
    %v3973 = vsub.s32 %v3970, %v3972
    %v3974 = vrot.slane %v3966, %v3973
    %v3976 = vunpack.c.l.s4 1983009808
    %v3977 = vunpack.c.0.s8 %v3976
    %v3978 = vlaneseq
    %v3979 = vshrl.u32 %v3978, 7
    %v3980 = vsub.s32 %v3977, %v3979
    %v3981 = vrot.slane %v3967, %v3980
    %v3982 = vcombine.low %v3549, %v3641
    %v3983 = vcombine.high %v3549, %v3641
    %v3985 = vunpack.c.l.s4 1983009808
    %v3986 = vunpack.c.0.s8 %v3985
    %v3987 = vlaneseq
    %v3988 = vshrl.u32 %v3987, 7
    %v3989 = vsub.s32 %v3986, %v3988
    %v3990 = vrot.slane %v3982, %v3989
    %v3992 = vunpack.c.l.s4 1983009808
    %v3993 = vunpack.c.0.s8 %v3992
    %v3994 = vlaneseq
    %v3995 = vshrl.u32 %v3994, 7
    %v3996 = vsub.s32 %v3993, %v3995
    %v3997 = vrot.slane %v3983, %v3996
    %v3998 = vcombine.low %v3974, %v3990
    %v3999 = vcombine.high %v3974, %v3990
    %v4001 = vunpack.c.l.s4 1934713408
    %v4002 = vunpack.c.0.s8 %v4001
    %v4003 = vlaneseq
    %v4004 = vshrl.u32 %v4003, 7
    %v4005 = vsub.s32 %v4002, %v4004
    %v4006 = vrot.slane %v3998, %v4005
    %v4008 = vunpack.c.l.s4 1934713408
    %v4009 = vunpack.c.0.s8 %v4008
    %v4010 = vlaneseq
    %v4011 = vshrl.u32 %v4010, 7
    %v4012 = vsub.s32 %v4009, %v4011
    %v4013 = vrot.slane %v3999, %v4012
    %v4014 = vcombine.low %v3981, %v3997
    %v4015 = vcombine.high %v3981, %v3997
    %v4017 = vunpack.c.l.s4 1934713408
    %v4018 = vunpack.c.0.s8 %v4017
    %v4019 = vlaneseq
    %v4020 = vshrl.u32 %v4019, 7
    %v4021 = vsub.s32 %v4018, %v4020
    %v4022 = vrot.slane %v4014, %v4021
    %v4024 = vunpack.c.l.s4 1934713408
    %v4025 = vunpack.c.0.s8 %v4024
    %v4026 = vlaneseq
    %v4027 = vshrl.u32 %v4026, 7
    %v4028 = vsub.s32 %v4025, %v4027
    %v4029 = vrot.slane %v4015, %v4028
    %v4030 = vcombine.high %v4006, 0.0
    %v4031 = vcombine.high %v4013, 0.0
    %v4032 = vcombine.high %v4022, 0.0
    %v4033 = vcombine.high %v4029, 0.0
    %v4034 = vcombine.low %v3687, %v3779
    %v4035 = vcombine.high %v3687, %v3779
    %v4037 = vunpack.c.l.s4 1983009808
    %v4038 = vunpack.c.0.s8 %v4037
    %v4039 = vlaneseq
    %v4040 = vshrl.u32 %v4039, 7
    %v4041 = vsub.s32 %v4038, %v4040
    %v4042 = vrot.slane %v4034, %v4041
    %v4044 = vunpack.c.l.s4 1983009808
    %v4045 = vunpack.c.0.s8 %v4044
    %v4046 = vlaneseq
    %v4047 = vshrl.u32 %v4046, 7
    %v4048 = vsub.s32 %v4045, %v4047
    %v4049 = vrot.slane %v4035, %v4048
    %v4050 = vcombine.low %v3733, %v3825
    %v4051 = vcombine.high %v3733, %v3825
    %v4053 = vunpack.c.l.s4 1983009808
    %v4054 = vunpack.c.0.s8 %v4053
    %v4055 = vlaneseq
    %v4056 = vshrl.u32 %v4055, 7
    %v4057 = vsub.s32 %v4054, %v4056
    %v4058 = vrot.slane %v4050, %v4057
    %v4060 = vunpack.c.l.s4 1983009808
    %v4061 = vunpack.c.0.s8 %v4060
    %v4062 = vlaneseq
    %v4063 = vshrl.u32 %v4062, 7
    %v4064 = vsub.s32 %v4061, %v4063
    %v4065 = vrot.slane %v4051, %v4064
    %v4066 = vcombine.low %v4042, %v4058
    %v4067 = vcombine.high %v4042, %v4058
    %v4069 = vunpack.c.l.s4 1934713408
    %v4070 = vunpack.c.0.s8 %v4069
    %v4071 = vlaneseq
    %v4072 = vshrl.u32 %v4071, 7
    %v4073 = vsub.s32 %v4070, %v4072
    %v4074 = vrot.slane %v4066, %v4073
    %v4076 = vunpack.c.l.s4 1934713408
    %v4077 = vunpack.c.0.s8 %v4076
    %v4078 = vlaneseq
    %v4079 = vshrl.u32 %v4078, 7
    %v4080 = vsub.s32 %v4077, %v4079
    %v4081 = vrot.slane %v4067, %v4080
    %v4082 = vcombine.low %v4049, %v4065
    %v4083 = vcombine.high %v4049, %v4065
    %v4085 = vunpack.c.l.s4 1934713408
    %v4086 = vunpack.c.0.s8 %v4085
    %v4087 = vlaneseq
    %v4088 = vshrl.u32 %v4087, 7
    %v4089 = vsub.s32 %v4086, %v4088
    %v4090 = vrot.slane %v4082, %v4089
    %v4092 = vunpack.c.l.s4 1934713408
    %v4093 = vunpack.c.0.s8 %v4092
    %v4094 = vlaneseq
    %v4095 = vshrl.u32 %v4094, 7
    %v4096 = vsub.s32 %v4093, %v4095
    %v4097 = vrot.slane %v4083, %v4096
    %v4098 = vcombine.high %v4074, 0.0
    %v4099 = vcombine.high %v4081, 0.0
    %v4100 = vcombine.high %v4090, 0.0
    %v4101 = vcombine.high %v4097, 0.0
    %v4102 = vcombine.low %v3870, %v3877
    %v4104 = vunpack.c.l.s4 1983009808
    %v4105 = vunpack.c.0.s8 %v4104
    %v4106 = vlaneseq
    %v4107 = vshrl.u32 %v4106, 7
    %v4108 = vsub.s32 %v4105, %v4107
    %v4109 = vrot.slane %v4102, %v4108
    %v4110 = vcombine.low %v3894, %v3895
    %v4112 = vunpack.c.l.s4 1983009808
    %v4113 = vunpack.c.0.s8 %v4112
    %v4114 = vlaneseq
    %v4115 = vshrl.u32 %v4114, 7
    %v4116 = vsub.s32 %v4113, %v4115
    %v4117 = vrot.slane %v4110, %v4116
    %v4118 = vcombine.low %v3886, %v3893
    %v4120 = vunpack.c.l.s4 1983009808
    %v4121 = vunpack.c.0.s8 %v4120
    %v4122 = vlaneseq
    %v4123 = vshrl.u32 %v4122, 7
    %v4124 = vsub.s32 %v4121, %v4123
    %v4125 = vrot.slane %v4118, %v4124
    %v4126 = vcombine.low %v3896, %v3897
    %v4128 = vunpack.c.l.s4 1983009808
    %v4129 = vunpack.c.0.s8 %v4128
    %v4130 = vlaneseq
    %v4131 = vshrl.u32 %v4130, 7
    %v4132 = vsub.s32 %v4129, %v4131
    %v4133 = vrot.slane %v4126, %v4132
    %v4134 = vcombine.low %v4109, %v4117
    %v4135 = vcombine.high %v4109, %v4117
    %v4137 = vunpack.c.l.s4 1934713408
    %v4138 = vunpack.c.0.s8 %v4137
    %v4139 = vlaneseq
    %v4140 = vshrl.u32 %v4139, 7
    %v4141 = vsub.s32 %v4138, %v4140
    %v4142 = vrot.slane %v4134, %v4141
    %v4144 = vunpack.c.l.s4 1934713408
    %v4145 = vunpack.c.0.s8 %v4144
    %v4146 = vlaneseq
    %v4147 = vshrl.u32 %v4146, 7
    %v4148 = vsub.s32 %v4145, %v4147
    %v4149 = vrot.slane %v4135, %v4148
    %v4150 = vcombine.low %v4125, %v4133
    %v4151 = vcombine.high %v4125, %v4133
    %v4153 = vunpack.c.l.s4 1934713408
    %v4154 = vunpack.c.0.s8 %v4153
    %v4155 = vlaneseq
    %v4156 = vshrl.u32 %v4155, 7
    %v4157 = vsub.s32 %v4154, %v4156
    %v4158 = vrot.slane %v4150, %v4157
    %v4160 = vunpack.c.l.s4 1934713408
    %v4161 = vunpack.c.0.s8 %v4160
    %v4162 = vlaneseq
    %v4163 = vshrl.u32 %v4162, 7
    %v4164 = vsub.s32 %v4161, %v4163
    %v4165 = vrot.slane %v4151, %v4164
    %v4166 = vcombine.low %v4142, %v4158
    %v4167 = vcombine.high %v4142, %v4158
    %v4168 = vcombine.low %v4149, %v4165
    %v4169 = vcombine.high %v4149, %v4165
    %v4170 = vcombine.low %v3938, %v3945
    %v4172 = vunpack.c.l.s4 1983009808
    %v4173 = vunpack.c.0.s8 %v4172
    %v4174 = vlaneseq
    %v4175 = vshrl.u32 %v4174, 7
    %v4176 = vsub.s32 %v4173, %v4175
    %v4177 = vrot.slane %v4170, %v4176
    %v4178 = vcombine.low %v3962, %v3963
    %v4180 = vunpack.c.l.s4 1983009808
    %v4181 = vunpack.c.0.s8 %v4180
    %v4182 = vlaneseq
    %v4183 = vshrl.u32 %v4182, 7
    %v4184 = vsub.s32 %v4181, %v4183
    %v4185 = vrot.slane %v4178, %v4184
    %v4186 = vcombine.low %v3954, %v3961
    %v4188 = vunpack.c.l.s4 1983009808
    %v4189 = vunpack.c.0.s8 %v4188
    %v4190 = vlaneseq
    %v4191 = vshrl.u32 %v4190, 7
    %v4192 = vsub.s32 %v4189, %v4191
    %v4193 = vrot.slane %v4186, %v4192
    %v4194 = vcombine.low %v3964, %v3965
    %v4196 = vunpack.c.l.s4 1983009808
    %v4197 = vunpack.c.0.s8 %v4196
    %v4198 = vlaneseq
    %v4199 = vshrl.u32 %v4198, 7
    %v4200 = vsub.s32 %v4197, %v4199
    %v4201 = vrot.slane %v4194, %v4200
    %v4202 = vcombine.low %v4177, %v4185
    %v4203 = vcombine.high %v4177, %v4185
    %v4205 = vunpack.c.l.s4 1934713408
    %v4206 = vunpack.c.0.s8 %v4205
    %v4207 = vlaneseq
    %v4208 = vshrl.u32 %v4207, 7
    %v4209 = vsub.s32 %v4206, %v4208
    %v4210 = vrot.slane %v4202, %v4209
    %v4212 = vunpack.c.l.s4 1934713408
    %v4213 = vunpack.c.0.s8 %v4212
    %v4214 = vlaneseq
    %v4215 = vshrl.u32 %v4214, 7
    %v4216 = vsub.s32 %v4213, %v4215
    %v4217 = vrot.slane %v4203, %v4216
    %v4218 = vcombine.low %v4193, %v4201
    %v4219 = vcombine.high %v4193, %v4201
    %v4221 = vunpack.c.l.s4 1934713408
    %v4222 = vunpack.c.0.s8 %v4221
    %v4223 = vlaneseq
    %v4224 = vshrl.u32 %v4223, 7
    %v4225 = vsub.s32 %v4222, %v4224
    %v4226 = vrot.slane %v4218, %v4225
    %v4228 = vunpack.c.l.s4 1934713408
    %v4229 = vunpack.c.0.s8 %v4228
    %v4230 = vlaneseq
    %v4231 = vshrl.u32 %v4230, 7
    %v4232 = vsub.s32 %v4229, %v4231
    %v4233 = vrot.slane %v4219, %v4232
    %v4234 = vcombine.low %v4210, %v4226
    %v4235 = vcombine.high %v4210, %v4226
    %v4236 = vcombine.low %v4217, %v4233
    %v4237 = vcombine.high %v4217, %v4233
    %v4238 = vcombine.low %v4006, %v4013
    %v4240 = vunpack.c.l.s4 1983009808
    %v4241 = vunpack.c.0.s8 %v4240
    %v4242 = vlaneseq
    %v4243 = vshrl.u32 %v4242, 7
    %v4244 = vsub.s32 %v4241, %v4243
    %v4245 = vrot.slane %v4238, %v4244
    %v4246 = vcombine.low %v4030, %v4031
    %v4248 = vunpack.c.l.s4 1983009808
    %v4249 = vunpack.c.0.s8 %v4248
    %v4250 = vlaneseq
    %v4251 = vshrl.u32 %v4250, 7
    %v4252 = vsub.s32 %v4249, %v4251
    %v4253 = vrot.slane %v4246, %v4252
    %v4254 = vcombine.low %v4022, %v4029
    %v4256 = vunpack.c.l.s4 1983009808
    %v4257 = vunpack.c.0.s8 %v4256
    %v4258 = vlaneseq
    %v4259 = vshrl.u32 %v4258, 7
    %v4260 = vsub.s32 %v4257, %v4259
    %v4261 = vrot.slane %v4254, %v4260
    %v4262 = vcombine.low %v4032, %v4033
    %v4264 = vunpack.c.l.s4 1983009808
    %v4265 = vunpack.c.0.s8 %v4264
    %v4266 = vlaneseq
    %v4267 = vshrl.u32 %v4266, 7
    %v4268 = vsub.s32 %v4265, %v4267
    %v4269 = vrot.slane %v4262, %v4268
    %v4270 = vcombine.low %v4245, %v4253
    %v4271 = vcombine.high %v4245, %v4253
    %v4273 = vunpack.c.l.s4 1934713408
    %v4274 = vunpack.c.0.s8 %v4273
    %v4275 = vlaneseq
    %v4276 = vshrl.u32 %v4275, 7
    %v4277 = vsub.s32 %v4274, %v4276
    %v4278 = vrot.slane %v4270, %v4277
    %v4280 = vunpack.c.l.s4 1934713408
    %v4281 = vunpack.c.0.s8 %v4280
    %v4282 = vlaneseq
    %v4283 = vshrl.u32 %v4282, 7
    %v4284 = vsub.s32 %v4281, %v4283
    %v4285 = vrot.slane %v4271, %v4284
    %v4286 = vcombine.low %v4261, %v4269
    %v4287 = vcombine.high %v4261, %v4269
    %v4289 = vunpack.c.l.s4 1934713408
    %v4290 = vunpack.c.0.s8 %v4289
    %v4291 = vlaneseq
    %v4292 = vshrl.u32 %v4291, 7
    %v4293 = vsub.s32 %v4290, %v4292
    %v4294 = vrot.slane %v4286, %v4293
    %v4296 = vunpack.c.l.s4 1934713408
    %v4297 = vunpack.c.0.s8 %v4296
    %v4298 = vlaneseq
    %v4299 = vshrl.u32 %v4298, 7
    %v4300 = vsub.s32 %v4297, %v4299
    %v4301 = vrot.slane %v4287, %v4300
    %v4302 = vcombine.low %v4278, %v4294
    %v4303 = vcombine.high %v4278, %v4294
    %v4304 = vcombine.low %v4285, %v4301
    %v4305 = vcombine.high %v4285, %v4301
    %v4306 = vcombine.low %v4074, %v4081
    %v4308 = vunpack.c.l.s4 1983009808
    %v4309 = vunpack.c.0.s8 %v4308
    %v4310 = vlaneseq
    %v4311 = vshrl.u32 %v4310, 7
    %v4312 = vsub.s32 %v4309, %v4311
    %v4313 = vrot.slane %v4306, %v4312
    %v4314 = vcombine.low %v4098, %v4099
    %v4316 = vunpack.c.l.s4 1983009808
    %v4317 = vunpack.c.0.s8 %v4316
    %v4318 = vlaneseq
    %v4319 = vshrl.u32 %v4318, 7
    %v4320 = vsub.s32 %v4317, %v4319
    %v4321 = vrot.slane %v4314, %v4320
    %v4322 = vcombine.low %v4090, %v4097
    %v4324 = vunpack.c.l.s4 1983009808
    %v4325 = vunpack.c.0.s8 %v4324
    %v4326 = vlaneseq
    %v4327 = vshrl.u32 %v4326, 7
    %v4328 = vsub.s32 %v4325, %v4327
    %v4329 = vrot.slane %v4322, %v4328
    %v4330 = vcombine.low %v4100, %v4101
    %v4332 = vunpack.c.l.s4 1983009808
    %v4333 = vunpack.c.0.s8 %v4332
    %v4334 = vlaneseq
    %v4335 = vshrl.u32 %v4334, 7
    %v4336 = vsub.s32 %v4333, %v4335
    %v4337 = vrot.slane %v4330, %v4336
    %v4338 = vcombine.low %v4313, %v4321
    %v4339 = vcombine.high %v4313, %v4321
    %v4341 = vunpack.c.l.s4 1934713408
    %v4342 = vunpack.c.0.s8 %v4341
    %v4343 = vlaneseq
    %v4344 = vshrl.u32 %v4343, 7
    %v4345 = vsub.s32 %v4342, %v4344
    %v4346 = vrot.slane %v4338, %v4345
    %v4348 = vunpack.c.l.s4 1934713408
    %v4349 = vunpack.c.0.s8 %v4348
    %v4350 = vlaneseq
    %v4351 = vshrl.u32 %v4350, 7
    %v4352 = vsub.s32 %v4349, %v4351
    %v4353 = vrot.slane %v4339, %v4352
    %v4354 = vcombine.low %v4329, %v4337
    %v4355 = vcombine.high %v4329, %v4337
    %v4357 = vunpack.c.l.s4 1934713408
    %v4358 = vunpack.c.0.s8 %v4357
    %v4359 = vlaneseq
    %v4360 = vshrl.u32 %v4359, 7
    %v4361 = vsub.s32 %v4358, %v4360
    %v4362 = vrot.slane %v4354, %v4361
    %v4364 = vunpack.c.l.s4 1934713408
    %v4365 = vunpack.c.0.s8 %v4364
    %v4366 = vlaneseq
    %v4367 = vshrl.u32 %v4366, 7
    %v4368 = vsub.s32 %v4365, %v4367
    %v4369 = vrot.slane %v4355, %v4368
    %v4370 = vcombine.low %v4346, %v4362
    %v4371 = vcombine.high %v4346, %v4362
    %v4372 = vcombine.low %v4353, %v4369
    %v4373 = vcombine.high %v4353, %v4369
    %4378 = vrot.lane.b32.xlu0 %v4167, 8
    %v4379 = vpop.permute.xlu0 %4378
    %4380 = vrot.lane.b32.xlu0 %v4235, 8
    %v4381 = vpop.permute.xlu0 %4380
    %4382 = vrot.lane.b32.xlu0 %v4303, 8
    %v4383 = vpop.permute.xlu0 %4382
    %4384 = vrot.lane.b32.xlu0 %v4371, 8
    %v4385 = vpop.permute.xlu0 %4384
    %4394 = vrot.lane.b32.xlu0 %v4168, 16
    %v4395 = vpop.permute.xlu0 %4394
    %4396 = vrot.lane.b32.xlu0 %v4236, 16
    %v4397 = vpop.permute.xlu0 %4396
    %4398 = vrot.lane.b32.xlu0 %v4304, 16
    %v4399 = vpop.permute.xlu0 %4398
    %4400 = vrot.lane.b32.xlu0 %v4372, 16
    %v4401 = vpop.permute.xlu0 %4400
    %4410 = vrot.lane.b32.xlu0 %v4169, 24
    %v4411 = vpop.permute.xlu0 %4410
    %4412 = vrot.lane.b32.xlu0 %v4237, 24
    %v4413 = vpop.permute.xlu0 %4412
    %4414 = vrot.lane.b32.xlu0 %v4305, 24
    %v4415 = vpop.permute.xlu0 %4414
    %4416 = vrot.lane.b32.xlu0 %v4373, 24
    %v4417 = vpop.permute.xlu0 %4416
    %v4422 = vsel %vm2132, %v4166, %v4379
    %v4423 = vsel %vm2132, %v4234, %v4381
    %v4424 = vsel %vm2132, %v4302, %v4383
    %v4425 = vsel %vm2132, %v4370, %v4385
    %vm4426 = vcmask 130048
    %v4427 = vsel %vm4426, %v4422, %v4395
    %v4428 = vsel %vm4426, %v4423, %v4397
    %v4429 = vsel %vm4426, %v4424, %v4399
    %v4430 = vsel %vm4426, %v4425, %v4401
    %vm4431 = vcmask 195584
    %v4432 = vsel %vm4431, %v4427, %v4411
    %v4433 = vsel %vm4431, %v4428, %v4413
    %v4434 = vsel %vm4431, %v4429, %v4415
    %v4435 = vsel %vm4431, %v4430, %v4417
    %v4436 = vpack.c.bf16 %v4433, %v4432
    %v4437 = vpack.c.bf16 %v4435, %v4434
    %v4442 = vunpack.c.l.b16 %v232
    %v4443 = vunpack.c.l.b16 %v233
    %v4444 = vunpack.c.l.b16 %v234
    %v4445 = vunpack.c.l.b16 %v235
    %v4446 = vpack.c.b16 %v4443, %v4442
    %v4447 = vpack.c.b16 %v4445, %v4444
    %v4451 = vsel %vm260, %v4436, 0
    %v4454 = vsel %vm260, %v4437, 0
    %4456 = vmatprep.subr.bf16.mxu0 0
    %4457 = vmatpush1.bf16.msra.mxu0 %v4446
    %4458 = vmatprep.subr.bf16.mxu0 0
    %4459 = vmatpush1.bf16.msra.mxu0 %v4447
    %4460 = vmatprep.subr.bf16.mxu0 0
    %4461 = vmatpush1.bf16.msra.mxu0 0
    %4462 = vmatprep.subr.bf16.mxu0 0
    %4463 = vmatpush1.bf16.msra.mxu0 0
    %4464 = vmatprep.subr.bf16.mxu0 0
    %4465 = vmatpush1.bf16.msra.mxu0 0
    %4466 = vmatprep.subr.bf16.mxu0 0
    %4467 = vmatpush1.bf16.msra.mxu0 0
    %4468 = vmatprep.subr.bf16.mxu0 0
    %4469 = vmatpush1.bf16.msra.mxu0 0
    %4470 = vmatprep.subr.bf16.mxu0 0
    %4471 = vmatpush1.bf16.msra.mxu0 0
    %4472 = vmatprep.subr.bf16.mxu0 0
    %4473 = vmatpush1.bf16.msra.mxu0 0
    %4474 = vmatprep.subr.bf16.mxu0 0
    %4475 = vmatpush1.bf16.msra.mxu0 0
    %4476 = vmatprep.subr.bf16.mxu0 0
    %4477 = vmatpush1.bf16.msra.mxu0 0
    %4478 = vmatprep.subr.bf16.mxu0 0
    %4479 = vmatpush1.bf16.msra.mxu0 0
    %4480 = vmatprep.subr.bf16.mxu0 0
    %4481 = vmatpush1.bf16.msra.mxu0 0
    %4482 = vmatprep.subr.bf16.mxu0 0
    %4483 = vmatpush1.bf16.msra.mxu0 0
    %4484 = vmatprep.subr.bf16.mxu0 0
    %4485 = vmatpush1.bf16.msra.mxu0 0
    %4486 = vmatprep.subr.bf16.mxu0 0
    %4487 = vmatpush1.bf16.msra.mxu0 0
    %4488 = vmatprep.mubr.bf16.mxu0 0
    %4489 = vmatmul.mubr.bf16.gmra.mrb[0].mxu0 %v4451
    %v4490 = vpop.f32.mrb[0].mxu0
    %v4491 = vadd.f32 0.0, %v4490
    %v4492 = vpop.f32.mrb[0].mxu0
    %v4493 = vpop.f32.mrb[0].mxu0
    %v4494 = vadd.f32 0.0, %v4493
    %v4495 = vpop.f32.mrb[0].mxu0
    %4496 = vmatprep.mubr.bf16.mxu0 0
    %4497 = vmatmul.mubr.bf16.gmra.mrb[0].mxu0 %v4454
    %v4498 = vpop.f32.mrb[0].mxu0
    %v4499 = vadd.f32 0.0, %v4498
    %v4500 = vpop.f32.mrb[0].mxu0
    %v4501 = vpop.f32.mrb[0].mxu0
    %v4502 = vadd.f32 0.0, %v4501
    %v4503 = vpop.f32.mrb[0].mxu0
    %4504 = vdwg.mxu0
    %v4505 = vadd.f32 %v196, %v4491
    %v4506 = vadd.f32 %v197, %v4494
    %v4507 = vadd.f32 %v198, %v4499
    %v4508 = vadd.f32 %v199, %v4502
    %v4509 = vsel %vm260, %v4505, 0.0
    %4510 = vadd.xlane.f32.xlu0 %v4509
    %v4511 = vpop.xlane.xlu0 %4510
    %v4512 = vsel %vm260, %v4506, 0.0
    %4513 = vadd.xlane.f32.xlu0 %v4512
    %v4514 = vpop.xlane.xlu0 %4513
    %v4515 = vsel %vm260, %v4507, 0.0
    %4516 = vadd.xlane.f32.xlu0 %v4515
    %v4517 = vpop.xlane.xlu0 %4516
    %v4518 = vsel %vm260, %v4508, 0.0
    %4519 = vadd.xlane.f32.xlu0 %v4518
    %v4520 = vpop.xlane.xlu0 %4519
    %v4521 = vrcp.pop 32.0
    %v4522 = vmul.f32 %v4511, %v4521
    %v4523 = vmul.f32 %v4514, %v4521
    %v4524 = vmul.f32 %v4517, %v4521
    %v4525 = vmul.f32 %v4520, %v4521
    %v4526 = vsub.f32 %v4505, %v4522
    %v4527 = vsub.f32 %v4506, %v4523
    %v4528 = vsub.f32 %v4507, %v4524
    %v4529 = vsub.f32 %v4508, %v4525
    %v4530 = vmul.f32 %v4526, %v4526
    %v4531 = vmul.f32 %v4527, %v4527
    %v4532 = vmul.f32 %v4528, %v4528
    %v4533 = vmul.f32 %v4529, %v4529
    %v4534 = vsel %vm260, %v4530, 0.0
    %4535 = vadd.xlane.f32.xlu0 %v4534
    %v4536 = vpop.xlane.xlu0 %4535
    %v4537 = vsel %vm260, %v4531, 0.0
    %4538 = vadd.xlane.f32.xlu0 %v4537
    %v4539 = vpop.xlane.xlu0 %4538
    %v4540 = vsel %vm260, %v4532, 0.0
    %4541 = vadd.xlane.f32.xlu0 %v4540
    %v4542 = vpop.xlane.xlu0 %4541
    %v4543 = vsel %vm260, %v4533, 0.0
    %4544 = vadd.xlane.f32.xlu0 %v4543
    %v4545 = vpop.xlane.xlu0 %4544
    %v4546 = vmul.f32 %v4536, %v4521
    %v4547 = vmul.f32 %v4539, %v4521
    %v4548 = vmul.f32 %v4542, %v4521
    %v4549 = vmul.f32 %v4545, %v4521
    %v4550 = vadd.f32 %v4546, 1e-05
    %v4551 = vadd.f32 %v4547, 1e-05
    %v4552 = vadd.f32 %v4548, 1e-05
    %v4553 = vadd.f32 %v4549, 1e-05
    %v4554 = vrsqrt.pop %v4550
    %v4555 = vrsqrt.pop %v4551
    %v4556 = vrsqrt.pop %v4552
    %v4557 = vrsqrt.pop %v4553
    %v4558 = vmul.f32 %v4526, %v4554
    %v4559 = vmul.f32 %v4527, %v4555
    %v4560 = vmul.f32 %v4528, %v4556
    %v4561 = vmul.f32 %v4529, %v4557
    %v4563 = vlaneseq
    %v4564 = vshrl.u32 %v4563, 7
    %v4565 = vsub.s32 0, %v4564
    %v4566 = vrot.slane %v244, %v4565
    %v4568 = vmul.f32 %v4558, %v4566
    %v4569 = vmul.f32 %v4559, %v4566
    %v4570 = vmul.f32 %v4560, %v4566
    %v4571 = vmul.f32 %v4561, %v4566
    %v4573 = vlaneseq
    %v4574 = vshrl.u32 %v4573, 7
    %v4575 = vsub.s32 0, %v4574
    %v4576 = vrot.slane %v245, %v4575
    %v4578 = vadd.f32 %v4568, %v4576
    %v4579 = vadd.f32 %v4569, %v4576
    %v4580 = vadd.f32 %v4570, %v4576
    %v4581 = vadd.f32 %v4571, %v4576
    %v4582 = vpack.c.bf16 %v4579, %v4578
    %v4583 = vpack.c.bf16 %v4581, %v4580
    %v4588 = vunpack.c.l.b16 %v236
    %v4589 = vunpack.c.l.b16 %v237
    %v4590 = vunpack.c.l.b16 %v238
    %v4591 = vunpack.c.l.b16 %v239
    %v4592 = vpack.c.b16 %v4589, %v4588
    %v4593 = vpack.c.b16 %v4591, %v4590
    %v4597 = vsel %vm260, %v4582, 0
    %v4600 = vsel %vm260, %v4583, 0
    %4602 = vmatprep.subr.bf16.mxu0 0
    %4603 = vmatpush1.bf16.msra.mxu0 %v4592
    %4604 = vmatprep.subr.bf16.mxu0 0
    %4605 = vmatpush1.bf16.msra.mxu0 %v4593
    %4606 = vmatprep.subr.bf16.mxu0 0
    %4607 = vmatpush1.bf16.msra.mxu0 0
    %4608 = vmatprep.subr.bf16.mxu0 0
    %4609 = vmatpush1.bf16.msra.mxu0 0
    %4610 = vmatprep.subr.bf16.mxu0 0
    %4611 = vmatpush1.bf16.msra.mxu0 0
    %4612 = vmatprep.subr.bf16.mxu0 0
    %4613 = vmatpush1.bf16.msra.mxu0 0
    %4614 = vmatprep.subr.bf16.mxu0 0
    %4615 = vmatpush1.bf16.msra.mxu0 0
    %4616 = vmatprep.subr.bf16.mxu0 0
    %4617 = vmatpush1.bf16.msra.mxu0 0
    %4618 = vmatprep.subr.bf16.mxu0 0
    %4619 = vmatpush1.bf16.msra.mxu0 0
    %4620 = vmatprep.subr.bf16.mxu0 0
    %4621 = vmatpush1.bf16.msra.mxu0 0
    %4622 = vmatprep.subr.bf16.mxu0 0
    %4623 = vmatpush1.bf16.msra.mxu0 0
    %4624 = vmatprep.subr.bf16.mxu0 0
    %4625 = vmatpush1.bf16.msra.mxu0 0
    %4626 = vmatprep.subr.bf16.mxu0 0
    %4627 = vmatpush1.bf16.msra.mxu0 0
    %4628 = vmatprep.subr.bf16.mxu0 0
    %4629 = vmatpush1.bf16.msra.mxu0 0
    %4630 = vmatprep.subr.bf16.mxu0 0
    %4631 = vmatpush1.bf16.msra.mxu0 0
    %4632 = vmatprep.subr.bf16.mxu0 0
    %4633 = vmatpush1.bf16.msra.mxu0 0
    %4634 = vmatprep.mubr.bf16.mxu0 0
    %4635 = vmatmul.mubr.bf16.gmra.mrb[0].mxu0 %v4597
    %v4636 = vpop.f32.mrb[0].mxu0
    %v4637 = vadd.f32 0.0, %v4636
    %v4638 = vpop.f32.mrb[0].mxu0
    %v4639 = vpop.f32.mrb[0].mxu0
    %v4640 = vadd.f32 0.0, %v4639
    %v4641 = vpop.f32.mrb[0].mxu0
    %4642 = vmatprep.mubr.bf16.mxu0 0
    %4643 = vmatmul.mubr.bf16.gmra.mrb[0].mxu0 %v4600
    %v4644 = vpop.f32.mrb[0].mxu0
    %v4645 = vadd.f32 0.0, %v4644
    %v4646 = vpop.f32.mrb[0].mxu0
    %v4647 = vpop.f32.mrb[0].mxu0
    %v4648 = vadd.f32 0.0, %v4647
    %v4649 = vpop.f32.mrb[0].mxu0
    %4650 = vdwg.mxu0
    %v4651 = vmax.f32 %v4637, 0.0
    %v4652 = vmax.f32 %v4640, 0.0
    %v4653 = vmax.f32 %v4645, 0.0
    %v4654 = vmax.f32 %v4648, 0.0
    %v4655 = vpack.c.bf16 %v4652, %v4651
    %v4656 = vpack.c.bf16 %v4654, %v4653
    %v4661 = vunpack.c.l.b16 %v240
    %v4662 = vunpack.c.l.b16 %v241
    %v4663 = vunpack.c.l.b16 %v242
    %v4664 = vunpack.c.l.b16 %v243
    %v4665 = vpack.c.b16 %v4662, %v4661
    %v4666 = vpack.c.b16 %v4664, %v4663
    %v4670 = vsel %vm260, %v4655, 0
    %v4673 = vsel %vm260, %v4656, 0
    %4675 = vmatprep.subr.bf16.mxu0 0
    %4676 = vmatpush1.bf16.msra.mxu0 %v4665
    %4677 = vmatprep.subr.bf16.mxu0 0
    %4678 = vmatpush1.bf16.msra.mxu0 %v4666
    %4679 = vmatprep.subr.bf16.mxu0 0
    %4680 = vmatpush1.bf16.msra.mxu0 0
    %4681 = vmatprep.subr.bf16.mxu0 0
    %4682 = vmatpush1.bf16.msra.mxu0 0
    %4683 = vmatprep.subr.bf16.mxu0 0
    %4684 = vmatpush1.bf16.msra.mxu0 0
    %4685 = vmatprep.subr.bf16.mxu0 0
    %4686 = vmatpush1.bf16.msra.mxu0 0
    %4687 = vmatprep.subr.bf16.mxu0 0
    %4688 = vmatpush1.bf16.msra.mxu0 0
    %4689 = vmatprep.subr.bf16.mxu0 0
    %4690 = vmatpush1.bf16.msra.mxu0 0
    %4691 = vmatprep.subr.bf16.mxu0 0
    %4692 = vmatpush1.bf16.msra.mxu0 0
    %4693 = vmatprep.subr.bf16.mxu0 0
    %4694 = vmatpush1.bf16.msra.mxu0 0
    %4695 = vmatprep.subr.bf16.mxu0 0
    %4696 = vmatpush1.bf16.msra.mxu0 0
    %4697 = vmatprep.subr.bf16.mxu0 0
    %4698 = vmatpush1.bf16.msra.mxu0 0
    %4699 = vmatprep.subr.bf16.mxu0 0
    %4700 = vmatpush1.bf16.msra.mxu0 0
    %4701 = vmatprep.subr.bf16.mxu0 0
    %4702 = vmatpush1.bf16.msra.mxu0 0
    %4703 = vmatprep.subr.bf16.mxu0 0
    %4704 = vmatpush1.bf16.msra.mxu0 0
    %4705 = vmatprep.subr.bf16.mxu0 0
    %4706 = vmatpush1.bf16.msra.mxu0 0
    %4707 = vmatprep.mubr.bf16.mxu0 0
    %4708 = vmatmul.mubr.bf16.gmra.mrb[0].mxu0 %v4670
    %v4709 = vpop.f32.mrb[0].mxu0
    %v4710 = vadd.f32 0.0, %v4709
    %v4711 = vpop.f32.mrb[0].mxu0
    %v4712 = vpop.f32.mrb[0].mxu0
    %v4713 = vadd.f32 0.0, %v4712
    %v4714 = vpop.f32.mrb[0].mxu0
    %4715 = vmatprep.mubr.bf16.mxu0 0
    %4716 = vmatmul.mubr.bf16.gmra.mrb[0].mxu0 %v4673
    %v4717 = vpop.f32.mrb[0].mxu0
    %v4718 = vadd.f32 0.0, %v4717
    %v4719 = vpop.f32.mrb[0].mxu0
    %v4720 = vpop.f32.mrb[0].mxu0
    %v4721 = vadd.f32 0.0, %v4720
    %v4722 = vpop.f32.mrb[0].mxu0
    %4723 = vdwg.mxu0
    %v4724 = vadd.f32 %v4505, %v4710
    %v4725 = vadd.f32 %v4506, %v4713
    %v4726 = vadd.f32 %v4507, %v4718
    %v4727 = vadd.f32 %v4508, %v4721
    %s4728 = scalar_lea.vmem [#allocation7], 16
    %v4729 = vld [vmem:[%s4728] sm:$0xf]
    %v4730 = vld [vmem:[%s4728 + $0x4] sm:$0xf]
    %v4731 = vld [vmem:[%s4728 + $0x8] sm:$0xf]
    %v4732 = vld [vmem:[%s4728 + $0xc] sm:$0xf]
    %s4733 = scalar_lea.vmem [#allocation8], 16
    %v4734 = vld [vmem:[%s4733] sm:$0xf]
    %v4735 = vld [vmem:[%s4733 + $0x4] sm:$0xf]
    %v4736 = vld [vmem:[%s4733 + $0x8] sm:$0xf]
    %v4737 = vld [vmem:[%s4733 + $0xc] sm:$0xf]
    %s4738 = scalar_lea.vmem [#allocation10], 16
    %v4739 = vld [vmem:[%s4738] sm:$0xf]
    %v4740 = vld [vmem:[%s4738 + $0x4] sm:$0xf]
    %v4741 = vld [vmem:[%s4738 + $0x8] sm:$0xf]
    %v4742 = vld [vmem:[%s4738 + $0xc] sm:$0xf]
    %s4743 = scalar_lea.vmem %s7, 16
    %v4744 = vld [vmem:[%s4743] sm:$0xf]
    %v4745 = vld [vmem:[%s4743 + $0x4] sm:$0xf]
    %v4746 = vld [vmem:[%s4743 + $0x8] sm:$0xf]
    %v4747 = vld [vmem:[%s4743 + $0xc] sm:$0xf]
    %s4748 = scalar_lea.vmem %s8, 1
    %v4749 = vld [vmem:[%s4748] sm:$0x1]
    %s4750 = scalar_lea.vmem %s9, 1
    %v4751 = vld [vmem:[%s4750] sm:$0x1]
    %v4752 = vpack.c.bf16 %v4725, %v4724
    %v4753 = vpack.c.bf16 %v4727, %v4726
    %v4758 = vunpack.c.l.b16 %v4729
    %v4759 = vunpack.c.l.b16 %v4730
    %v4760 = vunpack.c.l.b16 %v4731
    %v4761 = vunpack.c.l.b16 %v4732
    %v4762 = vpack.c.b16 %v4759, %v4758
    %v4763 = vpack.c.b16 %v4761, %v4760
    %v4767 = vsel %vm260, %v4752, 0
    %v4770 = vsel %vm260, %v4753, 0
    %4772 = vmatprep.subr.bf16.mxu0 0
    %4773 = vmatpush1.bf16.msra.mxu0 %v4762
    %4774 = vmatprep.subr.bf16.mxu0 0
    %4775 = vmatpush1.bf16.msra.mxu0 %v4763
    %4776 = vmatprep.subr.bf16.mxu0 0
    %4777 = vmatpush1.bf16.msra.mxu0 0
    %4778 = vmatprep.subr.bf16.mxu0 0
    %4779 = vmatpush1.bf16.msra.mxu0 0
    %4780 = vmatprep.subr.bf16.mxu0 0
    %4781 = vmatpush1.bf16.msra.mxu0 0
    %4782 = vmatprep.subr.bf16.mxu0 0
    %4783 = vmatpush1.bf16.msra.mxu0 0
    %4784 = vmatprep.subr.bf16.mxu0 0
    %4785 = vmatpush1.bf16.msra.mxu0 0
    %4786 = vmatprep.subr.bf16.mxu0 0
    %4787 = vmatpush1.bf16.msra.mxu0 0
    %4788 = vmatprep.subr.bf16.mxu0 0
    %4789 = vmatpush1.bf16.msra.mxu0 0
    %4790 = vmatprep.subr.bf16.mxu0 0
    %4791 = vmatpush1.bf16.msra.mxu0 0
    %4792 = vmatprep.subr.bf16.mxu0 0
    %4793 = vmatpush1.bf16.msra.mxu0 0
    %4794 = vmatprep.subr.bf16.mxu0 0
    %4795 = vmatpush1.bf16.msra.mxu0 0
    %4796 = vmatprep.subr.bf16.mxu0 0
    %4797 = vmatpush1.bf16.msra.mxu0 0
    %4798 = vmatprep.subr.bf16.mxu0 0
    %4799 = vmatpush1.bf16.msra.mxu0 0
    %4800 = vmatprep.subr.bf16.mxu0 0
    %4801 = vmatpush1.bf16.msra.mxu0 0
    %4802 = vmatprep.subr.bf16.mxu0 0
    %4803 = vmatpush1.bf16.msra.mxu0 0
    %4804 = vmatprep.mubr.bf16.mxu0 0
    %4805 = vmatmul.mubr.bf16.gmra.mrb[0].mxu0 %v4767
    %v4806 = vpop.f32.mrb[0].mxu0
    %v4807 = vadd.f32 0.0, %v4806
    %v4808 = vpop.f32.mrb[0].mxu0
    %v4809 = vpop.f32.mrb[0].mxu0
    %v4810 = vadd.f32 0.0, %v4809
    %v4811 = vpop.f32.mrb[0].mxu0
    %4812 = vmatprep.mubr.bf16.mxu0 0
    %4813 = vmatmul.mubr.bf16.gmra.mrb[0].mxu0 %v4770
    %v4814 = vpop.f32.mrb[0].mxu0
    %v4815 = vadd.f32 0.0, %v4814
    %v4816 = vpop.f32.mrb[0].mxu0
    %v4817 = vpop.f32.mrb[0].mxu0
    %v4818 = vadd.f32 0.0, %v4817
    %v4819 = vpop.f32.mrb[0].mxu0
    %4820 = vdwg.mxu0
    %4825 = vrot.lane.b32.xlu0 %v4807, 120
    %v4826 = vpop.permute.xlu0 %4825
    %4827 = vrot.lane.b32.xlu0 %v4810, 120
    %v4828 = vpop.permute.xlu0 %4827
    %4829 = vrot.lane.b32.xlu0 %v4815, 120
    %v4830 = vpop.permute.xlu0 %4829
    %4831 = vrot.lane.b32.xlu0 %v4818, 120
    %v4832 = vpop.permute.xlu0 %4831
    %4837 = vrot.lane.b32.xlu0 %v4807, 112
    %v4838 = vpop.permute.xlu0 %4837
    %4839 = vrot.lane.b32.xlu0 %v4810, 112
    %v4840 = vpop.permute.xlu0 %4839
    %4841 = vrot.lane.b32.xlu0 %v4815, 112
    %v4842 = vpop.permute.xlu0 %4841
    %4843 = vrot.lane.b32.xlu0 %v4818, 112
    %v4844 = vpop.permute.xlu0 %4843
    %4849 = vrot.lane.b32.xlu0 %v4807, 104
    %v4850 = vpop.permute.xlu0 %4849
    %4851 = vrot.lane.b32.xlu0 %v4810, 104
    %v4852 = vpop.permute.xlu0 %4851
    %4853 = vrot.lane.b32.xlu0 %v4815, 104
    %v4854 = vpop.permute.xlu0 %4853
    %4855 = vrot.lane.b32.xlu0 %v4818, 104
    %v4856 = vpop.permute.xlu0 %4855
    %v4861 = vcombine.low %v4807, %v4838
    %v4862 = vcombine.high %v4807, %v4838
    %v4864 = vunpack.c.l.s4 1983009808
    %v4865 = vunpack.c.0.s8 %v4864
    %v4866 = vlaneseq
    %v4867 = vshrl.u32 %v4866, 7
    %v4868 = vsub.s32 %v4865, %v4867
    %v4869 = vrot.slane %v4861, %v4868
    %v4871 = vunpack.c.l.s4 1983009808
    %v4872 = vunpack.c.0.s8 %v4871
    %v4873 = vlaneseq
    %v4874 = vshrl.u32 %v4873, 7
    %v4875 = vsub.s32 %v4872, %v4874
    %v4876 = vrot.slane %v4862, %v4875
    %v4877 = vcombine.low %v4826, %v4850
    %v4878 = vcombine.high %v4826, %v4850
    %v4880 = vunpack.c.l.s4 1983009808
    %v4881 = vunpack.c.0.s8 %v4880
    %v4882 = vlaneseq
    %v4883 = vshrl.u32 %v4882, 7
    %v4884 = vsub.s32 %v4881, %v4883
    %v4885 = vrot.slane %v4877, %v4884
    %v4887 = vunpack.c.l.s4 1983009808
    %v4888 = vunpack.c.0.s8 %v4887
    %v4889 = vlaneseq
    %v4890 = vshrl.u32 %v4889, 7
    %v4891 = vsub.s32 %v4888, %v4890
    %v4892 = vrot.slane %v4878, %v4891
    %v4893 = vcombine.low %v4869, %v4885
    %v4894 = vcombine.high %v4869, %v4885
    %v4896 = vunpack.c.l.s4 1934713408
    %v4897 = vunpack.c.0.s8 %v4896
    %v4898 = vlaneseq
    %v4899 = vshrl.u32 %v4898, 7
    %v4900 = vsub.s32 %v4897, %v4899
    %v4901 = vrot.slane %v4893, %v4900
    %v4903 = vunpack.c.l.s4 1934713408
    %v4904 = vunpack.c.0.s8 %v4903
    %v4905 = vlaneseq
    %v4906 = vshrl.u32 %v4905, 7
    %v4907 = vsub.s32 %v4904, %v4906
    %v4908 = vrot.slane %v4894, %v4907
    %v4909 = vcombine.low %v4876, %v4892
    %v4910 = vcombine.high %v4876, %v4892
    %v4912 = vunpack.c.l.s4 1934713408
    %v4913 = vunpack.c.0.s8 %v4912
    %v4914 = vlaneseq
    %v4915 = vshrl.u32 %v4914, 7
    %v4916 = vsub.s32 %v4913, %v4915
    %v4917 = vrot.slane %v4909, %v4916
    %v4919 = vunpack.c.l.s4 1934713408
    %v4920 = vunpack.c.0.s8 %v4919
    %v4921 = vlaneseq
    %v4922 = vshrl.u32 %v4921, 7
    %v4923 = vsub.s32 %v4920, %v4922
    %v4924 = vrot.slane %v4910, %v4923
    %v4925 = vcombine.high %v4901, 0.0
    %v4926 = vcombine.high %v4908, 0.0
    %v4927 = vcombine.high %v4917, 0.0
    %v4928 = vcombine.high %v4924, 0.0
    %v4929 = vcombine.low %v4810, %v4840
    %v4930 = vcombine.high %v4810, %v4840
    %v4932 = vunpack.c.l.s4 1983009808
    %v4933 = vunpack.c.0.s8 %v4932
    %v4934 = vlaneseq
    %v4935 = vshrl.u32 %v4934, 7
    %v4936 = vsub.s32 %v4933, %v4935
    %v4937 = vrot.slane %v4929, %v4936
    %v4939 = vunpack.c.l.s4 1983009808
    %v4940 = vunpack.c.0.s8 %v4939
    %v4941 = vlaneseq
    %v4942 = vshrl.u32 %v4941, 7
    %v4943 = vsub.s32 %v4940, %v4942
    %v4944 = vrot.slane %v4930, %v4943
    %v4945 = vcombine.low %v4828, %v4852
    %v4946 = vcombine.high %v4828, %v4852
    %v4948 = vunpack.c.l.s4 1983009808
    %v4949 = vunpack.c.0.s8 %v4948
    %v4950 = vlaneseq
    %v4951 = vshrl.u32 %v4950, 7
    %v4952 = vsub.s32 %v4949, %v4951
    %v4953 = vrot.slane %v4945, %v4952
    %v4955 = vunpack.c.l.s4 1983009808
    %v4956 = vunpack.c.0.s8 %v4955
    %v4957 = vlaneseq
    %v4958 = vshrl.u32 %v4957, 7
    %v4959 = vsub.s32 %v4956, %v4958
    %v4960 = vrot.slane %v4946, %v4959
    %v4961 = vcombine.low %v4937, %v4953
    %v4962 = vcombine.high %v4937, %v4953
    %v4964 = vunpack.c.l.s4 1934713408
    %v4965 = vunpack.c.0.s8 %v4964
    %v4966 = vlaneseq
    %v4967 = vshrl.u32 %v4966, 7
    %v4968 = vsub.s32 %v4965, %v4967
    %v4969 = vrot.slane %v4961, %v4968
    %v4971 = vunpack.c.l.s4 1934713408
    %v4972 = vunpack.c.0.s8 %v4971
    %v4973 = vlaneseq
    %v4974 = vshrl.u32 %v4973, 7
    %v4975 = vsub.s32 %v4972, %v4974
    %v4976 = vrot.slane %v4962, %v4975
    %v4977 = vcombine.low %v4944, %v4960
    %v4978 = vcombine.high %v4944, %v4960
    %v4980 = vunpack.c.l.s4 1934713408
    %v4981 = vunpack.c.0.s8 %v4980
    %v4982 = vlaneseq
    %v4983 = vshrl.u32 %v4982, 7
    %v4984 = vsub.s32 %v4981, %v4983
    %v4985 = vrot.slane %v4977, %v4984
    %v4987 = vunpack.c.l.s4 1934713408
    %v4988 = vunpack.c.0.s8 %v4987
    %v4989 = vlaneseq
    %v4990 = vshrl.u32 %v4989, 7
    %v4991 = vsub.s32 %v4988, %v4990
    %v4992 = vrot.slane %v4978, %v4991
    %v4993 = vcombine.high %v4969, 0.0
    %v4994 = vcombine.high %v4976, 0.0
    %v4995 = vcombine.high %v4985, 0.0
    %v4996 = vcombine.high %v4992, 0.0
    %v4997 = vcombine.low %v4815, %v4842
    %v4998 = vcombine.high %v4815, %v4842
    %v5000 = vunpack.c.l.s4 1983009808
    %v5001 = vunpack.c.0.s8 %v5000
    %v5002 = vlaneseq
    %v5003 = vshrl.u32 %v5002, 7
    %v5004 = vsub.s32 %v5001, %v5003
    %v5005 = vrot.slane %v4997, %v5004
    %v5007 = vunpack.c.l.s4 1983009808
    %v5008 = vunpack.c.0.s8 %v5007
    %v5009 = vlaneseq
    %v5010 = vshrl.u32 %v5009, 7
    %v5011 = vsub.s32 %v5008, %v5010
    %v5012 = vrot.slane %v4998, %v5011
    %v5013 = vcombine.low %v4830, %v4854
    %v5014 = vcombine.high %v4830, %v4854
    %v5016 = vunpack.c.l.s4 1983009808
    %v5017 = vunpack.c.0.s8 %v5016
    %v5018 = vlaneseq
    %v5019 = vshrl.u32 %v5018, 7
    %v5020 = vsub.s32 %v5017, %v5019
    %v5021 = vrot.slane %v5013, %v5020
    %v5023 = vunpack.c.l.s4 1983009808
    %v5024 = vunpack.c.0.s8 %v5023
    %v5025 = vlaneseq
    %v5026 = vshrl.u32 %v5025, 7
    %v5027 = vsub.s32 %v5024, %v5026
    %v5028 = vrot.slane %v5014, %v5027
    %v5029 = vcombine.low %v5005, %v5021
    %v5030 = vcombine.high %v5005, %v5021
    %v5032 = vunpack.c.l.s4 1934713408
    %v5033 = vunpack.c.0.s8 %v5032
    %v5034 = vlaneseq
    %v5035 = vshrl.u32 %v5034, 7
    %v5036 = vsub.s32 %v5033, %v5035
    %v5037 = vrot.slane %v5029, %v5036
    %v5039 = vunpack.c.l.s4 1934713408
    %v5040 = vunpack.c.0.s8 %v5039
    %v5041 = vlaneseq
    %v5042 = vshrl.u32 %v5041, 7
    %v5043 = vsub.s32 %v5040, %v5042
    %v5044 = vrot.slane %v5030, %v5043
    %v5045 = vcombine.low %v5012, %v5028
    %v5046 = vcombine.high %v5012, %v5028
    %v5048 = vunpack.c.l.s4 1934713408
    %v5049 = vunpack.c.0.s8 %v5048
    %v5050 = vlaneseq
    %v5051 = vshrl.u32 %v5050, 7
    %v5052 = vsub.s32 %v5049, %v5051
    %v5053 = vrot.slane %v5045, %v5052
    %v5055 = vunpack.c.l.s4 1934713408
    %v5056 = vunpack.c.0.s8 %v5055
    %v5057 = vlaneseq
    %v5058 = vshrl.u32 %v5057, 7
    %v5059 = vsub.s32 %v5056, %v5058
    %v5060 = vrot.slane %v5046, %v5059
    %v5061 = vcombine.high %v5037, 0.0
    %v5062 = vcombine.high %v5044, 0.0
    %v5063 = vcombine.high %v5053, 0.0
    %v5064 = vcombine.high %v5060, 0.0
    %v5065 = vcombine.low %v4818, %v4844
    %v5066 = vcombine.high %v4818, %v4844
    %v5068 = vunpack.c.l.s4 1983009808
    %v5069 = vunpack.c.0.s8 %v5068
    %v5070 = vlaneseq
    %v5071 = vshrl.u32 %v5070, 7
    %v5072 = vsub.s32 %v5069, %v5071
    %v5073 = vrot.slane %v5065, %v5072
    %v5075 = vunpack.c.l.s4 1983009808
    %v5076 = vunpack.c.0.s8 %v5075
    %v5077 = vlaneseq
    %v5078 = vshrl.u32 %v5077, 7
    %v5079 = vsub.s32 %v5076, %v5078
    %v5080 = vrot.slane %v5066, %v5079
    %v5081 = vcombine.low %v4832, %v4856
    %v5082 = vcombine.high %v4832, %v4856
    %v5084 = vunpack.c.l.s4 1983009808
    %v5085 = vunpack.c.0.s8 %v5084
    %v5086 = vlaneseq
    %v5087 = vshrl.u32 %v5086, 7
    %v5088 = vsub.s32 %v5085, %v5087
    %v5089 = vrot.slane %v5081, %v5088
    %v5091 = vunpack.c.l.s4 1983009808
    %v5092 = vunpack.c.0.s8 %v5091
    %v5093 = vlaneseq
    %v5094 = vshrl.u32 %v5093, 7
    %v5095 = vsub.s32 %v5092, %v5094
    %v5096 = vrot.slane %v5082, %v5095
    %v5097 = vcombine.low %v5073, %v5089
    %v5098 = vcombine.high %v5073, %v5089
    %v5100 = vunpack.c.l.s4 1934713408
    %v5101 = vunpack.c.0.s8 %v5100
    %v5102 = vlaneseq
    %v5103 = vshrl.u32 %v5102, 7
    %v5104 = vsub.s32 %v5101, %v5103
    %v5105 = vrot.slane %v5097, %v5104
    %v5107 = vunpack.c.l.s4 1934713408
    %v5108 = vunpack.c.0.s8 %v5107
    %v5109 = vlaneseq
    %v5110 = vshrl.u32 %v5109, 7
    %v5111 = vsub.s32 %v5108, %v5110
    %v5112 = vrot.slane %v5098, %v5111
    %v5113 = vcombine.low %v5080, %v5096
    %v5114 = vcombine.high %v5080, %v5096
    %v5116 = vunpack.c.l.s4 1934713408
    %v5117 = vunpack.c.0.s8 %v5116
    %v5118 = vlaneseq
    %v5119 = vshrl.u32 %v5118, 7
    %v5120 = vsub.s32 %v5117, %v5119
    %v5121 = vrot.slane %v5113, %v5120
    %v5123 = vunpack.c.l.s4 1934713408
    %v5124 = vunpack.c.0.s8 %v5123
    %v5125 = vlaneseq
    %v5126 = vshrl.u32 %v5125, 7
    %v5127 = vsub.s32 %v5124, %v5126
    %v5128 = vrot.slane %v5114, %v5127
    %v5129 = vcombine.high %v5105, 0.0
    %v5130 = vcombine.high %v5112, 0.0
    %v5131 = vcombine.high %v5121, 0.0
    %v5132 = vcombine.high %v5128, 0.0
    %v5133 = vcombine.low %v4901, %v4908
    %v5135 = vunpack.c.l.s4 1983009808
    %v5136 = vunpack.c.0.s8 %v5135
    %v5137 = vlaneseq
    %v5138 = vshrl.u32 %v5137, 7
    %v5139 = vsub.s32 %v5136, %v5138
    %v5140 = vrot.slane %v5133, %v5139
    %v5141 = vcombine.low %v4925, %v4926
    %v5143 = vunpack.c.l.s4 1983009808
    %v5144 = vunpack.c.0.s8 %v5143
    %v5145 = vlaneseq
    %v5146 = vshrl.u32 %v5145, 7
    %v5147 = vsub.s32 %v5144, %v5146
    %v5148 = vrot.slane %v5141, %v5147
    %v5149 = vcombine.low %v4917, %v4924
    %v5151 = vunpack.c.l.s4 1983009808
    %v5152 = vunpack.c.0.s8 %v5151
    %v5153 = vlaneseq
    %v5154 = vshrl.u32 %v5153, 7
    %v5155 = vsub.s32 %v5152, %v5154
    %v5156 = vrot.slane %v5149, %v5155
    %v5157 = vcombine.low %v4927, %v4928
    %v5159 = vunpack.c.l.s4 1983009808
    %v5160 = vunpack.c.0.s8 %v5159
    %v5161 = vlaneseq
    %v5162 = vshrl.u32 %v5161, 7
    %v5163 = vsub.s32 %v5160, %v5162
    %v5164 = vrot.slane %v5157, %v5163
    %v5165 = vcombine.low %v5140, %v5148
    %v5166 = vcombine.high %v5140, %v5148
    %v5168 = vunpack.c.l.s4 1934713408
    %v5169 = vunpack.c.0.s8 %v5168
    %v5170 = vlaneseq
    %v5171 = vshrl.u32 %v5170, 7
    %v5172 = vsub.s32 %v5169, %v5171
    %v5173 = vrot.slane %v5165, %v5172
    %v5175 = vunpack.c.l.s4 1934713408
    %v5176 = vunpack.c.0.s8 %v5175
    %v5177 = vlaneseq
    %v5178 = vshrl.u32 %v5177, 7
    %v5179 = vsub.s32 %v5176, %v5178
    %v5180 = vrot.slane %v5166, %v5179
    %v5181 = vcombine.low %v5156, %v5164
    %v5182 = vcombine.high %v5156, %v5164
    %v5184 = vunpack.c.l.s4 1934713408
    %v5185 = vunpack.c.0.s8 %v5184
    %v5186 = vlaneseq
    %v5187 = vshrl.u32 %v5186, 7
    %v5188 = vsub.s32 %v5185, %v5187
    %v5189 = vrot.slane %v5181, %v5188
    %v5191 = vunpack.c.l.s4 1934713408
    %v5192 = vunpack.c.0.s8 %v5191
    %v5193 = vlaneseq
    %v5194 = vshrl.u32 %v5193, 7
    %v5195 = vsub.s32 %v5192, %v5194
    %v5196 = vrot.slane %v5182, %v5195
    %v5197 = vcombine.low %v5173, %v5189
    %v5198 = vcombine.high %v5173, %v5189
    %v5199 = vcombine.low %v5180, %v5196
    %v5200 = vcombine.high %v5180, %v5196
    %v5201 = vcombine.low %v4969, %v4976
    %v5203 = vunpack.c.l.s4 1983009808
    %v5204 = vunpack.c.0.s8 %v5203
    %v5205 = vlaneseq
    %v5206 = vshrl.u32 %v5205, 7
    %v5207 = vsub.s32 %v5204, %v5206
    %v5208 = vrot.slane %v5201, %v5207
    %v5209 = vcombine.low %v4993, %v4994
    %v5211 = vunpack.c.l.s4 1983009808
    %v5212 = vunpack.c.0.s8 %v5211
    %v5213 = vlaneseq
    %v5214 = vshrl.u32 %v5213, 7
    %v5215 = vsub.s32 %v5212, %v5214
    %v5216 = vrot.slane %v5209, %v5215
    %v5217 = vcombine.low %v4985, %v4992
    %v5219 = vunpack.c.l.s4 1983009808
    %v5220 = vunpack.c.0.s8 %v5219
    %v5221 = vlaneseq
    %v5222 = vshrl.u32 %v5221, 7
    %v5223 = vsub.s32 %v5220, %v5222
    %v5224 = vrot.slane %v5217, %v5223
    %v5225 = vcombine.low %v4995, %v4996
    %v5227 = vunpack.c.l.s4 1983009808
    %v5228 = vunpack.c.0.s8 %v5227
    %v5229 = vlaneseq
    %v5230 = vshrl.u32 %v5229, 7
    %v5231 = vsub.s32 %v5228, %v5230
    %v5232 = vrot.slane %v5225, %v5231
    %v5233 = vcombine.low %v5208, %v5216
    %v5234 = vcombine.high %v5208, %v5216
    %v5236 = vunpack.c.l.s4 1934713408
    %v5237 = vunpack.c.0.s8 %v5236
    %v5238 = vlaneseq
    %v5239 = vshrl.u32 %v5238, 7
    %v5240 = vsub.s32 %v5237, %v5239
    %v5241 = vrot.slane %v5233, %v5240
    %v5243 = vunpack.c.l.s4 1934713408
    %v5244 = vunpack.c.0.s8 %v5243
    %v5245 = vlaneseq
    %v5246 = vshrl.u32 %v5245, 7
    %v5247 = vsub.s32 %v5244, %v5246
    %v5248 = vrot.slane %v5234, %v5247
    %v5249 = vcombine.low %v5224, %v5232
    %v5250 = vcombine.high %v5224, %v5232
    %v5252 = vunpack.c.l.s4 1934713408
    %v5253 = vunpack.c.0.s8 %v5252
    %v5254 = vlaneseq
    %v5255 = vshrl.u32 %v5254, 7
    %v5256 = vsub.s32 %v5253, %v5255
    %v5257 = vrot.slane %v5249, %v5256
    %v5259 = vunpack.c.l.s4 1934713408
    %v5260 = vunpack.c.0.s8 %v5259
    %v5261 = vlaneseq
    %v5262 = vshrl.u32 %v5261, 7
    %v5263 = vsub.s32 %v5260, %v5262
    %v5264 = vrot.slane %v5250, %v5263
    %v5265 = vcombine.low %v5241, %v5257
    %v5266 = vcombine.high %v5241, %v5257
    %v5267 = vcombine.low %v5248, %v5264
    %v5268 = vcombine.high %v5248, %v5264
    %v5269 = vcombine.low %v5037, %v5044
    %v5271 = vunpack.c.l.s4 1983009808
    %v5272 = vunpack.c.0.s8 %v5271
    %v5273 = vlaneseq
    %v5274 = vshrl.u32 %v5273, 7
    %v5275 = vsub.s32 %v5272, %v5274
    %v5276 = vrot.slane %v5269, %v5275
    %v5277 = vcombine.low %v5061, %v5062
    %v5279 = vunpack.c.l.s4 1983009808
    %v5280 = vunpack.c.0.s8 %v5279
    %v5281 = vlaneseq
    %v5282 = vshrl.u32 %v5281, 7
    %v5283 = vsub.s32 %v5280, %v5282
    %v5284 = vrot.slane %v5277, %v5283
    %v5285 = vcombine.low %v5053, %v5060
    %v5287 = vunpack.c.l.s4 1983009808
    %v5288 = vunpack.c.0.s8 %v5287
    %v5289 = vlaneseq
    %v5290 = vshrl.u32 %v5289, 7
    %v5291 = vsub.s32 %v5288, %v5290
    %v5292 = vrot.slane %v5285, %v5291
    %v5293 = vcombine.low %v5063, %v5064
    %v5295 = vunpack.c.l.s4 1983009808
    %v5296 = vunpack.c.0.s8 %v5295
    %v5297 = vlaneseq
    %v5298 = vshrl.u32 %v5297, 7
    %v5299 = vsub.s32 %v5296, %v5298
    %v5300 = vrot.slane %v5293, %v5299
    %v5301 = vcombine.low %v5276, %v5284
    %v5302 = vcombine.high %v5276, %v5284
    %v5304 = vunpack.c.l.s4 1934713408
    %v5305 = vunpack.c.0.s8 %v5304
    %v5306 = vlaneseq
    %v5307 = vshrl.u32 %v5306, 7
    %v5308 = vsub.s32 %v5305, %v5307
    %v5309 = vrot.slane %v5301, %v5308
    %v5311 = vunpack.c.l.s4 1934713408
    %v5312 = vunpack.c.0.s8 %v5311
    %v5313 = vlaneseq
    %v5314 = vshrl.u32 %v5313, 7
    %v5315 = vsub.s32 %v5312, %v5314
    %v5316 = vrot.slane %v5302, %v5315
    %v5317 = vcombine.low %v5292, %v5300
    %v5318 = vcombine.high %v5292, %v5300
    %v5320 = vunpack.c.l.s4 1934713408
    %v5321 = vunpack.c.0.s8 %v5320
    %v5322 = vlaneseq
    %v5323 = vshrl.u32 %v5322, 7
    %v5324 = vsub.s32 %v5321, %v5323
    %v5325 = vrot.slane %v5317, %v5324
    %v5327 = vunpack.c.l.s4 1934713408
    %v5328 = vunpack.c.0.s8 %v5327
    %v5329 = vlaneseq
    %v5330 = vshrl.u32 %v5329, 7
    %v5331 = vsub.s32 %v5328, %v5330
    %v5332 = vrot.slane %v5318, %v5331
    %v5333 = vcombine.low %v5309, %v5325
    %v5334 = vcombine.high %v5309, %v5325
    %v5335 = vcombine.low %v5316, %v5332
    %v5336 = vcombine.high %v5316, %v5332
    %v5337 = vcombine.low %v5105, %v5112
    %v5339 = vunpack.c.l.s4 1983009808
    %v5340 = vunpack.c.0.s8 %v5339
    %v5341 = vlaneseq
    %v5342 = vshrl.u32 %v5341, 7
    %v5343 = vsub.s32 %v5340, %v5342
    %v5344 = vrot.slane %v5337, %v5343
    %v5345 = vcombine.low %v5129, %v5130
    %v5347 = vunpack.c.l.s4 1983009808
    %v5348 = vunpack.c.0.s8 %v5347
    %v5349 = vlaneseq
    %v5350 = vshrl.u32 %v5349, 7
    %v5351 = vsub.s32 %v5348, %v5350
    %v5352 = vrot.slane %v5345, %v5351
    %v5353 = vcombine.low %v5121, %v5128
    %v5355 = vunpack.c.l.s4 1983009808
    %v5356 = vunpack.c.0.s8 %v5355
    %v5357 = vlaneseq
    %v5358 = vshrl.u32 %v5357, 7
    %v5359 = vsub.s32 %v5356, %v5358
    %v5360 = vrot.slane %v5353, %v5359
    %v5361 = vcombine.low %v5131, %v5132
    %v5363 = vunpack.c.l.s4 1983009808
    %v5364 = vunpack.c.0.s8 %v5363
    %v5365 = vlaneseq
    %v5366 = vshrl.u32 %v5365, 7
    %v5367 = vsub.s32 %v5364, %v5366
    %v5368 = vrot.slane %v5361, %v5367
    %v5369 = vcombine.low %v5344, %v5352
    %v5370 = vcombine.high %v5344, %v5352
    %v5372 = vunpack.c.l.s4 1934713408
    %v5373 = vunpack.c.0.s8 %v5372
    %v5374 = vlaneseq
    %v5375 = vshrl.u32 %v5374, 7
    %v5376 = vsub.s32 %v5373, %v5375
    %v5377 = vrot.slane %v5369, %v5376
    %v5379 = vunpack.c.l.s4 1934713408
    %v5380 = vunpack.c.0.s8 %v5379
    %v5381 = vlaneseq
    %v5382 = vshrl.u32 %v5381, 7
    %v5383 = vsub.s32 %v5380, %v5382
    %v5384 = vrot.slane %v5370, %v5383
    %v5385 = vcombine.low %v5360, %v5368
    %v5386 = vcombine.high %v5360, %v5368
    %v5388 = vunpack.c.l.s4 1934713408
    %v5389 = vunpack.c.0.s8 %v5388
    %v5390 = vlaneseq
    %v5391 = vshrl.u32 %v5390, 7
    %v5392 = vsub.s32 %v5389, %v5391
    %v5393 = vrot.slane %v5385, %v5392
    %v5395 = vunpack.c.l.s4 1934713408
    %v5396 = vunpack.c.0.s8 %v5395
    %v5397 = vlaneseq
    %v5398 = vshrl.u32 %v5397, 7
    %v5399 = vsub.s32 %v5396, %v5398
    %v5400 = vrot.slane %v5386, %v5399
    %v5401 = vcombine.low %v5377, %v5393
    %v5402 = vcombine.high %v5377, %v5393
    %v5403 = vcombine.low %v5384, %v5400
    %v5404 = vcombine.high %v5384, %v5400
    %v5405 = vpack.c.bf16 %v5197, %v5197
    %v5406 = vpack.c.bf16 %v5198, %v5198
    %v5407 = vpack.c.bf16 %v5199, %v5199
    %v5408 = vpack.c.bf16 %v5200, %v5200
    %v5409 = vpack.c.bf16 %v5265, %v5265
    %v5410 = vpack.c.bf16 %v5266, %v5266
    %v5411 = vpack.c.bf16 %v5267, %v5267
    %v5412 = vpack.c.bf16 %v5268, %v5268
    %v5413 = vpack.c.bf16 %v5333, %v5333
    %v5414 = vpack.c.bf16 %v5334, %v5334
    %v5415 = vpack.c.bf16 %v5335, %v5335
    %v5416 = vpack.c.bf16 %v5336, %v5336
    %v5417 = vpack.c.bf16 %v5401, %v5401
    %v5418 = vpack.c.bf16 %v5402, %v5402
    %v5419 = vpack.c.bf16 %v5403, %v5403
    %v5420 = vpack.c.bf16 %v5404, %v5404
    %5421 = vrot.lane.b32.xlu0 %v4807, 96
    %v5422 = vpop.permute.xlu0 %5421
    %5423 = vrot.lane.b32.xlu0 %v4810, 96
    %v5424 = vpop.permute.xlu0 %5423
    %5425 = vrot.lane.b32.xlu0 %v4815, 96
    %v5426 = vpop.permute.xlu0 %5425
    %5427 = vrot.lane.b32.xlu0 %v4818, 96
    %v5428 = vpop.permute.xlu0 %5427
    %5429 = vrot.lane.b32.xlu0 %v4826, 96
    %v5430 = vpop.permute.xlu0 %5429
    %5431 = vrot.lane.b32.xlu0 %v4828, 96
    %v5432 = vpop.permute.xlu0 %5431
    %5433 = vrot.lane.b32.xlu0 %v4830, 96
    %v5434 = vpop.permute.xlu0 %5433
    %5435 = vrot.lane.b32.xlu0 %v4832, 96
    %v5436 = vpop.permute.xlu0 %5435
    %5437 = vrot.lane.b32.xlu0 %v4838, 96
    %v5438 = vpop.permute.xlu0 %5437
    %5439 = vrot.lane.b32.xlu0 %v4840, 96
    %v5440 = vpop.permute.xlu0 %5439
    %5441 = vrot.lane.b32.xlu0 %v4842, 96
    %v5442 = vpop.permute.xlu0 %5441
    %5443 = vrot.lane.b32.xlu0 %v4844, 96
    %v5444 = vpop.permute.xlu0 %5443
    %5445 = vrot.lane.b32.xlu0 %v4850, 96
    %v5446 = vpop.permute.xlu0 %5445
    %5447 = vrot.lane.b32.xlu0 %v4852, 96
    %v5448 = vpop.permute.xlu0 %5447
    %5449 = vrot.lane.b32.xlu0 %v4854, 96
    %v5450 = vpop.permute.xlu0 %5449
    %5451 = vrot.lane.b32.xlu0 %v4856, 96
    %v5452 = vpop.permute.xlu0 %5451
    %v5469 = vcombine.low %v5422, %v5438
    %v5470 = vcombine.high %v5422, %v5438
    %v5472 = vunpack.c.l.s4 1983009808
    %v5473 = vunpack.c.0.s8 %v5472
    %v5474 = vlaneseq
    %v5475 = vshrl.u32 %v5474, 7
    %v5476 = vsub.s32 %v5473, %v5475
    %v5477 = vrot.slane %v5469, %v5476
    %v5479 = vunpack.c.l.s4 1983009808
    %v5480 = vunpack.c.0.s8 %v5479
    %v5481 = vlaneseq
    %v5482 = vshrl.u32 %v5481, 7
    %v5483 = vsub.s32 %v5480, %v5482
    %v5484 = vrot.slane %v5470, %v5483
    %v5485 = vcombine.low %v5430, %v5446
    %v5486 = vcombine.high %v5430, %v5446
    %v5488 = vunpack.c.l.s4 1983009808
    %v5489 = vunpack.c.0.s8 %v5488
    %v5490 = vlaneseq
    %v5491 = vshrl.u32 %v5490, 7
    %v5492 = vsub.s32 %v5489, %v5491
    %v5493 = vrot.slane %v5485, %v5492
    %v5495 = vunpack.c.l.s4 1983009808
    %v5496 = vunpack.c.0.s8 %v5495
    %v5497 = vlaneseq
    %v5498 = vshrl.u32 %v5497, 7
    %v5499 = vsub.s32 %v5496, %v5498
    %v5500 = vrot.slane %v5486, %v5499
    %v5501 = vcombine.low %v5477, %v5493
    %v5502 = vcombine.high %v5477, %v5493
    %v5504 = vunpack.c.l.s4 1934713408
    %v5505 = vunpack.c.0.s8 %v5504
    %v5506 = vlaneseq
    %v5507 = vshrl.u32 %v5506, 7
    %v5508 = vsub.s32 %v5505, %v5507
    %v5509 = vrot.slane %v5501, %v5508
    %v5511 = vunpack.c.l.s4 1934713408
    %v5512 = vunpack.c.0.s8 %v5511
    %v5513 = vlaneseq
    %v5514 = vshrl.u32 %v5513, 7
    %v5515 = vsub.s32 %v5512, %v5514
    %v5516 = vrot.slane %v5502, %v5515
    %v5517 = vcombine.low %v5484, %v5500
    %v5518 = vcombine.high %v5484, %v5500
    %v5520 = vunpack.c.l.s4 1934713408
    %v5521 = vunpack.c.0.s8 %v5520
    %v5522 = vlaneseq
    %v5523 = vshrl.u32 %v5522, 7
    %v5524 = vsub.s32 %v5521, %v5523
    %v5525 = vrot.slane %v5517, %v5524
    %v5527 = vunpack.c.l.s4 1934713408
    %v5528 = vunpack.c.0.s8 %v5527
    %v5529 = vlaneseq
    %v5530 = vshrl.u32 %v5529, 7
    %v5531 = vsub.s32 %v5528, %v5530
    %v5532 = vrot.slane %v5518, %v5531
    %v5533 = vcombine.high %v5509, 0.0
    %v5534 = vcombine.high %v5516, 0.0
    %v5535 = vcombine.high %v5525, 0.0
    %v5536 = vcombine.high %v5532, 0.0
    %v5537 = vcombine.low %v5424, %v5440
    %v5538 = vcombine.high %v5424, %v5440
    %v5540 = vunpack.c.l.s4 1983009808
    %v5541 = vunpack.c.0.s8 %v5540
    %v5542 = vlaneseq
    %v5543 = vshrl.u32 %v5542, 7
    %v5544 = vsub.s32 %v5541, %v5543
    %v5545 = vrot.slane %v5537, %v5544
    %v5547 = vunpack.c.l.s4 1983009808
    %v5548 = vunpack.c.0.s8 %v5547
    %v5549 = vlaneseq
    %v5550 = vshrl.u32 %v5549, 7
    %v5551 = vsub.s32 %v5548, %v5550
    %v5552 = vrot.slane %v5538, %v5551
    %v5553 = vcombine.low %v5432, %v5448
    %v5554 = vcombine.high %v5432, %v5448
    %v5556 = vunpack.c.l.s4 1983009808
    %v5557 = vunpack.c.0.s8 %v5556
    %v5558 = vlaneseq
    %v5559 = vshrl.u32 %v5558, 7
    %v5560 = vsub.s32 %v5557, %v5559
    %v5561 = vrot.slane %v5553, %v5560
    %v5563 = vunpack.c.l.s4 1983009808
    %v5564 = vunpack.c.0.s8 %v5563
    %v5565 = vlaneseq
    %v5566 = vshrl.u32 %v5565, 7
    %v5567 = vsub.s32 %v5564, %v5566
    %v5568 = vrot.slane %v5554, %v5567
    %v5569 = vcombine.low %v5545, %v5561
    %v5570 = vcombine.high %v5545, %v5561
    %v5572 = vunpack.c.l.s4 1934713408
    %v5573 = vunpack.c.0.s8 %v5572
    %v5574 = vlaneseq
    %v5575 = vshrl.u32 %v5574, 7
    %v5576 = vsub.s32 %v5573, %v5575
    %v5577 = vrot.slane %v5569, %v5576
    %v5579 = vunpack.c.l.s4 1934713408
    %v5580 = vunpack.c.0.s8 %v5579
    %v5581 = vlaneseq
    %v5582 = vshrl.u32 %v5581, 7
    %v5583 = vsub.s32 %v5580, %v5582
    %v5584 = vrot.slane %v5570, %v5583
    %v5585 = vcombine.low %v5552, %v5568
    %v5586 = vcombine.high %v5552, %v5568
    %v5588 = vunpack.c.l.s4 1934713408
    %v5589 = vunpack.c.0.s8 %v5588
    %v5590 = vlaneseq
    %v5591 = vshrl.u32 %v5590, 7
    %v5592 = vsub.s32 %v5589, %v5591
    %v5593 = vrot.slane %v5585, %v5592
    %v5595 = vunpack.c.l.s4 1934713408
    %v5596 = vunpack.c.0.s8 %v5595
    %v5597 = vlaneseq
    %v5598 = vshrl.u32 %v5597, 7
    %v5599 = vsub.s32 %v5596, %v5598
    %v5600 = vrot.slane %v5586, %v5599
    %v5601 = vcombine.high %v5577, 0.0
    %v5602 = vcombine.high %v5584, 0.0
    %v5603 = vcombine.high %v5593, 0.0
    %v5604 = vcombine.high %v5600, 0.0
    %v5605 = vcombine.low %v5426, %v5442
    %v5606 = vcombine.high %v5426, %v5442
    %v5608 = vunpack.c.l.s4 1983009808
    %v5609 = vunpack.c.0.s8 %v5608
    %v5610 = vlaneseq
    %v5611 = vshrl.u32 %v5610, 7
    %v5612 = vsub.s32 %v5609, %v5611
    %v5613 = vrot.slane %v5605, %v5612
    %v5615 = vunpack.c.l.s4 1983009808
    %v5616 = vunpack.c.0.s8 %v5615
    %v5617 = vlaneseq
    %v5618 = vshrl.u32 %v5617, 7
    %v5619 = vsub.s32 %v5616, %v5618
    %v5620 = vrot.slane %v5606, %v5619
    %v5621 = vcombine.low %v5434, %v5450
    %v5622 = vcombine.high %v5434, %v5450
    %v5624 = vunpack.c.l.s4 1983009808
    %v5625 = vunpack.c.0.s8 %v5624
    %v5626 = vlaneseq
    %v5627 = vshrl.u32 %v5626, 7
    %v5628 = vsub.s32 %v5625, %v5627
    %v5629 = vrot.slane %v5621, %v5628
    %v5631 = vunpack.c.l.s4 1983009808
    %v5632 = vunpack.c.0.s8 %v5631
    %v5633 = vlaneseq
    %v5634 = vshrl.u32 %v5633, 7
    %v5635 = vsub.s32 %v5632, %v5634
    %v5636 = vrot.slane %v5622, %v5635
    %v5637 = vcombine.low %v5613, %v5629
    %v5638 = vcombine.high %v5613, %v5629
    %v5640 = vunpack.c.l.s4 1934713408
    %v5641 = vunpack.c.0.s8 %v5640
    %v5642 = vlaneseq
    %v5643 = vshrl.u32 %v5642, 7
    %v5644 = vsub.s32 %v5641, %v5643
    %v5645 = vrot.slane %v5637, %v5644
    %v5647 = vunpack.c.l.s4 1934713408
    %v5648 = vunpack.c.0.s8 %v5647
    %v5649 = vlaneseq
    %v5650 = vshrl.u32 %v5649, 7
    %v5651 = vsub.s32 %v5648, %v5650
    %v5652 = vrot.slane %v5638, %v5651
    %v5653 = vcombine.low %v5620, %v5636
    %v5654 = vcombine.high %v5620, %v5636
    %v5656 = vunpack.c.l.s4 1934713408
    %v5657 = vunpack.c.0.s8 %v5656
    %v5658 = vlaneseq
    %v5659 = vshrl.u32 %v5658, 7
    %v5660 = vsub.s32 %v5657, %v5659
    %v5661 = vrot.slane %v5653, %v5660
    %v5663 = vunpack.c.l.s4 1934713408
    %v5664 = vunpack.c.0.s8 %v5663
    %v5665 = vlaneseq
    %v5666 = vshrl.u32 %v5665, 7
    %v5667 = vsub.s32 %v5664, %v5666
    %v5668 = vrot.slane %v5654, %v5667
    %v5669 = vcombine.high %v5645, 0.0
    %v5670 = vcombine.high %v5652, 0.0
    %v5671 = vcombine.high %v5661, 0.0
    %v5672 = vcombine.high %v5668, 0.0
    %v5673 = vcombine.low %v5428, %v5444
    %v5674 = vcombine.high %v5428, %v5444
    %v5676 = vunpack.c.l.s4 1983009808
    %v5677 = vunpack.c.0.s8 %v5676
    %v5678 = vlaneseq
    %v5679 = vshrl.u32 %v5678, 7
    %v5680 = vsub.s32 %v5677, %v5679
    %v5681 = vrot.slane %v5673, %v5680
    %v5683 = vunpack.c.l.s4 1983009808
    %v5684 = vunpack.c.0.s8 %v5683
    %v5685 = vlaneseq
    %v5686 = vshrl.u32 %v5685, 7
    %v5687 = vsub.s32 %v5684, %v5686
    %v5688 = vrot.slane %v5674, %v5687
    %v5689 = vcombine.low %v5436, %v5452
    %v5690 = vcombine.high %v5436, %v5452
    %v5692 = vunpack.c.l.s4 1983009808
    %v5693 = vunpack.c.0.s8 %v5692
    %v5694 = vlaneseq
    %v5695 = vshrl.u32 %v5694, 7
    %v5696 = vsub.s32 %v5693, %v5695
    %v5697 = vrot.slane %v5689, %v5696
    %v5699 = vunpack.c.l.s4 1983009808
    %v5700 = vunpack.c.0.s8 %v5699
    %v5701 = vlaneseq
    %v5702 = vshrl.u32 %v5701, 7
    %v5703 = vsub.s32 %v5700, %v5702
    %v5704 = vrot.slane %v5690, %v5703
    %v5705 = vcombine.low %v5681, %v5697
    %v5706 = vcombine.high %v5681, %v5697
    %v5708 = vunpack.c.l.s4 1934713408
    %v5709 = vunpack.c.0.s8 %v5708
    %v5710 = vlaneseq
    %v5711 = vshrl.u32 %v5710, 7
    %v5712 = vsub.s32 %v5709, %v5711
    %v5713 = vrot.slane %v5705, %v5712
    %v5715 = vunpack.c.l.s4 1934713408
    %v5716 = vunpack.c.0.s8 %v5715
    %v5717 = vlaneseq
    %v5718 = vshrl.u32 %v5717, 7
    %v5719 = vsub.s32 %v5716, %v5718
    %v5720 = vrot.slane %v5706, %v5719
    %v5721 = vcombine.low %v5688, %v5704
    %v5722 = vcombine.high %v5688, %v5704
    %v5724 = vunpack.c.l.s4 1934713408
    %v5725 = vunpack.c.0.s8 %v5724
    %v5726 = vlaneseq
    %v5727 = vshrl.u32 %v5726, 7
    %v5728 = vsub.s32 %v5725, %v5727
    %v5729 = vrot.slane %v5721, %v5728
    %v5731 = vunpack.c.l.s4 1934713408
    %v5732 = vunpack.c.0.s8 %v5731
    %v5733 = vlaneseq
    %v5734 = vshrl.u32 %v5733, 7
    %v5735 = vsub.s32 %v5732, %v5734
    %v5736 = vrot.slane %v5722, %v5735
    %v5737 = vcombine.high %v5713, 0.0
    %v5738 = vcombine.high %v5720, 0.0
    %v5739 = vcombine.high %v5729, 0.0
    %v5740 = vcombine.high %v5736, 0.0
    %v5741 = vcombine.low %v5509, %v5516
    %v5743 = vunpack.c.l.s4 1983009808
    %v5744 = vunpack.c.0.s8 %v5743
    %v5745 = vlaneseq
    %v5746 = vshrl.u32 %v5745, 7
    %v5747 = vsub.s32 %v5744, %v5746
    %v5748 = vrot.slane %v5741, %v5747
    %v5749 = vcombine.low %v5533, %v5534
    %v5751 = vunpack.c.l.s4 1983009808
    %v5752 = vunpack.c.0.s8 %v5751
    %v5753 = vlaneseq
    %v5754 = vshrl.u32 %v5753, 7
    %v5755 = vsub.s32 %v5752, %v5754
    %v5756 = vrot.slane %v5749, %v5755
    %v5757 = vcombine.low %v5525, %v5532
    %v5759 = vunpack.c.l.s4 1983009808
    %v5760 = vunpack.c.0.s8 %v5759
    %v5761 = vlaneseq
    %v5762 = vshrl.u32 %v5761, 7
    %v5763 = vsub.s32 %v5760, %v5762
    %v5764 = vrot.slane %v5757, %v5763
    %v5765 = vcombine.low %v5535, %v5536
    %v5767 = vunpack.c.l.s4 1983009808
    %v5768 = vunpack.c.0.s8 %v5767
    %v5769 = vlaneseq
    %v5770 = vshrl.u32 %v5769, 7
    %v5771 = vsub.s32 %v5768, %v5770
    %v5772 = vrot.slane %v5765, %v5771
    %v5773 = vcombine.low %v5748, %v5756
    %v5774 = vcombine.high %v5748, %v5756
    %v5776 = vunpack.c.l.s4 1934713408
    %v5777 = vunpack.c.0.s8 %v5776
    %v5778 = vlaneseq
    %v5779 = vshrl.u32 %v5778, 7
    %v5780 = vsub.s32 %v5777, %v5779
    %v5781 = vrot.slane %v5773, %v5780
    %v5783 = vunpack.c.l.s4 1934713408
    %v5784 = vunpack.c.0.s8 %v5783
    %v5785 = vlaneseq
    %v5786 = vshrl.u32 %v5785, 7
    %v5787 = vsub.s32 %v5784, %v5786
    %v5788 = vrot.slane %v5774, %v5787
    %v5789 = vcombine.low %v5764, %v5772
    %v5790 = vcombine.high %v5764, %v5772
    %v5792 = vunpack.c.l.s4 1934713408
    %v5793 = vunpack.c.0.s8 %v5792
    %v5794 = vlaneseq
    %v5795 = vshrl.u32 %v5794, 7
    %v5796 = vsub.s32 %v5793, %v5795
    %v5797 = vrot.slane %v5789, %v5796
    %v5799 = vunpack.c.l.s4 1934713408
    %v5800 = vunpack.c.0.s8 %v5799
    %v5801 = vlaneseq
    %v5802 = vshrl.u32 %v5801, 7
    %v5803 = vsub.s32 %v5800, %v5802
    %v5804 = vrot.slane %v5790, %v5803
    %v5805 = vcombine.low %v5781, %v5797
    %v5806 = vcombine.high %v5781, %v5797
    %v5807 = vcombine.low %v5788, %v5804
    %v5808 = vcombine.high %v5788, %v5804
    %v5809 = vcombine.low %v5577, %v5584
    %v5811 = vunpack.c.l.s4 1983009808
    %v5812 = vunpack.c.0.s8 %v5811
    %v5813 = vlaneseq
    %v5814 = vshrl.u32 %v5813, 7
    %v5815 = vsub.s32 %v5812, %v5814
    %v5816 = vrot.slane %v5809, %v5815
    %v5817 = vcombine.low %v5601, %v5602
    %v5819 = vunpack.c.l.s4 1983009808
    %v5820 = vunpack.c.0.s8 %v5819
    %v5821 = vlaneseq
    %v5822 = vshrl.u32 %v5821, 7
    %v5823 = vsub.s32 %v5820, %v5822
    %v5824 = vrot.slane %v5817, %v5823
    %v5825 = vcombine.low %v5593, %v5600
    %v5827 = vunpack.c.l.s4 1983009808
    %v5828 = vunpack.c.0.s8 %v5827
    %v5829 = vlaneseq
    %v5830 = vshrl.u32 %v5829, 7
    %v5831 = vsub.s32 %v5828, %v5830
    %v5832 = vrot.slane %v5825, %v5831
    %v5833 = vcombine.low %v5603, %v5604
    %v5835 = vunpack.c.l.s4 1983009808
    %v5836 = vunpack.c.0.s8 %v5835
    %v5837 = vlaneseq
    %v5838 = vshrl.u32 %v5837, 7
    %v5839 = vsub.s32 %v5836, %v5838
    %v5840 = vrot.slane %v5833, %v5839
    %v5841 = vcombine.low %v5816, %v5824
    %v5842 = vcombine.high %v5816, %v5824
    %v5844 = vunpack.c.l.s4 1934713408
    %v5845 = vunpack.c.0.s8 %v5844
    %v5846 = vlaneseq
    %v5847 = vshrl.u32 %v5846, 7
    %v5848 = vsub.s32 %v5845, %v5847
    %v5849 = vrot.slane %v5841, %v5848
    %v5851 = vunpack.c.l.s4 1934713408
    %v5852 = vunpack.c.0.s8 %v5851
    %v5853 = vlaneseq
    %v5854 = vshrl.u32 %v5853, 7
    %v5855 = vsub.s32 %v5852, %v5854
    %v5856 = vrot.slane %v5842, %v5855
    %v5857 = vcombine.low %v5832, %v5840
    %v5858 = vcombine.high %v5832, %v5840
    %v5860 = vunpack.c.l.s4 1934713408
    %v5861 = vunpack.c.0.s8 %v5860
    %v5862 = vlaneseq
    %v5863 = vshrl.u32 %v5862, 7
    %v5864 = vsub.s32 %v5861, %v5863
    %v5865 = vrot.slane %v5857, %v5864
    %v5867 = vunpack.c.l.s4 1934713408
    %v5868 = vunpack.c.0.s8 %v5867
    %v5869 = vlaneseq
    %v5870 = vshrl.u32 %v5869, 7
    %v5871 = vsub.s32 %v5868, %v5870
    %v5872 = vrot.slane %v5858, %v5871
    %v5873 = vcombine.low %v5849, %v5865
    %v5874 = vcombine.high %v5849, %v5865
    %v5875 = vcombine.low %v5856, %v5872
    %v5876 = vcombine.high %v5856, %v5872
    %v5877 = vcombine.low %v5645, %v5652
    %v5879 = vunpack.c.l.s4 1983009808
    %v5880 = vunpack.c.0.s8 %v5879
    %v5881 = vlaneseq
    %v5882 = vshrl.u32 %v5881, 7
    %v5883 = vsub.s32 %v5880, %v5882
    %v5884 = vrot.slane %v5877, %v5883
    %v5885 = vcombine.low %v5669, %v5670
    %v5887 = vunpack.c.l.s4 1983009808
    %v5888 = vunpack.c.0.s8 %v5887
    %v5889 = vlaneseq
    %v5890 = vshrl.u32 %v5889, 7
    %v5891 = vsub.s32 %v5888, %v5890
    %v5892 = vrot.slane %v5885, %v5891
    %v5893 = vcombine.low %v5661, %v5668
    %v5895 = vunpack.c.l.s4 1983009808
    %v5896 = vunpack.c.0.s8 %v5895
    %v5897 = vlaneseq
    %v5898 = vshrl.u32 %v5897, 7
    %v5899 = vsub.s32 %v5896, %v5898
    %v5900 = vrot.slane %v5893, %v5899
    %v5901 = vcombine.low %v5671, %v5672
    %v5903 = vunpack.c.l.s4 1983009808
    %v5904 = vunpack.c.0.s8 %v5903
    %v5905 = vlaneseq
    %v5906 = vshrl.u32 %v5905, 7
    %v5907 = vsub.s32 %v5904, %v5906
    %v5908 = vrot.slane %v5901, %v5907
    %v5909 = vcombine.low %v5884, %v5892
    %v5910 = vcombine.high %v5884, %v5892
    %v5912 = vunpack.c.l.s4 1934713408
    %v5913 = vunpack.c.0.s8 %v5912
    %v5914 = vlaneseq
    %v5915 = vshrl.u32 %v5914, 7
    %v5916 = vsub.s32 %v5913, %v5915
    %v5917 = vrot.slane %v5909, %v5916
    %v5919 = vunpack.c.l.s4 1934713408
    %v5920 = vunpack.c.0.s8 %v5919
    %v5921 = vlaneseq
    %v5922 = vshrl.u32 %v5921, 7
    %v5923 = vsub.s32 %v5920, %v5922
    %v5924 = vrot.slane %v5910, %v5923
    %v5925 = vcombine.low %v5900, %v5908
    %v5926 = vcombine.high %v5900, %v5908
    %v5928 = vunpack.c.l.s4 1934713408
    %v5929 = vunpack.c.0.s8 %v5928
    %v5930 = vlaneseq
    %v5931 = vshrl.u32 %v5930, 7
    %v5932 = vsub.s32 %v5929, %v5931
    %v5933 = vrot.slane %v5925, %v5932
    %v5935 = vunpack.c.l.s4 1934713408
    %v5936 = vunpack.c.0.s8 %v5935
    %v5937 = vlaneseq
    %v5938 = vshrl.u32 %v5937, 7
    %v5939 = vsub.s32 %v5936, %v5938
    %v5940 = vrot.slane %v5926, %v5939
    %v5941 = vcombine.low %v5917, %v5933
    %v5942 = vcombine.high %v5917, %v5933
    %v5943 = vcombine.low %v5924, %v5940
    %v5944 = vcombine.high %v5924, %v5940
    %v5945 = vcombine.low %v5713, %v5720
    %v5947 = vunpack.c.l.s4 1983009808
    %v5948 = vunpack.c.0.s8 %v5947
    %v5949 = vlaneseq
    %v5950 = vshrl.u32 %v5949, 7
    %v5951 = vsub.s32 %v5948, %v5950
    %v5952 = vrot.slane %v5945, %v5951
    %v5953 = vcombine.low %v5737, %v5738
    %v5955 = vunpack.c.l.s4 1983009808
    %v5956 = vunpack.c.0.s8 %v5955
    %v5957 = vlaneseq
    %v5958 = vshrl.u32 %v5957, 7
    %v5959 = vsub.s32 %v5956, %v5958
    %v5960 = vrot.slane %v5953, %v5959
    %v5961 = vcombine.low %v5729, %v5736
    %v5963 = vunpack.c.l.s4 1983009808
    %v5964 = vunpack.c.0.s8 %v5963
    %v5965 = vlaneseq
    %v5966 = vshrl.u32 %v5965, 7
    %v5967 = vsub.s32 %v5964, %v5966
    %v5968 = vrot.slane %v5961, %v5967
    %v5969 = vcombine.low %v5739, %v5740
    %v5971 = vunpack.c.l.s4 1983009808
    %v5972 = vunpack.c.0.s8 %v5971
    %v5973 = vlaneseq
    %v5974 = vshrl.u32 %v5973, 7
    %v5975 = vsub.s32 %v5972, %v5974
    %v5976 = vrot.slane %v5969, %v5975
    %v5977 = vcombine.low %v5952, %v5960
    %v5978 = vcombine.high %v5952, %v5960
    %v5980 = vunpack.c.l.s4 1934713408
    %v5981 = vunpack.c.0.s8 %v5980
    %v5982 = vlaneseq
    %v5983 = vshrl.u32 %v5982, 7
    %v5984 = vsub.s32 %v5981, %v5983
    %v5985 = vrot.slane %v5977, %v5984
    %v5987 = vunpack.c.l.s4 1934713408
    %v5988 = vunpack.c.0.s8 %v5987
    %v5989 = vlaneseq
    %v5990 = vshrl.u32 %v5989, 7
    %v5991 = vsub.s32 %v5988, %v5990
    %v5992 = vrot.slane %v5978, %v5991
    %v5993 = vcombine.low %v5968, %v5976
    %v5994 = vcombine.high %v5968, %v5976
    %v5996 = vunpack.c.l.s4 1934713408
    %v5997 = vunpack.c.0.s8 %v5996
    %v5998 = vlaneseq
    %v5999 = vshrl.u32 %v5998, 7
    %v6000 = vsub.s32 %v5997, %v5999
    %v6001 = vrot.slane %v5993, %v6000
    %v6003 = vunpack.c.l.s4 1934713408
    %v6004 = vunpack.c.0.s8 %v6003
    %v6005 = vlaneseq
    %v6006 = vshrl.u32 %v6005, 7
    %v6007 = vsub.s32 %v6004, %v6006
    %v6008 = vrot.slane %v5994, %v6007
    %v6009 = vcombine.low %v5985, %v6001
    %v6010 = vcombine.high %v5985, %v6001
    %v6011 = vcombine.low %v5992, %v6008
    %v6012 = vcombine.high %v5992, %v6008
    %v6013 = vpack.c.bf16 %v5805, %v5805
    %v6014 = vpack.c.bf16 %v5806, %v5806
    %v6015 = vpack.c.bf16 %v5807, %v5807
    %v6016 = vpack.c.bf16 %v5808, %v5808
    %v6017 = vpack.c.bf16 %v5873, %v5873
    %v6018 = vpack.c.bf16 %v5874, %v5874
    %v6019 = vpack.c.bf16 %v5875, %v5875
    %v6020 = vpack.c.bf16 %v5876, %v5876
    %v6021 = vpack.c.bf16 %v5941, %v5941
    %v6022 = vpack.c.bf16 %v5942, %v5942
    %v6023 = vpack.c.bf16 %v5943, %v5943
    %v6024 = vpack.c.bf16 %v5944, %v5944
    %v6025 = vpack.c.bf16 %v6009, %v6009
    %v6026 = vpack.c.bf16 %v6010, %v6010
    %v6027 = vpack.c.bf16 %v6011, %v6011
    %v6028 = vpack.c.bf16 %v6012, %v6012
    %6029 = vrot.lane.b32.xlu0 %v4807, 64
    %v6030 = vpop.permute.xlu0 %6029
    %6031 = vrot.lane.b32.xlu0 %v4810, 64
    %v6032 = vpop.permute.xlu0 %6031
    %6033 = vrot.lane.b32.xlu0 %v4815, 64
    %v6034 = vpop.permute.xlu0 %6033
    %6035 = vrot.lane.b32.xlu0 %v4818, 64
    %v6036 = vpop.permute.xlu0 %6035
    %6037 = vrot.lane.b32.xlu0 %v4826, 64
    %v6038 = vpop.permute.xlu0 %6037
    %6039 = vrot.lane.b32.xlu0 %v4828, 64
    %v6040 = vpop.permute.xlu0 %6039
    %6041 = vrot.lane.b32.xlu0 %v4830, 64
    %v6042 = vpop.permute.xlu0 %6041
    %6043 = vrot.lane.b32.xlu0 %v4832, 64
    %v6044 = vpop.permute.xlu0 %6043
    %6045 = vrot.lane.b32.xlu0 %v4838, 64
    %v6046 = vpop.permute.xlu0 %6045
    %6047 = vrot.lane.b32.xlu0 %v4840, 64
    %v6048 = vpop.permute.xlu0 %6047
    %6049 = vrot.lane.b32.xlu0 %v4842, 64
    %v6050 = vpop.permute.xlu0 %6049
    %6051 = vrot.lane.b32.xlu0 %v4844, 64
    %v6052 = vpop.permute.xlu0 %6051
    %6053 = vrot.lane.b32.xlu0 %v4850, 64
    %v6054 = vpop.permute.xlu0 %6053
    %6055 = vrot.lane.b32.xlu0 %v4852, 64
    %v6056 = vpop.permute.xlu0 %6055
    %6057 = vrot.lane.b32.xlu0 %v4854, 64
    %v6058 = vpop.permute.xlu0 %6057
    %6059 = vrot.lane.b32.xlu0 %v4856, 64
    %v6060 = vpop.permute.xlu0 %6059
    %v6077 = vcombine.low %v6030, %v6046
    %v6078 = vcombine.high %v6030, %v6046
    %v6080 = vunpack.c.l.s4 1983009808
    %v6081 = vunpack.c.0.s8 %v6080
    %v6082 = vlaneseq
    %v6083 = vshrl.u32 %v6082, 7
    %v6084 = vsub.s32 %v6081, %v6083
    %v6085 = vrot.slane %v6077, %v6084
    %v6087 = vunpack.c.l.s4 1983009808
    %v6088 = vunpack.c.0.s8 %v6087
    %v6089 = vlaneseq
    %v6090 = vshrl.u32 %v6089, 7
    %v6091 = vsub.s32 %v6088, %v6090
    %v6092 = vrot.slane %v6078, %v6091
    %v6093 = vcombine.low %v6038, %v6054
    %v6094 = vcombine.high %v6038, %v6054
    %v6096 = vunpack.c.l.s4 1983009808
    %v6097 = vunpack.c.0.s8 %v6096
    %v6098 = vlaneseq
    %v6099 = vshrl.u32 %v6098, 7
    %v6100 = vsub.s32 %v6097, %v6099
    %v6101 = vrot.slane %v6093, %v6100
    %v6103 = vunpack.c.l.s4 1983009808
    %v6104 = vunpack.c.0.s8 %v6103
    %v6105 = vlaneseq
    %v6106 = vshrl.u32 %v6105, 7
    %v6107 = vsub.s32 %v6104, %v6106
    %v6108 = vrot.slane %v6094, %v6107
    %v6109 = vcombine.low %v6085, %v6101
    %v6110 = vcombine.high %v6085, %v6101
    %v6112 = vunpack.c.l.s4 1934713408
    %v6113 = vunpack.c.0.s8 %v6112
    %v6114 = vlaneseq
    %v6115 = vshrl.u32 %v6114, 7
    %v6116 = vsub.s32 %v6113, %v6115
    %v6117 = vrot.slane %v6109, %v6116
    %v6119 = vunpack.c.l.s4 1934713408
    %v6120 = vunpack.c.0.s8 %v6119
    %v6121 = vlaneseq
    %v6122 = vshrl.u32 %v6121, 7
    %v6123 = vsub.s32 %v6120, %v6122
    %v6124 = vrot.slane %v6110, %v6123
    %v6125 = vcombine.low %v6092, %v6108
    %v6126 = vcombine.high %v6092, %v6108
    %v6128 = vunpack.c.l.s4 1934713408
    %v6129 = vunpack.c.0.s8 %v6128
    %v6130 = vlaneseq
    %v6131 = vshrl.u32 %v6130, 7
    %v6132 = vsub.s32 %v6129, %v6131
    %v6133 = vrot.slane %v6125, %v6132
    %v6135 = vunpack.c.l.s4 1934713408
    %v6136 = vunpack.c.0.s8 %v6135
    %v6137 = vlaneseq
    %v6138 = vshrl.u32 %v6137, 7
    %v6139 = vsub.s32 %v6136, %v6138
    %v6140 = vrot.slane %v6126, %v6139
    %v6141 = vcombine.high %v6117, 0.0
    %v6142 = vcombine.high %v6124, 0.0
    %v6143 = vcombine.high %v6133, 0.0
    %v6144 = vcombine.high %v6140, 0.0
    %v6145 = vcombine.low %v6032, %v6048
    %v6146 = vcombine.high %v6032, %v6048
    %v6148 = vunpack.c.l.s4 1983009808
    %v6149 = vunpack.c.0.s8 %v6148
    %v6150 = vlaneseq
    %v6151 = vshrl.u32 %v6150, 7
    %v6152 = vsub.s32 %v6149, %v6151
    %v6153 = vrot.slane %v6145, %v6152
    %v6155 = vunpack.c.l.s4 1983009808
    %v6156 = vunpack.c.0.s8 %v6155
    %v6157 = vlaneseq
    %v6158 = vshrl.u32 %v6157, 7
    %v6159 = vsub.s32 %v6156, %v6158
    %v6160 = vrot.slane %v6146, %v6159
    %v6161 = vcombine.low %v6040, %v6056
    %v6162 = vcombine.high %v6040, %v6056
    %v6164 = vunpack.c.l.s4 1983009808
    %v6165 = vunpack.c.0.s8 %v6164
    %v6166 = vlaneseq
    %v6167 = vshrl.u32 %v6166, 7
    %v6168 = vsub.s32 %v6165, %v6167
    %v6169 = vrot.slane %v6161, %v6168
    %v6171 = vunpack.c.l.s4 1983009808
    %v6172 = vunpack.c.0.s8 %v6171
    %v6173 = vlaneseq
    %v6174 = vshrl.u32 %v6173, 7
    %v6175 = vsub.s32 %v6172, %v6174
    %v6176 = vrot.slane %v6162, %v6175
    %v6177 = vcombine.low %v6153, %v6169
    %v6178 = vcombine.high %v6153, %v6169
    %v6180 = vunpack.c.l.s4 1934713408
    %v6181 = vunpack.c.0.s8 %v6180
    %v6182 = vlaneseq
    %v6183 = vshrl.u32 %v6182, 7
    %v6184 = vsub.s32 %v6181, %v6183
    %v6185 = vrot.slane %v6177, %v6184
    %v6187 = vunpack.c.l.s4 1934713408
    %v6188 = vunpack.c.0.s8 %v6187
    %v6189 = vlaneseq
    %v6190 = vshrl.u32 %v6189, 7
    %v6191 = vsub.s32 %v6188, %v6190
    %v6192 = vrot.slane %v6178, %v6191
    %v6193 = vcombine.low %v6160, %v6176
    %v6194 = vcombine.high %v6160, %v6176
    %v6196 = vunpack.c.l.s4 1934713408
    %v6197 = vunpack.c.0.s8 %v6196
    %v6198 = vlaneseq
    %v6199 = vshrl.u32 %v6198, 7
    %v6200 = vsub.s32 %v6197, %v6199
    %v6201 = vrot.slane %v6193, %v6200
    %v6203 = vunpack.c.l.s4 1934713408
    %v6204 = vunpack.c.0.s8 %v6203
    %v6205 = vlaneseq
    %v6206 = vshrl.u32 %v6205, 7
    %v6207 = vsub.s32 %v6204, %v6206
    %v6208 = vrot.slane %v6194, %v6207
    %v6209 = vcombine.high %v6185, 0.0
    %v6210 = vcombine.high %v6192, 0.0
    %v6211 = vcombine.high %v6201, 0.0
    %v6212 = vcombine.high %v6208, 0.0
    %v6213 = vcombine.low %v6034, %v6050
    %v6214 = vcombine.high %v6034, %v6050
    %v6216 = vunpack.c.l.s4 1983009808
    %v6217 = vunpack.c.0.s8 %v6216
    %v6218 = vlaneseq
    %v6219 = vshrl.u32 %v6218, 7
    %v6220 = vsub.s32 %v6217, %v6219
    %v6221 = vrot.slane %v6213, %v6220
    %v6223 = vunpack.c.l.s4 1983009808
    %v6224 = vunpack.c.0.s8 %v6223
    %v6225 = vlaneseq
    %v6226 = vshrl.u32 %v6225, 7
    %v6227 = vsub.s32 %v6224, %v6226
    %v6228 = vrot.slane %v6214, %v6227
    %v6229 = vcombine.low %v6042, %v6058
    %v6230 = vcombine.high %v6042, %v6058
    %v6232 = vunpack.c.l.s4 1983009808
    %v6233 = vunpack.c.0.s8 %v6232
    %v6234 = vlaneseq
    %v6235 = vshrl.u32 %v6234, 7
    %v6236 = vsub.s32 %v6233, %v6235
    %v6237 = vrot.slane %v6229, %v6236
    %v6239 = vunpack.c.l.s4 1983009808
    %v6240 = vunpack.c.0.s8 %v6239
    %v6241 = vlaneseq
    %v6242 = vshrl.u32 %v6241, 7
    %v6243 = vsub.s32 %v6240, %v6242
    %v6244 = vrot.slane %v6230, %v6243
    %v6245 = vcombine.low %v6221, %v6237
    %v6246 = vcombine.high %v6221, %v6237
    %v6248 = vunpack.c.l.s4 1934713408
    %v6249 = vunpack.c.0.s8 %v6248
    %v6250 = vlaneseq
    %v6251 = vshrl.u32 %v6250, 7
    %v6252 = vsub.s32 %v6249, %v6251
    %v6253 = vrot.slane %v6245, %v6252
    %v6255 = vunpack.c.l.s4 1934713408
    %v6256 = vunpack.c.0.s8 %v6255
    %v6257 = vlaneseq
    %v6258 = vshrl.u32 %v6257, 7
    %v6259 = vsub.s32 %v6256, %v6258
    %v6260 = vrot.slane %v6246, %v6259
    %v6261 = vcombine.low %v6228, %v6244
    %v6262 = vcombine.high %v6228, %v6244
    %v6264 = vunpack.c.l.s4 1934713408
    %v6265 = vunpack.c.0.s8 %v6264
    %v6266 = vlaneseq
    %v6267 = vshrl.u32 %v6266, 7
    %v6268 = vsub.s32 %v6265, %v6267
    %v6269 = vrot.slane %v6261, %v6268
    %v6271 = vunpack.c.l.s4 1934713408
    %v6272 = vunpack.c.0.s8 %v6271
    %v6273 = vlaneseq
    %v6274 = vshrl.u32 %v6273, 7
    %v6275 = vsub.s32 %v6272, %v6274
    %v6276 = vrot.slane %v6262, %v6275
    %v6277 = vcombine.high %v6253, 0.0
    %v6278 = vcombine.high %v6260, 0.0
    %v6279 = vcombine.high %v6269, 0.0
    %v6280 = vcombine.high %v6276, 0.0
    %v6281 = vcombine.low %v6036, %v6052
    %v6282 = vcombine.high %v6036, %v6052
    %v6284 = vunpack.c.l.s4 1983009808
    %v6285 = vunpack.c.0.s8 %v6284
    %v6286 = vlaneseq
    %v6287 = vshrl.u32 %v6286, 7
    %v6288 = vsub.s32 %v6285, %v6287
    %v6289 = vrot.slane %v6281, %v6288
    %v6291 = vunpack.c.l.s4 1983009808
    %v6292 = vunpack.c.0.s8 %v6291
    %v6293 = vlaneseq
    %v6294 = vshrl.u32 %v6293, 7
    %v6295 = vsub.s32 %v6292, %v6294
    %v6296 = vrot.slane %v6282, %v6295
    %v6297 = vcombine.low %v6044, %v6060
    %v6298 = vcombine.high %v6044, %v6060
    %v6300 = vunpack.c.l.s4 1983009808
    %v6301 = vunpack.c.0.s8 %v6300
    %v6302 = vlaneseq
    %v6303 = vshrl.u32 %v6302, 7
    %v6304 = vsub.s32 %v6301, %v6303
    %v6305 = vrot.slane %v6297, %v6304
    %v6307 = vunpack.c.l.s4 1983009808
    %v6308 = vunpack.c.0.s8 %v6307
    %v6309 = vlaneseq
    %v6310 = vshrl.u32 %v6309, 7
    %v6311 = vsub.s32 %v6308, %v6310
    %v6312 = vrot.slane %v6298, %v6311
    %v6313 = vcombine.low %v6289, %v6305
    %v6314 = vcombine.high %v6289, %v6305
    %v6316 = vunpack.c.l.s4 1934713408
    %v6317 = vunpack.c.0.s8 %v6316
    %v6318 = vlaneseq
    %v6319 = vshrl.u32 %v6318, 7
    %v6320 = vsub.s32 %v6317, %v6319
    %v6321 = vrot.slane %v6313, %v6320
    %v6323 = vunpack.c.l.s4 1934713408
    %v6324 = vunpack.c.0.s8 %v6323
    %v6325 = vlaneseq
    %v6326 = vshrl.u32 %v6325, 7
    %v6327 = vsub.s32 %v6324, %v6326
    %v6328 = vrot.slane %v6314, %v6327
    %v6329 = vcombine.low %v6296, %v6312
    %v6330 = vcombine.high %v6296, %v6312
    %v6332 = vunpack.c.l.s4 1934713408
    %v6333 = vunpack.c.0.s8 %v6332
    %v6334 = vlaneseq
    %v6335 = vshrl.u32 %v6334, 7
    %v6336 = vsub.s32 %v6333, %v6335
    %v6337 = vrot.slane %v6329, %v6336
    %v6339 = vunpack.c.l.s4 1934713408
    %v6340 = vunpack.c.0.s8 %v6339
    %v6341 = vlaneseq
    %v6342 = vshrl.u32 %v6341, 7
    %v6343 = vsub.s32 %v6340, %v6342
    %v6344 = vrot.slane %v6330, %v6343
    %v6345 = vcombine.high %v6321, 0.0
    %v6346 = vcombine.high %v6328, 0.0
    %v6347 = vcombine.high %v6337, 0.0
    %v6348 = vcombine.high %v6344, 0.0
    %v6349 = vcombine.low %v6117, %v6124
    %v6351 = vunpack.c.l.s4 1983009808
    %v6352 = vunpack.c.0.s8 %v6351
    %v6353 = vlaneseq
    %v6354 = vshrl.u32 %v6353, 7
    %v6355 = vsub.s32 %v6352, %v6354
    %v6356 = vrot.slane %v6349, %v6355
    %v6357 = vcombine.low %v6141, %v6142
    %v6359 = vunpack.c.l.s4 1983009808
    %v6360 = vunpack.c.0.s8 %v6359
    %v6361 = vlaneseq
    %v6362 = vshrl.u32 %v6361, 7
    %v6363 = vsub.s32 %v6360, %v6362
    %v6364 = vrot.slane %v6357, %v6363
    %v6365 = vcombine.low %v6133, %v6140
    %v6367 = vunpack.c.l.s4 1983009808
    %v6368 = vunpack.c.0.s8 %v6367
    %v6369 = vlaneseq
    %v6370 = vshrl.u32 %v6369, 7
    %v6371 = vsub.s32 %v6368, %v6370
    %v6372 = vrot.slane %v6365, %v6371
    %v6373 = vcombine.low %v6143, %v6144
    %v6375 = vunpack.c.l.s4 1983009808
    %v6376 = vunpack.c.0.s8 %v6375
    %v6377 = vlaneseq
    %v6378 = vshrl.u32 %v6377, 7
    %v6379 = vsub.s32 %v6376, %v6378
    %v6380 = vrot.slane %v6373, %v6379
    %v6381 = vcombine.low %v6356, %v6364
    %v6382 = vcombine.high %v6356, %v6364
    %v6384 = vunpack.c.l.s4 1934713408
    %v6385 = vunpack.c.0.s8 %v6384
    %v6386 = vlaneseq
    %v6387 = vshrl.u32 %v6386, 7
    %v6388 = vsub.s32 %v6385, %v6387
    %v6389 = vrot.slane %v6381, %v6388
    %v6391 = vunpack.c.l.s4 1934713408
    %v6392 = vunpack.c.0.s8 %v6391
    %v6393 = vlaneseq
    %v6394 = vshrl.u32 %v6393, 7
    %v6395 = vsub.s32 %v6392, %v6394
    %v6396 = vrot.slane %v6382, %v6395
    %v6397 = vcombine.low %v6372, %v6380
    %v6398 = vcombine.high %v6372, %v6380
    %v6400 = vunpack.c.l.s4 1934713408
    %v6401 = vunpack.c.0.s8 %v6400
    %v6402 = vlaneseq
    %v6403 = vshrl.u32 %v6402, 7
    %v6404 = vsub.s32 %v6401, %v6403
    %v6405 = vrot.slane %v6397, %v6404
    %v6407 = vunpack.c.l.s4 1934713408
    %v6408 = vunpack.c.0.s8 %v6407
    %v6409 = vlaneseq
    %v6410 = vshrl.u32 %v6409, 7
    %v6411 = vsub.s32 %v6408, %v6410
    %v6412 = vrot.slane %v6398, %v6411
    %v6413 = vcombine.low %v6389, %v6405
    %v6414 = vcombine.high %v6389, %v6405
    %v6415 = vcombine.low %v6396, %v6412
    %v6416 = vcombine.high %v6396, %v6412
    %v6417 = vcombine.low %v6185, %v6192
    %v6419 = vunpack.c.l.s4 1983009808
    %v6420 = vunpack.c.0.s8 %v6419
    %v6421 = vlaneseq
    %v6422 = vshrl.u32 %v6421, 7
    %v6423 = vsub.s32 %v6420, %v6422
    %v6424 = vrot.slane %v6417, %v6423
    %v6425 = vcombine.low %v6209, %v6210
    %v6427 = vunpack.c.l.s4 1983009808
    %v6428 = vunpack.c.0.s8 %v6427
    %v6429 = vlaneseq
    %v6430 = vshrl.u32 %v6429, 7
    %v6431 = vsub.s32 %v6428, %v6430
    %v6432 = vrot.slane %v6425, %v6431
    %v6433 = vcombine.low %v6201, %v6208
    %v6435 = vunpack.c.l.s4 1983009808
    %v6436 = vunpack.c.0.s8 %v6435
    %v6437 = vlaneseq
    %v6438 = vshrl.u32 %v6437, 7
    %v6439 = vsub.s32 %v6436, %v6438
    %v6440 = vrot.slane %v6433, %v6439
    %v6441 = vcombine.low %v6211, %v6212
    %v6443 = vunpack.c.l.s4 1983009808
    %v6444 = vunpack.c.0.s8 %v6443
    %v6445 = vlaneseq
    %v6446 = vshrl.u32 %v6445, 7
    %v6447 = vsub.s32 %v6444, %v6446
    %v6448 = vrot.slane %v6441, %v6447
    %v6449 = vcombine.low %v6424, %v6432
    %v6450 = vcombine.high %v6424, %v6432
    %v6452 = vunpack.c.l.s4 1934713408
    %v6453 = vunpack.c.0.s8 %v6452
    %v6454 = vlaneseq
    %v6455 = vshrl.u32 %v6454, 7
    %v6456 = vsub.s32 %v6453, %v6455
    %v6457 = vrot.slane %v6449, %v6456
    %v6459 = vunpack.c.l.s4 1934713408
    %v6460 = vunpack.c.0.s8 %v6459
    %v6461 = vlaneseq
    %v6462 = vshrl.u32 %v6461, 7
    %v6463 = vsub.s32 %v6460, %v6462
    %v6464 = vrot.slane %v6450, %v6463
    %v6465 = vcombine.low %v6440, %v6448
    %v6466 = vcombine.high %v6440, %v6448
    %v6468 = vunpack.c.l.s4 1934713408
    %v6469 = vunpack.c.0.s8 %v6468
    %v6470 = vlaneseq
    %v6471 = vshrl.u32 %v6470, 7
    %v6472 = vsub.s32 %v6469, %v6471
    %v6473 = vrot.slane %v6465, %v6472
    %v6475 = vunpack.c.l.s4 1934713408
    %v6476 = vunpack.c.0.s8 %v6475
    %v6477 = vlaneseq
    %v6478 = vshrl.u32 %v6477, 7
    %v6479 = vsub.s32 %v6476, %v6478
    %v6480 = vrot.slane %v6466, %v6479
    %v6481 = vcombine.low %v6457, %v6473
    %v6482 = vcombine.high %v6457, %v6473
    %v6483 = vcombine.low %v6464, %v6480
    %v6484 = vcombine.high %v6464, %v6480
    %v6485 = vcombine.low %v6253, %v6260
    %v6487 = vunpack.c.l.s4 1983009808
    %v6488 = vunpack.c.0.s8 %v6487
    %v6489 = vlaneseq
    %v6490 = vshrl.u32 %v6489, 7
    %v6491 = vsub.s32 %v6488, %v6490
    %v6492 = vrot.slane %v6485, %v6491
    %v6493 = vcombine.low %v6277, %v6278
    %v6495 = vunpack.c.l.s4 1983009808
    %v6496 = vunpack.c.0.s8 %v6495
    %v6497 = vlaneseq
    %v6498 = vshrl.u32 %v6497, 7
    %v6499 = vsub.s32 %v6496, %v6498
    %v6500 = vrot.slane %v6493, %v6499
    %v6501 = vcombine.low %v6269, %v6276
    %v6503 = vunpack.c.l.s4 1983009808
    %v6504 = vunpack.c.0.s8 %v6503
    %v6505 = vlaneseq
    %v6506 = vshrl.u32 %v6505, 7
    %v6507 = vsub.s32 %v6504, %v6506
    %v6508 = vrot.slane %v6501, %v6507
    %v6509 = vcombine.low %v6279, %v6280
    %v6511 = vunpack.c.l.s4 1983009808
    %v6512 = vunpack.c.0.s8 %v6511
    %v6513 = vlaneseq
    %v6514 = vshrl.u32 %v6513, 7
    %v6515 = vsub.s32 %v6512, %v6514
    %v6516 = vrot.slane %v6509, %v6515
    %v6517 = vcombine.low %v6492, %v6500
    %v6518 = vcombine.high %v6492, %v6500
    %v6520 = vunpack.c.l.s4 1934713408
    %v6521 = vunpack.c.0.s8 %v6520
    %v6522 = vlaneseq
    %v6523 = vshrl.u32 %v6522, 7
    %v6524 = vsub.s32 %v6521, %v6523
    %v6525 = vrot.slane %v6517, %v6524
    %v6527 = vunpack.c.l.s4 1934713408
    %v6528 = vunpack.c.0.s8 %v6527
    %v6529 = vlaneseq
    %v6530 = vshrl.u32 %v6529, 7
    %v6531 = vsub.s32 %v6528, %v6530
    %v6532 = vrot.slane %v6518, %v6531
    %v6533 = vcombine.low %v6508, %v6516
    %v6534 = vcombine.high %v6508, %v6516
    %v6536 = vunpack.c.l.s4 1934713408
    %v6537 = vunpack.c.0.s8 %v6536
    %v6538 = vlaneseq
    %v6539 = vshrl.u32 %v6538, 7
    %v6540 = vsub.s32 %v6537, %v6539
    %v6541 = vrot.slane %v6533, %v6540
    %v6543 = vunpack.c.l.s4 1934713408
    %v6544 = vunpack.c.0.s8 %v6543
    %v6545 = vlaneseq
    %v6546 = vshrl.u32 %v6545, 7
    %v6547 = vsub.s32 %v6544, %v6546
    %v6548 = vrot.slane %v6534, %v6547
    %v6549 = vcombine.low %v6525, %v6541
    %v6550 = vcombine.high %v6525, %v6541
    %v6551 = vcombine.low %v6532, %v6548
    %v6552 = vcombine.high %v6532, %v6548
    %v6553 = vcombine.low %v6321, %v6328
    %v6555 = vunpack.c.l.s4 1983009808
    %v6556 = vunpack.c.0.s8 %v6555
    %v6557 = vlaneseq
    %v6558 = vshrl.u32 %v6557, 7
    %v6559 = vsub.s32 %v6556, %v6558
    %v6560 = vrot.slane %v6553, %v6559
    %v6561 = vcombine.low %v6345, %v6346
    %v6563 = vunpack.c.l.s4 1983009808
    %v6564 = vunpack.c.0.s8 %v6563
    %v6565 = vlaneseq
    %v6566 = vshrl.u32 %v6565, 7
    %v6567 = vsub.s32 %v6564, %v6566
    %v6568 = vrot.slane %v6561, %v6567
    %v6569 = vcombine.low %v6337, %v6344
    %v6571 = vunpack.c.l.s4 1983009808
    %v6572 = vunpack.c.0.s8 %v6571
    %v6573 = vlaneseq
    %v6574 = vshrl.u32 %v6573, 7
    %v6575 = vsub.s32 %v6572, %v6574
    %v6576 = vrot.slane %v6569, %v6575
    %v6577 = vcombine.low %v6347, %v6348
    %v6579 = vunpack.c.l.s4 1983009808
    %v6580 = vunpack.c.0.s8 %v6579
    %v6581 = vlaneseq
    %v6582 = vshrl.u32 %v6581, 7
    %v6583 = vsub.s32 %v6580, %v6582
    %v6584 = vrot.slane %v6577, %v6583
    %v6585 = vcombine.low %v6560, %v6568
    %v6586 = vcombine.high %v6560, %v6568
    %v6588 = vunpack.c.l.s4 1934713408
    %v6589 = vunpack.c.0.s8 %v6588
    %v6590 = vlaneseq
    %v6591 = vshrl.u32 %v6590, 7
    %v6592 = vsub.s32 %v6589, %v6591
    %v6593 = vrot.slane %v6585, %v6592
    %v6595 = vunpack.c.l.s4 1934713408
    %v6596 = vunpack.c.0.s8 %v6595
    %v6597 = vlaneseq
    %v6598 = vshrl.u32 %v6597, 7
    %v6599 = vsub.s32 %v6596, %v6598
    %v6600 = vrot.slane %v6586, %v6599
    %v6601 = vcombine.low %v6576, %v6584
    %v6602 = vcombine.high %v6576, %v6584
    %v6604 = vunpack.c.l.s4 1934713408
    %v6605 = vunpack.c.0.s8 %v6604
    %v6606 = vlaneseq
    %v6607 = vshrl.u32 %v6606, 7
    %v6608 = vsub.s32 %v6605, %v6607
    %v6609 = vrot.slane %v6601, %v6608
    %v6611 = vunpack.c.l.s4 1934713408
    %v6612 = vunpack.c.0.s8 %v6611
    %v6613 = vlaneseq
    %v6614 = vshrl.u32 %v6613, 7
    %v6615 = vsub.s32 %v6612, %v6614
    %v6616 = vrot.slane %v6602, %v6615
    %v6617 = vcombine.low %v6593, %v6609
    %v6618 = vcombine.high %v6593, %v6609
    %v6619 = vcombine.low %v6600, %v6616
    %v6620 = vcombine.high %v6600, %v6616
    %v6621 = vpack.c.bf16 %v6413, %v6413
    %v6622 = vpack.c.bf16 %v6414, %v6414
    %v6623 = vpack.c.bf16 %v6415, %v6415
    %v6624 = vpack.c.bf16 %v6416, %v6416
    %v6625 = vpack.c.bf16 %v6481, %v6481
    %v6626 = vpack.c.bf16 %v6482, %v6482
    %v6627 = vpack.c.bf16 %v6483, %v6483
    %v6628 = vpack.c.bf16 %v6484, %v6484
    %v6629 = vpack.c.bf16 %v6549, %v6549
    %v6630 = vpack.c.bf16 %v6550, %v6550
    %v6631 = vpack.c.bf16 %v6551, %v6551
    %v6632 = vpack.c.bf16 %v6552, %v6552
    %v6633 = vpack.c.bf16 %v6617, %v6617
    %v6634 = vpack.c.bf16 %v6618, %v6618
    %v6635 = vpack.c.bf16 %v6619, %v6619
    %v6636 = vpack.c.bf16 %v6620, %v6620
    %v6638 = vsel %vm2132, %v5405, 0
    %v6641 = vsel %vm2132, %v6013, 0
    %6643 = vmatprep.subr.bf16.mxu0 0
    %6644 = vmatpush1.bf16.xpose.msra.mxu0 %v6641
    %6645 = vmatprep.subr.bf16.mxu0 0
    %6646 = vmatpush1.bf16.xpose.msra.mxu0 0
    %6647 = vmatprep.subr.bf16.mxu0 0
    %6648 = vmatpush1.bf16.xpose.msra.mxu0 0
    %6649 = vmatprep.subr.bf16.mxu0 0
    %6650 = vmatpush1.bf16.xpose.msra.mxu0 0
    %6651 = vmatprep.subr.bf16.mxu0 0
    %6652 = vmatpush1.bf16.xpose.msra.mxu0 0
    %6653 = vmatprep.subr.bf16.mxu0 0
    %6654 = vmatpush1.bf16.xpose.msra.mxu0 0
    %6655 = vmatprep.subr.bf16.mxu0 0
    %6656 = vmatpush1.bf16.xpose.msra.mxu0 0
    %6657 = vmatprep.subr.bf16.mxu0 0
    %6658 = vmatpush1.bf16.xpose.msra.mxu0 0
    %6659 = vmatprep.subr.bf16.mxu0 0
    %6660 = vmatpush1.bf16.xpose.msra.mxu0 0
    %6661 = vmatprep.subr.bf16.mxu0 0
    %6662 = vmatpush1.bf16.xpose.msra.mxu0 0
    %6663 = vmatprep.subr.bf16.mxu0 0
    %6664 = vmatpush1.bf16.xpose.msra.mxu0 0
    %6665 = vmatprep.subr.bf16.mxu0 0
    %6666 = vmatpush1.bf16.xpose.msra.mxu0 0
    %6667 = vmatprep.subr.bf16.mxu0 0
    %6668 = vmatpush1.bf16.xpose.msra.mxu0 0
    %6669 = vmatprep.subr.bf16.mxu0 0
    %6670 = vmatpush1.bf16.xpose.msra.mxu0 0
    %6671 = vmatprep.subr.bf16.mxu0 0
    %6672 = vmatpush1.bf16.xpose.msra.mxu0 0
    %6673 = vmatprep.subr.bf16.mxu0 0
    %6674 = vmatpush1.bf16.xpose.msra.mxu0 0
    %6675 = vmatprep.mubr.bf16.mxu0 0
    %6676 = vmatmul.mubr.bf16.gmra.mrb[0].mxu0 %v6638
    %v6677 = vpop.f32.mrb[0].mxu0
    %v6678 = vadd.f32 0.0, %v6677
    %v6679 = vpop.f32.mrb[0].mxu0
    %v6680 = vpop.f32.mrb[0].mxu0
    %v6681 = vpop.f32.mrb[0].mxu0
    %6682 = vdwg.mxu0
    %v6684 = vsel %vm2132, %v5406, 0
    %v6687 = vsel %vm2132, %v6014, 0
    %6689 = vmatprep.subr.bf16.mxu0 0
    %6690 = vmatpush1.bf16.xpose.msra.mxu0 %v6687
    %6691 = vmatprep.subr.bf16.mxu0 0
    %6692 = vmatpush1.bf16.xpose.msra.mxu0 0
    %6693 = vmatprep.subr.bf16.mxu0 0
    %6694 = vmatpush1.bf16.xpose.msra.mxu0 0
    %6695 = vmatprep.subr.bf16.mxu0 0
    %6696 = vmatpush1.bf16.xpose.msra.mxu0 0
    %6697 = vmatprep.subr.bf16.mxu0 0
    %6698 = vmatpush1.bf16.xpose.msra.mxu0 0
    %6699 = vmatprep.subr.bf16.mxu0 0
    %6700 = vmatpush1.bf16.xpose.msra.mxu0 0
    %6701 = vmatprep.subr.bf16.mxu0 0
    %6702 = vmatpush1.bf16.xpose.msra.mxu0 0
    %6703 = vmatprep.subr.bf16.mxu0 0
    %6704 = vmatpush1.bf16.xpose.msra.mxu0 0
    %6705 = vmatprep.subr.bf16.mxu0 0
    %6706 = vmatpush1.bf16.xpose.msra.mxu0 0
    %6707 = vmatprep.subr.bf16.mxu0 0
    %6708 = vmatpush1.bf16.xpose.msra.mxu0 0
    %6709 = vmatprep.subr.bf16.mxu0 0
    %6710 = vmatpush1.bf16.xpose.msra.mxu0 0
    %6711 = vmatprep.subr.bf16.mxu0 0
    %6712 = vmatpush1.bf16.xpose.msra.mxu0 0
    %6713 = vmatprep.subr.bf16.mxu0 0
    %6714 = vmatpush1.bf16.xpose.msra.mxu0 0
    %6715 = vmatprep.subr.bf16.mxu0 0
    %6716 = vmatpush1.bf16.xpose.msra.mxu0 0
    %6717 = vmatprep.subr.bf16.mxu0 0
    %6718 = vmatpush1.bf16.xpose.msra.mxu0 0
    %6719 = vmatprep.subr.bf16.mxu0 0
    %6720 = vmatpush1.bf16.xpose.msra.mxu0 0
    %6721 = vmatprep.mubr.bf16.mxu0 0
    %6722 = vmatmul.mubr.bf16.gmra.mrb[0].mxu0 %v6684
    %v6723 = vpop.f32.mrb[0].mxu0
    %v6724 = vadd.f32 0.0, %v6723
    %v6725 = vpop.f32.mrb[0].mxu0
    %v6726 = vpop.f32.mrb[0].mxu0
    %v6727 = vpop.f32.mrb[0].mxu0
    %6728 = vdwg.mxu0
    %v6730 = vsel %vm2132, %v5407, 0
    %v6733 = vsel %vm2132, %v6015, 0
    %6735 = vmatprep.subr.bf16.mxu0 0
    %6736 = vmatpush1.bf16.xpose.msra.mxu0 %v6733
    %6737 = vmatprep.subr.bf16.mxu0 0
    %6738 = vmatpush1.bf16.xpose.msra.mxu0 0
    %6739 = vmatprep.subr.bf16.mxu0 0
    %6740 = vmatpush1.bf16.xpose.msra.mxu0 0
    %6741 = vmatprep.subr.bf16.mxu0 0
    %6742 = vmatpush1.bf16.xpose.msra.mxu0 0
    %6743 = vmatprep.subr.bf16.mxu0 0
    %6744 = vmatpush1.bf16.xpose.msra.mxu0 0
    %6745 = vmatprep.subr.bf16.mxu0 0
    %6746 = vmatpush1.bf16.xpose.msra.mxu0 0
    %6747 = vmatprep.subr.bf16.mxu0 0
    %6748 = vmatpush1.bf16.xpose.msra.mxu0 0
    %6749 = vmatprep.subr.bf16.mxu0 0
    %6750 = vmatpush1.bf16.xpose.msra.mxu0 0
    %6751 = vmatprep.subr.bf16.mxu0 0
    %6752 = vmatpush1.bf16.xpose.msra.mxu0 0
    %6753 = vmatprep.subr.bf16.mxu0 0
    %6754 = vmatpush1.bf16.xpose.msra.mxu0 0
    %6755 = vmatprep.subr.bf16.mxu0 0
    %6756 = vmatpush1.bf16.xpose.msra.mxu0 0
    %6757 = vmatprep.subr.bf16.mxu0 0
    %6758 = vmatpush1.bf16.xpose.msra.mxu0 0
    %6759 = vmatprep.subr.bf16.mxu0 0
    %6760 = vmatpush1.bf16.xpose.msra.mxu0 0
    %6761 = vmatprep.subr.bf16.mxu0 0
    %6762 = vmatpush1.bf16.xpose.msra.mxu0 0
    %6763 = vmatprep.subr.bf16.mxu0 0
    %6764 = vmatpush1.bf16.xpose.msra.mxu0 0
    %6765 = vmatprep.subr.bf16.mxu0 0
    %6766 = vmatpush1.bf16.xpose.msra.mxu0 0
    %6767 = vmatprep.mubr.bf16.mxu0 0
    %6768 = vmatmul.mubr.bf16.gmra.mrb[0].mxu0 %v6730
    %v6769 = vpop.f32.mrb[0].mxu0
    %v6770 = vadd.f32 0.0, %v6769
    %v6771 = vpop.f32.mrb[0].mxu0
    %v6772 = vpop.f32.mrb[0].mxu0
    %v6773 = vpop.f32.mrb[0].mxu0
    %6774 = vdwg.mxu0
    %v6776 = vsel %vm2132, %v5408, 0
    %v6779 = vsel %vm2132, %v6016, 0
    %6781 = vmatprep.subr.bf16.mxu0 0
    %6782 = vmatpush1.bf16.xpose.msra.mxu0 %v6779
    %6783 = vmatprep.subr.bf16.mxu0 0
    %6784 = vmatpush1.bf16.xpose.msra.mxu0 0
    %6785 = vmatprep.subr.bf16.mxu0 0
    %6786 = vmatpush1.bf16.xpose.msra.mxu0 0
    %6787 = vmatprep.subr.bf16.mxu0 0
    %6788 = vmatpush1.bf16.xpose.msra.mxu0 0
    %6789 = vmatprep.subr.bf16.mxu0 0
    %6790 = vmatpush1.bf16.xpose.msra.mxu0 0
    %6791 = vmatprep.subr.bf16.mxu0 0
    %6792 = vmatpush1.bf16.xpose.msra.mxu0 0
    %6793 = vmatprep.subr.bf16.mxu0 0
    %6794 = vmatpush1.bf16.xpose.msra.mxu0 0
    %6795 = vmatprep.subr.bf16.mxu0 0
    %6796 = vmatpush1.bf16.xpose.msra.mxu0 0
    %6797 = vmatprep.subr.bf16.mxu0 0
    %6798 = vmatpush1.bf16.xpose.msra.mxu0 0
    %6799 = vmatprep.subr.bf16.mxu0 0
    %6800 = vmatpush1.bf16.xpose.msra.mxu0 0
    %6801 = vmatprep.subr.bf16.mxu0 0
    %6802 = vmatpush1.bf16.xpose.msra.mxu0 0
    %6803 = vmatprep.subr.bf16.mxu0 0
    %6804 = vmatpush1.bf16.xpose.msra.mxu0 0
    %6805 = vmatprep.subr.bf16.mxu0 0
    %6806 = vmatpush1.bf16.xpose.msra.mxu0 0
    %6807 = vmatprep.subr.bf16.mxu0 0
    %6808 = vmatpush1.bf16.xpose.msra.mxu0 0
    %6809 = vmatprep.subr.bf16.mxu0 0
    %6810 = vmatpush1.bf16.xpose.msra.mxu0 0
    %6811 = vmatprep.subr.bf16.mxu0 0
    %6812 = vmatpush1.bf16.xpose.msra.mxu0 0
    %6813 = vmatprep.mubr.bf16.mxu0 0
    %6814 = vmatmul.mubr.bf16.gmra.mrb[0].mxu0 %v6776
    %v6815 = vpop.f32.mrb[0].mxu0
    %v6816 = vadd.f32 0.0, %v6815
    %v6817 = vpop.f32.mrb[0].mxu0
    %v6818 = vpop.f32.mrb[0].mxu0
    %v6819 = vpop.f32.mrb[0].mxu0
    %6820 = vdwg.mxu0
    %v6822 = vsel %vm2132, %v5409, 0
    %v6825 = vsel %vm2132, %v6017, 0
    %6827 = vmatprep.subr.bf16.mxu0 0
    %6828 = vmatpush1.bf16.xpose.msra.mxu0 %v6825
    %6829 = vmatprep.subr.bf16.mxu0 0
    %6830 = vmatpush1.bf16.xpose.msra.mxu0 0
    %6831 = vmatprep.subr.bf16.mxu0 0
    %6832 = vmatpush1.bf16.xpose.msra.mxu0 0
    %6833 = vmatprep.subr.bf16.mxu0 0
    %6834 = vmatpush1.bf16.xpose.msra.mxu0 0
    %6835 = vmatprep.subr.bf16.mxu0 0
    %6836 = vmatpush1.bf16.xpose.msra.mxu0 0
    %6837 = vmatprep.subr.bf16.mxu0 0
    %6838 = vmatpush1.bf16.xpose.msra.mxu0 0
    %6839 = vmatprep.subr.bf16.mxu0 0
    %6840 = vmatpush1.bf16.xpose.msra.mxu0 0
    %6841 = vmatprep.subr.bf16.mxu0 0
    %6842 = vmatpush1.bf16.xpose.msra.mxu0 0
    %6843 = vmatprep.subr.bf16.mxu0 0
    %6844 = vmatpush1.bf16.xpose.msra.mxu0 0
    %6845 = vmatprep.subr.bf16.mxu0 0
    %6846 = vmatpush1.bf16.xpose.msra.mxu0 0
    %6847 = vmatprep.subr.bf16.mxu0 0
    %6848 = vmatpush1.bf16.xpose.msra.mxu0 0
    %6849 = vmatprep.subr.bf16.mxu0 0
    %6850 = vmatpush1.bf16.xpose.msra.mxu0 0
    %6851 = vmatprep.subr.bf16.mxu0 0
    %6852 = vmatpush1.bf16.xpose.msra.mxu0 0
    %6853 = vmatprep.subr.bf16.mxu0 0
    %6854 = vmatpush1.bf16.xpose.msra.mxu0 0
    %6855 = vmatprep.subr.bf16.mxu0 0
    %6856 = vmatpush1.bf16.xpose.msra.mxu0 0
    %6857 = vmatprep.subr.bf16.mxu0 0
    %6858 = vmatpush1.bf16.xpose.msra.mxu0 0
    %6859 = vmatprep.mubr.bf16.mxu0 0
    %6860 = vmatmul.mubr.bf16.gmra.mrb[0].mxu0 %v6822
    %v6861 = vpop.f32.mrb[0].mxu0
    %v6862 = vadd.f32 0.0, %v6861
    %v6863 = vpop.f32.mrb[0].mxu0
    %v6864 = vpop.f32.mrb[0].mxu0
    %v6865 = vpop.f32.mrb[0].mxu0
    %6866 = vdwg.mxu0
    %v6868 = vsel %vm2132, %v5410, 0
    %v6871 = vsel %vm2132, %v6018, 0
    %6873 = vmatprep.subr.bf16.mxu0 0
    %6874 = vmatpush1.bf16.xpose.msra.mxu0 %v6871
    %6875 = vmatprep.subr.bf16.mxu0 0
    %6876 = vmatpush1.bf16.xpose.msra.mxu0 0
    %6877 = vmatprep.subr.bf16.mxu0 0
    %6878 = vmatpush1.bf16.xpose.msra.mxu0 0
    %6879 = vmatprep.subr.bf16.mxu0 0
    %6880 = vmatpush1.bf16.xpose.msra.mxu0 0
    %6881 = vmatprep.subr.bf16.mxu0 0
    %6882 = vmatpush1.bf16.xpose.msra.mxu0 0
    %6883 = vmatprep.subr.bf16.mxu0 0
    %6884 = vmatpush1.bf16.xpose.msra.mxu0 0
    %6885 = vmatprep.subr.bf16.mxu0 0
    %6886 = vmatpush1.bf16.xpose.msra.mxu0 0
    %6887 = vmatprep.subr.bf16.mxu0 0
    %6888 = vmatpush1.bf16.xpose.msra.mxu0 0
    %6889 = vmatprep.subr.bf16.mxu0 0
    %6890 = vmatpush1.bf16.xpose.msra.mxu0 0
    %6891 = vmatprep.subr.bf16.mxu0 0
    %6892 = vmatpush1.bf16.xpose.msra.mxu0 0
    %6893 = vmatprep.subr.bf16.mxu0 0
    %6894 = vmatpush1.bf16.xpose.msra.mxu0 0
    %6895 = vmatprep.subr.bf16.mxu0 0
    %6896 = vmatpush1.bf16.xpose.msra.mxu0 0
    %6897 = vmatprep.subr.bf16.mxu0 0
    %6898 = vmatpush1.bf16.xpose.msra.mxu0 0
    %6899 = vmatprep.subr.bf16.mxu0 0
    %6900 = vmatpush1.bf16.xpose.msra.mxu0 0
    %6901 = vmatprep.subr.bf16.mxu0 0
    %6902 = vmatpush1.bf16.xpose.msra.mxu0 0
    %6903 = vmatprep.subr.bf16.mxu0 0
    %6904 = vmatpush1.bf16.xpose.msra.mxu0 0
    %6905 = vmatprep.mubr.bf16.mxu0 0
    %6906 = vmatmul.mubr.bf16.gmra.mrb[0].mxu0 %v6868
    %v6907 = vpop.f32.mrb[0].mxu0
    %v6908 = vadd.f32 0.0, %v6907
    %v6909 = vpop.f32.mrb[0].mxu0
    %v6910 = vpop.f32.mrb[0].mxu0
    %v6911 = vpop.f32.mrb[0].mxu0
    %6912 = vdwg.mxu0
    %v6914 = vsel %vm2132, %v5411, 0
    %v6917 = vsel %vm2132, %v6019, 0
    %6919 = vmatprep.subr.bf16.mxu0 0
    %6920 = vmatpush1.bf16.xpose.msra.mxu0 %v6917
    %6921 = vmatprep.subr.bf16.mxu0 0
    %6922 = vmatpush1.bf16.xpose.msra.mxu0 0
    %6923 = vmatprep.subr.bf16.mxu0 0
    %6924 = vmatpush1.bf16.xpose.msra.mxu0 0
    %6925 = vmatprep.subr.bf16.mxu0 0
    %6926 = vmatpush1.bf16.xpose.msra.mxu0 0
    %6927 = vmatprep.subr.bf16.mxu0 0
    %6928 = vmatpush1.bf16.xpose.msra.mxu0 0
    %6929 = vmatprep.subr.bf16.mxu0 0
    %6930 = vmatpush1.bf16.xpose.msra.mxu0 0
    %6931 = vmatprep.subr.bf16.mxu0 0
    %6932 = vmatpush1.bf16.xpose.msra.mxu0 0
    %6933 = vmatprep.subr.bf16.mxu0 0
    %6934 = vmatpush1.bf16.xpose.msra.mxu0 0
    %6935 = vmatprep.subr.bf16.mxu0 0
    %6936 = vmatpush1.bf16.xpose.msra.mxu0 0
    %6937 = vmatprep.subr.bf16.mxu0 0
    %6938 = vmatpush1.bf16.xpose.msra.mxu0 0
    %6939 = vmatprep.subr.bf16.mxu0 0
    %6940 = vmatpush1.bf16.xpose.msra.mxu0 0
    %6941 = vmatprep.subr.bf16.mxu0 0
    %6942 = vmatpush1.bf16.xpose.msra.mxu0 0
    %6943 = vmatprep.subr.bf16.mxu0 0
    %6944 = vmatpush1.bf16.xpose.msra.mxu0 0
    %6945 = vmatprep.subr.bf16.mxu0 0
    %6946 = vmatpush1.bf16.xpose.msra.mxu0 0
    %6947 = vmatprep.subr.bf16.mxu0 0
    %6948 = vmatpush1.bf16.xpose.msra.mxu0 0
    %6949 = vmatprep.subr.bf16.mxu0 0
    %6950 = vmatpush1.bf16.xpose.msra.mxu0 0
    %6951 = vmatprep.mubr.bf16.mxu0 0
    %6952 = vmatmul.mubr.bf16.gmra.mrb[0].mxu0 %v6914
    %v6953 = vpop.f32.mrb[0].mxu0
    %v6954 = vadd.f32 0.0, %v6953
    %v6955 = vpop.f32.mrb[0].mxu0
    %v6956 = vpop.f32.mrb[0].mxu0
    %v6957 = vpop.f32.mrb[0].mxu0
    %6958 = vdwg.mxu0
    %v6960 = vsel %vm2132, %v5412, 0
    %v6963 = vsel %vm2132, %v6020, 0
    %6965 = vmatprep.subr.bf16.mxu0 0
    %6966 = vmatpush1.bf16.xpose.msra.mxu0 %v6963
    %6967 = vmatprep.subr.bf16.mxu0 0
    %6968 = vmatpush1.bf16.xpose.msra.mxu0 0
    %6969 = vmatprep.subr.bf16.mxu0 0
    %6970 = vmatpush1.bf16.xpose.msra.mxu0 0
    %6971 = vmatprep.subr.bf16.mxu0 0
    %6972 = vmatpush1.bf16.xpose.msra.mxu0 0
    %6973 = vmatprep.subr.bf16.mxu0 0
    %6974 = vmatpush1.bf16.xpose.msra.mxu0 0
    %6975 = vmatprep.subr.bf16.mxu0 0
    %6976 = vmatpush1.bf16.xpose.msra.mxu0 0
    %6977 = vmatprep.subr.bf16.mxu0 0
    %6978 = vmatpush1.bf16.xpose.msra.mxu0 0
    %6979 = vmatprep.subr.bf16.mxu0 0
    %6980 = vmatpush1.bf16.xpose.msra.mxu0 0
    %6981 = vmatprep.subr.bf16.mxu0 0
    %6982 = vmatpush1.bf16.xpose.msra.mxu0 0
    %6983 = vmatprep.subr.bf16.mxu0 0
    %6984 = vmatpush1.bf16.xpose.msra.mxu0 0
    %6985 = vmatprep.subr.bf16.mxu0 0
    %6986 = vmatpush1.bf16.xpose.msra.mxu0 0
    %6987 = vmatprep.subr.bf16.mxu0 0
    %6988 = vmatpush1.bf16.xpose.msra.mxu0 0
    %6989 = vmatprep.subr.bf16.mxu0 0
    %6990 = vmatpush1.bf16.xpose.msra.mxu0 0
    %6991 = vmatprep.subr.bf16.mxu0 0
    %6992 = vmatpush1.bf16.xpose.msra.mxu0 0
    %6993 = vmatprep.subr.bf16.mxu0 0
    %6994 = vmatpush1.bf16.xpose.msra.mxu0 0
    %6995 = vmatprep.subr.bf16.mxu0 0
    %6996 = vmatpush1.bf16.xpose.msra.mxu0 0
    %6997 = vmatprep.mubr.bf16.mxu0 0
    %6998 = vmatmul.mubr.bf16.gmra.mrb[0].mxu0 %v6960
    %v6999 = vpop.f32.mrb[0].mxu0
    %v7000 = vadd.f32 0.0, %v6999
    %v7001 = vpop.f32.mrb[0].mxu0
    %v7002 = vpop.f32.mrb[0].mxu0
    %v7003 = vpop.f32.mrb[0].mxu0
    %7004 = vdwg.mxu0
    %v7006 = vsel %vm2132, %v5413, 0
    %v7009 = vsel %vm2132, %v6021, 0
    %7011 = vmatprep.subr.bf16.mxu0 0
    %7012 = vmatpush1.bf16.xpose.msra.mxu0 %v7009
    %7013 = vmatprep.subr.bf16.mxu0 0
    %7014 = vmatpush1.bf16.xpose.msra.mxu0 0
    %7015 = vmatprep.subr.bf16.mxu0 0
    %7016 = vmatpush1.bf16.xpose.msra.mxu0 0
    %7017 = vmatprep.subr.bf16.mxu0 0
    %7018 = vmatpush1.bf16.xpose.msra.mxu0 0
    %7019 = vmatprep.subr.bf16.mxu0 0
    %7020 = vmatpush1.bf16.xpose.msra.mxu0 0
    %7021 = vmatprep.subr.bf16.mxu0 0
    %7022 = vmatpush1.bf16.xpose.msra.mxu0 0
    %7023 = vmatprep.subr.bf16.mxu0 0
    %7024 = vmatpush1.bf16.xpose.msra.mxu0 0
    %7025 = vmatprep.subr.bf16.mxu0 0
    %7026 = vmatpush1.bf16.xpose.msra.mxu0 0
    %7027 = vmatprep.subr.bf16.mxu0 0
    %7028 = vmatpush1.bf16.xpose.msra.mxu0 0
    %7029 = vmatprep.subr.bf16.mxu0 0
    %7030 = vmatpush1.bf16.xpose.msra.mxu0 0
    %7031 = vmatprep.subr.bf16.mxu0 0
    %7032 = vmatpush1.bf16.xpose.msra.mxu0 0
    %7033 = vmatprep.subr.bf16.mxu0 0
    %7034 = vmatpush1.bf16.xpose.msra.mxu0 0
    %7035 = vmatprep.subr.bf16.mxu0 0
    %7036 = vmatpush1.bf16.xpose.msra.mxu0 0
    %7037 = vmatprep.subr.bf16.mxu0 0
    %7038 = vmatpush1.bf16.xpose.msra.mxu0 0
    %7039 = vmatprep.subr.bf16.mxu0 0
    %7040 = vmatpush1.bf16.xpose.msra.mxu0 0
    %7041 = vmatprep.subr.bf16.mxu0 0
    %7042 = vmatpush1.bf16.xpose.msra.mxu0 0
    %7043 = vmatprep.mubr.bf16.mxu0 0
    %7044 = vmatmul.mubr.bf16.gmra.mrb[0].mxu0 %v7006
    %v7045 = vpop.f32.mrb[0].mxu0
    %v7046 = vadd.f32 0.0, %v7045
    %v7047 = vpop.f32.mrb[0].mxu0
    %v7048 = vpop.f32.mrb[0].mxu0
    %v7049 = vpop.f32.mrb[0].mxu0
    %7050 = vdwg.mxu0
    %v7052 = vsel %vm2132, %v5414, 0
    %v7055 = vsel %vm2132, %v6022, 0
    %7057 = vmatprep.subr.bf16.mxu0 0
    %7058 = vmatpush1.bf16.xpose.msra.mxu0 %v7055
    %7059 = vmatprep.subr.bf16.mxu0 0
    %7060 = vmatpush1.bf16.xpose.msra.mxu0 0
    %7061 = vmatprep.subr.bf16.mxu0 0
    %7062 = vmatpush1.bf16.xpose.msra.mxu0 0
    %7063 = vmatprep.subr.bf16.mxu0 0
    %7064 = vmatpush1.bf16.xpose.msra.mxu0 0
    %7065 = vmatprep.subr.bf16.mxu0 0
    %7066 = vmatpush1.bf16.xpose.msra.mxu0 0
    %7067 = vmatprep.subr.bf16.mxu0 0
    %7068 = vmatpush1.bf16.xpose.msra.mxu0 0
    %7069 = vmatprep.subr.bf16.mxu0 0
    %7070 = vmatpush1.bf16.xpose.msra.mxu0 0
    %7071 = vmatprep.subr.bf16.mxu0 0
    %7072 = vmatpush1.bf16.xpose.msra.mxu0 0
    %7073 = vmatprep.subr.bf16.mxu0 0
    %7074 = vmatpush1.bf16.xpose.msra.mxu0 0
    %7075 = vmatprep.subr.bf16.mxu0 0
    %7076 = vmatpush1.bf16.xpose.msra.mxu0 0
    %7077 = vmatprep.subr.bf16.mxu0 0
    %7078 = vmatpush1.bf16.xpose.msra.mxu0 0
    %7079 = vmatprep.subr.bf16.mxu0 0
    %7080 = vmatpush1.bf16.xpose.msra.mxu0 0
    %7081 = vmatprep.subr.bf16.mxu0 0
    %7082 = vmatpush1.bf16.xpose.msra.mxu0 0
    %7083 = vmatprep.subr.bf16.mxu0 0
    %7084 = vmatpush1.bf16.xpose.msra.mxu0 0
    %7085 = vmatprep.subr.bf16.mxu0 0
    %7086 = vmatpush1.bf16.xpose.msra.mxu0 0
    %7087 = vmatprep.subr.bf16.mxu0 0
    %7088 = vmatpush1.bf16.xpose.msra.mxu0 0
    %7089 = vmatprep.mubr.bf16.mxu0 0
    %7090 = vmatmul.mubr.bf16.gmra.mrb[0].mxu0 %v7052
    %v7091 = vpop.f32.mrb[0].mxu0
    %v7092 = vadd.f32 0.0, %v7091
    %v7093 = vpop.f32.mrb[0].mxu0
    %v7094 = vpop.f32.mrb[0].mxu0
    %v7095 = vpop.f32.mrb[0].mxu0
    %7096 = vdwg.mxu0
    %v7098 = vsel %vm2132, %v5415, 0
    %v7101 = vsel %vm2132, %v6023, 0
    %7103 = vmatprep.subr.bf16.mxu0 0
    %7104 = vmatpush1.bf16.xpose.msra.mxu0 %v7101
    %7105 = vmatprep.subr.bf16.mxu0 0
    %7106 = vmatpush1.bf16.xpose.msra.mxu0 0
    %7107 = vmatprep.subr.bf16.mxu0 0
    %7108 = vmatpush1.bf16.xpose.msra.mxu0 0
    %7109 = vmatprep.subr.bf16.mxu0 0
    %7110 = vmatpush1.bf16.xpose.msra.mxu0 0
    %7111 = vmatprep.subr.bf16.mxu0 0
    %7112 = vmatpush1.bf16.xpose.msra.mxu0 0
    %7113 = vmatprep.subr.bf16.mxu0 0
    %7114 = vmatpush1.bf16.xpose.msra.mxu0 0
    %7115 = vmatprep.subr.bf16.mxu0 0
    %7116 = vmatpush1.bf16.xpose.msra.mxu0 0
    %7117 = vmatprep.subr.bf16.mxu0 0
    %7118 = vmatpush1.bf16.xpose.msra.mxu0 0
    %7119 = vmatprep.subr.bf16.mxu0 0
    %7120 = vmatpush1.bf16.xpose.msra.mxu0 0
    %7121 = vmatprep.subr.bf16.mxu0 0
    %7122 = vmatpush1.bf16.xpose.msra.mxu0 0
    %7123 = vmatprep.subr.bf16.mxu0 0
    %7124 = vmatpush1.bf16.xpose.msra.mxu0 0
    %7125 = vmatprep.subr.bf16.mxu0 0
    %7126 = vmatpush1.bf16.xpose.msra.mxu0 0
    %7127 = vmatprep.subr.bf16.mxu0 0
    %7128 = vmatpush1.bf16.xpose.msra.mxu0 0
    %7129 = vmatprep.subr.bf16.mxu0 0
    %7130 = vmatpush1.bf16.xpose.msra.mxu0 0
    %7131 = vmatprep.subr.bf16.mxu0 0
    %7132 = vmatpush1.bf16.xpose.msra.mxu0 0
    %7133 = vmatprep.subr.bf16.mxu0 0
    %7134 = vmatpush1.bf16.xpose.msra.mxu0 0
    %7135 = vmatprep.mubr.bf16.mxu0 0
    %7136 = vmatmul.mubr.bf16.gmra.mrb[0].mxu0 %v7098
    %v7137 = vpop.f32.mrb[0].mxu0
    %v7138 = vadd.f32 0.0, %v7137
    %v7139 = vpop.f32.mrb[0].mxu0
    %v7140 = vpop.f32.mrb[0].mxu0
    %v7141 = vpop.f32.mrb[0].mxu0
    %7142 = vdwg.mxu0
    %v7144 = vsel %vm2132, %v5416, 0
    %v7147 = vsel %vm2132, %v6024, 0
    %7149 = vmatprep.subr.bf16.mxu0 0
    %7150 = vmatpush1.bf16.xpose.msra.mxu0 %v7147
    %7151 = vmatprep.subr.bf16.mxu0 0
    %7152 = vmatpush1.bf16.xpose.msra.mxu0 0
    %7153 = vmatprep.subr.bf16.mxu0 0
    %7154 = vmatpush1.bf16.xpose.msra.mxu0 0
    %7155 = vmatprep.subr.bf16.mxu0 0
    %7156 = vmatpush1.bf16.xpose.msra.mxu0 0
    %7157 = vmatprep.subr.bf16.mxu0 0
    %7158 = vmatpush1.bf16.xpose.msra.mxu0 0
    %7159 = vmatprep.subr.bf16.mxu0 0
    %7160 = vmatpush1.bf16.xpose.msra.mxu0 0
    %7161 = vmatprep.subr.bf16.mxu0 0
    %7162 = vmatpush1.bf16.xpose.msra.mxu0 0
    %7163 = vmatprep.subr.bf16.mxu0 0
    %7164 = vmatpush1.bf16.xpose.msra.mxu0 0
    %7165 = vmatprep.subr.bf16.mxu0 0
    %7166 = vmatpush1.bf16.xpose.msra.mxu0 0
    %7167 = vmatprep.subr.bf16.mxu0 0
    %7168 = vmatpush1.bf16.xpose.msra.mxu0 0
    %7169 = vmatprep.subr.bf16.mxu0 0
    %7170 = vmatpush1.bf16.xpose.msra.mxu0 0
    %7171 = vmatprep.subr.bf16.mxu0 0
    %7172 = vmatpush1.bf16.xpose.msra.mxu0 0
    %7173 = vmatprep.subr.bf16.mxu0 0
    %7174 = vmatpush1.bf16.xpose.msra.mxu0 0
    %7175 = vmatprep.subr.bf16.mxu0 0
    %7176 = vmatpush1.bf16.xpose.msra.mxu0 0
    %7177 = vmatprep.subr.bf16.mxu0 0
    %7178 = vmatpush1.bf16.xpose.msra.mxu0 0
    %7179 = vmatprep.subr.bf16.mxu0 0
    %7180 = vmatpush1.bf16.xpose.msra.mxu0 0
    %7181 = vmatprep.mubr.bf16.mxu0 0
    %7182 = vmatmul.mubr.bf16.gmra.mrb[0].mxu0 %v7144
    %v7183 = vpop.f32.mrb[0].mxu0
    %v7184 = vadd.f32 0.0, %v7183
    %v7185 = vpop.f32.mrb[0].mxu0
    %v7186 = vpop.f32.mrb[0].mxu0
    %v7187 = vpop.f32.mrb[0].mxu0
    %7188 = vdwg.mxu0
    %v7190 = vsel %vm2132, %v5417, 0
    %v7193 = vsel %vm2132, %v6025, 0
    %7195 = vmatprep.subr.bf16.mxu0 0
    %7196 = vmatpush1.bf16.xpose.msra.mxu0 %v7193
    %7197 = vmatprep.subr.bf16.mxu0 0
    %7198 = vmatpush1.bf16.xpose.msra.mxu0 0
    %7199 = vmatprep.subr.bf16.mxu0 0
    %7200 = vmatpush1.bf16.xpose.msra.mxu0 0
    %7201 = vmatprep.subr.bf16.mxu0 0
    %7202 = vmatpush1.bf16.xpose.msra.mxu0 0
    %7203 = vmatprep.subr.bf16.mxu0 0
    %7204 = vmatpush1.bf16.xpose.msra.mxu0 0
    %7205 = vmatprep.subr.bf16.mxu0 0
    %7206 = vmatpush1.bf16.xpose.msra.mxu0 0
    %7207 = vmatprep.subr.bf16.mxu0 0
    %7208 = vmatpush1.bf16.xpose.msra.mxu0 0
    %7209 = vmatprep.subr.bf16.mxu0 0
    %7210 = vmatpush1.bf16.xpose.msra.mxu0 0
    %7211 = vmatprep.subr.bf16.mxu0 0
    %7212 = vmatpush1.bf16.xpose.msra.mxu0 0
    %7213 = vmatprep.subr.bf16.mxu0 0
    %7214 = vmatpush1.bf16.xpose.msra.mxu0 0
    %7215 = vmatprep.subr.bf16.mxu0 0
    %7216 = vmatpush1.bf16.xpose.msra.mxu0 0
    %7217 = vmatprep.subr.bf16.mxu0 0
    %7218 = vmatpush1.bf16.xpose.msra.mxu0 0
    %7219 = vmatprep.subr.bf16.mxu0 0
    %7220 = vmatpush1.bf16.xpose.msra.mxu0 0
    %7221 = vmatprep.subr.bf16.mxu0 0
    %7222 = vmatpush1.bf16.xpose.msra.mxu0 0
    %7223 = vmatprep.subr.bf16.mxu0 0
    %7224 = vmatpush1.bf16.xpose.msra.mxu0 0
    %7225 = vmatprep.subr.bf16.mxu0 0
    %7226 = vmatpush1.bf16.xpose.msra.mxu0 0
    %7227 = vmatprep.mubr.bf16.mxu0 0
    %7228 = vmatmul.mubr.bf16.gmra.mrb[0].mxu0 %v7190
    %v7229 = vpop.f32.mrb[0].mxu0
    %v7230 = vadd.f32 0.0, %v7229
    %v7231 = vpop.f32.mrb[0].mxu0
    %v7232 = vpop.f32.mrb[0].mxu0
    %v7233 = vpop.f32.mrb[0].mxu0
    %7234 = vdwg.mxu0
    %v7236 = vsel %vm2132, %v5418, 0
    %v7239 = vsel %vm2132, %v6026, 0
    %7241 = vmatprep.subr.bf16.mxu0 0
    %7242 = vmatpush1.bf16.xpose.msra.mxu0 %v7239
    %7243 = vmatprep.subr.bf16.mxu0 0
    %7244 = vmatpush1.bf16.xpose.msra.mxu0 0
    %7245 = vmatprep.subr.bf16.mxu0 0
    %7246 = vmatpush1.bf16.xpose.msra.mxu0 0
    %7247 = vmatprep.subr.bf16.mxu0 0
    %7248 = vmatpush1.bf16.xpose.msra.mxu0 0
    %7249 = vmatprep.subr.bf16.mxu0 0
    %7250 = vmatpush1.bf16.xpose.msra.mxu0 0
    %7251 = vmatprep.subr.bf16.mxu0 0
    %7252 = vmatpush1.bf16.xpose.msra.mxu0 0
    %7253 = vmatprep.subr.bf16.mxu0 0
    %7254 = vmatpush1.bf16.xpose.msra.mxu0 0
    %7255 = vmatprep.subr.bf16.mxu0 0
    %7256 = vmatpush1.bf16.xpose.msra.mxu0 0
    %7257 = vmatprep.subr.bf16.mxu0 0
    %7258 = vmatpush1.bf16.xpose.msra.mxu0 0
    %7259 = vmatprep.subr.bf16.mxu0 0
    %7260 = vmatpush1.bf16.xpose.msra.mxu0 0
    %7261 = vmatprep.subr.bf16.mxu0 0
    %7262 = vmatpush1.bf16.xpose.msra.mxu0 0
    %7263 = vmatprep.subr.bf16.mxu0 0
    %7264 = vmatpush1.bf16.xpose.msra.mxu0 0
    %7265 = vmatprep.subr.bf16.mxu0 0
    %7266 = vmatpush1.bf16.xpose.msra.mxu0 0
    %7267 = vmatprep.subr.bf16.mxu0 0
    %7268 = vmatpush1.bf16.xpose.msra.mxu0 0
    %7269 = vmatprep.subr.bf16.mxu0 0
    %7270 = vmatpush1.bf16.xpose.msra.mxu0 0
    %7271 = vmatprep.subr.bf16.mxu0 0
    %7272 = vmatpush1.bf16.xpose.msra.mxu0 0
    %7273 = vmatprep.mubr.bf16.mxu0 0
    %7274 = vmatmul.mubr.bf16.gmra.mrb[0].mxu0 %v7236
    %v7275 = vpop.f32.mrb[0].mxu0
    %v7276 = vadd.f32 0.0, %v7275
    %v7277 = vpop.f32.mrb[0].mxu0
    %v7278 = vpop.f32.mrb[0].mxu0
    %v7279 = vpop.f32.mrb[0].mxu0
    %7280 = vdwg.mxu0
    %v7282 = vsel %vm2132, %v5419, 0
    %v7285 = vsel %vm2132, %v6027, 0
    %7287 = vmatprep.subr.bf16.mxu0 0
    %7288 = vmatpush1.bf16.xpose.msra.mxu0 %v7285
    %7289 = vmatprep.subr.bf16.mxu0 0
    %7290 = vmatpush1.bf16.xpose.msra.mxu0 0
    %7291 = vmatprep.subr.bf16.mxu0 0
    %7292 = vmatpush1.bf16.xpose.msra.mxu0 0
    %7293 = vmatprep.subr.bf16.mxu0 0
    %7294 = vmatpush1.bf16.xpose.msra.mxu0 0
    %7295 = vmatprep.subr.bf16.mxu0 0
    %7296 = vmatpush1.bf16.xpose.msra.mxu0 0
    %7297 = vmatprep.subr.bf16.mxu0 0
    %7298 = vmatpush1.bf16.xpose.msra.mxu0 0
    %7299 = vmatprep.subr.bf16.mxu0 0
    %7300 = vmatpush1.bf16.xpose.msra.mxu0 0
    %7301 = vmatprep.subr.bf16.mxu0 0
    %7302 = vmatpush1.bf16.xpose.msra.mxu0 0
    %7303 = vmatprep.subr.bf16.mxu0 0
    %7304 = vmatpush1.bf16.xpose.msra.mxu0 0
    %7305 = vmatprep.subr.bf16.mxu0 0
    %7306 = vmatpush1.bf16.xpose.msra.mxu0 0
    %7307 = vmatprep.subr.bf16.mxu0 0
    %7308 = vmatpush1.bf16.xpose.msra.mxu0 0
    %7309 = vmatprep.subr.bf16.mxu0 0
    %7310 = vmatpush1.bf16.xpose.msra.mxu0 0
    %7311 = vmatprep.subr.bf16.mxu0 0
    %7312 = vmatpush1.bf16.xpose.msra.mxu0 0
    %7313 = vmatprep.subr.bf16.mxu0 0
    %7314 = vmatpush1.bf16.xpose.msra.mxu0 0
    %7315 = vmatprep.subr.bf16.mxu0 0
    %7316 = vmatpush1.bf16.xpose.msra.mxu0 0
    %7317 = vmatprep.subr.bf16.mxu0 0
    %7318 = vmatpush1.bf16.xpose.msra.mxu0 0
    %7319 = vmatprep.mubr.bf16.mxu0 0
    %7320 = vmatmul.mubr.bf16.gmra.mrb[0].mxu0 %v7282
    %v7321 = vpop.f32.mrb[0].mxu0
    %v7322 = vadd.f32 0.0, %v7321
    %v7323 = vpop.f32.mrb[0].mxu0
    %v7324 = vpop.f32.mrb[0].mxu0
    %v7325 = vpop.f32.mrb[0].mxu0
    %7326 = vdwg.mxu0
    %v7328 = vsel %vm2132, %v5420, 0
    %v7331 = vsel %vm2132, %v6028, 0
    %7333 = vmatprep.subr.bf16.mxu0 0
    %7334 = vmatpush1.bf16.xpose.msra.mxu0 %v7331
    %7335 = vmatprep.subr.bf16.mxu0 0
    %7336 = vmatpush1.bf16.xpose.msra.mxu0 0
    %7337 = vmatprep.subr.bf16.mxu0 0
    %7338 = vmatpush1.bf16.xpose.msra.mxu0 0
    %7339 = vmatprep.subr.bf16.mxu0 0
    %7340 = vmatpush1.bf16.xpose.msra.mxu0 0
    %7341 = vmatprep.subr.bf16.mxu0 0
    %7342 = vmatpush1.bf16.xpose.msra.mxu0 0
    %7343 = vmatprep.subr.bf16.mxu0 0
    %7344 = vmatpush1.bf16.xpose.msra.mxu0 0
    %7345 = vmatprep.subr.bf16.mxu0 0
    %7346 = vmatpush1.bf16.xpose.msra.mxu0 0
    %7347 = vmatprep.subr.bf16.mxu0 0
    %7348 = vmatpush1.bf16.xpose.msra.mxu0 0
    %7349 = vmatprep.subr.bf16.mxu0 0
    %7350 = vmatpush1.bf16.xpose.msra.mxu0 0
    %7351 = vmatprep.subr.bf16.mxu0 0
    %7352 = vmatpush1.bf16.xpose.msra.mxu0 0
    %7353 = vmatprep.subr.bf16.mxu0 0
    %7354 = vmatpush1.bf16.xpose.msra.mxu0 0
    %7355 = vmatprep.subr.bf16.mxu0 0
    %7356 = vmatpush1.bf16.xpose.msra.mxu0 0
    %7357 = vmatprep.subr.bf16.mxu0 0
    %7358 = vmatpush1.bf16.xpose.msra.mxu0 0
    %7359 = vmatprep.subr.bf16.mxu0 0
    %7360 = vmatpush1.bf16.xpose.msra.mxu0 0
    %7361 = vmatprep.subr.bf16.mxu0 0
    %7362 = vmatpush1.bf16.xpose.msra.mxu0 0
    %7363 = vmatprep.subr.bf16.mxu0 0
    %7364 = vmatpush1.bf16.xpose.msra.mxu0 0
    %7365 = vmatprep.mubr.bf16.mxu0 0
    %7366 = vmatmul.mubr.bf16.gmra.mrb[0].mxu0 %v7328
    %v7367 = vpop.f32.mrb[0].mxu0
    %v7368 = vadd.f32 0.0, %v7367
    %v7369 = vpop.f32.mrb[0].mxu0
    %v7370 = vpop.f32.mrb[0].mxu0
    %v7371 = vpop.f32.mrb[0].mxu0
    %7372 = vdwg.mxu0
    %v7373 = vmul.f32 %v6678, 0.35355338
    %v7374 = vmul.f32 %v6724, 0.35355338
    %v7375 = vmul.f32 %v6770, 0.35355338
    %v7376 = vmul.f32 %v6816, 0.35355338
    %v7377 = vmul.f32 %v6862, 0.35355338
    %v7378 = vmul.f32 %v6908, 0.35355338
    %v7379 = vmul.f32 %v6954, 0.35355338
    %v7380 = vmul.f32 %v7000, 0.35355338
    %v7381 = vmul.f32 %v7046, 0.35355338
    %v7382 = vmul.f32 %v7092, 0.35355338
    %v7383 = vmul.f32 %v7138, 0.35355338
    %v7384 = vmul.f32 %v7184, 0.35355338
    %v7385 = vmul.f32 %v7230, 0.35355338
    %v7386 = vmul.f32 %v7276, 0.35355338
    %v7387 = vmul.f32 %v7322, 0.35355338
    %v7388 = vmul.f32 %v7368, 0.35355338
    %v7389 = vadd.f32 %v7373, %v211
    %v7390 = vadd.f32 %v7374, %v211
    %v7391 = vadd.f32 %v7375, %v211
    %v7392 = vadd.f32 %v7376, %v211
    %v7393 = vadd.f32 %v7377, %v215
    %v7394 = vadd.f32 %v7378, %v215
    %v7395 = vadd.f32 %v7379, %v215
    %v7396 = vadd.f32 %v7380, %v215
    %v7397 = vadd.f32 %v7381, %v219
    %v7398 = vadd.f32 %v7382, %v219
    %v7399 = vadd.f32 %v7383, %v219
    %v7400 = vadd.f32 %v7384, %v219
    %v7401 = vadd.f32 %v7385, %v223
    %v7402 = vadd.f32 %v7386, %v223
    %v7403 = vadd.f32 %v7387, %v223
    %v7404 = vadd.f32 %v7388, %v223
    %v7405 = vsel %vm2132, %v7389, -inf
    %7406 = vmax.xlane.f32.xlu0 %v7405
    %v7407 = vpop.xlane.xlu0 %7406
    %v7408 = vsel %vm2132, %v7390, -inf
    %7409 = vmax.xlane.f32.xlu0 %v7408
    %v7410 = vpop.xlane.xlu0 %7409
    %v7411 = vsel %vm2132, %v7391, -inf
    %7412 = vmax.xlane.f32.xlu0 %v7411
    %v7413 = vpop.xlane.xlu0 %7412
    %v7414 = vsel %vm2132, %v7392, -inf
    %7415 = vmax.xlane.f32.xlu0 %v7414
    %v7416 = vpop.xlane.xlu0 %7415
    %v7417 = vsel %vm2132, %v7393, -inf
    %7418 = vmax.xlane.f32.xlu0 %v7417
    %v7419 = vpop.xlane.xlu0 %7418
    %v7420 = vsel %vm2132, %v7394, -inf
    %7421 = vmax.xlane.f32.xlu0 %v7420
    %v7422 = vpop.xlane.xlu0 %7421
    %v7423 = vsel %vm2132, %v7395, -inf
    %7424 = vmax.xlane.f32.xlu0 %v7423
    %v7425 = vpop.xlane.xlu0 %7424
    %v7426 = vsel %vm2132, %v7396, -inf
    %7427 = vmax.xlane.f32.xlu0 %v7426
    %v7428 = vpop.xlane.xlu0 %7427
    %v7429 = vsel %vm2132, %v7397, -inf
    %7430 = vmax.xlane.f32.xlu0 %v7429
    %v7431 = vpop.xlane.xlu0 %7430
    %v7432 = vsel %vm2132, %v7398, -inf
    %7433 = vmax.xlane.f32.xlu0 %v7432
    %v7434 = vpop.xlane.xlu0 %7433
    %v7435 = vsel %vm2132, %v7399, -inf
    %7436 = vmax.xlane.f32.xlu0 %v7435
    %v7437 = vpop.xlane.xlu0 %7436
    %v7438 = vsel %vm2132, %v7400, -inf
    %7439 = vmax.xlane.f32.xlu0 %v7438
    %v7440 = vpop.xlane.xlu0 %7439
    %v7441 = vsel %vm2132, %v7401, -inf
    %7442 = vmax.xlane.f32.xlu0 %v7441
    %v7443 = vpop.xlane.xlu0 %7442
    %v7444 = vsel %vm2132, %v7402, -inf
    %7445 = vmax.xlane.f32.xlu0 %v7444
    %v7446 = vpop.xlane.xlu0 %7445
    %v7447 = vsel %vm2132, %v7403, -inf
    %7448 = vmax.xlane.f32.xlu0 %v7447
    %v7449 = vpop.xlane.xlu0 %7448
    %v7450 = vsel %vm2132, %v7404, -inf
    %7451 = vmax.xlane.f32.xlu0 %v7450
    %v7452 = vpop.xlane.xlu0 %7451
    %v7453 = vsub.f32 %v7389, %v7407
    %v7454 = vsub.f32 %v7390, %v7410
    %v7455 = vsub.f32 %v7391, %v7413
    %v7456 = vsub.f32 %v7392, %v7416
    %v7457 = vsub.f32 %v7393, %v7419
    %v7458 = vsub.f32 %v7394, %v7422
    %v7459 = vsub.f32 %v7395, %v7425
    %v7460 = vsub.f32 %v7396, %v7428
    %v7461 = vsub.f32 %v7397, %v7431
    %v7462 = vsub.f32 %v7398, %v7434
    %v7463 = vsub.f32 %v7399, %v7437
    %v7464 = vsub.f32 %v7400, %v7440
    %v7465 = vsub.f32 %v7401, %v7443
    %v7466 = vsub.f32 %v7402, %v7446
    %v7467 = vsub.f32 %v7403, %v7449
    %v7468 = vsub.f32 %v7404, %v7452
    %v7469 = vmul.f32 %v7453, 1.442695
    %v7470 = vpow.pop %v7469
    %v7471 = vmul.f32 %v7454, 1.442695
    %v7472 = vpow.pop %v7471
    %v7473 = vmul.f32 %v7455, 1.442695
    %v7474 = vpow.pop %v7473
    %v7475 = vmul.f32 %v7456, 1.442695
    %v7476 = vpow.pop %v7475
    %v7477 = vmul.f32 %v7457, 1.442695
    %v7478 = vpow.pop %v7477
    %v7479 = vmul.f32 %v7458, 1.442695
    %v7480 = vpow.pop %v7479
    %v7481 = vmul.f32 %v7459, 1.442695
    %v7482 = vpow.pop %v7481
    %v7483 = vmul.f32 %v7460, 1.442695
    %v7484 = vpow.pop %v7483
    %v7485 = vmul.f32 %v7461, 1.442695
    %v7486 = vpow.pop %v7485
    %v7487 = vmul.f32 %v7462, 1.442695
    %v7488 = vpow.pop %v7487
    %v7489 = vmul.f32 %v7463, 1.442695
    %v7490 = vpow.pop %v7489
    %v7491 = vmul.f32 %v7464, 1.442695
    %v7492 = vpow.pop %v7491
    %v7493 = vmul.f32 %v7465, 1.442695
    %v7494 = vpow.pop %v7493
    %v7495 = vmul.f32 %v7466, 1.442695
    %v7496 = vpow.pop %v7495
    %v7497 = vmul.f32 %v7467, 1.442695
    %v7498 = vpow.pop %v7497
    %v7499 = vmul.f32 %v7468, 1.442695
    %v7500 = vpow.pop %v7499
    %v7501 = vsel %vm2132, %v7470, 0.0
    %7502 = vadd.xlane.f32.xlu0 %v7501
    %v7503 = vpop.xlane.xlu0 %7502
    %v7504 = vsel %vm2132, %v7472, 0.0
    %7505 = vadd.xlane.f32.xlu0 %v7504
    %v7506 = vpop.xlane.xlu0 %7505
    %v7507 = vsel %vm2132, %v7474, 0.0
    %7508 = vadd.xlane.f32.xlu0 %v7507
    %v7509 = vpop.xlane.xlu0 %7508
    %v7510 = vsel %vm2132, %v7476, 0.0
    %7511 = vadd.xlane.f32.xlu0 %v7510
    %v7512 = vpop.xlane.xlu0 %7511
    %v7513 = vsel %vm2132, %v7478, 0.0
    %7514 = vadd.xlane.f32.xlu0 %v7513
    %v7515 = vpop.xlane.xlu0 %7514
    %v7516 = vsel %vm2132, %v7480, 0.0
    %7517 = vadd.xlane.f32.xlu0 %v7516
    %v7518 = vpop.xlane.xlu0 %7517
    %v7519 = vsel %vm2132, %v7482, 0.0
    %7520 = vadd.xlane.f32.xlu0 %v7519
    %v7521 = vpop.xlane.xlu0 %7520
    %v7522 = vsel %vm2132, %v7484, 0.0
    %7523 = vadd.xlane.f32.xlu0 %v7522
    %v7524 = vpop.xlane.xlu0 %7523
    %v7525 = vsel %vm2132, %v7486, 0.0
    %7526 = vadd.xlane.f32.xlu0 %v7525
    %v7527 = vpop.xlane.xlu0 %7526
    %v7528 = vsel %vm2132, %v7488, 0.0
    %7529 = vadd.xlane.f32.xlu0 %v7528
    %v7530 = vpop.xlane.xlu0 %7529
    %v7531 = vsel %vm2132, %v7490, 0.0
    %7532 = vadd.xlane.f32.xlu0 %v7531
    %v7533 = vpop.xlane.xlu0 %7532
    %v7534 = vsel %vm2132, %v7492, 0.0
    %7535 = vadd.xlane.f32.xlu0 %v7534
    %v7536 = vpop.xlane.xlu0 %7535
    %v7537 = vsel %vm2132, %v7494, 0.0
    %7538 = vadd.xlane.f32.xlu0 %v7537
    %v7539 = vpop.xlane.xlu0 %7538
    %v7540 = vsel %vm2132, %v7496, 0.0
    %7541 = vadd.xlane.f32.xlu0 %v7540
    %v7542 = vpop.xlane.xlu0 %7541
    %v7543 = vsel %vm2132, %v7498, 0.0
    %7544 = vadd.xlane.f32.xlu0 %v7543
    %v7545 = vpop.xlane.xlu0 %7544
    %v7546 = vsel %vm2132, %v7500, 0.0
    %7547 = vadd.xlane.f32.xlu0 %v7546
    %v7548 = vpop.xlane.xlu0 %7547
    %v7549 = vrcp.pop %v7503
    %v7550 = vrcp.pop %v7506
    %v7551 = vrcp.pop %v7509
    %v7552 = vrcp.pop %v7512
    %v7553 = vrcp.pop %v7515
    %v7554 = vrcp.pop %v7518
    %v7555 = vrcp.pop %v7521
    %v7556 = vrcp.pop %v7524
    %v7557 = vrcp.pop %v7527
    %v7558 = vrcp.pop %v7530
    %v7559 = vrcp.pop %v7533
    %v7560 = vrcp.pop %v7536
    %v7561 = vrcp.pop %v7539
    %v7562 = vrcp.pop %v7542
    %v7563 = vrcp.pop %v7545
    %v7564 = vrcp.pop %v7548
    %v7565 = vmul.f32 %v7470, %v7549
    %v7566 = vmul.f32 %v7472, %v7550
    %v7567 = vmul.f32 %v7474, %v7551
    %v7568 = vmul.f32 %v7476, %v7552
    %v7569 = vmul.f32 %v7478, %v7553
    %v7570 = vmul.f32 %v7480, %v7554
    %v7571 = vmul.f32 %v7482, %v7555
    %v7572 = vmul.f32 %v7484, %v7556
    %v7573 = vmul.f32 %v7486, %v7557
    %v7574 = vmul.f32 %v7488, %v7558
    %v7575 = vmul.f32 %v7490, %v7559
    %v7576 = vmul.f32 %v7492, %v7560
    %v7577 = vmul.f32 %v7494, %v7561
    %v7578 = vmul.f32 %v7496, %v7562
    %v7579 = vmul.f32 %v7498, %v7563
    %v7580 = vmul.f32 %v7500, %v7564
    %v7581 = vpack.c.bf16 %v7565, %v7565
    %v7582 = vpack.c.bf16 %v7566, %v7566
    %v7583 = vpack.c.bf16 %v7567, %v7567
    %v7584 = vpack.c.bf16 %v7568, %v7568
    %v7585 = vpack.c.bf16 %v7569, %v7569
    %v7586 = vpack.c.bf16 %v7570, %v7570
    %v7587 = vpack.c.bf16 %v7571, %v7571
    %v7588 = vpack.c.bf16 %v7572, %v7572
    %v7589 = vpack.c.bf16 %v7573, %v7573
    %v7590 = vpack.c.bf16 %v7574, %v7574
    %v7591 = vpack.c.bf16 %v7575, %v7575
    %v7592 = vpack.c.bf16 %v7576, %v7576
    %v7593 = vpack.c.bf16 %v7577, %v7577
    %v7594 = vpack.c.bf16 %v7578, %v7578
    %v7595 = vpack.c.bf16 %v7579, %v7579
    %v7596 = vpack.c.bf16 %v7580, %v7580
    %v7598 = vsel %vm2132, %v7581, 0
    %v7601 = vsel %vm3096, %v6621, 0
    %7603 = vmatprep.subr.bf16.mxu0 0
    %7604 = vmatpush1.bf16.msra.mxu0 %v7601
    %7605 = vmatprep.subr.bf16.mxu0 0
    %7606 = vmatpush1.bf16.msra.mxu0 0
    %7607 = vmatprep.subr.bf16.mxu0 0
    %7608 = vmatpush1.bf16.msra.mxu0 0
    %7609 = vmatprep.subr.bf16.mxu0 0
    %7610 = vmatpush1.bf16.msra.mxu0 0
    %7611 = vmatprep.subr.bf16.mxu0 0
    %7612 = vmatpush1.bf16.msra.mxu0 0
    %7613 = vmatprep.subr.bf16.mxu0 0
    %7614 = vmatpush1.bf16.msra.mxu0 0
    %7615 = vmatprep.subr.bf16.mxu0 0
    %7616 = vmatpush1.bf16.msra.mxu0 0
    %7617 = vmatprep.subr.bf16.mxu0 0
    %7618 = vmatpush1.bf16.msra.mxu0 0
    %7619 = vmatprep.subr.bf16.mxu0 0
    %7620 = vmatpush1.bf16.msra.mxu0 0
    %7621 = vmatprep.subr.bf16.mxu0 0
    %7622 = vmatpush1.bf16.msra.mxu0 0
    %7623 = vmatprep.subr.bf16.mxu0 0
    %7624 = vmatpush1.bf16.msra.mxu0 0
    %7625 = vmatprep.subr.bf16.mxu0 0
    %7626 = vmatpush1.bf16.msra.mxu0 0
    %7627 = vmatprep.subr.bf16.mxu0 0
    %7628 = vmatpush1.bf16.msra.mxu0 0
    %7629 = vmatprep.subr.bf16.mxu0 0
    %7630 = vmatpush1.bf16.msra.mxu0 0
    %7631 = vmatprep.subr.bf16.mxu0 0
    %7632 = vmatpush1.bf16.msra.mxu0 0
    %7633 = vmatprep.subr.bf16.mxu0 0
    %7634 = vmatpush1.bf16.msra.mxu0 0
    %7635 = vmatprep.mubr.bf16.mxu0 0
    %7636 = vmatmul.mubr.bf16.gmra.mrb[0].mxu0 %v7598
    %v7637 = vpop.f32.mrb[0].mxu0
    %v7638 = vadd.f32 0.0, %v7637
    %v7639 = vpop.f32.mrb[0].mxu0
    %v7640 = vpop.f32.mrb[0].mxu0
    %v7641 = vpop.f32.mrb[0].mxu0
    %7642 = vdwg.mxu0
    %v7644 = vsel %vm2132, %v7582, 0
    %v7647 = vsel %vm3096, %v6622, 0
    %7649 = vmatprep.subr.bf16.mxu0 0
    %7650 = vmatpush1.bf16.msra.mxu0 %v7647
    %7651 = vmatprep.subr.bf16.mxu0 0
    %7652 = vmatpush1.bf16.msra.mxu0 0
    %7653 = vmatprep.subr.bf16.mxu0 0
    %7654 = vmatpush1.bf16.msra.mxu0 0
    %7655 = vmatprep.subr.bf16.mxu0 0
    %7656 = vmatpush1.bf16.msra.mxu0 0
    %7657 = vmatprep.subr.bf16.mxu0 0
    %7658 = vmatpush1.bf16.msra.mxu0 0
    %7659 = vmatprep.subr.bf16.mxu0 0
    %7660 = vmatpush1.bf16.msra.mxu0 0
    %7661 = vmatprep.subr.bf16.mxu0 0
    %7662 = vmatpush1.bf16.msra.mxu0 0
    %7663 = vmatprep.subr.bf16.mxu0 0
    %7664 = vmatpush1.bf16.msra.mxu0 0
    %7665 = vmatprep.subr.bf16.mxu0 0
    %7666 = vmatpush1.bf16.msra.mxu0 0
    %7667 = vmatprep.subr.bf16.mxu0 0
    %7668 = vmatpush1.bf16.msra.mxu0 0
    %7669 = vmatprep.subr.bf16.mxu0 0
    %7670 = vmatpush1.bf16.msra.mxu0 0
    %7671 = vmatprep.subr.bf16.mxu0 0
    %7672 = vmatpush1.bf16.msra.mxu0 0
    %7673 = vmatprep.subr.bf16.mxu0 0
    %7674 = vmatpush1.bf16.msra.mxu0 0
    %7675 = vmatprep.subr.bf16.mxu0 0
    %7676 = vmatpush1.bf16.msra.mxu0 0
    %7677 = vmatprep.subr.bf16.mxu0 0
    %7678 = vmatpush1.bf16.msra.mxu0 0
    %7679 = vmatprep.subr.bf16.mxu0 0
    %7680 = vmatpush1.bf16.msra.mxu0 0
    %7681 = vmatprep.mubr.bf16.mxu0 0
    %7682 = vmatmul.mubr.bf16.gmra.mrb[0].mxu0 %v7644
    %v7683 = vpop.f32.mrb[0].mxu0
    %v7684 = vadd.f32 0.0, %v7683
    %v7685 = vpop.f32.mrb[0].mxu0
    %v7686 = vpop.f32.mrb[0].mxu0
    %v7687 = vpop.f32.mrb[0].mxu0
    %7688 = vdwg.mxu0
    %v7690 = vsel %vm2132, %v7583, 0
    %v7693 = vsel %vm3096, %v6623, 0
    %7695 = vmatprep.subr.bf16.mxu0 0
    %7696 = vmatpush1.bf16.msra.mxu0 %v7693
    %7697 = vmatprep.subr.bf16.mxu0 0
    %7698 = vmatpush1.bf16.msra.mxu0 0
    %7699 = vmatprep.subr.bf16.mxu0 0
    %7700 = vmatpush1.bf16.msra.mxu0 0
    %7701 = vmatprep.subr.bf16.mxu0 0
    %7702 = vmatpush1.bf16.msra.mxu0 0
    %7703 = vmatprep.subr.bf16.mxu0 0
    %7704 = vmatpush1.bf16.msra.mxu0 0
    %7705 = vmatprep.subr.bf16.mxu0 0
    %7706 = vmatpush1.bf16.msra.mxu0 0
    %7707 = vmatprep.subr.bf16.mxu0 0
    %7708 = vmatpush1.bf16.msra.mxu0 0
    %7709 = vmatprep.subr.bf16.mxu0 0
    %7710 = vmatpush1.bf16.msra.mxu0 0
    %7711 = vmatprep.subr.bf16.mxu0 0
    %7712 = vmatpush1.bf16.msra.mxu0 0
    %7713 = vmatprep.subr.bf16.mxu0 0
    %7714 = vmatpush1.bf16.msra.mxu0 0
    %7715 = vmatprep.subr.bf16.mxu0 0
    %7716 = vmatpush1.bf16.msra.mxu0 0
    %7717 = vmatprep.subr.bf16.mxu0 0
    %7718 = vmatpush1.bf16.msra.mxu0 0
    %7719 = vmatprep.subr.bf16.mxu0 0
    %7720 = vmatpush1.bf16.msra.mxu0 0
    %7721 = vmatprep.subr.bf16.mxu0 0
    %7722 = vmatpush1.bf16.msra.mxu0 0
    %7723 = vmatprep.subr.bf16.mxu0 0
    %7724 = vmatpush1.bf16.msra.mxu0 0
    %7725 = vmatprep.subr.bf16.mxu0 0
    %7726 = vmatpush1.bf16.msra.mxu0 0
    %7727 = vmatprep.mubr.bf16.mxu0 0
    %7728 = vmatmul.mubr.bf16.gmra.mrb[0].mxu0 %v7690
    %v7729 = vpop.f32.mrb[0].mxu0
    %v7730 = vadd.f32 0.0, %v7729
    %v7731 = vpop.f32.mrb[0].mxu0
    %v7732 = vpop.f32.mrb[0].mxu0
    %v7733 = vpop.f32.mrb[0].mxu0
    %7734 = vdwg.mxu0
    %v7736 = vsel %vm2132, %v7584, 0
    %v7739 = vsel %vm3096, %v6624, 0
    %7741 = vmatprep.subr.bf16.mxu0 0
    %7742 = vmatpush1.bf16.msra.mxu0 %v7739
    %7743 = vmatprep.subr.bf16.mxu0 0
    %7744 = vmatpush1.bf16.msra.mxu0 0
    %7745 = vmatprep.subr.bf16.mxu0 0
    %7746 = vmatpush1.bf16.msra.mxu0 0
    %7747 = vmatprep.subr.bf16.mxu0 0
    %7748 = vmatpush1.bf16.msra.mxu0 0
    %7749 = vmatprep.subr.bf16.mxu0 0
    %7750 = vmatpush1.bf16.msra.mxu0 0
    %7751 = vmatprep.subr.bf16.mxu0 0
    %7752 = vmatpush1.bf16.msra.mxu0 0
    %7753 = vmatprep.subr.bf16.mxu0 0
    %7754 = vmatpush1.bf16.msra.mxu0 0
    %7755 = vmatprep.subr.bf16.mxu0 0
    %7756 = vmatpush1.bf16.msra.mxu0 0
    %7757 = vmatprep.subr.bf16.mxu0 0
    %7758 = vmatpush1.bf16.msra.mxu0 0
    %7759 = vmatprep.subr.bf16.mxu0 0
    %7760 = vmatpush1.bf16.msra.mxu0 0
    %7761 = vmatprep.subr.bf16.mxu0 0
    %7762 = vmatpush1.bf16.msra.mxu0 0
    %7763 = vmatprep.subr.bf16.mxu0 0
    %7764 = vmatpush1.bf16.msra.mxu0 0
    %7765 = vmatprep.subr.bf16.mxu0 0
    %7766 = vmatpush1.bf16.msra.mxu0 0
    %7767 = vmatprep.subr.bf16.mxu0 0
    %7768 = vmatpush1.bf16.msra.mxu0 0
    %7769 = vmatprep.subr.bf16.mxu0 0
    %7770 = vmatpush1.bf16.msra.mxu0 0
    %7771 = vmatprep.subr.bf16.mxu0 0
    %7772 = vmatpush1.bf16.msra.mxu0 0
    %7773 = vmatprep.mubr.bf16.mxu0 0
    %7774 = vmatmul.mubr.bf16.gmra.mrb[0].mxu0 %v7736
    %v7775 = vpop.f32.mrb[0].mxu0
    %v7776 = vadd.f32 0.0, %v7775
    %v7777 = vpop.f32.mrb[0].mxu0
    %v7778 = vpop.f32.mrb[0].mxu0
    %v7779 = vpop.f32.mrb[0].mxu0
    %7780 = vdwg.mxu0
    %v7782 = vsel %vm2132, %v7585, 0
    %v7785 = vsel %vm3096, %v6625, 0
    %7787 = vmatprep.subr.bf16.mxu0 0
    %7788 = vmatpush1.bf16.msra.mxu0 %v7785
    %7789 = vmatprep.subr.bf16.mxu0 0
    %7790 = vmatpush1.bf16.msra.mxu0 0
    %7791 = vmatprep.subr.bf16.mxu0 0
    %7792 = vmatpush1.bf16.msra.mxu0 0
    %7793 = vmatprep.subr.bf16.mxu0 0
    %7794 = vmatpush1.bf16.msra.mxu0 0
    %7795 = vmatprep.subr.bf16.mxu0 0
    %7796 = vmatpush1.bf16.msra.mxu0 0
    %7797 = vmatprep.subr.bf16.mxu0 0
    %7798 = vmatpush1.bf16.msra.mxu0 0
    %7799 = vmatprep.subr.bf16.mxu0 0
    %7800 = vmatpush1.bf16.msra.mxu0 0
    %7801 = vmatprep.subr.bf16.mxu0 0
    %7802 = vmatpush1.bf16.msra.mxu0 0
    %7803 = vmatprep.subr.bf16.mxu0 0
    %7804 = vmatpush1.bf16.msra.mxu0 0
    %7805 = vmatprep.subr.bf16.mxu0 0
    %7806 = vmatpush1.bf16.msra.mxu0 0
    %7807 = vmatprep.subr.bf16.mxu0 0
    %7808 = vmatpush1.bf16.msra.mxu0 0
    %7809 = vmatprep.subr.bf16.mxu0 0
    %7810 = vmatpush1.bf16.msra.mxu0 0
    %7811 = vmatprep.subr.bf16.mxu0 0
    %7812 = vmatpush1.bf16.msra.mxu0 0
    %7813 = vmatprep.subr.bf16.mxu0 0
    %7814 = vmatpush1.bf16.msra.mxu0 0
    %7815 = vmatprep.subr.bf16.mxu0 0
    %7816 = vmatpush1.bf16.msra.mxu0 0
    %7817 = vmatprep.subr.bf16.mxu0 0
    %7818 = vmatpush1.bf16.msra.mxu0 0
    %7819 = vmatprep.mubr.bf16.mxu0 0
    %7820 = vmatmul.mubr.bf16.gmra.mrb[0].mxu0 %v7782
    %v7821 = vpop.f32.mrb[0].mxu0
    %v7822 = vadd.f32 0.0, %v7821
    %v7823 = vpop.f32.mrb[0].mxu0
    %v7824 = vpop.f32.mrb[0].mxu0
    %v7825 = vpop.f32.mrb[0].mxu0
    %7826 = vdwg.mxu0
    %v7828 = vsel %vm2132, %v7586, 0
    %v7831 = vsel %vm3096, %v6626, 0
    %7833 = vmatprep.subr.bf16.mxu0 0
    %7834 = vmatpush1.bf16.msra.mxu0 %v7831
    %7835 = vmatprep.subr.bf16.mxu0 0
    %7836 = vmatpush1.bf16.msra.mxu0 0
    %7837 = vmatprep.subr.bf16.mxu0 0
    %7838 = vmatpush1.bf16.msra.mxu0 0
    %7839 = vmatprep.subr.bf16.mxu0 0
    %7840 = vmatpush1.bf16.msra.mxu0 0
    %7841 = vmatprep.subr.bf16.mxu0 0
    %7842 = vmatpush1.bf16.msra.mxu0 0
    %7843 = vmatprep.subr.bf16.mxu0 0
    %7844 = vmatpush1.bf16.msra.mxu0 0
    %7845 = vmatprep.subr.bf16.mxu0 0
    %7846 = vmatpush1.bf16.msra.mxu0 0
    %7847 = vmatprep.subr.bf16.mxu0 0
    %7848 = vmatpush1.bf16.msra.mxu0 0
    %7849 = vmatprep.subr.bf16.mxu0 0
    %7850 = vmatpush1.bf16.msra.mxu0 0
    %7851 = vmatprep.subr.bf16.mxu0 0
    %7852 = vmatpush1.bf16.msra.mxu0 0
    %7853 = vmatprep.subr.bf16.mxu0 0
    %7854 = vmatpush1.bf16.msra.mxu0 0
    %7855 = vmatprep.subr.bf16.mxu0 0
    %7856 = vmatpush1.bf16.msra.mxu0 0
    %7857 = vmatprep.subr.bf16.mxu0 0
    %7858 = vmatpush1.bf16.msra.mxu0 0
    %7859 = vmatprep.subr.bf16.mxu0 0
    %7860 = vmatpush1.bf16.msra.mxu0 0
    %7861 = vmatprep.subr.bf16.mxu0 0
    %7862 = vmatpush1.bf16.msra.mxu0 0
    %7863 = vmatprep.subr.bf16.mxu0 0
    %7864 = vmatpush1.bf16.msra.mxu0 0
    %7865 = vmatprep.mubr.bf16.mxu0 0
    %7866 = vmatmul.mubr.bf16.gmra.mrb[0].mxu0 %v7828
    %v7867 = vpop.f32.mrb[0].mxu0
    %v7868 = vadd.f32 0.0, %v7867
    %v7869 = vpop.f32.mrb[0].mxu0
    %v7870 = vpop.f32.mrb[0].mxu0
    %v7871 = vpop.f32.mrb[0].mxu0
    %7872 = vdwg.mxu0
    %v7874 = vsel %vm2132, %v7587, 0
    %v7877 = vsel %vm3096, %v6627, 0
    %7879 = vmatprep.subr.bf16.mxu0 0
    %7880 = vmatpush1.bf16.msra.mxu0 %v7877
    %7881 = vmatprep.subr.bf16.mxu0 0
    %7882 = vmatpush1.bf16.msra.mxu0 0
    %7883 = vmatprep.subr.bf16.mxu0 0
    %7884 = vmatpush1.bf16.msra.mxu0 0
    %7885 = vmatprep.subr.bf16.mxu0 0
    %7886 = vmatpush1.bf16.msra.mxu0 0
    %7887 = vmatprep.subr.bf16.mxu0 0
    %7888 = vmatpush1.bf16.msra.mxu0 0
    %7889 = vmatprep.subr.bf16.mxu0 0
    %7890 = vmatpush1.bf16.msra.mxu0 0
    %7891 = vmatprep.subr.bf16.mxu0 0
    %7892 = vmatpush1.bf16.msra.mxu0 0
    %7893 = vmatprep.subr.bf16.mxu0 0
    %7894 = vmatpush1.bf16.msra.mxu0 0
    %7895 = vmatprep.subr.bf16.mxu0 0
    %7896 = vmatpush1.bf16.msra.mxu0 0
    %7897 = vmatprep.subr.bf16.mxu0 0
    %7898 = vmatpush1.bf16.msra.mxu0 0
    %7899 = vmatprep.subr.bf16.mxu0 0
    %7900 = vmatpush1.bf16.msra.mxu0 0
    %7901 = vmatprep.subr.bf16.mxu0 0
    %7902 = vmatpush1.bf16.msra.mxu0 0
    %7903 = vmatprep.subr.bf16.mxu0 0
    %7904 = vmatpush1.bf16.msra.mxu0 0
    %7905 = vmatprep.subr.bf16.mxu0 0
    %7906 = vmatpush1.bf16.msra.mxu0 0
    %7907 = vmatprep.subr.bf16.mxu0 0
    %7908 = vmatpush1.bf16.msra.mxu0 0
    %7909 = vmatprep.subr.bf16.mxu0 0
    %7910 = vmatpush1.bf16.msra.mxu0 0
    %7911 = vmatprep.mubr.bf16.mxu0 0
    %7912 = vmatmul.mubr.bf16.gmra.mrb[0].mxu0 %v7874
    %v7913 = vpop.f32.mrb[0].mxu0
    %v7914 = vadd.f32 0.0, %v7913
    %v7915 = vpop.f32.mrb[0].mxu0
    %v7916 = vpop.f32.mrb[0].mxu0
    %v7917 = vpop.f32.mrb[0].mxu0
    %7918 = vdwg.mxu0
    %v7920 = vsel %vm2132, %v7588, 0
    %v7923 = vsel %vm3096, %v6628, 0
    %7925 = vmatprep.subr.bf16.mxu0 0
    %7926 = vmatpush1.bf16.msra.mxu0 %v7923
    %7927 = vmatprep.subr.bf16.mxu0 0
    %7928 = vmatpush1.bf16.msra.mxu0 0
    %7929 = vmatprep.subr.bf16.mxu0 0
    %7930 = vmatpush1.bf16.msra.mxu0 0
    %7931 = vmatprep.subr.bf16.mxu0 0
    %7932 = vmatpush1.bf16.msra.mxu0 0
    %7933 = vmatprep.subr.bf16.mxu0 0
    %7934 = vmatpush1.bf16.msra.mxu0 0
    %7935 = vmatprep.subr.bf16.mxu0 0
    %7936 = vmatpush1.bf16.msra.mxu0 0
    %7937 = vmatprep.subr.bf16.mxu0 0
    %7938 = vmatpush1.bf16.msra.mxu0 0
    %7939 = vmatprep.subr.bf16.mxu0 0
    %7940 = vmatpush1.bf16.msra.mxu0 0
    %7941 = vmatprep.subr.bf16.mxu0 0
    %7942 = vmatpush1.bf16.msra.mxu0 0
    %7943 = vmatprep.subr.bf16.mxu0 0
    %7944 = vmatpush1.bf16.msra.mxu0 0
    %7945 = vmatprep.subr.bf16.mxu0 0
    %7946 = vmatpush1.bf16.msra.mxu0 0
    %7947 = vmatprep.subr.bf16.mxu0 0
    %7948 = vmatpush1.bf16.msra.mxu0 0
    %7949 = vmatprep.subr.bf16.mxu0 0
    %7950 = vmatpush1.bf16.msra.mxu0 0
    %7951 = vmatprep.subr.bf16.mxu0 0
    %7952 = vmatpush1.bf16.msra.mxu0 0
    %7953 = vmatprep.subr.bf16.mxu0 0
    %7954 = vmatpush1.bf16.msra.mxu0 0
    %7955 = vmatprep.subr.bf16.mxu0 0
    %7956 = vmatpush1.bf16.msra.mxu0 0
    %7957 = vmatprep.mubr.bf16.mxu0 0
    %7958 = vmatmul.mubr.bf16.gmra.mrb[0].mxu0 %v7920
    %v7959 = vpop.f32.mrb[0].mxu0
    %v7960 = vadd.f32 0.0, %v7959
    %v7961 = vpop.f32.mrb[0].mxu0
    %v7962 = vpop.f32.mrb[0].mxu0
    %v7963 = vpop.f32.mrb[0].mxu0
    %7964 = vdwg.mxu0
    %v7966 = vsel %vm2132, %v7589, 0
    %v7969 = vsel %vm3096, %v6629, 0
    %7971 = vmatprep.subr.bf16.mxu0 0
    %7972 = vmatpush1.bf16.msra.mxu0 %v7969
    %7973 = vmatprep.subr.bf16.mxu0 0
    %7974 = vmatpush1.bf16.msra.mxu0 0
    %7975 = vmatprep.subr.bf16.mxu0 0
    %7976 = vmatpush1.bf16.msra.mxu0 0
    %7977 = vmatprep.subr.bf16.mxu0 0
    %7978 = vmatpush1.bf16.msra.mxu0 0
    %7979 = vmatprep.subr.bf16.mxu0 0
    %7980 = vmatpush1.bf16.msra.mxu0 0
    %7981 = vmatprep.subr.bf16.mxu0 0
    %7982 = vmatpush1.bf16.msra.mxu0 0
    %7983 = vmatprep.subr.bf16.mxu0 0
    %7984 = vmatpush1.bf16.msra.mxu0 0
    %7985 = vmatprep.subr.bf16.mxu0 0
    %7986 = vmatpush1.bf16.msra.mxu0 0
    %7987 = vmatprep.subr.bf16.mxu0 0
    %7988 = vmatpush1.bf16.msra.mxu0 0
    %7989 = vmatprep.subr.bf16.mxu0 0
    %7990 = vmatpush1.bf16.msra.mxu0 0
    %7991 = vmatprep.subr.bf16.mxu0 0
    %7992 = vmatpush1.bf16.msra.mxu0 0
    %7993 = vmatprep.subr.bf16.mxu0 0
    %7994 = vmatpush1.bf16.msra.mxu0 0
    %7995 = vmatprep.subr.bf16.mxu0 0
    %7996 = vmatpush1.bf16.msra.mxu0 0
    %7997 = vmatprep.subr.bf16.mxu0 0
    %7998 = vmatpush1.bf16.msra.mxu0 0
    %7999 = vmatprep.subr.bf16.mxu0 0
    %8000 = vmatpush1.bf16.msra.mxu0 0
    %8001 = vmatprep.subr.bf16.mxu0 0
    %8002 = vmatpush1.bf16.msra.mxu0 0
    %8003 = vmatprep.mubr.bf16.mxu0 0
    %8004 = vmatmul.mubr.bf16.gmra.mrb[0].mxu0 %v7966
    %v8005 = vpop.f32.mrb[0].mxu0
    %v8006 = vadd.f32 0.0, %v8005
    %v8007 = vpop.f32.mrb[0].mxu0
    %v8008 = vpop.f32.mrb[0].mxu0
    %v8009 = vpop.f32.mrb[0].mxu0
    %8010 = vdwg.mxu0
    %v8012 = vsel %vm2132, %v7590, 0
    %v8015 = vsel %vm3096, %v6630, 0
    %8017 = vmatprep.subr.bf16.mxu0 0
    %8018 = vmatpush1.bf16.msra.mxu0 %v8015
    %8019 = vmatprep.subr.bf16.mxu0 0
    %8020 = vmatpush1.bf16.msra.mxu0 0
    %8021 = vmatprep.subr.bf16.mxu0 0
    %8022 = vmatpush1.bf16.msra.mxu0 0
    %8023 = vmatprep.subr.bf16.mxu0 0
    %8024 = vmatpush1.bf16.msra.mxu0 0
    %8025 = vmatprep.subr.bf16.mxu0 0
    %8026 = vmatpush1.bf16.msra.mxu0 0
    %8027 = vmatprep.subr.bf16.mxu0 0
    %8028 = vmatpush1.bf16.msra.mxu0 0
    %8029 = vmatprep.subr.bf16.mxu0 0
    %8030 = vmatpush1.bf16.msra.mxu0 0
    %8031 = vmatprep.subr.bf16.mxu0 0
    %8032 = vmatpush1.bf16.msra.mxu0 0
    %8033 = vmatprep.subr.bf16.mxu0 0
    %8034 = vmatpush1.bf16.msra.mxu0 0
    %8035 = vmatprep.subr.bf16.mxu0 0
    %8036 = vmatpush1.bf16.msra.mxu0 0
    %8037 = vmatprep.subr.bf16.mxu0 0
    %8038 = vmatpush1.bf16.msra.mxu0 0
    %8039 = vmatprep.subr.bf16.mxu0 0
    %8040 = vmatpush1.bf16.msra.mxu0 0
    %8041 = vmatprep.subr.bf16.mxu0 0
    %8042 = vmatpush1.bf16.msra.mxu0 0
    %8043 = vmatprep.subr.bf16.mxu0 0
    %8044 = vmatpush1.bf16.msra.mxu0 0
    %8045 = vmatprep.subr.bf16.mxu0 0
    %8046 = vmatpush1.bf16.msra.mxu0 0
    %8047 = vmatprep.subr.bf16.mxu0 0
    %8048 = vmatpush1.bf16.msra.mxu0 0
    %8049 = vmatprep.mubr.bf16.mxu0 0
    %8050 = vmatmul.mubr.bf16.gmra.mrb[0].mxu0 %v8012
    %v8051 = vpop.f32.mrb[0].mxu0
    %v8052 = vadd.f32 0.0, %v8051
    %v8053 = vpop.f32.mrb[0].mxu0
    %v8054 = vpop.f32.mrb[0].mxu0
    %v8055 = vpop.f32.mrb[0].mxu0
    %8056 = vdwg.mxu0
    %v8058 = vsel %vm2132, %v7591, 0
    %v8061 = vsel %vm3096, %v6631, 0
    %8063 = vmatprep.subr.bf16.mxu0 0
    %8064 = vmatpush1.bf16.msra.mxu0 %v8061
    %8065 = vmatprep.subr.bf16.mxu0 0
    %8066 = vmatpush1.bf16.msra.mxu0 0
    %8067 = vmatprep.subr.bf16.mxu0 0
    %8068 = vmatpush1.bf16.msra.mxu0 0
    %8069 = vmatprep.subr.bf16.mxu0 0
    %8070 = vmatpush1.bf16.msra.mxu0 0
    %8071 = vmatprep.subr.bf16.mxu0 0
    %8072 = vmatpush1.bf16.msra.mxu0 0
    %8073 = vmatprep.subr.bf16.mxu0 0
    %8074 = vmatpush1.bf16.msra.mxu0 0
    %8075 = vmatprep.subr.bf16.mxu0 0
    %8076 = vmatpush1.bf16.msra.mxu0 0
    %8077 = vmatprep.subr.bf16.mxu0 0
    %8078 = vmatpush1.bf16.msra.mxu0 0
    %8079 = vmatprep.subr.bf16.mxu0 0
    %8080 = vmatpush1.bf16.msra.mxu0 0
    %8081 = vmatprep.subr.bf16.mxu0 0
    %8082 = vmatpush1.bf16.msra.mxu0 0
    %8083 = vmatprep.subr.bf16.mxu0 0
    %8084 = vmatpush1.bf16.msra.mxu0 0
    %8085 = vmatprep.subr.bf16.mxu0 0
    %8086 = vmatpush1.bf16.msra.mxu0 0
    %8087 = vmatprep.subr.bf16.mxu0 0
    %8088 = vmatpush1.bf16.msra.mxu0 0
    %8089 = vmatprep.subr.bf16.mxu0 0
    %8090 = vmatpush1.bf16.msra.mxu0 0
    %8091 = vmatprep.subr.bf16.mxu0 0
    %8092 = vmatpush1.bf16.msra.mxu0 0
    %8093 = vmatprep.subr.bf16.mxu0 0
    %8094 = vmatpush1.bf16.msra.mxu0 0
    %8095 = vmatprep.mubr.bf16.mxu0 0
    %8096 = vmatmul.mubr.bf16.gmra.mrb[0].mxu0 %v8058
    %v8097 = vpop.f32.mrb[0].mxu0
    %v8098 = vadd.f32 0.0, %v8097
    %v8099 = vpop.f32.mrb[0].mxu0
    %v8100 = vpop.f32.mrb[0].mxu0
    %v8101 = vpop.f32.mrb[0].mxu0
    %8102 = vdwg.mxu0
    %v8104 = vsel %vm2132, %v7592, 0
    %v8107 = vsel %vm3096, %v6632, 0
    %8109 = vmatprep.subr.bf16.mxu0 0
    %8110 = vmatpush1.bf16.msra.mxu0 %v8107
    %8111 = vmatprep.subr.bf16.mxu0 0
    %8112 = vmatpush1.bf16.msra.mxu0 0
    %8113 = vmatprep.subr.bf16.mxu0 0
    %8114 = vmatpush1.bf16.msra.mxu0 0
    %8115 = vmatprep.subr.bf16.mxu0 0
    %8116 = vmatpush1.bf16.msra.mxu0 0
    %8117 = vmatprep.subr.bf16.mxu0 0
    %8118 = vmatpush1.bf16.msra.mxu0 0
    %8119 = vmatprep.subr.bf16.mxu0 0
    %8120 = vmatpush1.bf16.msra.mxu0 0
    %8121 = vmatprep.subr.bf16.mxu0 0
    %8122 = vmatpush1.bf16.msra.mxu0 0
    %8123 = vmatprep.subr.bf16.mxu0 0
    %8124 = vmatpush1.bf16.msra.mxu0 0
    %8125 = vmatprep.subr.bf16.mxu0 0
    %8126 = vmatpush1.bf16.msra.mxu0 0
    %8127 = vmatprep.subr.bf16.mxu0 0
    %8128 = vmatpush1.bf16.msra.mxu0 0
    %8129 = vmatprep.subr.bf16.mxu0 0
    %8130 = vmatpush1.bf16.msra.mxu0 0
    %8131 = vmatprep.subr.bf16.mxu0 0
    %8132 = vmatpush1.bf16.msra.mxu0 0
    %8133 = vmatprep.subr.bf16.mxu0 0
    %8134 = vmatpush1.bf16.msra.mxu0 0
    %8135 = vmatprep.subr.bf16.mxu0 0
    %8136 = vmatpush1.bf16.msra.mxu0 0
    %8137 = vmatprep.subr.bf16.mxu0 0
    %8138 = vmatpush1.bf16.msra.mxu0 0
    %8139 = vmatprep.subr.bf16.mxu0 0
    %8140 = vmatpush1.bf16.msra.mxu0 0
    %8141 = vmatprep.mubr.bf16.mxu0 0
    %8142 = vmatmul.mubr.bf16.gmra.mrb[0].mxu0 %v8104
    %v8143 = vpop.f32.mrb[0].mxu0
    %v8144 = vadd.f32 0.0, %v8143
    %v8145 = vpop.f32.mrb[0].mxu0
    %v8146 = vpop.f32.mrb[0].mxu0
    %v8147 = vpop.f32.mrb[0].mxu0
    %8148 = vdwg.mxu0
    %v8150 = vsel %vm2132, %v7593, 0
    %v8153 = vsel %vm3096, %v6633, 0
    %8155 = vmatprep.subr.bf16.mxu0 0
    %8156 = vmatpush1.bf16.msra.mxu0 %v8153
    %8157 = vmatprep.subr.bf16.mxu0 0
    %8158 = vmatpush1.bf16.msra.mxu0 0
    %8159 = vmatprep.subr.bf16.mxu0 0
    %8160 = vmatpush1.bf16.msra.mxu0 0
    %8161 = vmatprep.subr.bf16.mxu0 0
    %8162 = vmatpush1.bf16.msra.mxu0 0
    %8163 = vmatprep.subr.bf16.mxu0 0
    %8164 = vmatpush1.bf16.msra.mxu0 0
    %8165 = vmatprep.subr.bf16.mxu0 0
    %8166 = vmatpush1.bf16.msra.mxu0 0
    %8167 = vmatprep.subr.bf16.mxu0 0
    %8168 = vmatpush1.bf16.msra.mxu0 0
    %8169 = vmatprep.subr.bf16.mxu0 0
    %8170 = vmatpush1.bf16.msra.mxu0 0
    %8171 = vmatprep.subr.bf16.mxu0 0
    %8172 = vmatpush1.bf16.msra.mxu0 0
    %8173 = vmatprep.subr.bf16.mxu0 0
    %8174 = vmatpush1.bf16.msra.mxu0 0
    %8175 = vmatprep.subr.bf16.mxu0 0
    %8176 = vmatpush1.bf16.msra.mxu0 0
    %8177 = vmatprep.subr.bf16.mxu0 0
    %8178 = vmatpush1.bf16.msra.mxu0 0
    %8179 = vmatprep.subr.bf16.mxu0 0
    %8180 = vmatpush1.bf16.msra.mxu0 0
    %8181 = vmatprep.subr.bf16.mxu0 0
    %8182 = vmatpush1.bf16.msra.mxu0 0
    %8183 = vmatprep.subr.bf16.mxu0 0
    %8184 = vmatpush1.bf16.msra.mxu0 0
    %8185 = vmatprep.subr.bf16.mxu0 0
    %8186 = vmatpush1.bf16.msra.mxu0 0
    %8187 = vmatprep.mubr.bf16.mxu0 0
    %8188 = vmatmul.mubr.bf16.gmra.mrb[0].mxu0 %v8150
    %v8189 = vpop.f32.mrb[0].mxu0
    %v8190 = vadd.f32 0.0, %v8189
    %v8191 = vpop.f32.mrb[0].mxu0
    %v8192 = vpop.f32.mrb[0].mxu0
    %v8193 = vpop.f32.mrb[0].mxu0
    %8194 = vdwg.mxu0
    %v8196 = vsel %vm2132, %v7594, 0
    %v8199 = vsel %vm3096, %v6634, 0
    %8201 = vmatprep.subr.bf16.mxu0 0
    %8202 = vmatpush1.bf16.msra.mxu0 %v8199
    %8203 = vmatprep.subr.bf16.mxu0 0
    %8204 = vmatpush1.bf16.msra.mxu0 0
    %8205 = vmatprep.subr.bf16.mxu0 0
    %8206 = vmatpush1.bf16.msra.mxu0 0
    %8207 = vmatprep.subr.bf16.mxu0 0
    %8208 = vmatpush1.bf16.msra.mxu0 0
    %8209 = vmatprep.subr.bf16.mxu0 0
    %8210 = vmatpush1.bf16.msra.mxu0 0
    %8211 = vmatprep.subr.bf16.mxu0 0
    %8212 = vmatpush1.bf16.msra.mxu0 0
    %8213 = vmatprep.subr.bf16.mxu0 0
    %8214 = vmatpush1.bf16.msra.mxu0 0
    %8215 = vmatprep.subr.bf16.mxu0 0
    %8216 = vmatpush1.bf16.msra.mxu0 0
    %8217 = vmatprep.subr.bf16.mxu0 0
    %8218 = vmatpush1.bf16.msra.mxu0 0
    %8219 = vmatprep.subr.bf16.mxu0 0
    %8220 = vmatpush1.bf16.msra.mxu0 0
    %8221 = vmatprep.subr.bf16.mxu0 0
    %8222 = vmatpush1.bf16.msra.mxu0 0
    %8223 = vmatprep.subr.bf16.mxu0 0
    %8224 = vmatpush1.bf16.msra.mxu0 0
    %8225 = vmatprep.subr.bf16.mxu0 0
    %8226 = vmatpush1.bf16.msra.mxu0 0
    %8227 = vmatprep.subr.bf16.mxu0 0
    %8228 = vmatpush1.bf16.msra.mxu0 0
    %8229 = vmatprep.subr.bf16.mxu0 0
    %8230 = vmatpush1.bf16.msra.mxu0 0
    %8231 = vmatprep.subr.bf16.mxu0 0
    %8232 = vmatpush1.bf16.msra.mxu0 0
    %8233 = vmatprep.mubr.bf16.mxu0 0
    %8234 = vmatmul.mubr.bf16.gmra.mrb[0].mxu0 %v8196
    %v8235 = vpop.f32.mrb[0].mxu0
    %v8236 = vadd.f32 0.0, %v8235
    %v8237 = vpop.f32.mrb[0].mxu0
    %v8238 = vpop.f32.mrb[0].mxu0
    %v8239 = vpop.f32.mrb[0].mxu0
    %8240 = vdwg.mxu0
    %v8242 = vsel %vm2132, %v7595, 0
    %v8245 = vsel %vm3096, %v6635, 0
    %8247 = vmatprep.subr.bf16.mxu0 0
    %8248 = vmatpush1.bf16.msra.mxu0 %v8245
    %8249 = vmatprep.subr.bf16.mxu0 0
    %8250 = vmatpush1.bf16.msra.mxu0 0
    %8251 = vmatprep.subr.bf16.mxu0 0
    %8252 = vmatpush1.bf16.msra.mxu0 0
    %8253 = vmatprep.subr.bf16.mxu0 0
    %8254 = vmatpush1.bf16.msra.mxu0 0
    %8255 = vmatprep.subr.bf16.mxu0 0
    %8256 = vmatpush1.bf16.msra.mxu0 0
    %8257 = vmatprep.subr.bf16.mxu0 0
    %8258 = vmatpush1.bf16.msra.mxu0 0
    %8259 = vmatprep.subr.bf16.mxu0 0
    %8260 = vmatpush1.bf16.msra.mxu0 0
    %8261 = vmatprep.subr.bf16.mxu0 0
    %8262 = vmatpush1.bf16.msra.mxu0 0
    %8263 = vmatprep.subr.bf16.mxu0 0
    %8264 = vmatpush1.bf16.msra.mxu0 0
    %8265 = vmatprep.subr.bf16.mxu0 0
    %8266 = vmatpush1.bf16.msra.mxu0 0
    %8267 = vmatprep.subr.bf16.mxu0 0
    %8268 = vmatpush1.bf16.msra.mxu0 0
    %8269 = vmatprep.subr.bf16.mxu0 0
    %8270 = vmatpush1.bf16.msra.mxu0 0
    %8271 = vmatprep.subr.bf16.mxu0 0
    %8272 = vmatpush1.bf16.msra.mxu0 0
    %8273 = vmatprep.subr.bf16.mxu0 0
    %8274 = vmatpush1.bf16.msra.mxu0 0
    %8275 = vmatprep.subr.bf16.mxu0 0
    %8276 = vmatpush1.bf16.msra.mxu0 0
    %8277 = vmatprep.subr.bf16.mxu0 0
    %8278 = vmatpush1.bf16.msra.mxu0 0
    %8279 = vmatprep.mubr.bf16.mxu0 0
    %8280 = vmatmul.mubr.bf16.gmra.mrb[0].mxu0 %v8242
    %v8281 = vpop.f32.mrb[0].mxu0
    %v8282 = vadd.f32 0.0, %v8281
    %v8283 = vpop.f32.mrb[0].mxu0
    %v8284 = vpop.f32.mrb[0].mxu0
    %v8285 = vpop.f32.mrb[0].mxu0
    %8286 = vdwg.mxu0
    %v8288 = vsel %vm2132, %v7596, 0
    %v8291 = vsel %vm3096, %v6636, 0
    %8293 = vmatprep.subr.bf16.mxu0 0
    %8294 = vmatpush1.bf16.msra.mxu0 %v8291
    %8295 = vmatprep.subr.bf16.mxu0 0
    %8296 = vmatpush1.bf16.msra.mxu0 0
    %8297 = vmatprep.subr.bf16.mxu0 0
    %8298 = vmatpush1.bf16.msra.mxu0 0
    %8299 = vmatprep.subr.bf16.mxu0 0
    %8300 = vmatpush1.bf16.msra.mxu0 0
    %8301 = vmatprep.subr.bf16.mxu0 0
    %8302 = vmatpush1.bf16.msra.mxu0 0
    %8303 = vmatprep.subr.bf16.mxu0 0
    %8304 = vmatpush1.bf16.msra.mxu0 0
    %8305 = vmatprep.subr.bf16.mxu0 0
    %8306 = vmatpush1.bf16.msra.mxu0 0
    %8307 = vmatprep.subr.bf16.mxu0 0
    %8308 = vmatpush1.bf16.msra.mxu0 0
    %8309 = vmatprep.subr.bf16.mxu0 0
    %8310 = vmatpush1.bf16.msra.mxu0 0
    %8311 = vmatprep.subr.bf16.mxu0 0
    %8312 = vmatpush1.bf16.msra.mxu0 0
    %8313 = vmatprep.subr.bf16.mxu0 0
    %8314 = vmatpush1.bf16.msra.mxu0 0
    %8315 = vmatprep.subr.bf16.mxu0 0
    %8316 = vmatpush1.bf16.msra.mxu0 0
    %8317 = vmatprep.subr.bf16.mxu0 0
    %8318 = vmatpush1.bf16.msra.mxu0 0
    %8319 = vmatprep.subr.bf16.mxu0 0
    %8320 = vmatpush1.bf16.msra.mxu0 0
    %8321 = vmatprep.subr.bf16.mxu0 0
    %8322 = vmatpush1.bf16.msra.mxu0 0
    %8323 = vmatprep.subr.bf16.mxu0 0
    %8324 = vmatpush1.bf16.msra.mxu0 0
    %8325 = vmatprep.mubr.bf16.mxu0 0
    %8326 = vmatmul.mubr.bf16.gmra.mrb[0].mxu0 %v8288
    %v8327 = vpop.f32.mrb[0].mxu0
    %v8328 = vadd.f32 0.0, %v8327
    %v8329 = vpop.f32.mrb[0].mxu0
    %v8330 = vpop.f32.mrb[0].mxu0
    %v8331 = vpop.f32.mrb[0].mxu0
    %8332 = vdwg.mxu0
    %v8333 = vcombine.low %v7638, %v7730
    %v8334 = vcombine.high %v7638, %v7730
    %v8336 = vunpack.c.l.s4 1983009808
    %v8337 = vunpack.c.0.s8 %v8336
    %v8338 = vlaneseq
    %v8339 = vshrl.u32 %v8338, 7
    %v8340 = vsub.s32 %v8337, %v8339
    %v8341 = vrot.slane %v8333, %v8340
    %v8343 = vunpack.c.l.s4 1983009808
    %v8344 = vunpack.c.0.s8 %v8343
    %v8345 = vlaneseq
    %v8346 = vshrl.u32 %v8345, 7
    %v8347 = vsub.s32 %v8344, %v8346
    %v8348 = vrot.slane %v8334, %v8347
    %v8349 = vcombine.low %v7684, %v7776
    %v8350 = vcombine.high %v7684, %v7776
    %v8352 = vunpack.c.l.s4 1983009808
    %v8353 = vunpack.c.0.s8 %v8352
    %v8354 = vlaneseq
    %v8355 = vshrl.u32 %v8354, 7
    %v8356 = vsub.s32 %v8353, %v8355
    %v8357 = vrot.slane %v8349, %v8356
    %v8359 = vunpack.c.l.s4 1983009808
    %v8360 = vunpack.c.0.s8 %v8359
    %v8361 = vlaneseq
    %v8362 = vshrl.u32 %v8361, 7
    %v8363 = vsub.s32 %v8360, %v8362
    %v8364 = vrot.slane %v8350, %v8363
    %v8365 = vcombine.low %v8341, %v8357
    %v8366 = vcombine.high %v8341, %v8357
    %v8368 = vunpack.c.l.s4 1934713408
    %v8369 = vunpack.c.0.s8 %v8368
    %v8370 = vlaneseq
    %v8371 = vshrl.u32 %v8370, 7
    %v8372 = vsub.s32 %v8369, %v8371
    %v8373 = vrot.slane %v8365, %v8372
    %v8375 = vunpack.c.l.s4 1934713408
    %v8376 = vunpack.c.0.s8 %v8375
    %v8377 = vlaneseq
    %v8378 = vshrl.u32 %v8377, 7
    %v8379 = vsub.s32 %v8376, %v8378
    %v8380 = vrot.slane %v8366, %v8379
    %v8381 = vcombine.low %v8348, %v8364
    %v8382 = vcombine.high %v8348, %v8364
    %v8384 = vunpack.c.l.s4 1934713408
    %v8385 = vunpack.c.0.s8 %v8384
    %v8386 = vlaneseq
    %v8387 = vshrl.u32 %v8386, 7
    %v8388 = vsub.s32 %v8385, %v8387
    %v8389 = vrot.slane %v8381, %v8388
    %v8391 = vunpack.c.l.s4 1934713408
    %v8392 = vunpack.c.0.s8 %v8391
    %v8393 = vlaneseq
    %v8394 = vshrl.u32 %v8393, 7
    %v8395 = vsub.s32 %v8392, %v8394
    %v8396 = vrot.slane %v8382, %v8395
    %v8397 = vcombine.high %v8373, 0.0
    %v8398 = vcombine.high %v8380, 0.0
    %v8399 = vcombine.high %v8389, 0.0
    %v8400 = vcombine.high %v8396, 0.0
    %v8401 = vcombine.low %v7822, %v7914
    %v8402 = vcombine.high %v7822, %v7914
    %v8404 = vunpack.c.l.s4 1983009808
    %v8405 = vunpack.c.0.s8 %v8404
    %v8406 = vlaneseq
    %v8407 = vshrl.u32 %v8406, 7
    %v8408 = vsub.s32 %v8405, %v8407
    %v8409 = vrot.slane %v8401, %v8408
    %v8411 = vunpack.c.l.s4 1983009808
    %v8412 = vunpack.c.0.s8 %v8411
    %v8413 = vlaneseq
    %v8414 = vshrl.u32 %v8413, 7
    %v8415 = vsub.s32 %v8412, %v8414
    %v8416 = vrot.slane %v8402, %v8415
    %v8417 = vcombine.low %v7868, %v7960
    %v8418 = vcombine.high %v7868, %v7960
    %v8420 = vunpack.c.l.s4 1983009808
    %v8421 = vunpack.c.0.s8 %v8420
    %v8422 = vlaneseq
    %v8423 = vshrl.u32 %v8422, 7
    %v8424 = vsub.s32 %v8421, %v8423
    %v8425 = vrot.slane %v8417, %v8424
    %v8427 = vunpack.c.l.s4 1983009808
    %v8428 = vunpack.c.0.s8 %v8427
    %v8429 = vlaneseq
    %v8430 = vshrl.u32 %v8429, 7
    %v8431 = vsub.s32 %v8428, %v8430
    %v8432 = vrot.slane %v8418, %v8431
    %v8433 = vcombine.low %v8409, %v8425
    %v8434 = vcombine.high %v8409, %v8425
    %v8436 = vunpack.c.l.s4 1934713408
    %v8437 = vunpack.c.0.s8 %v8436
    %v8438 = vlaneseq
    %v8439 = vshrl.u32 %v8438, 7
    %v8440 = vsub.s32 %v8437, %v8439
    %v8441 = vrot.slane %v8433, %v8440
    %v8443 = vunpack.c.l.s4 1934713408
    %v8444 = vunpack.c.0.s8 %v8443
    %v8445 = vlaneseq
    %v8446 = vshrl.u32 %v8445, 7
    %v8447 = vsub.s32 %v8444, %v8446
    %v8448 = vrot.slane %v8434, %v8447
    %v8449 = vcombine.low %v8416, %v8432
    %v8450 = vcombine.high %v8416, %v8432
    %v8452 = vunpack.c.l.s4 1934713408
    %v8453 = vunpack.c.0.s8 %v8452
    %v8454 = vlaneseq
    %v8455 = vshrl.u32 %v8454, 7
    %v8456 = vsub.s32 %v8453, %v8455
    %v8457 = vrot.slane %v8449, %v8456
    %v8459 = vunpack.c.l.s4 1934713408
    %v8460 = vunpack.c.0.s8 %v8459
    %v8461 = vlaneseq
    %v8462 = vshrl.u32 %v8461, 7
    %v8463 = vsub.s32 %v8460, %v8462
    %v8464 = vrot.slane %v8450, %v8463
    %v8465 = vcombine.high %v8441, 0.0
    %v8466 = vcombine.high %v8448, 0.0
    %v8467 = vcombine.high %v8457, 0.0
    %v8468 = vcombine.high %v8464, 0.0
    %v8469 = vcombine.low %v8006, %v8098
    %v8470 = vcombine.high %v8006, %v8098
    %v8472 = vunpack.c.l.s4 1983009808
    %v8473 = vunpack.c.0.s8 %v8472
    %v8474 = vlaneseq
    %v8475 = vshrl.u32 %v8474, 7
    %v8476 = vsub.s32 %v8473, %v8475
    %v8477 = vrot.slane %v8469, %v8476
    %v8479 = vunpack.c.l.s4 1983009808
    %v8480 = vunpack.c.0.s8 %v8479
    %v8481 = vlaneseq
    %v8482 = vshrl.u32 %v8481, 7
    %v8483 = vsub.s32 %v8480, %v8482
    %v8484 = vrot.slane %v8470, %v8483
    %v8485 = vcombine.low %v8052, %v8144
    %v8486 = vcombine.high %v8052, %v8144
    %v8488 = vunpack.c.l.s4 1983009808
    %v8489 = vunpack.c.0.s8 %v8488
    %v8490 = vlaneseq
    %v8491 = vshrl.u32 %v8490, 7
    %v8492 = vsub.s32 %v8489, %v8491
    %v8493 = vrot.slane %v8485, %v8492
    %v8495 = vunpack.c.l.s4 1983009808
    %v8496 = vunpack.c.0.s8 %v8495
    %v8497 = vlaneseq
    %v8498 = vshrl.u32 %v8497, 7
    %v8499 = vsub.s32 %v8496, %v8498
    %v8500 = vrot.slane %v8486, %v8499
    %v8501 = vcombine.low %v8477, %v8493
    %v8502 = vcombine.high %v8477, %v8493
    %v8504 = vunpack.c.l.s4 1934713408
    %v8505 = vunpack.c.0.s8 %v8504
    %v8506 = vlaneseq
    %v8507 = vshrl.u32 %v8506, 7
    %v8508 = vsub.s32 %v8505, %v8507
    %v8509 = vrot.slane %v8501, %v8508
    %v8511 = vunpack.c.l.s4 1934713408
    %v8512 = vunpack.c.0.s8 %v8511
    %v8513 = vlaneseq
    %v8514 = vshrl.u32 %v8513, 7
    %v8515 = vsub.s32 %v8512, %v8514
    %v8516 = vrot.slane %v8502, %v8515
    %v8517 = vcombine.low %v8484, %v8500
    %v8518 = vcombine.high %v8484, %v8500
    %v8520 = vunpack.c.l.s4 1934713408
    %v8521 = vunpack.c.0.s8 %v8520
    %v8522 = vlaneseq
    %v8523 = vshrl.u32 %v8522, 7
    %v8524 = vsub.s32 %v8521, %v8523
    %v8525 = vrot.slane %v8517, %v8524
    %v8527 = vunpack.c.l.s4 1934713408
    %v8528 = vunpack.c.0.s8 %v8527
    %v8529 = vlaneseq
    %v8530 = vshrl.u32 %v8529, 7
    %v8531 = vsub.s32 %v8528, %v8530
    %v8532 = vrot.slane %v8518, %v8531
    %v8533 = vcombine.high %v8509, 0.0
    %v8534 = vcombine.high %v8516, 0.0
    %v8535 = vcombine.high %v8525, 0.0
    %v8536 = vcombine.high %v8532, 0.0
    %v8537 = vcombine.low %v8190, %v8282
    %v8538 = vcombine.high %v8190, %v8282
    %v8540 = vunpack.c.l.s4 1983009808
    %v8541 = vunpack.c.0.s8 %v8540
    %v8542 = vlaneseq
    %v8543 = vshrl.u32 %v8542, 7
    %v8544 = vsub.s32 %v8541, %v8543
    %v8545 = vrot.slane %v8537, %v8544
    %v8547 = vunpack.c.l.s4 1983009808
    %v8548 = vunpack.c.0.s8 %v8547
    %v8549 = vlaneseq
    %v8550 = vshrl.u32 %v8549, 7
    %v8551 = vsub.s32 %v8548, %v8550
    %v8552 = vrot.slane %v8538, %v8551
    %v8553 = vcombine.low %v8236, %v8328
    %v8554 = vcombine.high %v8236, %v8328
    %v8556 = vunpack.c.l.s4 1983009808
    %v8557 = vunpack.c.0.s8 %v8556
    %v8558 = vlaneseq
    %v8559 = vshrl.u32 %v8558, 7
    %v8560 = vsub.s32 %v8557, %v8559
    %v8561 = vrot.slane %v8553, %v8560
    %v8563 = vunpack.c.l.s4 1983009808
    %v8564 = vunpack.c.0.s8 %v8563
    %v8565 = vlaneseq
    %v8566 = vshrl.u32 %v8565, 7
    %v8567 = vsub.s32 %v8564, %v8566
    %v8568 = vrot.slane %v8554, %v8567
    %v8569 = vcombine.low %v8545, %v8561
    %v8570 = vcombine.high %v8545, %v8561
    %v8572 = vunpack.c.l.s4 1934713408
    %v8573 = vunpack.c.0.s8 %v8572
    %v8574 = vlaneseq
    %v8575 = vshrl.u32 %v8574, 7
    %v8576 = vsub.s32 %v8573, %v8575
    %v8577 = vrot.slane %v8569, %v8576
    %v8579 = vunpack.c.l.s4 1934713408
    %v8580 = vunpack.c.0.s8 %v8579
    %v8581 = vlaneseq
    %v8582 = vshrl.u32 %v8581, 7
    %v8583 = vsub.s32 %v8580, %v8582
    %v8584 = vrot.slane %v8570, %v8583
    %v8585 = vcombine.low %v8552, %v8568
    %v8586 = vcombine.high %v8552, %v8568
    %v8588 = vunpack.c.l.s4 1934713408
    %v8589 = vunpack.c.0.s8 %v8588
    %v8590 = vlaneseq
    %v8591 = vshrl.u32 %v8590, 7
    %v8592 = vsub.s32 %v8589, %v8591
    %v8593 = vrot.slane %v8585, %v8592
    %v8595 = vunpack.c.l.s4 1934713408
    %v8596 = vunpack.c.0.s8 %v8595
    %v8597 = vlaneseq
    %v8598 = vshrl.u32 %v8597, 7
    %v8599 = vsub.s32 %v8596, %v8598
    %v8600 = vrot.slane %v8586, %v8599
    %v8601 = vcombine.high %v8577, 0.0
    %v8602 = vcombine.high %v8584, 0.0
    %v8603 = vcombine.high %v8593, 0.0
    %v8604 = vcombine.high %v8600, 0.0
    %v8605 = vcombine.low %v8373, %v8380
    %v8607 = vunpack.c.l.s4 1983009808
    %v8608 = vunpack.c.0.s8 %v8607
    %v8609 = vlaneseq
    %v8610 = vshrl.u32 %v8609, 7
    %v8611 = vsub.s32 %v8608, %v8610
    %v8612 = vrot.slane %v8605, %v8611
    %v8613 = vcombine.low %v8397, %v8398
    %v8615 = vunpack.c.l.s4 1983009808
    %v8616 = vunpack.c.0.s8 %v8615
    %v8617 = vlaneseq
    %v8618 = vshrl.u32 %v8617, 7
    %v8619 = vsub.s32 %v8616, %v8618
    %v8620 = vrot.slane %v8613, %v8619
    %v8621 = vcombine.low %v8389, %v8396
    %v8623 = vunpack.c.l.s4 1983009808
    %v8624 = vunpack.c.0.s8 %v8623
    %v8625 = vlaneseq
    %v8626 = vshrl.u32 %v8625, 7
    %v8627 = vsub.s32 %v8624, %v8626
    %v8628 = vrot.slane %v8621, %v8627
    %v8629 = vcombine.low %v8399, %v8400
    %v8631 = vunpack.c.l.s4 1983009808
    %v8632 = vunpack.c.0.s8 %v8631
    %v8633 = vlaneseq
    %v8634 = vshrl.u32 %v8633, 7
    %v8635 = vsub.s32 %v8632, %v8634
    %v8636 = vrot.slane %v8629, %v8635
    %v8637 = vcombine.low %v8612, %v8620
    %v8638 = vcombine.high %v8612, %v8620
    %v8640 = vunpack.c.l.s4 1934713408
    %v8641 = vunpack.c.0.s8 %v8640
    %v8642 = vlaneseq
    %v8643 = vshrl.u32 %v8642, 7
    %v8644 = vsub.s32 %v8641, %v8643
    %v8645 = vrot.slane %v8637, %v8644
    %v8647 = vunpack.c.l.s4 1934713408
    %v8648 = vunpack.c.0.s8 %v8647
    %v8649 = vlaneseq
    %v8650 = vshrl.u32 %v8649, 7
    %v8651 = vsub.s32 %v8648, %v8650
    %v8652 = vrot.slane %v8638, %v8651
    %v8653 = vcombine.low %v8628, %v8636
    %v8654 = vcombine.high %v8628, %v8636
    %v8656 = vunpack.c.l.s4 1934713408
    %v8657 = vunpack.c.0.s8 %v8656
    %v8658 = vlaneseq
    %v8659 = vshrl.u32 %v8658, 7
    %v8660 = vsub.s32 %v8657, %v8659
    %v8661 = vrot.slane %v8653, %v8660
    %v8663 = vunpack.c.l.s4 1934713408
    %v8664 = vunpack.c.0.s8 %v8663
    %v8665 = vlaneseq
    %v8666 = vshrl.u32 %v8665, 7
    %v8667 = vsub.s32 %v8664, %v8666
    %v8668 = vrot.slane %v8654, %v8667
    %v8669 = vcombine.low %v8645, %v8661
    %v8670 = vcombine.high %v8645, %v8661
    %v8671 = vcombine.low %v8652, %v8668
    %v8672 = vcombine.high %v8652, %v8668
    %v8673 = vcombine.low %v8441, %v8448
    %v8675 = vunpack.c.l.s4 1983009808
    %v8676 = vunpack.c.0.s8 %v8675
    %v8677 = vlaneseq
    %v8678 = vshrl.u32 %v8677, 7
    %v8679 = vsub.s32 %v8676, %v8678
    %v8680 = vrot.slane %v8673, %v8679
    %v8681 = vcombine.low %v8465, %v8466
    %v8683 = vunpack.c.l.s4 1983009808
    %v8684 = vunpack.c.0.s8 %v8683
    %v8685 = vlaneseq
    %v8686 = vshrl.u32 %v8685, 7
    %v8687 = vsub.s32 %v8684, %v8686
    %v8688 = vrot.slane %v8681, %v8687
    %v8689 = vcombine.low %v8457, %v8464
    %v8691 = vunpack.c.l.s4 1983009808
    %v8692 = vunpack.c.0.s8 %v8691
    %v8693 = vlaneseq
    %v8694 = vshrl.u32 %v8693, 7
    %v8695 = vsub.s32 %v8692, %v8694
    %v8696 = vrot.slane %v8689, %v8695
    %v8697 = vcombine.low %v8467, %v8468
    %v8699 = vunpack.c.l.s4 1983009808
    %v8700 = vunpack.c.0.s8 %v8699
    %v8701 = vlaneseq
    %v8702 = vshrl.u32 %v8701, 7
    %v8703 = vsub.s32 %v8700, %v8702
    %v8704 = vrot.slane %v8697, %v8703
    %v8705 = vcombine.low %v8680, %v8688
    %v8706 = vcombine.high %v8680, %v8688
    %v8708 = vunpack.c.l.s4 1934713408
    %v8709 = vunpack.c.0.s8 %v8708
    %v8710 = vlaneseq
    %v8711 = vshrl.u32 %v8710, 7
    %v8712 = vsub.s32 %v8709, %v8711
    %v8713 = vrot.slane %v8705, %v8712
    %v8715 = vunpack.c.l.s4 1934713408
    %v8716 = vunpack.c.0.s8 %v8715
    %v8717 = vlaneseq
    %v8718 = vshrl.u32 %v8717, 7
    %v8719 = vsub.s32 %v8716, %v8718
    %v8720 = vrot.slane %v8706, %v8719
    %v8721 = vcombine.low %v8696, %v8704
    %v8722 = vcombine.high %v8696, %v8704
    %v8724 = vunpack.c.l.s4 1934713408
    %v8725 = vunpack.c.0.s8 %v8724
    %v8726 = vlaneseq
    %v8727 = vshrl.u32 %v8726, 7
    %v8728 = vsub.s32 %v8725, %v8727
    %v8729 = vrot.slane %v8721, %v8728
    %v8731 = vunpack.c.l.s4 1934713408
    %v8732 = vunpack.c.0.s8 %v8731
    %v8733 = vlaneseq
    %v8734 = vshrl.u32 %v8733, 7
    %v8735 = vsub.s32 %v8732, %v8734
    %v8736 = vrot.slane %v8722, %v8735
    %v8737 = vcombine.low %v8713, %v8729
    %v8738 = vcombine.high %v8713, %v8729
    %v8739 = vcombine.low %v8720, %v8736
    %v8740 = vcombine.high %v8720, %v8736
    %v8741 = vcombine.low %v8509, %v8516
    %v8743 = vunpack.c.l.s4 1983009808
    %v8744 = vunpack.c.0.s8 %v8743
    %v8745 = vlaneseq
    %v8746 = vshrl.u32 %v8745, 7
    %v8747 = vsub.s32 %v8744, %v8746
    %v8748 = vrot.slane %v8741, %v8747
    %v8749 = vcombine.low %v8533, %v8534
    %v8751 = vunpack.c.l.s4 1983009808
    %v8752 = vunpack.c.0.s8 %v8751
    %v8753 = vlaneseq
    %v8754 = vshrl.u32 %v8753, 7
    %v8755 = vsub.s32 %v8752, %v8754
    %v8756 = vrot.slane %v8749, %v8755
    %v8757 = vcombine.low %v8525, %v8532
    %v8759 = vunpack.c.l.s4 1983009808
    %v8760 = vunpack.c.0.s8 %v8759
    %v8761 = vlaneseq
    %v8762 = vshrl.u32 %v8761, 7
    %v8763 = vsub.s32 %v8760, %v8762
    %v8764 = vrot.slane %v8757, %v8763
    %v8765 = vcombine.low %v8535, %v8536
    %v8767 = vunpack.c.l.s4 1983009808
    %v8768 = vunpack.c.0.s8 %v8767
    %v8769 = vlaneseq
    %v8770 = vshrl.u32 %v8769, 7
    %v8771 = vsub.s32 %v8768, %v8770
    %v8772 = vrot.slane %v8765, %v8771
    %v8773 = vcombine.low %v8748, %v8756
    %v8774 = vcombine.high %v8748, %v8756
    %v8776 = vunpack.c.l.s4 1934713408
    %v8777 = vunpack.c.0.s8 %v8776
    %v8778 = vlaneseq
    %v8779 = vshrl.u32 %v8778, 7
    %v8780 = vsub.s32 %v8777, %v8779
    %v8781 = vrot.slane %v8773, %v8780
    %v8783 = vunpack.c.l.s4 1934713408
    %v8784 = vunpack.c.0.s8 %v8783
    %v8785 = vlaneseq
    %v8786 = vshrl.u32 %v8785, 7
    %v8787 = vsub.s32 %v8784, %v8786
    %v8788 = vrot.slane %v8774, %v8787
    %v8789 = vcombine.low %v8764, %v8772
    %v8790 = vcombine.high %v8764, %v8772
    %v8792 = vunpack.c.l.s4 1934713408
    %v8793 = vunpack.c.0.s8 %v8792
    %v8794 = vlaneseq
    %v8795 = vshrl.u32 %v8794, 7
    %v8796 = vsub.s32 %v8793, %v8795
    %v8797 = vrot.slane %v8789, %v8796
    %v8799 = vunpack.c.l.s4 1934713408
    %v8800 = vunpack.c.0.s8 %v8799
    %v8801 = vlaneseq
    %v8802 = vshrl.u32 %v8801, 7
    %v8803 = vsub.s32 %v8800, %v8802
    %v8804 = vrot.slane %v8790, %v8803
    %v8805 = vcombine.low %v8781, %v8797
    %v8806 = vcombine.high %v8781, %v8797
    %v8807 = vcombine.low %v8788, %v8804
    %v8808 = vcombine.high %v8788, %v8804
    %v8809 = vcombine.low %v8577, %v8584
    %v8811 = vunpack.c.l.s4 1983009808
    %v8812 = vunpack.c.0.s8 %v8811
    %v8813 = vlaneseq
    %v8814 = vshrl.u32 %v8813, 7
    %v8815 = vsub.s32 %v8812, %v8814
    %v8816 = vrot.slane %v8809, %v8815
    %v8817 = vcombine.low %v8601, %v8602
    %v8819 = vunpack.c.l.s4 1983009808
    %v8820 = vunpack.c.0.s8 %v8819
    %v8821 = vlaneseq
    %v8822 = vshrl.u32 %v8821, 7
    %v8823 = vsub.s32 %v8820, %v8822
    %v8824 = vrot.slane %v8817, %v8823
    %v8825 = vcombine.low %v8593, %v8600
    %v8827 = vunpack.c.l.s4 1983009808
    %v8828 = vunpack.c.0.s8 %v8827
    %v8829 = vlaneseq
    %v8830 = vshrl.u32 %v8829, 7
    %v8831 = vsub.s32 %v8828, %v8830
    %v8832 = vrot.slane %v8825, %v8831
    %v8833 = vcombine.low %v8603, %v8604
    %v8835 = vunpack.c.l.s4 1983009808
    %v8836 = vunpack.c.0.s8 %v8835
    %v8837 = vlaneseq
    %v8838 = vshrl.u32 %v8837, 7
    %v8839 = vsub.s32 %v8836, %v8838
    %v8840 = vrot.slane %v8833, %v8839
    %v8841 = vcombine.low %v8816, %v8824
    %v8842 = vcombine.high %v8816, %v8824
    %v8844 = vunpack.c.l.s4 1934713408
    %v8845 = vunpack.c.0.s8 %v8844
    %v8846 = vlaneseq
    %v8847 = vshrl.u32 %v8846, 7
    %v8848 = vsub.s32 %v8845, %v8847
    %v8849 = vrot.slane %v8841, %v8848
    %v8851 = vunpack.c.l.s4 1934713408
    %v8852 = vunpack.c.0.s8 %v8851
    %v8853 = vlaneseq
    %v8854 = vshrl.u32 %v8853, 7
    %v8855 = vsub.s32 %v8852, %v8854
    %v8856 = vrot.slane %v8842, %v8855
    %v8857 = vcombine.low %v8832, %v8840
    %v8858 = vcombine.high %v8832, %v8840
    %v8860 = vunpack.c.l.s4 1934713408
    %v8861 = vunpack.c.0.s8 %v8860
    %v8862 = vlaneseq
    %v8863 = vshrl.u32 %v8862, 7
    %v8864 = vsub.s32 %v8861, %v8863
    %v8865 = vrot.slane %v8857, %v8864
    %v8867 = vunpack.c.l.s4 1934713408
    %v8868 = vunpack.c.0.s8 %v8867
    %v8869 = vlaneseq
    %v8870 = vshrl.u32 %v8869, 7
    %v8871 = vsub.s32 %v8868, %v8870
    %v8872 = vrot.slane %v8858, %v8871
    %v8873 = vcombine.low %v8849, %v8865
    %v8874 = vcombine.high %v8849, %v8865
    %v8875 = vcombine.low %v8856, %v8872
    %v8876 = vcombine.high %v8856, %v8872
    %8881 = vrot.lane.b32.xlu0 %v8670, 8
    %v8882 = vpop.permute.xlu0 %8881
    %8883 = vrot.lane.b32.xlu0 %v8738, 8
    %v8884 = vpop.permute.xlu0 %8883
    %8885 = vrot.lane.b32.xlu0 %v8806, 8
    %v8886 = vpop.permute.xlu0 %8885
    %8887 = vrot.lane.b32.xlu0 %v8874, 8
    %v8888 = vpop.permute.xlu0 %8887
    %8897 = vrot.lane.b32.xlu0 %v8671, 16
    %v8898 = vpop.permute.xlu0 %8897
    %8899 = vrot.lane.b32.xlu0 %v8739, 16
    %v8900 = vpop.permute.xlu0 %8899
    %8901 = vrot.lane.b32.xlu0 %v8807, 16
    %v8902 = vpop.permute.xlu0 %8901
    %8903 = vrot.lane.b32.xlu0 %v8875, 16
    %v8904 = vpop.permute.xlu0 %8903
    %8913 = vrot.lane.b32.xlu0 %v8672, 24
    %v8914 = vpop.permute.xlu0 %8913
    %8915 = vrot.lane.b32.xlu0 %v8740, 24
    %v8916 = vpop.permute.xlu0 %8915
    %8917 = vrot.lane.b32.xlu0 %v8808, 24
    %v8918 = vpop.permute.xlu0 %8917
    %8919 = vrot.lane.b32.xlu0 %v8876, 24
    %v8920 = vpop.permute.xlu0 %8919
    %v8925 = vsel %vm2132, %v8669, %v8882
    %v8926 = vsel %vm2132, %v8737, %v8884
    %v8927 = vsel %vm2132, %v8805, %v8886
    %v8928 = vsel %vm2132, %v8873, %v8888
    %v8929 = vsel %vm4426, %v8925, %v8898
    %v8930 = vsel %vm4426, %v8926, %v8900
    %v8931 = vsel %vm4426, %v8927, %v8902
    %v8932 = vsel %vm4426, %v8928, %v8904
    %v8933 = vsel %vm4431, %v8929, %v8914
    %v8934 = vsel %vm4431, %v8930, %v8916
    %v8935 = vsel %vm4431, %v8931, %v8918
    %v8936 = vsel %vm4431, %v8932, %v8920
    %v8937 = vpack.c.bf16 %v8934, %v8933
    %v8938 = vpack.c.bf16 %v8936, %v8935
    %v8943 = vunpack.c.l.b16 %v4734
    %v8944 = vunpack.c.l.b16 %v4735
    %v8945 = vunpack.c.l.b16 %v4736
    %v8946 = vunpack.c.l.b16 %v4737
    %v8947 = vpack.c.b16 %v8944, %v8943
    %v8948 = vpack.c.b16 %v8946, %v8945
    %v8952 = vsel %vm260, %v8937, 0
    %v8955 = vsel %vm260, %v8938, 0
    %8957 = vmatprep.subr.bf16.mxu0 0
    %8958 = vmatpush1.bf16.msra.mxu0 %v8947
    %8959 = vmatprep.subr.bf16.mxu0 0
    %8960 = vmatpush1.bf16.msra.mxu0 %v8948
    %8961 = vmatprep.subr.bf16.mxu0 0
    %8962 = vmatpush1.bf16.msra.mxu0 0
    %8963 = vmatprep.subr.bf16.mxu0 0
    %8964 = vmatpush1.bf16.msra.mxu0 0
    %8965 = vmatprep.subr.bf16.mxu0 0
    %8966 = vmatpush1.bf16.msra.mxu0 0
    %8967 = vmatprep.subr.bf16.mxu0 0
    %8968 = vmatpush1.bf16.msra.mxu0 0
    %8969 = vmatprep.subr.bf16.mxu0 0
    %8970 = vmatpush1.bf16.msra.mxu0 0
    %8971 = vmatprep.subr.bf16.mxu0 0
    %8972 = vmatpush1.bf16.msra.mxu0 0
    %8973 = vmatprep.subr.bf16.mxu0 0
    %8974 = vmatpush1.bf16.msra.mxu0 0
    %8975 = vmatprep.subr.bf16.mxu0 0
    %8976 = vmatpush1.bf16.msra.mxu0 0
    %8977 = vmatprep.subr.bf16.mxu0 0
    %8978 = vmatpush1.bf16.msra.mxu0 0
    %8979 = vmatprep.subr.bf16.mxu0 0
    %8980 = vmatpush1.bf16.msra.mxu0 0
    %8981 = vmatprep.subr.bf16.mxu0 0
    %8982 = vmatpush1.bf16.msra.mxu0 0
    %8983 = vmatprep.subr.bf16.mxu0 0
    %8984 = vmatpush1.bf16.msra.mxu0 0
    %8985 = vmatprep.subr.bf16.mxu0 0
    %8986 = vmatpush1.bf16.msra.mxu0 0
    %8987 = vmatprep.subr.bf16.mxu0 0
    %8988 = vmatpush1.bf16.msra.mxu0 0
    %8989 = vmatprep.mubr.bf16.mxu0 0
    %8990 = vmatmul.mubr.bf16.gmra.mrb[0].mxu0 %v8952
    %v8991 = vpop.f32.mrb[0].mxu0
    %v8992 = vadd.f32 0.0, %v8991
    %v8993 = vpop.f32.mrb[0].mxu0
    %v8994 = vpop.f32.mrb[0].mxu0
    %v8995 = vadd.f32 0.0, %v8994
    %v8996 = vpop.f32.mrb[0].mxu0
    %8997 = vmatprep.mubr.bf16.mxu0 0
    %8998 = vmatmul.mubr.bf16.gmra.mrb[0].mxu0 %v8955
    %v8999 = vpop.f32.mrb[0].mxu0
    %v9000 = vadd.f32 0.0, %v8999
    %v9001 = vpop.f32.mrb[0].mxu0
    %v9002 = vpop.f32.mrb[0].mxu0
    %v9003 = vadd.f32 0.0, %v9002
    %v9004 = vpop.f32.mrb[0].mxu0
    %9005 = vdwg.mxu0
    %v9006 = vadd.f32 %v4724, %v8992
    %v9007 = vadd.f32 %v4725, %v8995
    %v9008 = vadd.f32 %v4726, %v9000
    %v9009 = vadd.f32 %v4727, %v9003
    %v9010 = vsel %vm260, %v9006, 0.0
    %9011 = vadd.xlane.f32.xlu0 %v9010
    %v9012 = vpop.xlane.xlu0 %9011
    %v9013 = vsel %vm260, %v9007, 0.0
    %9014 = vadd.xlane.f32.xlu0 %v9013
    %v9015 = vpop.xlane.xlu0 %9014
    %v9016 = vsel %vm260, %v9008, 0.0
    %9017 = vadd.xlane.f32.xlu0 %v9016
    %v9018 = vpop.xlane.xlu0 %9017
    %v9019 = vsel %vm260, %v9009, 0.0
    %9020 = vadd.xlane.f32.xlu0 %v9019
    %v9021 = vpop.xlane.xlu0 %9020
    %v9022 = vmul.f32 %v9012, %v4521
    %v9023 = vmul.f32 %v9015, %v4521
    %v9024 = vmul.f32 %v9018, %v4521
    %v9025 = vmul.f32 %v9021, %v4521
    %v9026 = vsub.f32 %v9006, %v9022
    %v9027 = vsub.f32 %v9007, %v9023
    %v9028 = vsub.f32 %v9008, %v9024
    %v9029 = vsub.f32 %v9009, %v9025
    %v9030 = vmul.f32 %v9026, %v9026
    %v9031 = vmul.f32 %v9027, %v9027
    %v9032 = vmul.f32 %v9028, %v9028
    %v9033 = vmul.f32 %v9029, %v9029
    %v9034 = vsel %vm260, %v9030, 0.0
    %9035 = vadd.xlane.f32.xlu0 %v9034
    %v9036 = vpop.xlane.xlu0 %9035
    %v9037 = vsel %vm260, %v9031, 0.0
    %9038 = vadd.xlane.f32.xlu0 %v9037
    %v9039 = vpop.xlane.xlu0 %9038
    %v9040 = vsel %vm260, %v9032, 0.0
    %9041 = vadd.xlane.f32.xlu0 %v9040
    %v9042 = vpop.xlane.xlu0 %9041
    %v9043 = vsel %vm260, %v9033, 0.0
    %9044 = vadd.xlane.f32.xlu0 %v9043
    %v9045 = vpop.xlane.xlu0 %9044
    %v9046 = vmul.f32 %v9036, %v4521
    %v9047 = vmul.f32 %v9039, %v4521
    %v9048 = vmul.f32 %v9042, %v4521
    %v9049 = vmul.f32 %v9045, %v4521
    %v9050 = vadd.f32 %v9046, 1e-05
    %v9051 = vadd.f32 %v9047, 1e-05
    %v9052 = vadd.f32 %v9048, 1e-05
    %v9053 = vadd.f32 %v9049, 1e-05
    %v9054 = vrsqrt.pop %v9050
    %v9055 = vrsqrt.pop %v9051
    %v9056 = vrsqrt.pop %v9052
    %v9057 = vrsqrt.pop %v9053
    %v9058 = vmul.f32 %v9026, %v9054
    %v9059 = vmul.f32 %v9027, %v9055
    %v9060 = vmul.f32 %v9028, %v9056
    %v9061 = vmul.f32 %v9029, %v9057
    %v9063 = vlaneseq
    %v9064 = vshrl.u32 %v9063, 7
    %v9065 = vsub.s32 0, %v9064
    %v9066 = vrot.slane %v4749, %v9065
    %v9068 = vmul.f32 %v9058, %v9066
    %v9069 = vmul.f32 %v9059, %v9066
    %v9070 = vmul.f32 %v9060, %v9066
    %v9071 = vmul.f32 %v9061, %v9066
    %v9073 = vlaneseq
    %v9074 = vshrl.u32 %v9073, 7
    %v9075 = vsub.s32 0, %v9074
    %v9076 = vrot.slane %v4751, %v9075
    %v9078 = vadd.f32 %v9068, %v9076
    %v9079 = vadd.f32 %v9069, %v9076
    %v9080 = vadd.f32 %v9070, %v9076
    %v9081 = vadd.f32 %v9071, %v9076
    %v9082 = vpack.c.bf16 %v9079, %v9078
    %v9083 = vpack.c.bf16 %v9081, %v9080
    %v9088 = vunpack.c.l.b16 %v4739
    %v9089 = vunpack.c.l.b16 %v4740
    %v9090 = vunpack.c.l.b16 %v4741
    %v9091 = vunpack.c.l.b16 %v4742
    %v9092 = vpack.c.b16 %v9089, %v9088
    %v9093 = vpack.c.b16 %v9091, %v9090
    %v9097 = vsel %vm260, %v9082, 0
    %v9100 = vsel %vm260, %v9083, 0
    %9102 = vmatprep.subr.bf16.mxu0 0
    %9103 = vmatpush1.bf16.msra.mxu0 %v9092
    %9104 = vmatprep.subr.bf16.mxu0 0
    %9105 = vmatpush1.bf16.msra.mxu0 %v9093
    %9106 = vmatprep.subr.bf16.mxu0 0
    %9107 = vmatpush1.bf16.msra.mxu0 0
    %9108 = vmatprep.subr.bf16.mxu0 0
    %9109 = vmatpush1.bf16.msra.mxu0 0
    %9110 = vmatprep.subr.bf16.mxu0 0
    %9111 = vmatpush1.bf16.msra.mxu0 0
    %9112 = vmatprep.subr.bf16.mxu0 0
    %9113 = vmatpush1.bf16.msra.mxu0 0
    %9114 = vmatprep.subr.bf16.mxu0 0
    %9115 = vmatpush1.bf16.msra.mxu0 0
    %9116 = vmatprep.subr.bf16.mxu0 0
    %9117 = vmatpush1.bf16.msra.mxu0 0
    %9118 = vmatprep.subr.bf16.mxu0 0
    %9119 = vmatpush1.bf16.msra.mxu0 0
    %9120 = vmatprep.subr.bf16.mxu0 0
    %9121 = vmatpush1.bf16.msra.mxu0 0
    %9122 = vmatprep.subr.bf16.mxu0 0
    %9123 = vmatpush1.bf16.msra.mxu0 0
    %9124 = vmatprep.subr.bf16.mxu0 0
    %9125 = vmatpush1.bf16.msra.mxu0 0
    %9126 = vmatprep.subr.bf16.mxu0 0
    %9127 = vmatpush1.bf16.msra.mxu0 0
    %9128 = vmatprep.subr.bf16.mxu0 0
    %9129 = vmatpush1.bf16.msra.mxu0 0
    %9130 = vmatprep.subr.bf16.mxu0 0
    %9131 = vmatpush1.bf16.msra.mxu0 0
    %9132 = vmatprep.subr.bf16.mxu0 0
    %9133 = vmatpush1.bf16.msra.mxu0 0
    %9134 = vmatprep.mubr.bf16.mxu0 0
    %9135 = vmatmul.mubr.bf16.gmra.mrb[0].mxu0 %v9097
    %v9136 = vpop.f32.mrb[0].mxu0
    %v9137 = vadd.f32 0.0, %v9136
    %v9138 = vpop.f32.mrb[0].mxu0
    %v9139 = vpop.f32.mrb[0].mxu0
    %v9140 = vadd.f32 0.0, %v9139
    %v9141 = vpop.f32.mrb[0].mxu0
    %9142 = vmatprep.mubr.bf16.mxu0 0
    %9143 = vmatmul.mubr.bf16.gmra.mrb[0].mxu0 %v9100
    %v9144 = vpop.f32.mrb[0].mxu0
    %v9145 = vadd.f32 0.0, %v9144
    %v9146 = vpop.f32.mrb[0].mxu0
    %v9147 = vpop.f32.mrb[0].mxu0
    %v9148 = vadd.f32 0.0, %v9147
    %v9149 = vpop.f32.mrb[0].mxu0
    %9150 = vdwg.mxu0
    %v9151 = vmax.f32 %v9137, 0.0
    %v9152 = vmax.f32 %v9140, 0.0
    %v9153 = vmax.f32 %v9145, 0.0
    %v9154 = vmax.f32 %v9148, 0.0
    %v9155 = vpack.c.bf16 %v9152, %v9151
    %v9156 = vpack.c.bf16 %v9154, %v9153
    %v9161 = vunpack.c.l.b16 %v4744
    %v9162 = vunpack.c.l.b16 %v4745
    %v9163 = vunpack.c.l.b16 %v4746
    %v9164 = vunpack.c.l.b16 %v4747
    %v9165 = vpack.c.b16 %v9162, %v9161
    %v9166 = vpack.c.b16 %v9164, %v9163
    %v9170 = vsel %vm260, %v9155, 0
    %v9173 = vsel %vm260, %v9156, 0
    %9175 = vmatprep.subr.bf16.mxu0 0
    %9176 = vmatpush1.bf16.msra.mxu0 %v9165
    %9177 = vmatprep.subr.bf16.mxu0 0
    %9178 = vmatpush1.bf16.msra.mxu0 %v9166
    %9179 = vmatprep.subr.bf16.mxu0 0
    %9180 = vmatpush1.bf16.msra.mxu0 0
    %9181 = vmatprep.subr.bf16.mxu0 0
    %9182 = vmatpush1.bf16.msra.mxu0 0
    %9183 = vmatprep.subr.bf16.mxu0 0
    %9184 = vmatpush1.bf16.msra.mxu0 0
    %9185 = vmatprep.subr.bf16.mxu0 0
    %9186 = vmatpush1.bf16.msra.mxu0 0
    %9187 = vmatprep.subr.bf16.mxu0 0
    %9188 = vmatpush1.bf16.msra.mxu0 0
    %9189 = vmatprep.subr.bf16.mxu0 0
    %9190 = vmatpush1.bf16.msra.mxu0 0
    %9191 = vmatprep.subr.bf16.mxu0 0
    %9192 = vmatpush1.bf16.msra.mxu0 0
    %9193 = vmatprep.subr.bf16.mxu0 0
    %9194 = vmatpush1.bf16.msra.mxu0 0
    %9195 = vmatprep.subr.bf16.mxu0 0
    %9196 = vmatpush1.bf16.msra.mxu0 0
    %9197 = vmatprep.subr.bf16.mxu0 0
    %9198 = vmatpush1.bf16.msra.mxu0 0
    %9199 = vmatprep.subr.bf16.mxu0 0
    %9200 = vmatpush1.bf16.msra.mxu0 0
    %9201 = vmatprep.subr.bf16.mxu0 0
    %9202 = vmatpush1.bf16.msra.mxu0 0
    %9203 = vmatprep.subr.bf16.mxu0 0
    %9204 = vmatpush1.bf16.msra.mxu0 0
    %9205 = vmatprep.subr.bf16.mxu0 0
    %9206 = vmatpush1.bf16.msra.mxu0 0
    %9207 = vmatprep.mubr.bf16.mxu0 0
    %9208 = vmatmul.mubr.bf16.gmra.mrb[0].mxu0 %v9170
    %v9209 = vpop.f32.mrb[0].mxu0
    %v9210 = vadd.f32 0.0, %v9209
    %v9211 = vpop.f32.mrb[0].mxu0
    %v9212 = vpop.f32.mrb[0].mxu0
    %v9213 = vadd.f32 0.0, %v9212
    %v9214 = vpop.f32.mrb[0].mxu0
    %9215 = vmatprep.mubr.bf16.mxu0 0
    %9216 = vmatmul.mubr.bf16.gmra.mrb[0].mxu0 %v9173
    %v9217 = vpop.f32.mrb[0].mxu0
    %v9218 = vadd.f32 0.0, %v9217
    %v9219 = vpop.f32.mrb[0].mxu0
    %v9220 = vpop.f32.mrb[0].mxu0
    %v9221 = vadd.f32 0.0, %v9220
    %v9222 = vpop.f32.mrb[0].mxu0
    %9223 = vdwg.mxu0
    %v9224 = vadd.f32 %v9006, %v9210
    %v9225 = vadd.f32 %v9007, %v9213
    %v9226 = vadd.f32 %v9008, %v9218
    %v9227 = vadd.f32 %v9009, %v9221
    %9228 = vst.msk [vmem:[#allocation11] sm:$0xff] %vm260, %v9224
    %9229 = vst.msk [vmem:[#allocation11 + $0x8] sm:$0xff] %vm260, %v9225
    %9230 = vst.msk [vmem:[#allocation11 + $0x10] sm:$0xff] %vm260, %v9226
    %9231 = vst.msk [vmem:[#allocation11 + $0x18] sm:$0xff] %vm260, %v9227
    // Predicated region
    $region62: #{tpu_custom_call.1} parent=1 // pred_check
      _
    $region63: #{tpu_custom_call.1} parent=1 // pred_check_branch
      %9233 = sbr.rel (0) target = $region65
    $region64: #{tpu_custom_call.1} parent=1 // pred_region
      %s9235 = ssub.s32 512, 512
      %9236 = vsyncadd [#allocation4], %s9235
      %s9237 = sshll.u32 [#allocation11], 4
      %s9238 = int_to_ptr.vmem [resolvable:$true] %s9237
      %9243 = dma.vmem_to_hbm [thread:$0]  %s9238, 512, %s10, [#allocation4], 128, 128, 8
    $region65: #{tpu_custom_call.1} parent=1 // pred_fallthru
      _
    // Predicated region
    $region66: #{tpu_custom_call.1} parent=1 // pred_check
      _
    $region67: #{tpu_custom_call.1} parent=1 // pred_check_branch
      %9245 = sbr.rel (0) target = $region69
    $region68: #{tpu_custom_call.1} parent=1 // pred_region
      %9246 = dma.done [#allocation4], 512
    $region69: #{tpu_custom_call.1} parent=1 // pred_fallthru
      _
    %9247 = vsyncpa [#allocation3], 1
    %9248 = vsyncpa [#allocation6], 1
    %9249 = vsyncpa [#allocation9], 1
    %9250 = vsyncpa [#allocation4], 1

</llo_original>
